<compile_context>
chip_gen: v7x
topology: tpu7x:2x2x1
jax: 0.10.0
libtpu: 0.0.40
codegen_flags: <defaults>
</compile_context>

<pallas_src>
import jax
import jax.numpy as jnp
from jax.experimental import pallas as pl
from jax.experimental.pallas import tpu as pltpu


# ---------------------------------------------------------------------------
# In-kernel helpers (trace-time functions on values / refs).
# ---------------------------------------------------------------------------
def _maxpool2x2(y):
    """2x2 / stride-2 max pool on an NHWC value."""
    n, h, w, c = y.shape
    y = y.reshape(n, h // 2, 2, w, c)                    # split leading H dim (cheap)
    y = jnp.maximum(y[:, :, 0], y[:, :, 1])              # (n, h/2, w, c)
    y = y.reshape(n, h // 2, w // 2, 2, c)
    return jnp.maximum(y[:, :, :, 0], y[:, :, :, 1])     # (n, h/2, w/2, c)


def _zero_halo(pad_ref):
    """Zero only the 4 border strips of a padded scratch buffer (interior is
    fully rewritten every grid step, so never zero it)."""
    n, hp, wp, c = pad_ref.shape
    z_row = jnp.zeros((n, 1, wp, c), pad_ref.dtype)
    pad_ref[:, 0:1, :, :] = z_row
    pad_ref[:, hp - 1:hp, :, :] = z_row
    z_col = jnp.zeros((n, hp, 1, c), pad_ref.dtype)
    pad_ref[:, :, 0:1, :] = z_col
    pad_ref[:, :, wp - 1:wp, :] = z_col


def _conv3x3_mm_relu_pool(pad_ref, w_ref, b_ref):
    """3x3 conv (pad=1) + bias + ReLU + 2x2 maxpool.

    The padded input already sits in pad_ref (n, h+2, w+2, cin).  Instead of
    building an im2col patch matrix in scratch, the 9 taps are 9 accumulating
    MXU matmuls reading the shifted windows directly (same total MACs, no
    patch-scratch VMEM or lane-misaligned stores).
    """
    n, hp, wp, cin = pad_ref.shape
    h, w = hp - 2, wp - 2
    cout = w_ref.shape[1]

    acc = jnp.zeros((n * h * w, cout), jnp.float32)
    for dy in range(3):
        for dx in range(3):
            k = 3 * dy + dx
            win = pad_ref[:, dy:dy + h, dx:dx + w, :].reshape(n * h * w, cin)
            acc = acc + jnp.dot(win.astype(w_ref.dtype),
                                w_ref[k * cin:(k + 1) * cin, :],
                                preferred_element_type=jnp.float32)
    acc = jnp.maximum(acc + b_ref[...], 0.0)
    return _maxpool2x2(acc.reshape(n, h, w, cout))


# ---------------------------------------------------------------------------
# The fused kernel: conv1 -> conv2 -> conv3 -> fc1 -> ReLU -> fc2
# ---------------------------------------------------------------------------
def fused_cnn_kernel(x_ref, w1_ref, b1_ref, w2_ref, b2_ref, w3_ref, b3_ref,
                     fc1w_ref, fc1b_ref, fc2w_ref, fc2b_ref,
                     out_ref,
                     pad1_ref, pad2_ref, pad3_ref, feat_ref):
    n, H, W, _ = x_ref.shape
    c1 = w1_ref.shape[1]
    H2, W2 = H // 2, W // 2
    H3, W3 = H // 4, W // 4

    # Halo borders only; interiors are rewritten below each step.
    _zero_halo(pad1_ref)
    _zero_halo(pad2_ref)
    _zero_halo(pad3_ref)

    # ---- Stage 1: conv 1->32.  With Cin == 1 the MXU would only see K=1 outer
    # products, so run the 9 taps as VPU broadcast multiply-adds.  Processed in
    # 4-row strips to bound the live accumulator; each strip's pooled rows are
    # written straight into pad2's interior (no separate x1 buffer).
    pad1_ref[:, 1:H + 1, 1:W + 1, :] = x_ref[...]
    b1 = b1_ref[...].reshape(1, 1, 1, c1)
    STRIP = 4                                            # conv-output rows per strip
    for s in range(H // STRIP):
        y0 = s * STRIP
        acc = jnp.zeros((n, STRIP, W, c1), jnp.float32)
        for dy in range(3):
            for dx in range(3):
                k = 3 * dy + dx
                tap = w1_ref[k:k + 1, :].reshape(1, 1, 1, c1)
                acc = acc + pad1_ref[:, y0 + dy:y0 + dy + STRIP, dx:dx + W, :] * tap
        pooled = _maxpool2x2(jnp.maximum(acc + b1, 0.0))           # (n, STRIP/2, W2, c1)
        r0 = 1 + y0 // 2
        pad2_ref[:, r0:r0 + STRIP // 2, 1:W2 + 1, :] = pooled

    # ---- Stage 2: conv 32->64 + ReLU + pool; result fills pad3's interior.
    x2 = _conv3x3_mm_relu_pool(pad2_ref, w2_ref, b2_ref)           # (n, H3, W3, 64)
    pad3_ref[:, 1:H3 + 1, 1:W3 + 1, :] = x2

    # ---- Stage 3: conv 64->128 + ReLU + pool.
    x3 = _conv3x3_mm_relu_pool(pad3_ref, w3_ref, b3_ref)           # (n, H/8, W/8, 128)

    # ---- MLP head.  Pack the pooled map into a lane-dense (n, hf*wf*128) slab
    # (stores at 128-lane-aligned offsets), then ONE fc1 matmul + ReLU + fc2.
    hf, wf, cf = x3.shape[1], x3.shape[2], x3.shape[3]
    for i in range(hf):
        for j in range(wf):
            off = (i * wf + j) * cf
            feat_ref[:, off:off + cf] = x3[:, i:i + 1, j:j + 1, :].reshape(n, cf)

    hid = jnp.dot(feat_ref[...].astype(fc1w_ref.dtype), fc1w_ref[...],
                  preferred_element_type=jnp.float32) + fc1b_ref[...]
    hid = jnp.maximum(hid, 0.0)
    # TODO(synk): nn.Dropout(0.5) is treated as eval-mode identity (inference forward).
    out_ref[...] = (jnp.dot(hid.astype(fc2w_ref.dtype), fc2w_ref[...],
                            preferred_element_type=jnp.float32) + fc2b_ref[...])


# ---------------------------------------------------------------------------
# pallas_call wrapper
# ---------------------------------------------------------------------------
def cnn_forward_fused(x_nhwc, kp, *, batch_block=None,
                      vmem_limit_bytes=64 * 1024 * 1024):
    n, h, w, cin = x_nhwc.shape
    assert cin == 1, "CNNAudioClassifier takes a single input channel"
    assert h % 8 == 0 and w % 8 == 0, "spatial dims must be divisible by 8 (3 pools)"

    # Don't default to the whole batch: ~0.6 MiB/item of scratch+activations, so cap
    # the per-step block and let the "parallel" grid cover large batches (fits v7x's
    # 64 MiB VMEM and uses both of its TensorCores).
    bb = min(n, 16) if batch_block is None else batch_block

    num_classes = kp["fc2_w"].shape[1]
    c1 = kp["b1"].shape[1]            # conv1 out / conv2 in channels (32)
    c2 = kp["b2"].shape[1]            # conv2 out / conv3 in channels (64)
    c3 = kp["b3"].shape[1]            # conv3 out channels (128)
    hf, wf = h // 8, w // 8

    weights = (kp["w1"], kp["b1"], kp["w2"], kp["b2"], kp["w3"], kp["b3"],
               kp["fc1_w"], kp["fc1_b"], kp["fc2_w"], kp["fc2_b"])

    def _const_spec(a):
        return pl.BlockSpec(a.shape, lambda b, nd=a.ndim: (0,) * nd)

    return pl.pallas_call(
        fused_cnn_kernel,
        out_shape=jax.ShapeDtypeStruct((n, num_classes), jnp.float32),
        grid=(pl.cdiv(n, bb),),
        in_specs=[pl.BlockSpec((bb, h, w, 1), lambda b: (b, 0, 0, 0))]
                 + [_const_spec(a) for a in weights],
        out_specs=pl.BlockSpec((bb, num_classes), lambda b: (b, 0)),
        scratch_shapes=[
            pltpu.VMEM((bb, h + 2, w + 2, 1), jnp.float32),               # pad1 (halo)
            pltpu.VMEM((bb, h // 2 + 2, w // 2 + 2, c1), jnp.float32),    # pad2 (halo)
            pltpu.VMEM((bb, h // 4 + 2, w // 4 + 2, c2), jnp.float32),    # pad3 (halo)
            pltpu.VMEM((bb, hf * wf * c3), jnp.float32),                  # fc1 feature slab
        ],
        compiler_params=pltpu.CompilerParams(
            dimension_semantics=("parallel",),        # batch-block axis
            vmem_limit_bytes=vmem_limit_bytes),
    )(x_nhwc, *weights)


@jax.jit
def cnn_audio_classifier_forward(x_nchw, kparams):
    """x_nchw: (N, 1, H, W) float32, PyTorch layout at the boundary."""
    # NCHW -> NHWC.  With in_channels == 1 this is a pure relabeling (free).
    x_nhwc = jnp.transpose(x_nchw, (0, 2, 3, 1))
    return cnn_forward_fused(x_nhwc, kparams)


# ---------------------------------------------------------------------------
# Parameters: PyTorch-native layouts + one-time repack into kernel layouts
# ---------------------------------------------------------------------------
def init_torch_params(key, input_shape=(16, 16), num_classes=8):
    """Random parameters in PyTorch-native layouts (Conv2d: OIHW, Linear: (out, in))."""
    hf, wf = input_shape[0] // 8, input_shape[1] // 8
    flat = 128 * hf * wf
    ks = jax.random.split(key, 10)
    s = 0.05
    return {
        "conv1_w": s * jax.random.normal(ks[0], (32, 1, 3, 3), jnp.float32),
        "conv1_b": s * jax.random.normal(ks[1], (32,), jnp.float32),
        "conv2_w": s * jax.random.normal(ks[2], (64, 32, 3, 3), jnp.float32),
        "conv2_b": s * jax.random.normal(ks[3], (64,), jnp.float32),
        "conv3_w": s * jax.random.normal(ks[4], (128, 64, 3, 3), jnp.float32),
        "conv3_b": s * jax.random.normal(ks[5], (128,), jnp.float32),
        "fc1_w": s * jax.random.normal(ks[6], (128, flat), jnp.float32),
        "fc1_b": s * jax.random.normal(ks[7], (128,), jnp.float32),
        "fc2_w": s * jax.random.normal(ks[8], (num_classes, 128), jnp.float32),
        "fc2_b": s * jax.random.normal(ks[9], (num_classes,), jnp.float32),
    }


def prepare_kernel_params(p, input_shape=(16, 16), matmul_dtype=jnp.bfloat16):
    """One-time repack of PyTorch-layout params into kernel layouts.

    MXU-matmul weights (conv2/conv3/fc1/fc2) are stored in `matmul_dtype`
    (bfloat16 by default; pass jnp.float32 for exact f32 reference numerics).
    Stage-1 (VPU) weights and all biases stay f32.
    """
    hf, wf = input_shape[0] // 8, input_shape[1] // 8

    def conv_w(w_oihw, dtype):
        # (Cout, Cin, 3, 3) -> (9*Cin, Cout); row order (kh, kw, cin) matches the
        # kernel's per-tap weight-slice order.
        cout = w_oihw.shape[0]
        return jnp.transpose(w_oihw, (2, 3, 1, 0)).reshape(-1, cout).astype(dtype)

    # fc1: PyTorch flattens NCHW (feature index = c*hf*wf + i*wf + j).  Repack the
    # (hidden, flat) weight to (hf*wf*c, hidden) with row index (i*wf + j)*c + cc so
    # the kernel's lane-dense feature slab feeds it with a single matmul.
    hidden, flat = p["fc1_w"].shape
    cf = flat // (hf * wf)
    w_chw = p["fc1_w"].T.reshape(cf, hf, wf, hidden)                 # (c, h, w, hidden)
    fc1_w = jnp.transpose(w_chw, (1, 2, 0, 3)).reshape(hf * wf * cf, hidden)

    return {
        "w1": conv_w(p["conv1_w"], jnp.float32),       # (9, 32)    VPU stage, f32
        "b1": p["conv1_b"].reshape(1, -1),             # (1, 32)
        "w2": conv_w(p["conv2_w"], matmul_dtype),      # (288, 64)
        "b2": p["conv2_b"].reshape(1, -1),             # (1, 64)
        "w3": conv_w(p["conv3_w"], matmul_dtype),      # (576, 128)
        "b3": p["conv3_b"].reshape(1, -1),             # (1, 128)
        "fc1_w": fc1_w.astype(matmul_dtype),           # (hf*wf*128, 128)
        "fc1_b": p["fc1_b"].reshape(1, -1),            # (1, 128)
        "fc2_w": p["fc2_w"].T.astype(matmul_dtype),    # (128, num_classes)
        "fc2_b": p["fc2_b"].reshape(1, -1),            # (1, num_classes)
    }


if __name__ == "__main__":
    # Small, pool-friendly shapes: batch=2, in_channels=1, input 16x16, 8 classes.
    key = jax.random.PRNGKey(0)
    kx, kw = jax.random.split(key)
    x = jax.random.normal(kx, (2, 1, 16, 16), jnp.float32)
    torch_params = init_torch_params(kw, input_shape=(16, 16), num_classes=8)
    kparams = prepare_kernel_params(torch_params, input_shape=(16, 16))

    out = cnn_audio_classifier_forward(x, kparams)
    jax.block_until_ready(out)
    assert out.shape == (2, 8), out.shape
    print("KERNEL_OK")
</pallas_src>

<mosaic_0001>
module attributes {stable_mosaic.version = 11 : i64} {
  func.func @fused_cnn_kernel(%arg0: i32, %arg1: memref<2x16x16x1xf32, #tpu.memory_space<vmem>>, %arg2: memref<9x32xf32, #tpu.memory_space<vmem>>, %arg3: memref<1x32xf32, #tpu.memory_space<vmem>>, %arg4: memref<288x64xbf16, #tpu.memory_space<vmem>>, %arg5: memref<1x64xf32, #tpu.memory_space<vmem>>, %arg6: memref<576x128xbf16, #tpu.memory_space<vmem>>, %arg7: memref<1x128xf32, #tpu.memory_space<vmem>>, %arg8: memref<512x128xbf16, #tpu.memory_space<vmem>>, %arg9: memref<1x128xf32, #tpu.memory_space<vmem>>, %arg10: memref<128x8xbf16, #tpu.memory_space<vmem>>, %arg11: memref<1x8xf32, #tpu.memory_space<vmem>>, %arg12: memref<2x8xf32, #tpu.memory_space<vmem>>, %arg13: memref<2x18x18x1xf32, #tpu.memory_space<vmem>>, %arg14: memref<2x10x10x32xf32, #tpu.memory_space<vmem>>, %arg15: memref<2x6x6x64xf32, #tpu.memory_space<vmem>>, %arg16: memref<2x512xf32, #tpu.memory_space<vmem>>) attributes {dimension_semantics = [#tpu.dimension_semantics<parallel>], iteration_bounds = array<i64: 1>, scalar_prefetch = 0 : i64, scratch_operands = 4 : i64, tpu.core_type = #tpu.core_type<tc>, window_params = [{transform_indices = @transform_0, window_bounds = array<i64: 2, 16, 16, 1>}, {pipeline_mode = #tpu.pipeline_mode<synchronous>, transform_indices = @transform_1, window_bounds = array<i64: 9, 32>}, {pipeline_mode = #tpu.pipeline_mode<synchronous>, transform_indices = @transform_2, window_bounds = array<i64: 1, 32>}, {pipeline_mode = #tpu.pipeline_mode<synchronous>, transform_indices = @transform_3, window_bounds = array<i64: 288, 64>}, {pipeline_mode = #tpu.pipeline_mode<synchronous>, transform_indices = @transform_4, window_bounds = array<i64: 1, 64>}, {pipeline_mode = #tpu.pipeline_mode<synchronous>, transform_indices = @transform_5, window_bounds = array<i64: 576, 128>}, {pipeline_mode = #tpu.pipeline_mode<synchronous>, transform_indices = @transform_6, window_bounds = array<i64: 1, 128>}, {pipeline_mode = #tpu.pipeline_mode<synchronous>, transform_indices = @transform_7, window_bounds = array<i64: 512, 128>}, {pipeline_mode = #tpu.pipeline_mode<synchronous>, transform_indices = @transform_8, window_bounds = array<i64: 1, 128>}, {pipeline_mode = #tpu.pipeline_mode<synchronous>, transform_indices = @transform_9, window_bounds = array<i64: 128, 8>}, {pipeline_mode = #tpu.pipeline_mode<synchronous>, transform_indices = @transform_10, window_bounds = array<i64: 1, 8>}, {transform_indices = @transform_11, window_bounds = array<i64: 2, 8>}]} {
    %cst = arith.constant 0.000000e+00 : f32
    %0 = vector.broadcast %cst : f32 to vector<2x1x18x1xf32>
    %c0 = arith.constant 0 : index
    %c0_0 = arith.constant 0 : index
    %c0_1 = arith.constant 0 : index
    %c0_2 = arith.constant 0 : index
    %1 = vector.load %arg13[%c0, %c0_0, %c0_1, %c0_2] : memref<2x18x18x1xf32, #tpu.memory_space<vmem>>, vector<2x1x18x1xf32>
    tpu.vector_store %arg13[%c0, %c0_0, %c0_1, %c0_2], %0 {strides = array<i32>} : memref<2x18x18x1xf32, #tpu.memory_space<vmem>>, vector<2x1x18x1xf32>,
    %c0_3 = arith.constant 0 : index
    %c17 = arith.constant 17 : index
    %c0_4 = arith.constant 0 : index
    %c0_5 = arith.constant 0 : index
    %2 = vector.load %arg13[%c0_3, %c17, %c0_4, %c0_5] : memref<2x18x18x1xf32, #tpu.memory_space<vmem>>, vector<2x1x18x1xf32>
    tpu.vector_store %arg13[%c0_3, %c17, %c0_4, %c0_5], %0 {strides = array<i32>} : memref<2x18x18x1xf32, #tpu.memory_space<vmem>>, vector<2x1x18x1xf32>,
    %cst_6 = arith.constant 0.000000e+00 : f32
    %3 = vector.broadcast %cst_6 : f32 to vector<2x18x1x1xf32>
    %c0_7 = arith.constant 0 : index
    %c0_8 = arith.constant 0 : index
    %c0_9 = arith.constant 0 : index
    %c0_10 = arith.constant 0 : index
    %4 = vector.load %arg13[%c0_7, %c0_8, %c0_9, %c0_10] : memref<2x18x18x1xf32, #tpu.memory_space<vmem>>, vector<2x18x1x1xf32>
    tpu.vector_store %arg13[%c0_7, %c0_8, %c0_9, %c0_10], %3 {strides = array<i32>} : memref<2x18x18x1xf32, #tpu.memory_space<vmem>>, vector<2x18x1x1xf32>,
    %c0_11 = arith.constant 0 : index
    %c0_12 = arith.constant 0 : index
    %c17_13 = arith.constant 17 : index
    %c0_14 = arith.constant 0 : index
    %5 = vector.load %arg13[%c0_11, %c0_12, %c17_13, %c0_14] : memref<2x18x18x1xf32, #tpu.memory_space<vmem>>, vector<2x18x1x1xf32>
    tpu.vector_store %arg13[%c0_11, %c0_12, %c17_13, %c0_14], %3 {strides = array<i32>} : memref<2x18x18x1xf32, #tpu.memory_space<vmem>>, vector<2x18x1x1xf32>,
    %cst_15 = arith.constant 0.000000e+00 : f32
    %6 = vector.broadcast %cst_15 : f32 to vector<2x1x10x32xf32>
    %c0_16 = arith.constant 0 : index
    %c0_17 = arith.constant 0 : index
    %c0_18 = arith.constant 0 : index
    %c0_19 = arith.constant 0 : index
    %7 = vector.load %arg14[%c0_16, %c0_17, %c0_18, %c0_19] : memref<2x10x10x32xf32, #tpu.memory_space<vmem>>, vector<2x1x10x32xf32>
    tpu.vector_store %arg14[%c0_16, %c0_17, %c0_18, %c0_19], %6 {strides = array<i32>} : memref<2x10x10x32xf32, #tpu.memory_space<vmem>>, vector<2x1x10x32xf32>,
    %c0_20 = arith.constant 0 : index
    %c9 = arith.constant 9 : index
    %c0_21 = arith.constant 0 : index
    %c0_22 = arith.constant 0 : index
    %8 = vector.load %arg14[%c0_20, %c9, %c0_21, %c0_22] : memref<2x10x10x32xf32, #tpu.memory_space<vmem>>, vector<2x1x10x32xf32>
    tpu.vector_store %arg14[%c0_20, %c9, %c0_21, %c0_22], %6 {strides = array<i32>} : memref<2x10x10x32xf32, #tpu.memory_space<vmem>>, vector<2x1x10x32xf32>,
    %cst_23 = arith.constant 0.000000e+00 : f32
    %9 = vector.broadcast %cst_23 : f32 to vector<2x10x1x32xf32>
    %c0_24 = arith.constant 0 : index
    %c0_25 = arith.constant 0 : index
    %c0_26 = arith.constant 0 : index
    %c0_27 = arith.constant 0 : index
    %10 = vector.load %arg14[%c0_24, %c0_25, %c0_26, %c0_27] : memref<2x10x10x32xf32, #tpu.memory_space<vmem>>, vector<2x10x1x32xf32>
    tpu.vector_store %arg14[%c0_24, %c0_25, %c0_26, %c0_27], %9 {strides = array<i32>} : memref<2x10x10x32xf32, #tpu.memory_space<vmem>>, vector<2x10x1x32xf32>,
    %c0_28 = arith.constant 0 : index
    %c0_29 = arith.constant 0 : index
    %c9_30 = arith.constant 9 : index
    %c0_31 = arith.constant 0 : index
    %11 = vector.load %arg14[%c0_28, %c0_29, %c9_30, %c0_31] : memref<2x10x10x32xf32, #tpu.memory_space<vmem>>, vector<2x10x1x32xf32>
    tpu.vector_store %arg14[%c0_28, %c0_29, %c9_30, %c0_31], %9 {strides = array<i32>} : memref<2x10x10x32xf32, #tpu.memory_space<vmem>>, vector<2x10x1x32xf32>,
    %cst_32 = arith.constant 0.000000e+00 : f32
    %12 = vector.broadcast %cst_32 : f32 to vector<2x1x6x64xf32>
    %c0_33 = arith.constant 0 : index
    %c0_34 = arith.constant 0 : index
    %c0_35 = arith.constant 0 : index
    %c0_36 = arith.constant 0 : index
    %13 = vector.load %arg15[%c0_33, %c0_34, %c0_35, %c0_36] : memref<2x6x6x64xf32, #tpu.memory_space<vmem>>, vector<2x1x6x64xf32>
    tpu.vector_store %arg15[%c0_33, %c0_34, %c0_35, %c0_36], %12 {strides = array<i32>} : memref<2x6x6x64xf32, #tpu.memory_space<vmem>>, vector<2x1x6x64xf32>,
    %c0_37 = arith.constant 0 : index
    %c5 = arith.constant 5 : index
    %c0_38 = arith.constant 0 : index
    %c0_39 = arith.constant 0 : index
    %14 = vector.load %arg15[%c0_37, %c5, %c0_38, %c0_39] : memref<2x6x6x64xf32, #tpu.memory_space<vmem>>, vector<2x1x6x64xf32>
    tpu.vector_store %arg15[%c0_37, %c5, %c0_38, %c0_39], %12 {strides = array<i32>} : memref<2x6x6x64xf32, #tpu.memory_space<vmem>>, vector<2x1x6x64xf32>,
    %cst_40 = arith.constant 0.000000e+00 : f32
    %15 = vector.broadcast %cst_40 : f32 to vector<2x6x1x64xf32>
    %c0_41 = arith.constant 0 : index
    %c0_42 = arith.constant 0 : index
    %c0_43 = arith.constant 0 : index
    %c0_44 = arith.constant 0 : index
    %16 = vector.load %arg15[%c0_41, %c0_42, %c0_43, %c0_44] : memref<2x6x6x64xf32, #tpu.memory_space<vmem>>, vector<2x6x1x64xf32>
    tpu.vector_store %arg15[%c0_41, %c0_42, %c0_43, %c0_44], %15 {strides = array<i32>} : memref<2x6x6x64xf32, #tpu.memory_space<vmem>>, vector<2x6x1x64xf32>,
    %c0_45 = arith.constant 0 : index
    %c0_46 = arith.constant 0 : index
    %c5_47 = arith.constant 5 : index
    %c0_48 = arith.constant 0 : index
    %17 = vector.load %arg15[%c0_45, %c0_46, %c5_47, %c0_48] : memref<2x6x6x64xf32, #tpu.memory_space<vmem>>, vector<2x6x1x64xf32>
    tpu.vector_store %arg15[%c0_45, %c0_46, %c5_47, %c0_48], %15 {strides = array<i32>} : memref<2x6x6x64xf32, #tpu.memory_space<vmem>>, vector<2x6x1x64xf32>,
    %c0_49 = arith.constant 0 : index
    %c0_50 = arith.constant 0 : index
    %c0_51 = arith.constant 0 : index
    %c0_52 = arith.constant 0 : index
    %18 = vector.load %arg1[%c0_49, %c0_50, %c0_51, %c0_52] : memref<2x16x16x1xf32, #tpu.memory_space<vmem>>, vector<2x16x16x1xf32>
    %c0_53 = arith.constant 0 : index
    %c1 = arith.constant 1 : index
    %c1_54 = arith.constant 1 : index
    %c0_55 = arith.constant 0 : index
    %19 = vector.load %arg13[%c0_53, %c1, %c1_54, %c0_55] : memref<2x18x18x1xf32, #tpu.memory_space<vmem>>, vector<2x16x16x1xf32>
    tpu.vector_store %arg13[%c0_53, %c1, %c1_54, %c0_55], %18 {strides = array<i32>} : memref<2x18x18x1xf32, #tpu.memory_space<vmem>>, vector<2x16x16x1xf32>,
    %c0_56 = arith.constant 0 : index
    %c0_57 = arith.constant 0 : index
    %20 = vector.load %arg3[%c0_56, %c0_57] : memref<1x32xf32, #tpu.memory_space<vmem>>, vector<1x32xf32>
    %21 = vector.shape_cast %20 : vector<1x32xf32> to vector<1x1x1x32xf32>
    %cst_58 = arith.constant 0.000000e+00 : f32
    %22 = vector.broadcast %cst_58 : f32 to vector<2x4x16x32xf32>
    %c0_59 = arith.constant 0 : index
    %c0_60 = arith.constant 0 : index
    %23 = vector.load %arg2[%c0_59, %c0_60] : memref<9x32xf32, #tpu.memory_space<vmem>>, vector<1x32xf32>
    %24 = vector.shape_cast %23 : vector<1x32xf32> to vector<1x1x1x32xf32>
    %c0_61 = arith.constant 0 : index
    %c0_62 = arith.constant 0 : index
    %c0_63 = arith.constant 0 : index
    %c0_64 = arith.constant 0 : index
    %25 = vector.load %arg13[%c0_61, %c0_62, %c0_63, %c0_64] : memref<2x18x18x1xf32, #tpu.memory_space<vmem>>, vector<2x4x16x1xf32>
    %26 = vector.broadcast %25 : vector<2x4x16x1xf32> to vector<2x4x16x32xf32>
    %27 = vector.broadcast %24 : vector<1x1x1x32xf32> to vector<2x4x16x32xf32>
    %28 = arith.mulf %26, %27 : vector<2x4x16x32xf32>
    %29 = arith.addf %22, %28 : vector<2x4x16x32xf32>
    %c1_65 = arith.constant 1 : index
    %c0_66 = arith.constant 0 : index
    %30 = vector.load %arg2[%c1_65, %c0_66] : memref<9x32xf32, #tpu.memory_space<vmem>>, vector<1x32xf32>
    %31 = vector.shape_cast %30 : vector<1x32xf32> to vector<1x1x1x32xf32>
    %c0_67 = arith.constant 0 : index
    %c0_68 = arith.constant 0 : index
    %c1_69 = arith.constant 1 : index
    %c0_70 = arith.constant 0 : index
    %32 = vector.load %arg13[%c0_67, %c0_68, %c1_69, %c0_70] : memref<2x18x18x1xf32, #tpu.memory_space<vmem>>, vector<2x4x16x1xf32>
    %33 = vector.broadcast %32 : vector<2x4x16x1xf32> to vector<2x4x16x32xf32>
    %34 = vector.broadcast %31 : vector<1x1x1x32xf32> to vector<2x4x16x32xf32>
    %35 = arith.mulf %33, %34 : vector<2x4x16x32xf32>
    %36 = arith.addf %29, %35 : vector<2x4x16x32xf32>
    %c2 = arith.constant 2 : index
    %c0_71 = arith.constant 0 : index
    %37 = vector.load %arg2[%c2, %c0_71] : memref<9x32xf32, #tpu.memory_space<vmem>>, vector<1x32xf32>
    %38 = vector.shape_cast %37 : vector<1x32xf32> to vector<1x1x1x32xf32>
    %c0_72 = arith.constant 0 : index
    %c0_73 = arith.constant 0 : index
    %c2_74 = arith.constant 2 : index
    %c0_75 = arith.constant 0 : index
    %39 = vector.load %arg13[%c0_72, %c0_73, %c2_74, %c0_75] : memref<2x18x18x1xf32, #tpu.memory_space<vmem>>, vector<2x4x16x1xf32>
    %40 = vector.broadcast %39 : vector<2x4x16x1xf32> to vector<2x4x16x32xf32>
    %41 = vector.broadcast %38 : vector<1x1x1x32xf32> to vector<2x4x16x32xf32>
    %42 = arith.mulf %40, %41 : vector<2x4x16x32xf32>
    %43 = arith.addf %36, %42 : vector<2x4x16x32xf32>
    %c3 = arith.constant 3 : index
    %c0_76 = arith.constant 0 : index
    %44 = vector.load %arg2[%c3, %c0_76] : memref<9x32xf32, #tpu.memory_space<vmem>>, vector<1x32xf32>
    %45 = vector.shape_cast %44 : vector<1x32xf32> to vector<1x1x1x32xf32>
    %c0_77 = arith.constant 0 : index
    %c1_78 = arith.constant 1 : index
    %c0_79 = arith.constant 0 : index
    %c0_80 = arith.constant 0 : index
    %46 = vector.load %arg13[%c0_77, %c1_78, %c0_79, %c0_80] : memref<2x18x18x1xf32, #tpu.memory_space<vmem>>, vector<2x4x16x1xf32>
    %47 = vector.broadcast %46 : vector<2x4x16x1xf32> to vector<2x4x16x32xf32>
    %48 = vector.broadcast %45 : vector<1x1x1x32xf32> to vector<2x4x16x32xf32>
    %49 = arith.mulf %47, %48 : vector<2x4x16x32xf32>
    %50 = arith.addf %43, %49 : vector<2x4x16x32xf32>
    %c4 = arith.constant 4 : index
    %c0_81 = arith.constant 0 : index
    %51 = vector.load %arg2[%c4, %c0_81] : memref<9x32xf32, #tpu.memory_space<vmem>>, vector<1x32xf32>
    %52 = vector.shape_cast %51 : vector<1x32xf32> to vector<1x1x1x32xf32>
    %c0_82 = arith.constant 0 : index
    %c1_83 = arith.constant 1 : index
    %c1_84 = arith.constant 1 : index
    %c0_85 = arith.constant 0 : index
    %53 = vector.load %arg13[%c0_82, %c1_83, %c1_84, %c0_85] : memref<2x18x18x1xf32, #tpu.memory_space<vmem>>, vector<2x4x16x1xf32>
    %54 = vector.broadcast %53 : vector<2x4x16x1xf32> to vector<2x4x16x32xf32>
    %55 = vector.broadcast %52 : vector<1x1x1x32xf32> to vector<2x4x16x32xf32>
    %56 = arith.mulf %54, %55 : vector<2x4x16x32xf32>
    %57 = arith.addf %50, %56 : vector<2x4x16x32xf32>
    %c5_86 = arith.constant 5 : index
    %c0_87 = arith.constant 0 : index
    %58 = vector.load %arg2[%c5_86, %c0_87] : memref<9x32xf32, #tpu.memory_space<vmem>>, vector<1x32xf32>
    %59 = vector.shape_cast %58 : vector<1x32xf32> to vector<1x1x1x32xf32>
    %c0_88 = arith.constant 0 : index
    %c1_89 = arith.constant 1 : index
    %c2_90 = arith.constant 2 : index
    %c0_91 = arith.constant 0 : index
    %60 = vector.load %arg13[%c0_88, %c1_89, %c2_90, %c0_91] : memref<2x18x18x1xf32, #tpu.memory_space<vmem>>, vector<2x4x16x1xf32>
    %61 = vector.broadcast %60 : vector<2x4x16x1xf32> to vector<2x4x16x32xf32>
    %62 = vector.broadcast %59 : vector<1x1x1x32xf32> to vector<2x4x16x32xf32>
    %63 = arith.mulf %61, %62 : vector<2x4x16x32xf32>
    %64 = arith.addf %57, %63 : vector<2x4x16x32xf32>
    %c6 = arith.constant 6 : index
    %c0_92 = arith.constant 0 : index
    %65 = vector.load %arg2[%c6, %c0_92] : memref<9x32xf32, #tpu.memory_space<vmem>>, vector<1x32xf32>
    %66 = vector.shape_cast %65 : vector<1x32xf32> to vector<1x1x1x32xf32>
    %c0_93 = arith.constant 0 : index
    %c2_94 = arith.constant 2 : index
    %c0_95 = arith.constant 0 : index
    %c0_96 = arith.constant 0 : index
    %67 = vector.load %arg13[%c0_93, %c2_94, %c0_95, %c0_96] : memref<2x18x18x1xf32, #tpu.memory_space<vmem>>, vector<2x4x16x1xf32>
    %68 = vector.broadcast %67 : vector<2x4x16x1xf32> to vector<2x4x16x32xf32>
    %69 = vector.broadcast %66 : vector<1x1x1x32xf32> to vector<2x4x16x32xf32>
    %70 = arith.mulf %68, %69 : vector<2x4x16x32xf32>
    %71 = arith.addf %64, %70 : vector<2x4x16x32xf32>
    %c7 = arith.constant 7 : index
    %c0_97 = arith.constant 0 : index
    %72 = vector.load %arg2[%c7, %c0_97] : memref<9x32xf32, #tpu.memory_space<vmem>>, vector<1x32xf32>
    %73 = vector.shape_cast %72 : vector<1x32xf32> to vector<1x1x1x32xf32>
    %c0_98 = arith.constant 0 : index
    %c2_99 = arith.constant 2 : index
    %c1_100 = arith.constant 1 : index
    %c0_101 = arith.constant 0 : index
    %74 = vector.load %arg13[%c0_98, %c2_99, %c1_100, %c0_101] : memref<2x18x18x1xf32, #tpu.memory_space<vmem>>, vector<2x4x16x1xf32>
    %75 = vector.broadcast %74 : vector<2x4x16x1xf32> to vector<2x4x16x32xf32>
    %76 = vector.broadcast %73 : vector<1x1x1x32xf32> to vector<2x4x16x32xf32>
    %77 = arith.mulf %75, %76 : vector<2x4x16x32xf32>
    %78 = arith.addf %71, %77 : vector<2x4x16x32xf32>
    %c8 = arith.constant 8 : index
    %c0_102 = arith.constant 0 : index
    %79 = vector.load %arg2[%c8, %c0_102] : memref<9x32xf32, #tpu.memory_space<vmem>>, vector<1x32xf32>
    %80 = vector.shape_cast %79 : vector<1x32xf32> to vector<1x1x1x32xf32>
    %c0_103 = arith.constant 0 : index
    %c2_104 = arith.constant 2 : index
    %c2_105 = arith.constant 2 : index
    %c0_106 = arith.constant 0 : index
    %81 = vector.load %arg13[%c0_103, %c2_104, %c2_105, %c0_106] : memref<2x18x18x1xf32, #tpu.memory_space<vmem>>, vector<2x4x16x1xf32>
    %82 = vector.broadcast %81 : vector<2x4x16x1xf32> to vector<2x4x16x32xf32>
    %83 = vector.broadcast %80 : vector<1x1x1x32xf32> to vector<2x4x16x32xf32>
    %84 = arith.mulf %82, %83 : vector<2x4x16x32xf32>
    %85 = arith.addf %78, %84 : vector<2x4x16x32xf32>
    %86 = vector.broadcast %21 : vector<1x1x1x32xf32> to vector<2x4x16x32xf32>
    %87 = arith.addf %85, %86 : vector<2x4x16x32xf32>
    %cst_107 = arith.constant 0.000000e+00 : f32
    %88 = vector.broadcast %cst_107 : f32 to vector<2x4x16x32xf32>
    %89 = arith.maximumf %87, %88 : vector<2x4x16x32xf32>
    %90 = vector.shape_cast %89 : vector<2x4x16x32xf32> to vector<2x2x2x16x32xf32>
    %91 = vector.extract_strided_slice %90 {offsets = [0, 0, 0, 0, 0], sizes = [2, 2, 1, 16, 32], strides = [1, 1, 1, 1, 1]} : vector<2x2x2x16x32xf32> to vector<2x2x1x16x32xf32>
    %92 = vector.shape_cast %91 : vector<2x2x1x16x32xf32> to vector<2x2x16x32xf32>
    %93 = vector.extract_strided_slice %90 {offsets = [0, 0, 1, 0, 0], sizes = [2, 2, 1, 16, 32], strides = [1, 1, 1, 1, 1]} : vector<2x2x2x16x32xf32> to vector<2x2x1x16x32xf32>
    %94 = vector.shape_cast %93 : vector<2x2x1x16x32xf32> to vector<2x2x16x32xf32>
    %95 = arith.maximumf %92, %94 : vector<2x2x16x32xf32>
    %96 = vector.shape_cast %95 : vector<2x2x16x32xf32> to vector<2x2x8x2x32xf32>
    %97 = vector.extract_strided_slice %96 {offsets = [0, 0, 0, 0, 0], sizes = [2, 2, 8, 1, 32], strides = [1, 1, 1, 1, 1]} : vector<2x2x8x2x32xf32> to vector<2x2x8x1x32xf32>
    %98 = vector.shape_cast %97 : vector<2x2x8x1x32xf32> to vector<2x2x8x32xf32>
    %99 = vector.extract_strided_slice %96 {offsets = [0, 0, 0, 1, 0], sizes = [2, 2, 8, 1, 32], strides = [1, 1, 1, 1, 1]} : vector<2x2x8x2x32xf32> to vector<2x2x8x1x32xf32>
    %100 = vector.shape_cast %99 : vector<2x2x8x1x32xf32> to vector<2x2x8x32xf32>
    %101 = arith.maximumf %98, %100 : vector<2x2x8x32xf32>
    %c0_108 = arith.constant 0 : index
    %c1_109 = arith.constant 1 : index
    %c1_110 = arith.constant 1 : index
    %c0_111 = arith.constant 0 : index
    %102 = vector.load %arg14[%c0_108, %c1_109, %c1_110, %c0_111] : memref<2x10x10x32xf32, #tpu.memory_space<vmem>>, vector<2x2x8x32xf32>
    tpu.vector_store %arg14[%c0_108, %c1_109, %c1_110, %c0_111], %101 {strides = array<i32>} : memref<2x10x10x32xf32, #tpu.memory_space<vmem>>, vector<2x2x8x32xf32>,
    %cst_112 = arith.constant 0.000000e+00 : f32
    %103 = vector.broadcast %cst_112 : f32 to vector<2x4x16x32xf32>
    %c0_113 = arith.constant 0 : index
    %c0_114 = arith.constant 0 : index
    %104 = vector.load %arg2[%c0_113, %c0_114] : memref<9x32xf32, #tpu.memory_space<vmem>>, vector<1x32xf32>
    %105 = vector.shape_cast %104 : vector<1x32xf32> to vector<1x1x1x32xf32>
    %c0_115 = arith.constant 0 : index
    %c4_116 = arith.constant 4 : index
    %c0_117 = arith.constant 0 : index
    %c0_118 = arith.constant 0 : index
    %106 = vector.load %arg13[%c0_115, %c4_116, %c0_117, %c0_118] : memref<2x18x18x1xf32, #tpu.memory_space<vmem>>, vector<2x4x16x1xf32>
    %107 = vector.broadcast %106 : vector<2x4x16x1xf32> to vector<2x4x16x32xf32>
    %108 = vector.broadcast %105 : vector<1x1x1x32xf32> to vector<2x4x16x32xf32>
    %109 = arith.mulf %107, %108 : vector<2x4x16x32xf32>
    %110 = arith.addf %103, %109 : vector<2x4x16x32xf32>
    %c1_119 = arith.constant 1 : index
    %c0_120 = arith.constant 0 : index
    %111 = vector.load %arg2[%c1_119, %c0_120] : memref<9x32xf32, #tpu.memory_space<vmem>>, vector<1x32xf32>
    %112 = vector.shape_cast %111 : vector<1x32xf32> to vector<1x1x1x32xf32>
    %c0_121 = arith.constant 0 : index
    %c4_122 = arith.constant 4 : index
    %c1_123 = arith.constant 1 : index
    %c0_124 = arith.constant 0 : index
    %113 = vector.load %arg13[%c0_121, %c4_122, %c1_123, %c0_124] : memref<2x18x18x1xf32, #tpu.memory_space<vmem>>, vector<2x4x16x1xf32>
    %114 = vector.broadcast %113 : vector<2x4x16x1xf32> to vector<2x4x16x32xf32>
    %115 = vector.broadcast %112 : vector<1x1x1x32xf32> to vector<2x4x16x32xf32>
    %116 = arith.mulf %114, %115 : vector<2x4x16x32xf32>
    %117 = arith.addf %110, %116 : vector<2x4x16x32xf32>
    %c2_125 = arith.constant 2 : index
    %c0_126 = arith.constant 0 : index
    %118 = vector.load %arg2[%c2_125, %c0_126] : memref<9x32xf32, #tpu.memory_space<vmem>>, vector<1x32xf32>
    %119 = vector.shape_cast %118 : vector<1x32xf32> to vector<1x1x1x32xf32>
    %c0_127 = arith.constant 0 : index
    %c4_128 = arith.constant 4 : index
    %c2_129 = arith.constant 2 : index
    %c0_130 = arith.constant 0 : index
    %120 = vector.load %arg13[%c0_127, %c4_128, %c2_129, %c0_130] : memref<2x18x18x1xf32, #tpu.memory_space<vmem>>, vector<2x4x16x1xf32>
    %121 = vector.broadcast %120 : vector<2x4x16x1xf32> to vector<2x4x16x32xf32>
    %122 = vector.broadcast %119 : vector<1x1x1x32xf32> to vector<2x4x16x32xf32>
    %123 = arith.mulf %121, %122 : vector<2x4x16x32xf32>
    %124 = arith.addf %117, %123 : vector<2x4x16x32xf32>
    %c3_131 = arith.constant 3 : index
    %c0_132 = arith.constant 0 : index
    %125 = vector.load %arg2[%c3_131, %c0_132] : memref<9x32xf32, #tpu.memory_space<vmem>>, vector<1x32xf32>
    %126 = vector.shape_cast %125 : vector<1x32xf32> to vector<1x1x1x32xf32>
    %c0_133 = arith.constant 0 : index
    %c5_134 = arith.constant 5 : index
    %c0_135 = arith.constant 0 : index
    %c0_136 = arith.constant 0 : index
    %127 = vector.load %arg13[%c0_133, %c5_134, %c0_135, %c0_136] : memref<2x18x18x1xf32, #tpu.memory_space<vmem>>, vector<2x4x16x1xf32>
    %128 = vector.broadcast %127 : vector<2x4x16x1xf32> to vector<2x4x16x32xf32>
    %129 = vector.broadcast %126 : vector<1x1x1x32xf32> to vector<2x4x16x32xf32>
    %130 = arith.mulf %128, %129 : vector<2x4x16x32xf32>
    %131 = arith.addf %124, %130 : vector<2x4x16x32xf32>
    %c4_137 = arith.constant 4 : index
    %c0_138 = arith.constant 0 : index
    %132 = vector.load %arg2[%c4_137, %c0_138] : memref<9x32xf32, #tpu.memory_space<vmem>>, vector<1x32xf32>
    %133 = vector.shape_cast %132 : vector<1x32xf32> to vector<1x1x1x32xf32>
    %c0_139 = arith.constant 0 : index
    %c5_140 = arith.constant 5 : index
    %c1_141 = arith.constant 1 : index
    %c0_142 = arith.constant 0 : index
    %134 = vector.load %arg13[%c0_139, %c5_140, %c1_141, %c0_142] : memref<2x18x18x1xf32, #tpu.memory_space<vmem>>, vector<2x4x16x1xf32>
    %135 = vector.broadcast %134 : vector<2x4x16x1xf32> to vector<2x4x16x32xf32>
    %136 = vector.broadcast %133 : vector<1x1x1x32xf32> to vector<2x4x16x32xf32>
    %137 = arith.mulf %135, %136 : vector<2x4x16x32xf32>
    %138 = arith.addf %131, %137 : vector<2x4x16x32xf32>
    %c5_143 = arith.constant 5 : index
    %c0_144 = arith.constant 0 : index
    %139 = vector.load %arg2[%c5_143, %c0_144] : memref<9x32xf32, #tpu.memory_space<vmem>>, vector<1x32xf32>
    %140 = vector.shape_cast %139 : vector<1x32xf32> to vector<1x1x1x32xf32>
    %c0_145 = arith.constant 0 : index
    %c5_146 = arith.constant 5 : index
    %c2_147 = arith.constant 2 : index
    %c0_148 = arith.constant 0 : index
    %141 = vector.load %arg13[%c0_145, %c5_146, %c2_147, %c0_148] : memref<2x18x18x1xf32, #tpu.memory_space<vmem>>, vector<2x4x16x1xf32>
    %142 = vector.broadcast %141 : vector<2x4x16x1xf32> to vector<2x4x16x32xf32>
    %143 = vector.broadcast %140 : vector<1x1x1x32xf32> to vector<2x4x16x32xf32>
    %144 = arith.mulf %142, %143 : vector<2x4x16x32xf32>
    %145 = arith.addf %138, %144 : vector<2x4x16x32xf32>
    %c6_149 = arith.constant 6 : index
    %c0_150 = arith.constant 0 : index
    %146 = vector.load %arg2[%c6_149, %c0_150] : memref<9x32xf32, #tpu.memory_space<vmem>>, vector<1x32xf32>
    %147 = vector.shape_cast %146 : vector<1x32xf32> to vector<1x1x1x32xf32>
    %c0_151 = arith.constant 0 : index
    %c6_152 = arith.constant 6 : index
    %c0_153 = arith.constant 0 : index
    %c0_154 = arith.constant 0 : index
    %148 = vector.load %arg13[%c0_151, %c6_152, %c0_153, %c0_154] : memref<2x18x18x1xf32, #tpu.memory_space<vmem>>, vector<2x4x16x1xf32>
    %149 = vector.broadcast %148 : vector<2x4x16x1xf32> to vector<2x4x16x32xf32>
    %150 = vector.broadcast %147 : vector<1x1x1x32xf32> to vector<2x4x16x32xf32>
    %151 = arith.mulf %149, %150 : vector<2x4x16x32xf32>
    %152 = arith.addf %145, %151 : vector<2x4x16x32xf32>
    %c7_155 = arith.constant 7 : index
    %c0_156 = arith.constant 0 : index
    %153 = vector.load %arg2[%c7_155, %c0_156] : memref<9x32xf32, #tpu.memory_space<vmem>>, vector<1x32xf32>
    %154 = vector.shape_cast %153 : vector<1x32xf32> to vector<1x1x1x32xf32>
    %c0_157 = arith.constant 0 : index
    %c6_158 = arith.constant 6 : index
    %c1_159 = arith.constant 1 : index
    %c0_160 = arith.constant 0 : index
    %155 = vector.load %arg13[%c0_157, %c6_158, %c1_159, %c0_160] : memref<2x18x18x1xf32, #tpu.memory_space<vmem>>, vector<2x4x16x1xf32>
    %156 = vector.broadcast %155 : vector<2x4x16x1xf32> to vector<2x4x16x32xf32>
    %157 = vector.broadcast %154 : vector<1x1x1x32xf32> to vector<2x4x16x32xf32>
    %158 = arith.mulf %156, %157 : vector<2x4x16x32xf32>
    %159 = arith.addf %152, %158 : vector<2x4x16x32xf32>
    %c8_161 = arith.constant 8 : index
    %c0_162 = arith.constant 0 : index
    %160 = vector.load %arg2[%c8_161, %c0_162] : memref<9x32xf32, #tpu.memory_space<vmem>>, vector<1x32xf32>
    %161 = vector.shape_cast %160 : vector<1x32xf32> to vector<1x1x1x32xf32>
    %c0_163 = arith.constant 0 : index
    %c6_164 = arith.constant 6 : index
    %c2_165 = arith.constant 2 : index
    %c0_166 = arith.constant 0 : index
    %162 = vector.load %arg13[%c0_163, %c6_164, %c2_165, %c0_166] : memref<2x18x18x1xf32, #tpu.memory_space<vmem>>, vector<2x4x16x1xf32>
    %163 = vector.broadcast %162 : vector<2x4x16x1xf32> to vector<2x4x16x32xf32>
    %164 = vector.broadcast %161 : vector<1x1x1x32xf32> to vector<2x4x16x32xf32>
    %165 = arith.mulf %163, %164 : vector<2x4x16x32xf32>
    %166 = arith.addf %159, %165 : vector<2x4x16x32xf32>
    %167 = vector.broadcast %21 : vector<1x1x1x32xf32> to vector<2x4x16x32xf32>
    %168 = arith.addf %166, %167 : vector<2x4x16x32xf32>
    %cst_167 = arith.constant 0.000000e+00 : f32
    %169 = vector.broadcast %cst_167 : f32 to vector<2x4x16x32xf32>
    %170 = arith.maximumf %168, %169 : vector<2x4x16x32xf32>
    %171 = vector.shape_cast %170 : vector<2x4x16x32xf32> to vector<2x2x2x16x32xf32>
    %172 = vector.extract_strided_slice %171 {offsets = [0, 0, 0, 0, 0], sizes = [2, 2, 1, 16, 32], strides = [1, 1, 1, 1, 1]} : vector<2x2x2x16x32xf32> to vector<2x2x1x16x32xf32>
    %173 = vector.shape_cast %172 : vector<2x2x1x16x32xf32> to vector<2x2x16x32xf32>
    %174 = vector.extract_strided_slice %171 {offsets = [0, 0, 1, 0, 0], sizes = [2, 2, 1, 16, 32], strides = [1, 1, 1, 1, 1]} : vector<2x2x2x16x32xf32> to vector<2x2x1x16x32xf32>
    %175 = vector.shape_cast %174 : vector<2x2x1x16x32xf32> to vector<2x2x16x32xf32>
    %176 = arith.maximumf %173, %175 : vector<2x2x16x32xf32>
    %177 = vector.shape_cast %176 : vector<2x2x16x32xf32> to vector<2x2x8x2x32xf32>
    %178 = vector.extract_strided_slice %177 {offsets = [0, 0, 0, 0, 0], sizes = [2, 2, 8, 1, 32], strides = [1, 1, 1, 1, 1]} : vector<2x2x8x2x32xf32> to vector<2x2x8x1x32xf32>
    %179 = vector.shape_cast %178 : vector<2x2x8x1x32xf32> to vector<2x2x8x32xf32>
    %180 = vector.extract_strided_slice %177 {offsets = [0, 0, 0, 1, 0], sizes = [2, 2, 8, 1, 32], strides = [1, 1, 1, 1, 1]} : vector<2x2x8x2x32xf32> to vector<2x2x8x1x32xf32>
    %181 = vector.shape_cast %180 : vector<2x2x8x1x32xf32> to vector<2x2x8x32xf32>
    %182 = arith.maximumf %179, %181 : vector<2x2x8x32xf32>
    %c0_168 = arith.constant 0 : index
    %c3_169 = arith.constant 3 : index
    %c1_170 = arith.constant 1 : index
    %c0_171 = arith.constant 0 : index
    %183 = vector.load %arg14[%c0_168, %c3_169, %c1_170, %c0_171] : memref<2x10x10x32xf32, #tpu.memory_space<vmem>>, vector<2x2x8x32xf32>
    tpu.vector_store %arg14[%c0_168, %c3_169, %c1_170, %c0_171], %182 {strides = array<i32>} : memref<2x10x10x32xf32, #tpu.memory_space<vmem>>, vector<2x2x8x32xf32>,
    %cst_172 = arith.constant 0.000000e+00 : f32
    %184 = vector.broadcast %cst_172 : f32 to vector<2x4x16x32xf32>
    %c0_173 = arith.constant 0 : index
    %c0_174 = arith.constant 0 : index
    %185 = vector.load %arg2[%c0_173, %c0_174] : memref<9x32xf32, #tpu.memory_space<vmem>>, vector<1x32xf32>
    %186 = vector.shape_cast %185 : vector<1x32xf32> to vector<1x1x1x32xf32>
    %c0_175 = arith.constant 0 : index
    %c8_176 = arith.constant 8 : index
    %c0_177 = arith.constant 0 : index
    %c0_178 = arith.constant 0 : index
    %187 = vector.load %arg13[%c0_175, %c8_176, %c0_177, %c0_178] : memref<2x18x18x1xf32, #tpu.memory_space<vmem>>, vector<2x4x16x1xf32>
    %188 = vector.broadcast %187 : vector<2x4x16x1xf32> to vector<2x4x16x32xf32>
    %189 = vector.broadcast %186 : vector<1x1x1x32xf32> to vector<2x4x16x32xf32>
    %190 = arith.mulf %188, %189 : vector<2x4x16x32xf32>
    %191 = arith.addf %184, %190 : vector<2x4x16x32xf32>
    %c1_179 = arith.constant 1 : index
    %c0_180 = arith.constant 0 : index
    %192 = vector.load %arg2[%c1_179, %c0_180] : memref<9x32xf32, #tpu.memory_space<vmem>>, vector<1x32xf32>
    %193 = vector.shape_cast %192 : vector<1x32xf32> to vector<1x1x1x32xf32>
    %c0_181 = arith.constant 0 : index
    %c8_182 = arith.constant 8 : index
    %c1_183 = arith.constant 1 : index
    %c0_184 = arith.constant 0 : index
    %194 = vector.load %arg13[%c0_181, %c8_182, %c1_183, %c0_184] : memref<2x18x18x1xf32, #tpu.memory_space<vmem>>, vector<2x4x16x1xf32>
    %195 = vector.broadcast %194 : vector<2x4x16x1xf32> to vector<2x4x16x32xf32>
    %196 = vector.broadcast %193 : vector<1x1x1x32xf32> to vector<2x4x16x32xf32>
    %197 = arith.mulf %195, %196 : vector<2x4x16x32xf32>
    %198 = arith.addf %191, %197 : vector<2x4x16x32xf32>
    %c2_185 = arith.constant 2 : index
    %c0_186 = arith.constant 0 : index
    %199 = vector.load %arg2[%c2_185, %c0_186] : memref<9x32xf32, #tpu.memory_space<vmem>>, vector<1x32xf32>
    %200 = vector.shape_cast %199 : vector<1x32xf32> to vector<1x1x1x32xf32>
    %c0_187 = arith.constant 0 : index
    %c8_188 = arith.constant 8 : index
    %c2_189 = arith.constant 2 : index
    %c0_190 = arith.constant 0 : index
    %201 = vector.load %arg13[%c0_187, %c8_188, %c2_189, %c0_190] : memref<2x18x18x1xf32, #tpu.memory_space<vmem>>, vector<2x4x16x1xf32>
    %202 = vector.broadcast %201 : vector<2x4x16x1xf32> to vector<2x4x16x32xf32>
    %203 = vector.broadcast %200 : vector<1x1x1x32xf32> to vector<2x4x16x32xf32>
    %204 = arith.mulf %202, %203 : vector<2x4x16x32xf32>
    %205 = arith.addf %198, %204 : vector<2x4x16x32xf32>
    %c3_191 = arith.constant 3 : index
    %c0_192 = arith.constant 0 : index
    %206 = vector.load %arg2[%c3_191, %c0_192] : memref<9x32xf32, #tpu.memory_space<vmem>>, vector<1x32xf32>
    %207 = vector.shape_cast %206 : vector<1x32xf32> to vector<1x1x1x32xf32>
    %c0_193 = arith.constant 0 : index
    %c9_194 = arith.constant 9 : index
    %c0_195 = arith.constant 0 : index
    %c0_196 = arith.constant 0 : index
    %208 = vector.load %arg13[%c0_193, %c9_194, %c0_195, %c0_196] : memref<2x18x18x1xf32, #tpu.memory_space<vmem>>, vector<2x4x16x1xf32>
    %209 = vector.broadcast %208 : vector<2x4x16x1xf32> to vector<2x4x16x32xf32>
    %210 = vector.broadcast %207 : vector<1x1x1x32xf32> to vector<2x4x16x32xf32>
    %211 = arith.mulf %209, %210 : vector<2x4x16x32xf32>
    %212 = arith.addf %205, %211 : vector<2x4x16x32xf32>
    %c4_197 = arith.constant 4 : index
    %c0_198 = arith.constant 0 : index
    %213 = vector.load %arg2[%c4_197, %c0_198] : memref<9x32xf32, #tpu.memory_space<vmem>>, vector<1x32xf32>
    %214 = vector.shape_cast %213 : vector<1x32xf32> to vector<1x1x1x32xf32>
    %c0_199 = arith.constant 0 : index
    %c9_200 = arith.constant 9 : index
    %c1_201 = arith.constant 1 : index
    %c0_202 = arith.constant 0 : index
    %215 = vector.load %arg13[%c0_199, %c9_200, %c1_201, %c0_202] : memref<2x18x18x1xf32, #tpu.memory_space<vmem>>, vector<2x4x16x1xf32>
    %216 = vector.broadcast %215 : vector<2x4x16x1xf32> to vector<2x4x16x32xf32>
    %217 = vector.broadcast %214 : vector<1x1x1x32xf32> to vector<2x4x16x32xf32>
    %218 = arith.mulf %216, %217 : vector<2x4x16x32xf32>
    %219 = arith.addf %212, %218 : vector<2x4x16x32xf32>
    %c5_203 = arith.constant 5 : index
    %c0_204 = arith.constant 0 : index
    %220 = vector.load %arg2[%c5_203, %c0_204] : memref<9x32xf32, #tpu.memory_space<vmem>>, vector<1x32xf32>
    %221 = vector.shape_cast %220 : vector<1x32xf32> to vector<1x1x1x32xf32>
    %c0_205 = arith.constant 0 : index
    %c9_206 = arith.constant 9 : index
    %c2_207 = arith.constant 2 : index
    %c0_208 = arith.constant 0 : index
    %222 = vector.load %arg13[%c0_205, %c9_206, %c2_207, %c0_208] : memref<2x18x18x1xf32, #tpu.memory_space<vmem>>, vector<2x4x16x1xf32>
    %223 = vector.broadcast %222 : vector<2x4x16x1xf32> to vector<2x4x16x32xf32>
    %224 = vector.broadcast %221 : vector<1x1x1x32xf32> to vector<2x4x16x32xf32>
    %225 = arith.mulf %223, %224 : vector<2x4x16x32xf32>
    %226 = arith.addf %219, %225 : vector<2x4x16x32xf32>
    %c6_209 = arith.constant 6 : index
    %c0_210 = arith.constant 0 : index
    %227 = vector.load %arg2[%c6_209, %c0_210] : memref<9x32xf32, #tpu.memory_space<vmem>>, vector<1x32xf32>
    %228 = vector.shape_cast %227 : vector<1x32xf32> to vector<1x1x1x32xf32>
    %c0_211 = arith.constant 0 : index
    %c10 = arith.constant 10 : index
    %c0_212 = arith.constant 0 : index
    %c0_213 = arith.constant 0 : index
    %229 = vector.load %arg13[%c0_211, %c10, %c0_212, %c0_213] : memref<2x18x18x1xf32, #tpu.memory_space<vmem>>, vector<2x4x16x1xf32>
    %230 = vector.broadcast %229 : vector<2x4x16x1xf32> to vector<2x4x16x32xf32>
    %231 = vector.broadcast %228 : vector<1x1x1x32xf32> to vector<2x4x16x32xf32>
    %232 = arith.mulf %230, %231 : vector<2x4x16x32xf32>
    %233 = arith.addf %226, %232 : vector<2x4x16x32xf32>
    %c7_214 = arith.constant 7 : index
    %c0_215 = arith.constant 0 : index
    %234 = vector.load %arg2[%c7_214, %c0_215] : memref<9x32xf32, #tpu.memory_space<vmem>>, vector<1x32xf32>
    %235 = vector.shape_cast %234 : vector<1x32xf32> to vector<1x1x1x32xf32>
    %c0_216 = arith.constant 0 : index
    %c10_217 = arith.constant 10 : index
    %c1_218 = arith.constant 1 : index
    %c0_219 = arith.constant 0 : index
    %236 = vector.load %arg13[%c0_216, %c10_217, %c1_218, %c0_219] : memref<2x18x18x1xf32, #tpu.memory_space<vmem>>, vector<2x4x16x1xf32>
    %237 = vector.broadcast %236 : vector<2x4x16x1xf32> to vector<2x4x16x32xf32>
    %238 = vector.broadcast %235 : vector<1x1x1x32xf32> to vector<2x4x16x32xf32>
    %239 = arith.mulf %237, %238 : vector<2x4x16x32xf32>
    %240 = arith.addf %233, %239 : vector<2x4x16x32xf32>
    %c8_220 = arith.constant 8 : index
    %c0_221 = arith.constant 0 : index
    %241 = vector.load %arg2[%c8_220, %c0_221] : memref<9x32xf32, #tpu.memory_space<vmem>>, vector<1x32xf32>
    %242 = vector.shape_cast %241 : vector<1x32xf32> to vector<1x1x1x32xf32>
    %c0_222 = arith.constant 0 : index
    %c10_223 = arith.constant 10 : index
    %c2_224 = arith.constant 2 : index
    %c0_225 = arith.constant 0 : index
    %243 = vector.load %arg13[%c0_222, %c10_223, %c2_224, %c0_225] : memref<2x18x18x1xf32, #tpu.memory_space<vmem>>, vector<2x4x16x1xf32>
    %244 = vector.broadcast %243 : vector<2x4x16x1xf32> to vector<2x4x16x32xf32>
    %245 = vector.broadcast %242 : vector<1x1x1x32xf32> to vector<2x4x16x32xf32>
    %246 = arith.mulf %244, %245 : vector<2x4x16x32xf32>
    %247 = arith.addf %240, %246 : vector<2x4x16x32xf32>
    %248 = vector.broadcast %21 : vector<1x1x1x32xf32> to vector<2x4x16x32xf32>
    %249 = arith.addf %247, %248 : vector<2x4x16x32xf32>
    %cst_226 = arith.constant 0.000000e+00 : f32
    %250 = vector.broadcast %cst_226 : f32 to vector<2x4x16x32xf32>
    %251 = arith.maximumf %249, %250 : vector<2x4x16x32xf32>
    %252 = vector.shape_cast %251 : vector<2x4x16x32xf32> to vector<2x2x2x16x32xf32>
    %253 = vector.extract_strided_slice %252 {offsets = [0, 0, 0, 0, 0], sizes = [2, 2, 1, 16, 32], strides = [1, 1, 1, 1, 1]} : vector<2x2x2x16x32xf32> to vector<2x2x1x16x32xf32>
    %254 = vector.shape_cast %253 : vector<2x2x1x16x32xf32> to vector<2x2x16x32xf32>
    %255 = vector.extract_strided_slice %252 {offsets = [0, 0, 1, 0, 0], sizes = [2, 2, 1, 16, 32], strides = [1, 1, 1, 1, 1]} : vector<2x2x2x16x32xf32> to vector<2x2x1x16x32xf32>
    %256 = vector.shape_cast %255 : vector<2x2x1x16x32xf32> to vector<2x2x16x32xf32>
    %257 = arith.maximumf %254, %256 : vector<2x2x16x32xf32>
    %258 = vector.shape_cast %257 : vector<2x2x16x32xf32> to vector<2x2x8x2x32xf32>
    %259 = vector.extract_strided_slice %258 {offsets = [0, 0, 0, 0, 0], sizes = [2, 2, 8, 1, 32], strides = [1, 1, 1, 1, 1]} : vector<2x2x8x2x32xf32> to vector<2x2x8x1x32xf32>
    %260 = vector.shape_cast %259 : vector<2x2x8x1x32xf32> to vector<2x2x8x32xf32>
    %261 = vector.extract_strided_slice %258 {offsets = [0, 0, 0, 1, 0], sizes = [2, 2, 8, 1, 32], strides = [1, 1, 1, 1, 1]} : vector<2x2x8x2x32xf32> to vector<2x2x8x1x32xf32>
    %262 = vector.shape_cast %261 : vector<2x2x8x1x32xf32> to vector<2x2x8x32xf32>
    %263 = arith.maximumf %260, %262 : vector<2x2x8x32xf32>
    %c0_227 = arith.constant 0 : index
    %c5_228 = arith.constant 5 : index
    %c1_229 = arith.constant 1 : index
    %c0_230 = arith.constant 0 : index
    %264 = vector.load %arg14[%c0_227, %c5_228, %c1_229, %c0_230] : memref<2x10x10x32xf32, #tpu.memory_space<vmem>>, vector<2x2x8x32xf32>
    tpu.vector_store %arg14[%c0_227, %c5_228, %c1_229, %c0_230], %263 {strides = array<i32>} : memref<2x10x10x32xf32, #tpu.memory_space<vmem>>, vector<2x2x8x32xf32>,
    %cst_231 = arith.constant 0.000000e+00 : f32
    %265 = vector.broadcast %cst_231 : f32 to vector<2x4x16x32xf32>
    %c0_232 = arith.constant 0 : index
    %c0_233 = arith.constant 0 : index
    %266 = vector.load %arg2[%c0_232, %c0_233] : memref<9x32xf32, #tpu.memory_space<vmem>>, vector<1x32xf32>
    %267 = vector.shape_cast %266 : vector<1x32xf32> to vector<1x1x1x32xf32>
    %c0_234 = arith.constant 0 : index
    %c12 = arith.constant 12 : index
    %c0_235 = arith.constant 0 : index
    %c0_236 = arith.constant 0 : index
    %268 = vector.load %arg13[%c0_234, %c12, %c0_235, %c0_236] : memref<2x18x18x1xf32, #tpu.memory_space<vmem>>, vector<2x4x16x1xf32>
    %269 = vector.broadcast %268 : vector<2x4x16x1xf32> to vector<2x4x16x32xf32>
    %270 = vector.broadcast %267 : vector<1x1x1x32xf32> to vector<2x4x16x32xf32>
    %271 = arith.mulf %269, %270 : vector<2x4x16x32xf32>
    %272 = arith.addf %265, %271 : vector<2x4x16x32xf32>
    %c1_237 = arith.constant 1 : index
    %c0_238 = arith.constant 0 : index
    %273 = vector.load %arg2[%c1_237, %c0_238] : memref<9x32xf32, #tpu.memory_space<vmem>>, vector<1x32xf32>
    %274 = vector.shape_cast %273 : vector<1x32xf32> to vector<1x1x1x32xf32>
    %c0_239 = arith.constant 0 : index
    %c12_240 = arith.constant 12 : index
    %c1_241 = arith.constant 1 : index
    %c0_242 = arith.constant 0 : index
    %275 = vector.load %arg13[%c0_239, %c12_240, %c1_241, %c0_242] : memref<2x18x18x1xf32, #tpu.memory_space<vmem>>, vector<2x4x16x1xf32>
    %276 = vector.broadcast %275 : vector<2x4x16x1xf32> to vector<2x4x16x32xf32>
    %277 = vector.broadcast %274 : vector<1x1x1x32xf32> to vector<2x4x16x32xf32>
    %278 = arith.mulf %276, %277 : vector<2x4x16x32xf32>
    %279 = arith.addf %272, %278 : vector<2x4x16x32xf32>
    %c2_243 = arith.constant 2 : index
    %c0_244 = arith.constant 0 : index
    %280 = vector.load %arg2[%c2_243, %c0_244] : memref<9x32xf32, #tpu.memory_space<vmem>>, vector<1x32xf32>
    %281 = vector.shape_cast %280 : vector<1x32xf32> to vector<1x1x1x32xf32>
    %c0_245 = arith.constant 0 : index
    %c12_246 = arith.constant 12 : index
    %c2_247 = arith.constant 2 : index
    %c0_248 = arith.constant 0 : index
    %282 = vector.load %arg13[%c0_245, %c12_246, %c2_247, %c0_248] : memref<2x18x18x1xf32, #tpu.memory_space<vmem>>, vector<2x4x16x1xf32>
    %283 = vector.broadcast %282 : vector<2x4x16x1xf32> to vector<2x4x16x32xf32>
    %284 = vector.broadcast %281 : vector<1x1x1x32xf32> to vector<2x4x16x32xf32>
    %285 = arith.mulf %283, %284 : vector<2x4x16x32xf32>
    %286 = arith.addf %279, %285 : vector<2x4x16x32xf32>
    %c3_249 = arith.constant 3 : index
    %c0_250 = arith.constant 0 : index
    %287 = vector.load %arg2[%c3_249, %c0_250] : memref<9x32xf32, #tpu.memory_space<vmem>>, vector<1x32xf32>
    %288 = vector.shape_cast %287 : vector<1x32xf32> to vector<1x1x1x32xf32>
    %c0_251 = arith.constant 0 : index
    %c13 = arith.constant 13 : index
    %c0_252 = arith.constant 0 : index
    %c0_253 = arith.constant 0 : index
    %289 = vector.load %arg13[%c0_251, %c13, %c0_252, %c0_253] : memref<2x18x18x1xf32, #tpu.memory_space<vmem>>, vector<2x4x16x1xf32>
    %290 = vector.broadcast %289 : vector<2x4x16x1xf32> to vector<2x4x16x32xf32>
    %291 = vector.broadcast %288 : vector<1x1x1x32xf32> to vector<2x4x16x32xf32>
    %292 = arith.mulf %290, %291 : vector<2x4x16x32xf32>
    %293 = arith.addf %286, %292 : vector<2x4x16x32xf32>
    %c4_254 = arith.constant 4 : index
    %c0_255 = arith.constant 0 : index
    %294 = vector.load %arg2[%c4_254, %c0_255] : memref<9x32xf32, #tpu.memory_space<vmem>>, vector<1x32xf32>
    %295 = vector.shape_cast %294 : vector<1x32xf32> to vector<1x1x1x32xf32>
    %c0_256 = arith.constant 0 : index
    %c13_257 = arith.constant 13 : index
    %c1_258 = arith.constant 1 : index
    %c0_259 = arith.constant 0 : index
    %296 = vector.load %arg13[%c0_256, %c13_257, %c1_258, %c0_259] : memref<2x18x18x1xf32, #tpu.memory_space<vmem>>, vector<2x4x16x1xf32>
    %297 = vector.broadcast %296 : vector<2x4x16x1xf32> to vector<2x4x16x32xf32>
    %298 = vector.broadcast %295 : vector<1x1x1x32xf32> to vector<2x4x16x32xf32>
    %299 = arith.mulf %297, %298 : vector<2x4x16x32xf32>
    %300 = arith.addf %293, %299 : vector<2x4x16x32xf32>
    %c5_260 = arith.constant 5 : index
    %c0_261 = arith.constant 0 : index
    %301 = vector.load %arg2[%c5_260, %c0_261] : memref<9x32xf32, #tpu.memory_space<vmem>>, vector<1x32xf32>
    %302 = vector.shape_cast %301 : vector<1x32xf32> to vector<1x1x1x32xf32>
    %c0_262 = arith.constant 0 : index
    %c13_263 = arith.constant 13 : index
    %c2_264 = arith.constant 2 : index
    %c0_265 = arith.constant 0 : index
    %303 = vector.load %arg13[%c0_262, %c13_263, %c2_264, %c0_265] : memref<2x18x18x1xf32, #tpu.memory_space<vmem>>, vector<2x4x16x1xf32>
    %304 = vector.broadcast %303 : vector<2x4x16x1xf32> to vector<2x4x16x32xf32>
    %305 = vector.broadcast %302 : vector<1x1x1x32xf32> to vector<2x4x16x32xf32>
    %306 = arith.mulf %304, %305 : vector<2x4x16x32xf32>
    %307 = arith.addf %300, %306 : vector<2x4x16x32xf32>
    %c6_266 = arith.constant 6 : index
    %c0_267 = arith.constant 0 : index
    %308 = vector.load %arg2[%c6_266, %c0_267] : memref<9x32xf32, #tpu.memory_space<vmem>>, vector<1x32xf32>
    %309 = vector.shape_cast %308 : vector<1x32xf32> to vector<1x1x1x32xf32>
    %c0_268 = arith.constant 0 : index
    %c14 = arith.constant 14 : index
    %c0_269 = arith.constant 0 : index
    %c0_270 = arith.constant 0 : index
    %310 = vector.load %arg13[%c0_268, %c14, %c0_269, %c0_270] : memref<2x18x18x1xf32, #tpu.memory_space<vmem>>, vector<2x4x16x1xf32>
    %311 = vector.broadcast %310 : vector<2x4x16x1xf32> to vector<2x4x16x32xf32>
    %312 = vector.broadcast %309 : vector<1x1x1x32xf32> to vector<2x4x16x32xf32>
    %313 = arith.mulf %311, %312 : vector<2x4x16x32xf32>
    %314 = arith.addf %307, %313 : vector<2x4x16x32xf32>
    %c7_271 = arith.constant 7 : index
    %c0_272 = arith.constant 0 : index
    %315 = vector.load %arg2[%c7_271, %c0_272] : memref<9x32xf32, #tpu.memory_space<vmem>>, vector<1x32xf32>
    %316 = vector.shape_cast %315 : vector<1x32xf32> to vector<1x1x1x32xf32>
    %c0_273 = arith.constant 0 : index
    %c14_274 = arith.constant 14 : index
    %c1_275 = arith.constant 1 : index
    %c0_276 = arith.constant 0 : index
    %317 = vector.load %arg13[%c0_273, %c14_274, %c1_275, %c0_276] : memref<2x18x18x1xf32, #tpu.memory_space<vmem>>, vector<2x4x16x1xf32>
    %318 = vector.broadcast %317 : vector<2x4x16x1xf32> to vector<2x4x16x32xf32>
    %319 = vector.broadcast %316 : vector<1x1x1x32xf32> to vector<2x4x16x32xf32>
    %320 = arith.mulf %318, %319 : vector<2x4x16x32xf32>
    %321 = arith.addf %314, %320 : vector<2x4x16x32xf32>
    %c8_277 = arith.constant 8 : index
    %c0_278 = arith.constant 0 : index
    %322 = vector.load %arg2[%c8_277, %c0_278] : memref<9x32xf32, #tpu.memory_space<vmem>>, vector<1x32xf32>
    %323 = vector.shape_cast %322 : vector<1x32xf32> to vector<1x1x1x32xf32>
    %c0_279 = arith.constant 0 : index
    %c14_280 = arith.constant 14 : index
    %c2_281 = arith.constant 2 : index
    %c0_282 = arith.constant 0 : index
    %324 = vector.load %arg13[%c0_279, %c14_280, %c2_281, %c0_282] : memref<2x18x18x1xf32, #tpu.memory_space<vmem>>, vector<2x4x16x1xf32>
    %325 = vector.broadcast %324 : vector<2x4x16x1xf32> to vector<2x4x16x32xf32>
    %326 = vector.broadcast %323 : vector<1x1x1x32xf32> to vector<2x4x16x32xf32>
    %327 = arith.mulf %325, %326 : vector<2x4x16x32xf32>
    %328 = arith.addf %321, %327 : vector<2x4x16x32xf32>
    %329 = vector.broadcast %21 : vector<1x1x1x32xf32> to vector<2x4x16x32xf32>
    %330 = arith.addf %328, %329 : vector<2x4x16x32xf32>
    %cst_283 = arith.constant 0.000000e+00 : f32
    %331 = vector.broadcast %cst_283 : f32 to vector<2x4x16x32xf32>
    %332 = arith.maximumf %330, %331 : vector<2x4x16x32xf32>
    %333 = vector.shape_cast %332 : vector<2x4x16x32xf32> to vector<2x2x2x16x32xf32>
    %334 = vector.extract_strided_slice %333 {offsets = [0, 0, 0, 0, 0], sizes = [2, 2, 1, 16, 32], strides = [1, 1, 1, 1, 1]} : vector<2x2x2x16x32xf32> to vector<2x2x1x16x32xf32>
    %335 = vector.shape_cast %334 : vector<2x2x1x16x32xf32> to vector<2x2x16x32xf32>
    %336 = vector.extract_strided_slice %333 {offsets = [0, 0, 1, 0, 0], sizes = [2, 2, 1, 16, 32], strides = [1, 1, 1, 1, 1]} : vector<2x2x2x16x32xf32> to vector<2x2x1x16x32xf32>
    %337 = vector.shape_cast %336 : vector<2x2x1x16x32xf32> to vector<2x2x16x32xf32>
    %338 = arith.maximumf %335, %337 : vector<2x2x16x32xf32>
    %339 = vector.shape_cast %338 : vector<2x2x16x32xf32> to vector<2x2x8x2x32xf32>
    %340 = vector.extract_strided_slice %339 {offsets = [0, 0, 0, 0, 0], sizes = [2, 2, 8, 1, 32], strides = [1, 1, 1, 1, 1]} : vector<2x2x8x2x32xf32> to vector<2x2x8x1x32xf32>
    %341 = vector.shape_cast %340 : vector<2x2x8x1x32xf32> to vector<2x2x8x32xf32>
    %342 = vector.extract_strided_slice %339 {offsets = [0, 0, 0, 1, 0], sizes = [2, 2, 8, 1, 32], strides = [1, 1, 1, 1, 1]} : vector<2x2x8x2x32xf32> to vector<2x2x8x1x32xf32>
    %343 = vector.shape_cast %342 : vector<2x2x8x1x32xf32> to vector<2x2x8x32xf32>
    %344 = arith.maximumf %341, %343 : vector<2x2x8x32xf32>
    %c0_284 = arith.constant 0 : index
    %c7_285 = arith.constant 7 : index
    %c1_286 = arith.constant 1 : index
    %c0_287 = arith.constant 0 : index
    %345 = vector.load %arg14[%c0_284, %c7_285, %c1_286, %c0_287] : memref<2x10x10x32xf32, #tpu.memory_space<vmem>>, vector<2x2x8x32xf32>
    tpu.vector_store %arg14[%c0_284, %c7_285, %c1_286, %c0_287], %344 {strides = array<i32>} : memref<2x10x10x32xf32, #tpu.memory_space<vmem>>, vector<2x2x8x32xf32>,
    %cst_288 = arith.constant 0.000000e+00 : f32
    %346 = vector.broadcast %cst_288 : f32 to vector<128x64xf32>
    %c0_289 = arith.constant 0 : index
    %c0_290 = arith.constant 0 : index
    %c0_291 = arith.constant 0 : index
    %c0_292 = arith.constant 0 : index
    %347 = vector.load %arg14[%c0_289, %c0_290, %c0_291, %c0_292] : memref<2x10x10x32xf32, #tpu.memory_space<vmem>>, vector<2x8x8x32xf32>
    %348 = vector.shape_cast %347 : vector<2x8x8x32xf32> to vector<128x32xf32>
    %349 = arith.truncf %348 : vector<128x32xf32> to vector<128x32xbf16>
    %c0_293 = arith.constant 0 : index
    %c0_294 = arith.constant 0 : index
    %350 = vector.load %arg4[%c0_293, %c0_294] : memref<288x64xbf16, #tpu.memory_space<vmem>>, vector<32x64xbf16>
    %cst_295 = arith.constant dense<0.000000e+00> : vector<128x64xf32>
    %351 = tpu.matmul %349, %350, %cst_295 {dimension_numbers = #tpu.dot_dimension_numbers<[1], [0], [0], [1], [0, 0, 1, 1], [], []>} : vector<128x32xbf16>, vector<32x64xbf16>, vector<128x64xf32> -> vector<128x64xf32>
    %352 = arith.addf %346, %351 : vector<128x64xf32>
    %c0_296 = arith.constant 0 : index
    %c0_297 = arith.constant 0 : index
    %c1_298 = arith.constant 1 : index
    %c0_299 = arith.constant 0 : index
    %353 = vector.load %arg14[%c0_296, %c0_297, %c1_298, %c0_299] : memref<2x10x10x32xf32, #tpu.memory_space<vmem>>, vector<2x8x8x32xf32>
    %354 = vector.shape_cast %353 : vector<2x8x8x32xf32> to vector<128x32xf32>
    %355 = arith.truncf %354 : vector<128x32xf32> to vector<128x32xbf16>
    %c32 = arith.constant 32 : index
    %c0_300 = arith.constant 0 : index
    %356 = vector.load %arg4[%c32, %c0_300] : memref<288x64xbf16, #tpu.memory_space<vmem>>, vector<32x64xbf16>
    %cst_301 = arith.constant dense<0.000000e+00> : vector<128x64xf32>
    %357 = tpu.matmul %355, %356, %cst_301 {dimension_numbers = #tpu.dot_dimension_numbers<[1], [0], [0], [1], [0, 0, 1, 1], [], []>} : vector<128x32xbf16>, vector<32x64xbf16>, vector<128x64xf32> -> vector<128x64xf32>
    %358 = arith.addf %352, %357 : vector<128x64xf32>
    %c0_302 = arith.constant 0 : index
    %c0_303 = arith.constant 0 : index
    %c2_304 = arith.constant 2 : index
    %c0_305 = arith.constant 0 : index
    %359 = vector.load %arg14[%c0_302, %c0_303, %c2_304, %c0_305] : memref<2x10x10x32xf32, #tpu.memory_space<vmem>>, vector<2x8x8x32xf32>
    %360 = vector.shape_cast %359 : vector<2x8x8x32xf32> to vector<128x32xf32>
    %361 = arith.truncf %360 : vector<128x32xf32> to vector<128x32xbf16>
    %c64 = arith.constant 64 : index
    %c0_306 = arith.constant 0 : index
    %362 = vector.load %arg4[%c64, %c0_306] : memref<288x64xbf16, #tpu.memory_space<vmem>>, vector<32x64xbf16>
    %cst_307 = arith.constant dense<0.000000e+00> : vector<128x64xf32>
    %363 = tpu.matmul %361, %362, %cst_307 {dimension_numbers = #tpu.dot_dimension_numbers<[1], [0], [0], [1], [0, 0, 1, 1], [], []>} : vector<128x32xbf16>, vector<32x64xbf16>, vector<128x64xf32> -> vector<128x64xf32>
    %364 = arith.addf %358, %363 : vector<128x64xf32>
    %c0_308 = arith.constant 0 : index
    %c1_309 = arith.constant 1 : index
    %c0_310 = arith.constant 0 : index
    %c0_311 = arith.constant 0 : index
    %365 = vector.load %arg14[%c0_308, %c1_309, %c0_310, %c0_311] : memref<2x10x10x32xf32, #tpu.memory_space<vmem>>, vector<2x8x8x32xf32>
    %366 = vector.shape_cast %365 : vector<2x8x8x32xf32> to vector<128x32xf32>
    %367 = arith.truncf %366 : vector<128x32xf32> to vector<128x32xbf16>
    %c96 = arith.constant 96 : index
    %c0_312 = arith.constant 0 : index
    %368 = vector.load %arg4[%c96, %c0_312] : memref<288x64xbf16, #tpu.memory_space<vmem>>, vector<32x64xbf16>
    %cst_313 = arith.constant dense<0.000000e+00> : vector<128x64xf32>
    %369 = tpu.matmul %367, %368, %cst_313 {dimension_numbers = #tpu.dot_dimension_numbers<[1], [0], [0], [1], [0, 0, 1, 1], [], []>} : vector<128x32xbf16>, vector<32x64xbf16>, vector<128x64xf32> -> vector<128x64xf32>
    %370 = arith.addf %364, %369 : vector<128x64xf32>
    %c0_314 = arith.constant 0 : index
    %c1_315 = arith.constant 1 : index
    %c1_316 = arith.constant 1 : index
    %c0_317 = arith.constant 0 : index
    %371 = vector.load %arg14[%c0_314, %c1_315, %c1_316, %c0_317] : memref<2x10x10x32xf32, #tpu.memory_space<vmem>>, vector<2x8x8x32xf32>
    %372 = vector.shape_cast %371 : vector<2x8x8x32xf32> to vector<128x32xf32>
    %373 = arith.truncf %372 : vector<128x32xf32> to vector<128x32xbf16>
    %c128 = arith.constant 128 : index
    %c0_318 = arith.constant 0 : index
    %374 = vector.load %arg4[%c128, %c0_318] : memref<288x64xbf16, #tpu.memory_space<vmem>>, vector<32x64xbf16>
    %cst_319 = arith.constant dense<0.000000e+00> : vector<128x64xf32>
    %375 = tpu.matmul %373, %374, %cst_319 {dimension_numbers = #tpu.dot_dimension_numbers<[1], [0], [0], [1], [0, 0, 1, 1], [], []>} : vector<128x32xbf16>, vector<32x64xbf16>, vector<128x64xf32> -> vector<128x64xf32>
    %376 = arith.addf %370, %375 : vector<128x64xf32>
    %c0_320 = arith.constant 0 : index
    %c1_321 = arith.constant 1 : index
    %c2_322 = arith.constant 2 : index
    %c0_323 = arith.constant 0 : index
    %377 = vector.load %arg14[%c0_320, %c1_321, %c2_322, %c0_323] : memref<2x10x10x32xf32, #tpu.memory_space<vmem>>, vector<2x8x8x32xf32>
    %378 = vector.shape_cast %377 : vector<2x8x8x32xf32> to vector<128x32xf32>
    %379 = arith.truncf %378 : vector<128x32xf32> to vector<128x32xbf16>
    %c160 = arith.constant 160 : index
    %c0_324 = arith.constant 0 : index
    %380 = vector.load %arg4[%c160, %c0_324] : memref<288x64xbf16, #tpu.memory_space<vmem>>, vector<32x64xbf16>
    %cst_325 = arith.constant dense<0.000000e+00> : vector<128x64xf32>
    %381 = tpu.matmul %379, %380, %cst_325 {dimension_numbers = #tpu.dot_dimension_numbers<[1], [0], [0], [1], [0, 0, 1, 1], [], []>} : vector<128x32xbf16>, vector<32x64xbf16>, vector<128x64xf32> -> vector<128x64xf32>
    %382 = arith.addf %376, %381 : vector<128x64xf32>
    %c0_326 = arith.constant 0 : index
    %c2_327 = arith.constant 2 : index
    %c0_328 = arith.constant 0 : index
    %c0_329 = arith.constant 0 : index
    %383 = vector.load %arg14[%c0_326, %c2_327, %c0_328, %c0_329] : memref<2x10x10x32xf32, #tpu.memory_space<vmem>>, vector<2x8x8x32xf32>
    %384 = vector.shape_cast %383 : vector<2x8x8x32xf32> to vector<128x32xf32>
    %385 = arith.truncf %384 : vector<128x32xf32> to vector<128x32xbf16>
    %c192 = arith.constant 192 : index
    %c0_330 = arith.constant 0 : index
    %386 = vector.load %arg4[%c192, %c0_330] : memref<288x64xbf16, #tpu.memory_space<vmem>>, vector<32x64xbf16>
    %cst_331 = arith.constant dense<0.000000e+00> : vector<128x64xf32>
    %387 = tpu.matmul %385, %386, %cst_331 {dimension_numbers = #tpu.dot_dimension_numbers<[1], [0], [0], [1], [0, 0, 1, 1], [], []>} : vector<128x32xbf16>, vector<32x64xbf16>, vector<128x64xf32> -> vector<128x64xf32>
    %388 = arith.addf %382, %387 : vector<128x64xf32>
    %c0_332 = arith.constant 0 : index
    %c2_333 = arith.constant 2 : index
    %c1_334 = arith.constant 1 : index
    %c0_335 = arith.constant 0 : index
    %389 = vector.load %arg14[%c0_332, %c2_333, %c1_334, %c0_335] : memref<2x10x10x32xf32, #tpu.memory_space<vmem>>, vector<2x8x8x32xf32>
    %390 = vector.shape_cast %389 : vector<2x8x8x32xf32> to vector<128x32xf32>
    %391 = arith.truncf %390 : vector<128x32xf32> to vector<128x32xbf16>
    %c224 = arith.constant 224 : index
    %c0_336 = arith.constant 0 : index
    %392 = vector.load %arg4[%c224, %c0_336] : memref<288x64xbf16, #tpu.memory_space<vmem>>, vector<32x64xbf16>
    %cst_337 = arith.constant dense<0.000000e+00> : vector<128x64xf32>
    %393 = tpu.matmul %391, %392, %cst_337 {dimension_numbers = #tpu.dot_dimension_numbers<[1], [0], [0], [1], [0, 0, 1, 1], [], []>} : vector<128x32xbf16>, vector<32x64xbf16>, vector<128x64xf32> -> vector<128x64xf32>
    %394 = arith.addf %388, %393 : vector<128x64xf32>
    %c0_338 = arith.constant 0 : index
    %c2_339 = arith.constant 2 : index
    %c2_340 = arith.constant 2 : index
    %c0_341 = arith.constant 0 : index
    %395 = vector.load %arg14[%c0_338, %c2_339, %c2_340, %c0_341] : memref<2x10x10x32xf32, #tpu.memory_space<vmem>>, vector<2x8x8x32xf32>
    %396 = vector.shape_cast %395 : vector<2x8x8x32xf32> to vector<128x32xf32>
    %397 = arith.truncf %396 : vector<128x32xf32> to vector<128x32xbf16>
    %c256 = arith.constant 256 : index
    %c0_342 = arith.constant 0 : index
    %398 = vector.load %arg4[%c256, %c0_342] : memref<288x64xbf16, #tpu.memory_space<vmem>>, vector<32x64xbf16>
    %cst_343 = arith.constant dense<0.000000e+00> : vector<128x64xf32>
    %399 = tpu.matmul %397, %398, %cst_343 {dimension_numbers = #tpu.dot_dimension_numbers<[1], [0], [0], [1], [0, 0, 1, 1], [], []>} : vector<128x32xbf16>, vector<32x64xbf16>, vector<128x64xf32> -> vector<128x64xf32>
    %400 = arith.addf %394, %399 : vector<128x64xf32>
    %c0_344 = arith.constant 0 : index
    %c0_345 = arith.constant 0 : index
    %401 = vector.load %arg5[%c0_344, %c0_345] : memref<1x64xf32, #tpu.memory_space<vmem>>, vector<1x64xf32>
    %402 = vector.broadcast %401 : vector<1x64xf32> to vector<128x64xf32>
    %403 = arith.addf %400, %402 : vector<128x64xf32>
    %cst_346 = arith.constant 0.000000e+00 : f32
    %404 = vector.broadcast %cst_346 : f32 to vector<128x64xf32>
    %405 = arith.maximumf %403, %404 : vector<128x64xf32>
    %406 = vector.shape_cast %405 : vector<128x64xf32> to vector<2x8x8x64xf32>
    %407 = vector.shape_cast %406 : vector<2x8x8x64xf32> to vector<2x4x2x8x64xf32>
    %408 = vector.extract_strided_slice %407 {offsets = [0, 0, 0, 0, 0], sizes = [2, 4, 1, 8, 64], strides = [1, 1, 1, 1, 1]} : vector<2x4x2x8x64xf32> to vector<2x4x1x8x64xf32>
    %409 = vector.shape_cast %408 : vector<2x4x1x8x64xf32> to vector<2x4x8x64xf32>
    %410 = vector.extract_strided_slice %407 {offsets = [0, 0, 1, 0, 0], sizes = [2, 4, 1, 8, 64], strides = [1, 1, 1, 1, 1]} : vector<2x4x2x8x64xf32> to vector<2x4x1x8x64xf32>
    %411 = vector.shape_cast %410 : vector<2x4x1x8x64xf32> to vector<2x4x8x64xf32>
    %412 = arith.maximumf %409, %411 : vector<2x4x8x64xf32>
    %413 = vector.shape_cast %412 : vector<2x4x8x64xf32> to vector<2x4x4x2x64xf32>
    %414 = vector.extract_strided_slice %413 {offsets = [0, 0, 0, 0, 0], sizes = [2, 4, 4, 1, 64], strides = [1, 1, 1, 1, 1]} : vector<2x4x4x2x64xf32> to vector<2x4x4x1x64xf32>
    %415 = vector.shape_cast %414 : vector<2x4x4x1x64xf32> to vector<2x4x4x64xf32>
    %416 = vector.extract_strided_slice %413 {offsets = [0, 0, 0, 1, 0], sizes = [2, 4, 4, 1, 64], strides = [1, 1, 1, 1, 1]} : vector<2x4x4x2x64xf32> to vector<2x4x4x1x64xf32>
    %417 = vector.shape_cast %416 : vector<2x4x4x1x64xf32> to vector<2x4x4x64xf32>
    %418 = arith.maximumf %415, %417 : vector<2x4x4x64xf32>
    %c0_347 = arith.constant 0 : index
    %c1_348 = arith.constant 1 : index
    %c1_349 = arith.constant 1 : index
    %c0_350 = arith.constant 0 : index
    %419 = vector.load %arg15[%c0_347, %c1_348, %c1_349, %c0_350] : memref<2x6x6x64xf32, #tpu.memory_space<vmem>>, vector<2x4x4x64xf32>
    tpu.vector_store %arg15[%c0_347, %c1_348, %c1_349, %c0_350], %418 {strides = array<i32>} : memref<2x6x6x64xf32, #tpu.memory_space<vmem>>, vector<2x4x4x64xf32>,
    %cst_351 = arith.constant 0.000000e+00 : f32
    %420 = vector.broadcast %cst_351 : f32 to vector<32x128xf32>
    %c0_352 = arith.constant 0 : index
    %c0_353 = arith.constant 0 : index
    %c0_354 = arith.constant 0 : index
    %c0_355 = arith.constant 0 : index
    %421 = vector.load %arg15[%c0_352, %c0_353, %c0_354, %c0_355] : memref<2x6x6x64xf32, #tpu.memory_space<vmem>>, vector<2x4x4x64xf32>
    %422 = vector.shape_cast %421 : vector<2x4x4x64xf32> to vector<32x64xf32>
    %423 = arith.truncf %422 : vector<32x64xf32> to vector<32x64xbf16>
    %c0_356 = arith.constant 0 : index
    %c0_357 = arith.constant 0 : index
    %424 = vector.load %arg6[%c0_356, %c0_357] : memref<576x128xbf16, #tpu.memory_space<vmem>>, vector<64x128xbf16>
    %cst_358 = arith.constant dense<0.000000e+00> : vector<32x128xf32>
    %425 = tpu.matmul %423, %424, %cst_358 {dimension_numbers = #tpu.dot_dimension_numbers<[1], [0], [0], [1], [0, 0, 1, 1], [], []>} : vector<32x64xbf16>, vector<64x128xbf16>, vector<32x128xf32> -> vector<32x128xf32>
    %426 = arith.addf %420, %425 : vector<32x128xf32>
    %c0_359 = arith.constant 0 : index
    %c0_360 = arith.constant 0 : index
    %c1_361 = arith.constant 1 : index
    %c0_362 = arith.constant 0 : index
    %427 = vector.load %arg15[%c0_359, %c0_360, %c1_361, %c0_362] : memref<2x6x6x64xf32, #tpu.memory_space<vmem>>, vector<2x4x4x64xf32>
    %428 = vector.shape_cast %427 : vector<2x4x4x64xf32> to vector<32x64xf32>
    %429 = arith.truncf %428 : vector<32x64xf32> to vector<32x64xbf16>
    %c64_363 = arith.constant 64 : index
    %c0_364 = arith.constant 0 : index
    %430 = vector.load %arg6[%c64_363, %c0_364] : memref<576x128xbf16, #tpu.memory_space<vmem>>, vector<64x128xbf16>
    %cst_365 = arith.constant dense<0.000000e+00> : vector<32x128xf32>
    %431 = tpu.matmul %429, %430, %cst_365 {dimension_numbers = #tpu.dot_dimension_numbers<[1], [0], [0], [1], [0, 0, 1, 1], [], []>} : vector<32x64xbf16>, vector<64x128xbf16>, vector<32x128xf32> -> vector<32x128xf32>
    %432 = arith.addf %426, %431 : vector<32x128xf32>
    %c0_366 = arith.constant 0 : index
    %c0_367 = arith.constant 0 : index
    %c2_368 = arith.constant 2 : index
    %c0_369 = arith.constant 0 : index
    %433 = vector.load %arg15[%c0_366, %c0_367, %c2_368, %c0_369] : memref<2x6x6x64xf32, #tpu.memory_space<vmem>>, vector<2x4x4x64xf32>
    %434 = vector.shape_cast %433 : vector<2x4x4x64xf32> to vector<32x64xf32>
    %435 = arith.truncf %434 : vector<32x64xf32> to vector<32x64xbf16>
    %c128_370 = arith.constant 128 : index
    %c0_371 = arith.constant 0 : index
    %436 = vector.load %arg6[%c128_370, %c0_371] : memref<576x128xbf16, #tpu.memory_space<vmem>>, vector<64x128xbf16>
    %cst_372 = arith.constant dense<0.000000e+00> : vector<32x128xf32>
    %437 = tpu.matmul %435, %436, %cst_372 {dimension_numbers = #tpu.dot_dimension_numbers<[1], [0], [0], [1], [0, 0, 1, 1], [], []>} : vector<32x64xbf16>, vector<64x128xbf16>, vector<32x128xf32> -> vector<32x128xf32>
    %438 = arith.addf %432, %437 : vector<32x128xf32>
    %c0_373 = arith.constant 0 : index
    %c1_374 = arith.constant 1 : index
    %c0_375 = arith.constant 0 : index
    %c0_376 = arith.constant 0 : index
    %439 = vector.load %arg15[%c0_373, %c1_374, %c0_375, %c0_376] : memref<2x6x6x64xf32, #tpu.memory_space<vmem>>, vector<2x4x4x64xf32>
    %440 = vector.shape_cast %439 : vector<2x4x4x64xf32> to vector<32x64xf32>
    %441 = arith.truncf %440 : vector<32x64xf32> to vector<32x64xbf16>
    %c192_377 = arith.constant 192 : index
    %c0_378 = arith.constant 0 : index
    %442 = vector.load %arg6[%c192_377, %c0_378] : memref<576x128xbf16, #tpu.memory_space<vmem>>, vector<64x128xbf16>
    %cst_379 = arith.constant dense<0.000000e+00> : vector<32x128xf32>
    %443 = tpu.matmul %441, %442, %cst_379 {dimension_numbers = #tpu.dot_dimension_numbers<[1], [0], [0], [1], [0, 0, 1, 1], [], []>} : vector<32x64xbf16>, vector<64x128xbf16>, vector<32x128xf32> -> vector<32x128xf32>
    %444 = arith.addf %438, %443 : vector<32x128xf32>
    %c0_380 = arith.constant 0 : index
    %c1_381 = arith.constant 1 : index
    %c1_382 = arith.constant 1 : index
    %c0_383 = arith.constant 0 : index
    %445 = vector.load %arg15[%c0_380, %c1_381, %c1_382, %c0_383] : memref<2x6x6x64xf32, #tpu.memory_space<vmem>>, vector<2x4x4x64xf32>
    %446 = vector.shape_cast %445 : vector<2x4x4x64xf32> to vector<32x64xf32>
    %447 = arith.truncf %446 : vector<32x64xf32> to vector<32x64xbf16>
    %c256_384 = arith.constant 256 : index
    %c0_385 = arith.constant 0 : index
    %448 = vector.load %arg6[%c256_384, %c0_385] : memref<576x128xbf16, #tpu.memory_space<vmem>>, vector<64x128xbf16>
    %cst_386 = arith.constant dense<0.000000e+00> : vector<32x128xf32>
    %449 = tpu.matmul %447, %448, %cst_386 {dimension_numbers = #tpu.dot_dimension_numbers<[1], [0], [0], [1], [0, 0, 1, 1], [], []>} : vector<32x64xbf16>, vector<64x128xbf16>, vector<32x128xf32> -> vector<32x128xf32>
    %450 = arith.addf %444, %449 : vector<32x128xf32>
    %c0_387 = arith.constant 0 : index
    %c1_388 = arith.constant 1 : index
    %c2_389 = arith.constant 2 : index
    %c0_390 = arith.constant 0 : index
    %451 = vector.load %arg15[%c0_387, %c1_388, %c2_389, %c0_390] : memref<2x6x6x64xf32, #tpu.memory_space<vmem>>, vector<2x4x4x64xf32>
    %452 = vector.shape_cast %451 : vector<2x4x4x64xf32> to vector<32x64xf32>
    %453 = arith.truncf %452 : vector<32x64xf32> to vector<32x64xbf16>
    %c320 = arith.constant 320 : index
    %c0_391 = arith.constant 0 : index
    %454 = vector.load %arg6[%c320, %c0_391] : memref<576x128xbf16, #tpu.memory_space<vmem>>, vector<64x128xbf16>
    %cst_392 = arith.constant dense<0.000000e+00> : vector<32x128xf32>
    %455 = tpu.matmul %453, %454, %cst_392 {dimension_numbers = #tpu.dot_dimension_numbers<[1], [0], [0], [1], [0, 0, 1, 1], [], []>} : vector<32x64xbf16>, vector<64x128xbf16>, vector<32x128xf32> -> vector<32x128xf32>
    %456 = arith.addf %450, %455 : vector<32x128xf32>
    %c0_393 = arith.constant 0 : index
    %c2_394 = arith.constant 2 : index
    %c0_395 = arith.constant 0 : index
    %c0_396 = arith.constant 0 : index
    %457 = vector.load %arg15[%c0_393, %c2_394, %c0_395, %c0_396] : memref<2x6x6x64xf32, #tpu.memory_space<vmem>>, vector<2x4x4x64xf32>
    %458 = vector.shape_cast %457 : vector<2x4x4x64xf32> to vector<32x64xf32>
    %459 = arith.truncf %458 : vector<32x64xf32> to vector<32x64xbf16>
    %c384 = arith.constant 384 : index
    %c0_397 = arith.constant 0 : index
    %460 = vector.load %arg6[%c384, %c0_397] : memref<576x128xbf16, #tpu.memory_space<vmem>>, vector<64x128xbf16>
    %cst_398 = arith.constant dense<0.000000e+00> : vector<32x128xf32>
    %461 = tpu.matmul %459, %460, %cst_398 {dimension_numbers = #tpu.dot_dimension_numbers<[1], [0], [0], [1], [0, 0, 1, 1], [], []>} : vector<32x64xbf16>, vector<64x128xbf16>, vector<32x128xf32> -> vector<32x128xf32>
    %462 = arith.addf %456, %461 : vector<32x128xf32>
    %c0_399 = arith.constant 0 : index
    %c2_400 = arith.constant 2 : index
    %c1_401 = arith.constant 1 : index
    %c0_402 = arith.constant 0 : index
    %463 = vector.load %arg15[%c0_399, %c2_400, %c1_401, %c0_402] : memref<2x6x6x64xf32, #tpu.memory_space<vmem>>, vector<2x4x4x64xf32>
    %464 = vector.shape_cast %463 : vector<2x4x4x64xf32> to vector<32x64xf32>
    %465 = arith.truncf %464 : vector<32x64xf32> to vector<32x64xbf16>
    %c448 = arith.constant 448 : index
    %c0_403 = arith.constant 0 : index
    %466 = vector.load %arg6[%c448, %c0_403] : memref<576x128xbf16, #tpu.memory_space<vmem>>, vector<64x128xbf16>
    %cst_404 = arith.constant dense<0.000000e+00> : vector<32x128xf32>
    %467 = tpu.matmul %465, %466, %cst_404 {dimension_numbers = #tpu.dot_dimension_numbers<[1], [0], [0], [1], [0, 0, 1, 1], [], []>} : vector<32x64xbf16>, vector<64x128xbf16>, vector<32x128xf32> -> vector<32x128xf32>
    %468 = arith.addf %462, %467 : vector<32x128xf32>
    %c0_405 = arith.constant 0 : index
    %c2_406 = arith.constant 2 : index
    %c2_407 = arith.constant 2 : index
    %c0_408 = arith.constant 0 : index
    %469 = vector.load %arg15[%c0_405, %c2_406, %c2_407, %c0_408] : memref<2x6x6x64xf32, #tpu.memory_space<vmem>>, vector<2x4x4x64xf32>
    %470 = vector.shape_cast %469 : vector<2x4x4x64xf32> to vector<32x64xf32>
    %471 = arith.truncf %470 : vector<32x64xf32> to vector<32x64xbf16>
    %c512 = arith.constant 512 : index
    %c0_409 = arith.constant 0 : index
    %472 = vector.load %arg6[%c512, %c0_409] : memref<576x128xbf16, #tpu.memory_space<vmem>>, vector<64x128xbf16>
    %cst_410 = arith.constant dense<0.000000e+00> : vector<32x128xf32>
    %473 = tpu.matmul %471, %472, %cst_410 {dimension_numbers = #tpu.dot_dimension_numbers<[1], [0], [0], [1], [0, 0, 1, 1], [], []>} : vector<32x64xbf16>, vector<64x128xbf16>, vector<32x128xf32> -> vector<32x128xf32>
    %474 = arith.addf %468, %473 : vector<32x128xf32>
    %c0_411 = arith.constant 0 : index
    %c0_412 = arith.constant 0 : index
    %475 = vector.load %arg7[%c0_411, %c0_412] : memref<1x128xf32, #tpu.memory_space<vmem>>, vector<1x128xf32>
    %476 = vector.broadcast %475 : vector<1x128xf32> to vector<32x128xf32>
    %477 = arith.addf %474, %476 : vector<32x128xf32>
    %cst_413 = arith.constant 0.000000e+00 : f32
    %478 = vector.broadcast %cst_413 : f32 to vector<32x128xf32>
    %479 = arith.maximumf %477, %478 : vector<32x128xf32>
    %480 = vector.shape_cast %479 : vector<32x128xf32> to vector<2x4x4x128xf32>
    %481 = vector.shape_cast %480 : vector<2x4x4x128xf32> to vector<2x2x2x4x128xf32>
    %482 = vector.extract_strided_slice %481 {offsets = [0, 0, 0, 0, 0], sizes = [2, 2, 1, 4, 128], strides = [1, 1, 1, 1, 1]} : vector<2x2x2x4x128xf32> to vector<2x2x1x4x128xf32>
    %483 = vector.shape_cast %482 : vector<2x2x1x4x128xf32> to vector<2x2x4x128xf32>
    %484 = vector.extract_strided_slice %481 {offsets = [0, 0, 1, 0, 0], sizes = [2, 2, 1, 4, 128], strides = [1, 1, 1, 1, 1]} : vector<2x2x2x4x128xf32> to vector<2x2x1x4x128xf32>
    %485 = vector.shape_cast %484 : vector<2x2x1x4x128xf32> to vector<2x2x4x128xf32>
    %486 = arith.maximumf %483, %485 : vector<2x2x4x128xf32>
    %487 = vector.shape_cast %486 : vector<2x2x4x128xf32> to vector<2x2x2x2x128xf32>
    %488 = vector.extract_strided_slice %487 {offsets = [0, 0, 0, 0, 0], sizes = [2, 2, 2, 1, 128], strides = [1, 1, 1, 1, 1]} : vector<2x2x2x2x128xf32> to vector<2x2x2x1x128xf32>
    %489 = vector.shape_cast %488 : vector<2x2x2x1x128xf32> to vector<2x2x2x128xf32>
    %490 = vector.extract_strided_slice %487 {offsets = [0, 0, 0, 1, 0], sizes = [2, 2, 2, 1, 128], strides = [1, 1, 1, 1, 1]} : vector<2x2x2x2x128xf32> to vector<2x2x2x1x128xf32>
    %491 = vector.shape_cast %490 : vector<2x2x2x1x128xf32> to vector<2x2x2x128xf32>
    %492 = arith.maximumf %489, %491 : vector<2x2x2x128xf32>
    %493 = vector.extract_strided_slice %492 {offsets = [0, 0, 0, 0], sizes = [2, 1, 1, 128], strides = [1, 1, 1, 1]} : vector<2x2x2x128xf32> to vector<2x1x1x128xf32>
    %494 = vector.shape_cast %493 : vector<2x1x1x128xf32> to vector<2x128xf32>
    %c0_414 = arith.constant 0 : index
    %c0_415 = arith.constant 0 : index
    %495 = vector.load %arg16[%c0_414, %c0_415] : memref<2x512xf32, #tpu.memory_space<vmem>>, vector<2x128xf32>
    tpu.vector_store %arg16[%c0_414, %c0_415], %494 {strides = array<i32>} : memref<2x512xf32, #tpu.memory_space<vmem>>, vector<2x128xf32>,
    %496 = vector.extract_strided_slice %492 {offsets = [0, 0, 1, 0], sizes = [2, 1, 1, 128], strides = [1, 1, 1, 1]} : vector<2x2x2x128xf32> to vector<2x1x1x128xf32>
    %497 = vector.shape_cast %496 : vector<2x1x1x128xf32> to vector<2x128xf32>
    %c0_416 = arith.constant 0 : index
    %c128_417 = arith.constant 128 : index
    %498 = vector.load %arg16[%c0_416, %c128_417] : memref<2x512xf32, #tpu.memory_space<vmem>>, vector<2x128xf32>
    tpu.vector_store %arg16[%c0_416, %c128_417], %497 {strides = array<i32>} : memref<2x512xf32, #tpu.memory_space<vmem>>, vector<2x128xf32>,
    %499 = vector.extract_strided_slice %492 {offsets = [0, 1, 0, 0], sizes = [2, 1, 1, 128], strides = [1, 1, 1, 1]} : vector<2x2x2x128xf32> to vector<2x1x1x128xf32>
    %500 = vector.shape_cast %499 : vector<2x1x1x128xf32> to vector<2x128xf32>
    %c0_418 = arith.constant 0 : index
    %c256_419 = arith.constant 256 : index
    %501 = vector.load %arg16[%c0_418, %c256_419] : memref<2x512xf32, #tpu.memory_space<vmem>>, vector<2x128xf32>
    tpu.vector_store %arg16[%c0_418, %c256_419], %500 {strides = array<i32>} : memref<2x512xf32, #tpu.memory_space<vmem>>, vector<2x128xf32>,
    %502 = vector.extract_strided_slice %492 {offsets = [0, 1, 1, 0], sizes = [2, 1, 1, 128], strides = [1, 1, 1, 1]} : vector<2x2x2x128xf32> to vector<2x1x1x128xf32>
    %503 = vector.shape_cast %502 : vector<2x1x1x128xf32> to vector<2x128xf32>
    %c0_420 = arith.constant 0 : index
    %c384_421 = arith.constant 384 : index
    %504 = vector.load %arg16[%c0_420, %c384_421] : memref<2x512xf32, #tpu.memory_space<vmem>>, vector<2x128xf32>
    tpu.vector_store %arg16[%c0_420, %c384_421], %503 {strides = array<i32>} : memref<2x512xf32, #tpu.memory_space<vmem>>, vector<2x128xf32>,
    %c0_422 = arith.constant 0 : index
    %c0_423 = arith.constant 0 : index
    %505 = vector.load %arg16[%c0_422, %c0_423] : memref<2x512xf32, #tpu.memory_space<vmem>>, vector<2x512xf32>
    %506 = arith.truncf %505 : vector<2x512xf32> to vector<2x512xbf16>
    %c0_424 = arith.constant 0 : index
    %c0_425 = arith.constant 0 : index
    %507 = vector.load %arg8[%c0_424, %c0_425] : memref<512x128xbf16, #tpu.memory_space<vmem>>, vector<512x128xbf16>
    %cst_426 = arith.constant dense<0.000000e+00> : vector<2x128xf32>
    %508 = tpu.matmul %506, %507, %cst_426 {dimension_numbers = #tpu.dot_dimension_numbers<[1], [0], [0], [1], [0, 0, 1, 1], [], []>} : vector<2x512xbf16>, vector<512x128xbf16>, vector<2x128xf32> -> vector<2x128xf32>
    %c0_427 = arith.constant 0 : index
    %c0_428 = arith.constant 0 : index
    %509 = vector.load %arg9[%c0_427, %c0_428] : memref<1x128xf32, #tpu.memory_space<vmem>>, vector<1x128xf32>
    %510 = vector.broadcast %509 : vector<1x128xf32> to vector<2x128xf32>
    %511 = arith.addf %508, %510 : vector<2x128xf32>
    %cst_429 = arith.constant 0.000000e+00 : f32
    %512 = vector.broadcast %cst_429 : f32 to vector<2x128xf32>
    %513 = arith.maximumf %511, %512 : vector<2x128xf32>
    %514 = arith.truncf %513 : vector<2x128xf32> to vector<2x128xbf16>
    %c0_430 = arith.constant 0 : index
    %c0_431 = arith.constant 0 : index
    %515 = vector.load %arg10[%c0_430, %c0_431] : memref<128x8xbf16, #tpu.memory_space<vmem>>, vector<128x8xbf16>
    %cst_432 = arith.constant dense<0.000000e+00> : vector<2x8xf32>
    %516 = tpu.matmul %514, %515, %cst_432 {dimension_numbers = #tpu.dot_dimension_numbers<[1], [0], [0], [1], [0, 0, 1, 1], [], []>} : vector<2x128xbf16>, vector<128x8xbf16>, vector<2x8xf32> -> vector<2x8xf32>
    %c0_433 = arith.constant 0 : index
    %c0_434 = arith.constant 0 : index
    %517 = vector.load %arg11[%c0_433, %c0_434] : memref<1x8xf32, #tpu.memory_space<vmem>>, vector<1x8xf32>
    %518 = vector.broadcast %517 : vector<1x8xf32> to vector<2x8xf32>
    %519 = arith.addf %516, %518 : vector<2x8xf32>
    %c0_435 = arith.constant 0 : index
    %c0_436 = arith.constant 0 : index
    %520 = vector.load %arg12[%c0_435, %c0_436] : memref<2x8xf32, #tpu.memory_space<vmem>>, vector<2x8xf32>
    tpu.vector_store %arg12[%c0_435, %c0_436], %519 {strides = array<i32>} : memref<2x8xf32, #tpu.memory_space<vmem>>, vector<2x8xf32>,
    return
  }
  func.func @transform_0(%arg0: i32) -> (i32, i32, i32, i32) {
    %c0_i32 = arith.constant 0 : i32
    %c0_i32_0 = arith.constant 0 : i32
    %c0_i32_1 = arith.constant 0 : i32
    %c0_i32_2 = arith.constant 0 : i32
    return %arg0, %c0_i32, %c0_i32_0, %c0_i32_1 : i32, i32, i32, i32
  }
  func.func @transform_1(%arg0: i32) -> (i32, i32) {
    %c0_i32 = arith.constant 0 : i32
    %c0_i32_0 = arith.constant 0 : i32
    %c0_i32_1 = arith.constant 0 : i32
    return %c0_i32, %c0_i32_0 : i32, i32
  }
  func.func @transform_2(%arg0: i32) -> (i32, i32) {
    %c0_i32 = arith.constant 0 : i32
    %c0_i32_0 = arith.constant 0 : i32
    %c0_i32_1 = arith.constant 0 : i32
    return %c0_i32, %c0_i32_0 : i32, i32
  }
  func.func @transform_3(%arg0: i32) -> (i32, i32) {
    %c0_i32 = arith.constant 0 : i32
    %c0_i32_0 = arith.constant 0 : i32
    %c0_i32_1 = arith.constant 0 : i32
    return %c0_i32, %c0_i32_0 : i32, i32
  }
  func.func @transform_4(%arg0: i32) -> (i32, i32) {
    %c0_i32 = arith.constant 0 : i32
    %c0_i32_0 = arith.constant 0 : i32
    %c0_i32_1 = arith.constant 0 : i32
    return %c0_i32, %c0_i32_0 : i32, i32
  }
  func.func @transform_5(%arg0: i32) -> (i32, i32) {
    %c0_i32 = arith.constant 0 : i32
    %c0_i32_0 = arith.constant 0 : i32
    %c0_i32_1 = arith.constant 0 : i32
    return %c0_i32, %c0_i32_0 : i32, i32
  }
  func.func @transform_6(%arg0: i32) -> (i32, i32) {
    %c0_i32 = arith.constant 0 : i32
    %c0_i32_0 = arith.constant 0 : i32
    %c0_i32_1 = arith.constant 0 : i32
    return %c0_i32, %c0_i32_0 : i32, i32
  }
  func.func @transform_7(%arg0: i32) -> (i32, i32) {
    %c0_i32 = arith.constant 0 : i32
    %c0_i32_0 = arith.constant 0 : i32
    %c0_i32_1 = arith.constant 0 : i32
    return %c0_i32, %c0_i32_0 : i32, i32
  }
  func.func @transform_8(%arg0: i32) -> (i32, i32) {
    %c0_i32 = arith.constant 0 : i32
    %c0_i32_0 = arith.constant 0 : i32
    %c0_i32_1 = arith.constant 0 : i32
    return %c0_i32, %c0_i32_0 : i32, i32
  }
  func.func @transform_9(%arg0: i32) -> (i32, i32) {
    %c0_i32 = arith.constant 0 : i32
    %c0_i32_0 = arith.constant 0 : i32
    %c0_i32_1 = arith.constant 0 : i32
    return %c0_i32, %c0_i32_0 : i32, i32
  }
  func.func @transform_10(%arg0: i32) -> (i32, i32) {
    %c0_i32 = arith.constant 0 : i32
    %c0_i32_0 = arith.constant 0 : i32
    %c0_i32_1 = arith.constant 0 : i32
    return %c0_i32, %c0_i32_0 : i32, i32
  }
  func.func @transform_11(%arg0: i32) -> (i32, i32) {
    %c0_i32 = arith.constant 0 : i32
    %c0_i32_0 = arith.constant 0 : i32
    return %arg0, %c0_i32 : i32, i32
  }
}

</mosaic_0001>

<llo_original>
// kernel: cnn_audio_classifier_forward.1
$region0: #{cnn_audio_classifier_forward.1}
  #allocation0 [shape = 'u32[]', space=smem, size = 0x4, offset = 0x4, fixed_abs, tag = 'smem constant byte address 0x4 - core index']
  #allocation1 [shape = 'u32[144,128]{1,0:T(1,128)}', space=vmem, size = 0x12000, scoped, tag = 'internal scratch']
  #allocation2 [shape = 'f32[2,18,18,1]{3,2,1,0:T(8,128)}', space=vmem, size = 0x6c000, scoped, tag = 'scratch operand']
  #allocation3 [shape = 'f32[2,10,10,32]{3,2,1,0:T(8,128)}', space=vmem, size = 0x28000, scoped, tag = 'scratch operand']
  #allocation4 [shape = 'f32[2,6,6,64]{3,2,1,0:T(8,128)}', space=vmem, size = 0xc000, scoped, tag = 'scratch operand']
  #allocation5 [shape = 'f32[2,512]{1,0:T(2,128)}', space=vmem, size = 0x1000, scoped, tag = 'scratch operand']
  %s0 = inlined_call_operand.hbm [shape: f32[2,16,16,1], index: 0, kind: input, shape index: {}]
  %s1 = inlined_call_operand.hbm [shape: f32[9,32], index: 1, kind: input, shape index: {}]
  %s2 = inlined_call_operand.hbm [shape: f32[1,32], index: 2, kind: input, shape index: {}]
  %s3 = inlined_call_operand.hbm [shape: bf16[288,64], index: 3, kind: input, shape index: {}]
  %s4 = inlined_call_operand.hbm [shape: f32[1,64], index: 4, kind: input, shape index: {}]
  %s5 = inlined_call_operand.hbm [shape: bf16[576,128], index: 5, kind: input, shape index: {}]
  %s6 = inlined_call_operand.hbm [shape: f32[1,128], index: 6, kind: input, shape index: {}]
  %s7 = inlined_call_operand.hbm [shape: bf16[512,128], index: 7, kind: input, shape index: {}]
  %s8 = inlined_call_operand.hbm [shape: f32[1,128], index: 8, kind: input, shape index: {}]
  %s9 = inlined_call_operand.hbm [shape: bf16[128,8], index: 9, kind: input, shape index: {}]
  %s10 = inlined_call_operand.hbm [shape: f32[1,8], index: 10, kind: input, shape index: {}]
  %s11 = inlined_call_operand.hbm [shape: f32[2,8], index: 11, kind: output, shape index: {}]
  %s12 = sld [smem:[#allocation0]]
  $region98: #{cnn_audio_classifier_forward.1} parent=0
    _
  %s14 = ssub.s32 1, %s12
  %s15 = scalar_select 0, %s14, %s12
  $region1: #{cnn_audio_classifier_forward.1} parent=0
    #allocation6 [shape = 'u8[262144]{0}', space=vmem, size = 0x40000, scoped, tag = 'input window, operand 0, single buffered']
    #allocation7 [shape = 's32[1]{0}', space=sflag, size = 0x4, scoped, tag = 'scoped memory for cnn_audio_classifier_forward.1']
    #allocation8 [shape = 's32[1]{0}', space=sflag, size = 0x4, scoped, tag = 'scoped memory for cnn_audio_classifier_forward.1']
    #allocation9 [shape = 'u8[8192]{0}', space=vmem, size = 0x2000, scoped, tag = 'input window, operand 1, single buffered']
    #allocation10 [shape = 's32[1]{0}', space=sflag, size = 0x4, scoped, tag = 'scoped memory for cnn_audio_classifier_forward.1']
    #allocation11 [shape = 'u8[512]{0}', space=vmem, size = 0x400, scoped, tag = 'input window, operand 2, single buffered']
    #allocation12 [shape = 'u8[73728]{0}', space=vmem, size = 0x12000, scoped, tag = 'input window, operand 3, single buffered']
    #allocation13 [shape = 's32[1]{0}', space=sflag, size = 0x4, scoped, tag = 'scoped memory for cnn_audio_classifier_forward.1']
    #allocation14 [shape = 'u8[512]{0}', space=vmem, size = 0x400, scoped, tag = 'input window, operand 4, single buffered']
    #allocation15 [shape = 'u8[147456]{0}', space=vmem, size = 0x24000, scoped, tag = 'input window, operand 5, single buffered']
    #allocation16 [shape = 's32[1]{0}', space=sflag, size = 0x4, scoped, tag = 'scoped memory for cnn_audio_classifier_forward.1']
    #allocation17 [shape = 'u8[512]{0}', space=vmem, size = 0x400, scoped, tag = 'input window, operand 6, single buffered']
    #allocation18 [shape = 'u8[131072]{0}', space=vmem, size = 0x20000, scoped, tag = 'input window, operand 7, single buffered']
    #allocation19 [shape = 's32[1]{0}', space=sflag, size = 0x4, scoped, tag = 'scoped memory for cnn_audio_classifier_forward.1']
    #allocation20 [shape = 'u8[512]{0}', space=vmem, size = 0x400, scoped, tag = 'input window, operand 8, single buffered']
    #allocation21 [shape = 'u8[32768]{0}', space=vmem, size = 0x8000, scoped, tag = 'input window, operand 9, single buffered']
    #allocation22 [shape = 's32[1]{0}', space=sflag, size = 0x4, scoped, tag = 'scoped memory for cnn_audio_classifier_forward.1']
    #allocation23 [shape = 'u8[512]{0}', space=vmem, size = 0x400, scoped, tag = 'input window, operand 10, single buffered']
    #allocation24 [shape = 'u8[1024]{0}', space=vmem, size = 0x400, scoped, tag = 'output window, operand 0, single buffered']
    %16 = vsyncpa [#allocation7], 0
    %17 = vsyncpa [#allocation10], 0
    %18 = vsyncpa [#allocation13], 0
    %19 = vsyncpa [#allocation16], 0
    %20 = vsyncpa [#allocation19], 0
    %21 = vsyncpa [#allocation22], 0
    %22 = vsyncpa [#allocation8], 0
    // Predicated region
    $region2: #{cnn_audio_classifier_forward.1} parent=1 // pred_check
      _
    $region3: #{cnn_audio_classifier_forward.1} parent=1 // pred_check_branch
      %24 = sbr.rel (0) target = $region5
    $region4: #{cnn_audio_classifier_forward.1} parent=1 // pred_region
      %s26 = ssub.s32 8192, 8192
      %27 = vsyncadd [#allocation7], %s26
      %s28 = sshll.u32 [#allocation6], 4
      %s29 = int_to_ptr.vmem [resolvable:$true] %s28
      %34 = dma.hbm_to_vmem [thread:$0]  %s0, 8192, %s29, [#allocation7], 128, 128, 8
    $region5: #{cnn_audio_classifier_forward.1} parent=1 // pred_fallthru
      _
    // Predicated region
    $region6: #{cnn_audio_classifier_forward.1} parent=1 // pred_check
      _
    $region7: #{cnn_audio_classifier_forward.1} parent=1 // pred_check_branch
      %36 = sbr.rel (0) target = $region9
    $region8: #{cnn_audio_classifier_forward.1} parent=1 // pred_region
      %s38 = ssub.s32 256, 256
      %39 = vsyncadd [#allocation10], %s38
      %s40 = sshll.u32 [#allocation9], 4
      %s41 = int_to_ptr.vmem [resolvable:$true] %s40
      %46 = dma.hbm_to_vmem [thread:$0]  %s1, 256, %s41, [#allocation10], 128, 128, 8
    $region9: #{cnn_audio_classifier_forward.1} parent=1 // pred_fallthru
      _
    // Predicated region
    $region10: #{cnn_audio_classifier_forward.1} parent=1 // pred_check
      _
    $region11: #{cnn_audio_classifier_forward.1} parent=1 // pred_check_branch
      %48 = sbr.rel (0) target = $region13
    $region12: #{cnn_audio_classifier_forward.1} parent=1 // pred_region
      %s50 = ssub.s32 16, 16
      %51 = vsyncadd [#allocation10], %s50
      %s53 = sshll.u32 [#allocation11], 4
      %s54 = int_to_ptr.vmem [resolvable:$true] %s53
      %56 = dma.hbm_to_vmem [thread:$0]  %s2, 16, %s54, [#allocation10]
    $region13: #{cnn_audio_classifier_forward.1} parent=1 // pred_fallthru
      _
    // Predicated region
    $region14: #{cnn_audio_classifier_forward.1} parent=1 // pred_check
      _
    $region15: #{cnn_audio_classifier_forward.1} parent=1 // pred_check_branch
      %58 = sbr.rel (0) target = $region17
    $region16: #{cnn_audio_classifier_forward.1} parent=1 // pred_region
      %s60 = ssub.s32 2304, 2304
      %61 = vsyncadd [#allocation13], %s60
      %s62 = sshll.u32 [#allocation12], 4
      %s63 = int_to_ptr.vmem [resolvable:$true] %s62
      %68 = dma.hbm_to_vmem [thread:$0]  %s3, 2304, %s63, [#allocation13], 64, 64, 4
    $region17: #{cnn_audio_classifier_forward.1} parent=1 // pred_fallthru
      _
    // Predicated region
    $region18: #{cnn_audio_classifier_forward.1} parent=1 // pred_check
      _
    $region19: #{cnn_audio_classifier_forward.1} parent=1 // pred_check_branch
      %70 = sbr.rel (0) target = $region21
    $region20: #{cnn_audio_classifier_forward.1} parent=1 // pred_region
      %s72 = ssub.s32 16, 16
      %73 = vsyncadd [#allocation13], %s72
      %s75 = sshll.u32 [#allocation14], 4
      %s76 = int_to_ptr.vmem [resolvable:$true] %s75
      %78 = dma.hbm_to_vmem [thread:$0]  %s4, 16, %s76, [#allocation13]
    $region21: #{cnn_audio_classifier_forward.1} parent=1 // pred_fallthru
      _
    // Predicated region
    $region22: #{cnn_audio_classifier_forward.1} parent=1 // pred_check
      _
    $region23: #{cnn_audio_classifier_forward.1} parent=1 // pred_check_branch
      %80 = sbr.rel (0) target = $region25
    $region24: #{cnn_audio_classifier_forward.1} parent=1 // pred_region
      %s82 = ssub.s32 4608, 4608
      %83 = vsyncadd [#allocation16], %s82
      %s84 = sshll.u32 [#allocation15], 4
      %s85 = int_to_ptr.vmem [resolvable:$true] %s84
      %90 = dma.hbm_to_vmem [thread:$0]  %s5, 4608, %s85, [#allocation16], 64, 64, 4
    $region25: #{cnn_audio_classifier_forward.1} parent=1 // pred_fallthru
      _
    // Predicated region
    $region26: #{cnn_audio_classifier_forward.1} parent=1 // pred_check
      _
    $region27: #{cnn_audio_classifier_forward.1} parent=1 // pred_check_branch
      %92 = sbr.rel (0) target = $region29
    $region28: #{cnn_audio_classifier_forward.1} parent=1 // pred_region
      %s94 = ssub.s32 16, 16
      %95 = vsyncadd [#allocation16], %s94
      %s97 = sshll.u32 [#allocation17], 4
      %s98 = int_to_ptr.vmem [resolvable:$true] %s97
      %100 = dma.hbm_to_vmem [thread:$0]  %s6, 16, %s98, [#allocation16]
    $region29: #{cnn_audio_classifier_forward.1} parent=1 // pred_fallthru
      _
    // Predicated region
    $region30: #{cnn_audio_classifier_forward.1} parent=1 // pred_check
      _
    $region31: #{cnn_audio_classifier_forward.1} parent=1 // pred_check_branch
      %102 = sbr.rel (0) target = $region33
    $region32: #{cnn_audio_classifier_forward.1} parent=1 // pred_region
      %s104 = ssub.s32 4096, 4096
      %105 = vsyncadd [#allocation19], %s104
      %s106 = sshll.u32 [#allocation18], 4
      %s107 = int_to_ptr.vmem [resolvable:$true] %s106
      %112 = dma.hbm_to_vmem [thread:$0]  %s7, 4096, %s107, [#allocation19], 64, 64, 4
    $region33: #{cnn_audio_classifier_forward.1} parent=1 // pred_fallthru
      _
    // Predicated region
    $region34: #{cnn_audio_classifier_forward.1} parent=1 // pred_check
      _
    $region35: #{cnn_audio_classifier_forward.1} parent=1 // pred_check_branch
      %114 = sbr.rel (0) target = $region37
    $region36: #{cnn_audio_classifier_forward.1} parent=1 // pred_region
      %s116 = ssub.s32 16, 16
      %117 = vsyncadd [#allocation19], %s116
      %s119 = sshll.u32 [#allocation20], 4
      %s120 = int_to_ptr.vmem [resolvable:$true] %s119
      %122 = dma.hbm_to_vmem [thread:$0]  %s8, 16, %s120, [#allocation19]
    $region37: #{cnn_audio_classifier_forward.1} parent=1 // pred_fallthru
      _
    // Predicated region
    $region38: #{cnn_audio_classifier_forward.1} parent=1 // pred_check
      _
    $region39: #{cnn_audio_classifier_forward.1} parent=1 // pred_check_branch
      %124 = sbr.rel (0) target = $region41
    $region40: #{cnn_audio_classifier_forward.1} parent=1 // pred_region
      %s126 = ssub.s32 1024, 1024
      %127 = vsyncadd [#allocation22], %s126
      %s128 = sshll.u32 [#allocation21], 4
      %s129 = int_to_ptr.vmem [resolvable:$true] %s128
      %134 = dma.hbm_to_vmem [thread:$0]  %s9, 1024, %s129, [#allocation22], 64, 64, 4
    $region41: #{cnn_audio_classifier_forward.1} parent=1 // pred_fallthru
      _
    // Predicated region
    $region42: #{cnn_audio_classifier_forward.1} parent=1 // pred_check
      _
    $region43: #{cnn_audio_classifier_forward.1} parent=1 // pred_check_branch
      %136 = sbr.rel (0) target = $region45
    $region44: #{cnn_audio_classifier_forward.1} parent=1 // pred_region
      %s138 = ssub.s32 16, 16
      %139 = vsyncadd [#allocation22], %s138
      %s141 = sshll.u32 [#allocation23], 4
      %s142 = int_to_ptr.vmem [resolvable:$true] %s141
      %144 = dma.hbm_to_vmem [thread:$0]  %s10, 16, %s142, [#allocation22]
    $region45: #{cnn_audio_classifier_forward.1} parent=1 // pred_fallthru
      _
    // Predicated region
    $region46: #{cnn_audio_classifier_forward.1} parent=1 // pred_check
      _
    $region47: #{cnn_audio_classifier_forward.1} parent=1 // pred_check_branch
      %146 = sbr.rel (0) target = $region49
    $region48: #{cnn_audio_classifier_forward.1} parent=1 // pred_region
      %147 = dma.done [#allocation7], 8192
    $region49: #{cnn_audio_classifier_forward.1} parent=1 // pred_fallthru
      _
    // Predicated region
    $region50: #{cnn_audio_classifier_forward.1} parent=1 // pred_check
      _
    $region51: #{cnn_audio_classifier_forward.1} parent=1 // pred_check_branch
      %149 = sbr.rel (0) target = $region53
    $region52: #{cnn_audio_classifier_forward.1} parent=1 // pred_region
      %150 = dma.done [#allocation10], 256
    $region53: #{cnn_audio_classifier_forward.1} parent=1 // pred_fallthru
      _
    // Predicated region
    $region54: #{cnn_audio_classifier_forward.1} parent=1 // pred_check
      _
    $region55: #{cnn_audio_classifier_forward.1} parent=1 // pred_check_branch
      %152 = sbr.rel (0) target = $region57
    $region56: #{cnn_audio_classifier_forward.1} parent=1 // pred_region
      %153 = dma.done [#allocation10], 16
    $region57: #{cnn_audio_classifier_forward.1} parent=1 // pred_fallthru
      _
    // Predicated region
    $region58: #{cnn_audio_classifier_forward.1} parent=1 // pred_check
      _
    $region59: #{cnn_audio_classifier_forward.1} parent=1 // pred_check_branch
      %155 = sbr.rel (0) target = $region61
    $region60: #{cnn_audio_classifier_forward.1} parent=1 // pred_region
      %156 = dma.done [#allocation13], 2304
    $region61: #{cnn_audio_classifier_forward.1} parent=1 // pred_fallthru
      _
    // Predicated region
    $region62: #{cnn_audio_classifier_forward.1} parent=1 // pred_check
      _
    $region63: #{cnn_audio_classifier_forward.1} parent=1 // pred_check_branch
      %158 = sbr.rel (0) target = $region65
    $region64: #{cnn_audio_classifier_forward.1} parent=1 // pred_region
      %159 = dma.done [#allocation13], 16
    $region65: #{cnn_audio_classifier_forward.1} parent=1 // pred_fallthru
      _
    // Predicated region
    $region66: #{cnn_audio_classifier_forward.1} parent=1 // pred_check
      _
    $region67: #{cnn_audio_classifier_forward.1} parent=1 // pred_check_branch
      %161 = sbr.rel (0) target = $region69
    $region68: #{cnn_audio_classifier_forward.1} parent=1 // pred_region
      %162 = dma.done [#allocation16], 4608
    $region69: #{cnn_audio_classifier_forward.1} parent=1 // pred_fallthru
      _
    // Predicated region
    $region70: #{cnn_audio_classifier_forward.1} parent=1 // pred_check
      _
    $region71: #{cnn_audio_classifier_forward.1} parent=1 // pred_check_branch
      %164 = sbr.rel (0) target = $region73
    $region72: #{cnn_audio_classifier_forward.1} parent=1 // pred_region
      %165 = dma.done [#allocation16], 16
    $region73: #{cnn_audio_classifier_forward.1} parent=1 // pred_fallthru
      _
    // Predicated region
    $region74: #{cnn_audio_classifier_forward.1} parent=1 // pred_check
      _
    $region75: #{cnn_audio_classifier_forward.1} parent=1 // pred_check_branch
      %167 = sbr.rel (0) target = $region77
    $region76: #{cnn_audio_classifier_forward.1} parent=1 // pred_region
      %168 = dma.done [#allocation19], 4096
    $region77: #{cnn_audio_classifier_forward.1} parent=1 // pred_fallthru
      _
    // Predicated region
    $region78: #{cnn_audio_classifier_forward.1} parent=1 // pred_check
      _
    $region79: #{cnn_audio_classifier_forward.1} parent=1 // pred_check_branch
      %170 = sbr.rel (0) target = $region81
    $region80: #{cnn_audio_classifier_forward.1} parent=1 // pred_region
      %171 = dma.done [#allocation19], 16
    $region81: #{cnn_audio_classifier_forward.1} parent=1 // pred_fallthru
      _
    // Predicated region
    $region82: #{cnn_audio_classifier_forward.1} parent=1 // pred_check
      _
    $region83: #{cnn_audio_classifier_forward.1} parent=1 // pred_check_branch
      %173 = sbr.rel (0) target = $region85
    $region84: #{cnn_audio_classifier_forward.1} parent=1 // pred_region
      %174 = dma.done [#allocation22], 1024
    $region85: #{cnn_audio_classifier_forward.1} parent=1 // pred_fallthru
      _
    // Predicated region
    $region86: #{cnn_audio_classifier_forward.1} parent=1 // pred_check
      _
    $region87: #{cnn_audio_classifier_forward.1} parent=1 // pred_check_branch
      %176 = sbr.rel (0) target = $region89
    $region88: #{cnn_audio_classifier_forward.1} parent=1 // pred_region
      %177 = dma.done [#allocation22], 16
    $region89: #{cnn_audio_classifier_forward.1} parent=1 // pred_fallthru
      _
    %vm179 = vcmask 7168
    %180 = vst.msk [vmem:[#allocation2] sm:$0xff] %vm179, 0.0
    %181 = vst.msk [vmem:[#allocation2 + $0x8] sm:$0xff] %vm179, 0.0
    %vm182 = vcmask 1024
    %183 = vst.msk [vmem:[#allocation2 + $0x10] sm:$0x3] %vm182, 0.0
    %184 = vst.msk [vmem:[#allocation2 + $0x1b0] sm:$0xff] %vm179, 0.0
    %185 = vst.msk [vmem:[#allocation2 + $0x1b8] sm:$0xff] %vm179, 0.0
    %186 = vst.msk [vmem:[#allocation2 + $0x1c0] sm:$0x3] %vm182, 0.0
    %s187 = scalar_lea.vmem [#allocation2], 408
    %188 = vst.msk [vmem:[%s187] sm:$0xff] %vm179, 0.0
    %189 = vst.msk [vmem:[%s187 + $0x8] sm:$0xff] %vm179, 0.0
    %190 = vst.msk [vmem:[%s187 + $0x10] sm:$0x3] %vm182, 0.0
    %191 = vst.msk [vmem:[%s187 + $0x1b0] sm:$0xff] %vm179, 0.0
    %192 = vst.msk [vmem:[%s187 + $0x1b8] sm:$0xff] %vm179, 0.0
    %193 = vst.msk [vmem:[%s187 + $0x1c0] sm:$0x3] %vm182, 0.0
    %vm194 = vcmask 0
    %195 = vst.msk [vmem:[#allocation2] sm:$0x1] %vm194, 0.0
    %196 = vst.msk [vmem:[#allocation2 + $0x18] sm:$0x1] %vm194, 0.0
    %197 = vst.msk [vmem:[#allocation2 + $0x30] sm:$0x1] %vm194, 0.0
    %198 = vst.msk [vmem:[#allocation2 + $0x48] sm:$0x1] %vm194, 0.0
    %199 = vst.msk [vmem:[#allocation2 + $0x60] sm:$0x1] %vm194, 0.0
    %200 = vst.msk [vmem:[#allocation2 + $0x78] sm:$0x1] %vm194, 0.0
    %201 = vst.msk [vmem:[#allocation2 + $0x90] sm:$0x1] %vm194, 0.0
    %202 = vst.msk [vmem:[#allocation2 + $0xa8] sm:$0x1] %vm194, 0.0
    %203 = vst.msk [vmem:[#allocation2 + $0xc0] sm:$0x1] %vm194, 0.0
    %204 = vst.msk [vmem:[#allocation2 + $0xd8] sm:$0x1] %vm194, 0.0
    %205 = vst.msk [vmem:[#allocation2 + $0xf0] sm:$0x1] %vm194, 0.0
    %206 = vst.msk [vmem:[#allocation2 + $0x108] sm:$0x1] %vm194, 0.0
    %207 = vst.msk [vmem:[#allocation2 + $0x120] sm:$0x1] %vm194, 0.0
    %208 = vst.msk [vmem:[#allocation2 + $0x138] sm:$0x1] %vm194, 0.0
    %209 = vst.msk [vmem:[#allocation2 + $0x150] sm:$0x1] %vm194, 0.0
    %210 = vst.msk [vmem:[#allocation2 + $0x168] sm:$0x1] %vm194, 0.0
    %211 = vst.msk [vmem:[#allocation2 + $0x180] sm:$0x1] %vm194, 0.0
    %212 = vst.msk [vmem:[#allocation2 + $0x198] sm:$0x1] %vm194, 0.0
    %213 = vst.msk [vmem:[#allocation2 + $0x1b0] sm:$0x1] %vm194, 0.0
    %214 = vst.msk [vmem:[#allocation2 + $0x1c8] sm:$0x1] %vm194, 0.0
    %215 = vst.msk [vmem:[#allocation2 + $0x1e0] sm:$0x1] %vm194, 0.0
    %216 = vst.msk [vmem:[#allocation2 + $0x1f8] sm:$0x1] %vm194, 0.0
    %217 = vst.msk [vmem:[#allocation2 + $0x210] sm:$0x1] %vm194, 0.0
    %218 = vst.msk [vmem:[#allocation2 + $0x228] sm:$0x1] %vm194, 0.0
    %219 = vst.msk [vmem:[#allocation2 + $0x240] sm:$0x1] %vm194, 0.0
    %220 = vst.msk [vmem:[#allocation2 + $0x258] sm:$0x1] %vm194, 0.0
    %221 = vst.msk [vmem:[#allocation2 + $0x270] sm:$0x1] %vm194, 0.0
    %222 = vst.msk [vmem:[#allocation2 + $0x288] sm:$0x1] %vm194, 0.0
    %223 = vst.msk [vmem:[#allocation2 + $0x2a0] sm:$0x1] %vm194, 0.0
    %224 = vst.msk [vmem:[#allocation2 + $0x2b8] sm:$0x1] %vm194, 0.0
    %225 = vst.msk [vmem:[#allocation2 + $0x2d0] sm:$0x1] %vm194, 0.0
    %226 = vst.msk [vmem:[#allocation2 + $0x2e8] sm:$0x1] %vm194, 0.0
    %227 = vst.msk [vmem:[#allocation2 + $0x300] sm:$0x1] %vm194, 0.0
    %228 = vst.msk [vmem:[#allocation2 + $0x318] sm:$0x1] %vm194, 0.0
    %229 = vst.msk [vmem:[#allocation2 + $0x330] sm:$0x1] %vm194, 0.0
    %230 = vst.msk [vmem:[#allocation2 + $0x348] sm:$0x1] %vm194, 0.0
    %231 = vst.msk [vmem:[#allocation2 + $0x11] sm:$0x1] %vm194, 0.0
    %232 = vst.msk [vmem:[#allocation2 + $0x29] sm:$0x1] %vm194, 0.0
    %233 = vst.msk [vmem:[#allocation2 + $0x41] sm:$0x1] %vm194, 0.0
    %234 = vst.msk [vmem:[#allocation2 + $0x59] sm:$0x1] %vm194, 0.0
    %235 = vst.msk [vmem:[#allocation2 + $0x71] sm:$0x1] %vm194, 0.0
    %236 = vst.msk [vmem:[#allocation2 + $0x89] sm:$0x1] %vm194, 0.0
    %237 = vst.msk [vmem:[#allocation2 + $0xa1] sm:$0x1] %vm194, 0.0
    %238 = vst.msk [vmem:[#allocation2 + $0xb9] sm:$0x1] %vm194, 0.0
    %239 = vst.msk [vmem:[#allocation2 + $0xd1] sm:$0x1] %vm194, 0.0
    %240 = vst.msk [vmem:[#allocation2 + $0xe9] sm:$0x1] %vm194, 0.0
    %241 = vst.msk [vmem:[#allocation2 + $0x101] sm:$0x1] %vm194, 0.0
    %242 = vst.msk [vmem:[#allocation2 + $0x119] sm:$0x1] %vm194, 0.0
    %243 = vst.msk [vmem:[#allocation2 + $0x131] sm:$0x1] %vm194, 0.0
    %244 = vst.msk [vmem:[#allocation2 + $0x149] sm:$0x1] %vm194, 0.0
    %245 = vst.msk [vmem:[#allocation2 + $0x161] sm:$0x1] %vm194, 0.0
    %246 = vst.msk [vmem:[#allocation2 + $0x179] sm:$0x1] %vm194, 0.0
    %247 = vst.msk [vmem:[#allocation2 + $0x191] sm:$0x1] %vm194, 0.0
    %248 = vst.msk [vmem:[#allocation2 + $0x1a9] sm:$0x1] %vm194, 0.0
    %249 = vst.msk [vmem:[#allocation2 + $0x1c1] sm:$0x1] %vm194, 0.0
    %250 = vst.msk [vmem:[#allocation2 + $0x1d9] sm:$0x1] %vm194, 0.0
    %251 = vst.msk [vmem:[#allocation2 + $0x1f1] sm:$0x1] %vm194, 0.0
    %252 = vst.msk [vmem:[#allocation2 + $0x209] sm:$0x1] %vm194, 0.0
    %253 = vst.msk [vmem:[#allocation2 + $0x221] sm:$0x1] %vm194, 0.0
    %254 = vst.msk [vmem:[#allocation2 + $0x239] sm:$0x1] %vm194, 0.0
    %255 = vst.msk [vmem:[#allocation2 + $0x251] sm:$0x1] %vm194, 0.0
    %256 = vst.msk [vmem:[#allocation2 + $0x269] sm:$0x1] %vm194, 0.0
    %257 = vst.msk [vmem:[#allocation2 + $0x281] sm:$0x1] %vm194, 0.0
    %258 = vst.msk [vmem:[#allocation2 + $0x299] sm:$0x1] %vm194, 0.0
    %259 = vst.msk [vmem:[#allocation2 + $0x2b1] sm:$0x1] %vm194, 0.0
    %260 = vst.msk [vmem:[#allocation2 + $0x2c9] sm:$0x1] %vm194, 0.0
    %261 = vst.msk [vmem:[#allocation2 + $0x2e1] sm:$0x1] %vm194, 0.0
    %262 = vst.msk [vmem:[#allocation2 + $0x2f9] sm:$0x1] %vm194, 0.0
    %263 = vst.msk [vmem:[#allocation2 + $0x311] sm:$0x1] %vm194, 0.0
    %264 = vst.msk [vmem:[#allocation2 + $0x329] sm:$0x1] %vm194, 0.0
    %265 = vst.msk [vmem:[#allocation2 + $0x341] sm:$0x1] %vm194, 0.0
    %266 = vst.msk [vmem:[#allocation2 + $0x359] sm:$0x1] %vm194, 0.0
    %vm267 = vcmask 261120
    %268 = vst.msk [vmem:[#allocation3] sm:$0xff] %vm267, 0.0
    %vm269 = vcmask 254976
    %270 = vst.msk [vmem:[#allocation3 + $0x8] sm:$0x3] %vm269, 0.0
    %271 = vst.msk [vmem:[#allocation3 + $0xa0] sm:$0xff] %vm267, 0.0
    %272 = vst.msk [vmem:[#allocation3 + $0xa8] sm:$0x3] %vm269, 0.0
    %s273 = scalar_lea.vmem [#allocation3], 144
    %274 = vst.msk [vmem:[%s273] sm:$0xff] %vm267, 0.0
    %275 = vst.msk [vmem:[%s273 + $0x8] sm:$0x3] %vm269, 0.0
    %276 = vst.msk [vmem:[%s273 + $0xa0] sm:$0xff] %vm267, 0.0
    %277 = vst.msk [vmem:[%s273 + $0xa8] sm:$0x3] %vm269, 0.0
    %vm278 = vcmask 253952
    %279 = vst.msk [vmem:[#allocation3] sm:$0x1] %vm278, 0.0
    %280 = vst.msk [vmem:[#allocation3 + $0x10] sm:$0x1] %vm278, 0.0
    %281 = vst.msk [vmem:[#allocation3 + $0x20] sm:$0x1] %vm278, 0.0
    %282 = vst.msk [vmem:[#allocation3 + $0x30] sm:$0x1] %vm278, 0.0
    %283 = vst.msk [vmem:[#allocation3 + $0x40] sm:$0x1] %vm278, 0.0
    %284 = vst.msk [vmem:[#allocation3 + $0x50] sm:$0x1] %vm278, 0.0
    %285 = vst.msk [vmem:[#allocation3 + $0x60] sm:$0x1] %vm278, 0.0
    %286 = vst.msk [vmem:[#allocation3 + $0x70] sm:$0x1] %vm278, 0.0
    %287 = vst.msk [vmem:[#allocation3 + $0x80] sm:$0x1] %vm278, 0.0
    %288 = vst.msk [vmem:[#allocation3 + $0x90] sm:$0x1] %vm278, 0.0
    %289 = vst.msk [vmem:[#allocation3 + $0xa0] sm:$0x1] %vm278, 0.0
    %290 = vst.msk [vmem:[#allocation3 + $0xb0] sm:$0x1] %vm278, 0.0
    %291 = vst.msk [vmem:[#allocation3 + $0xc0] sm:$0x1] %vm278, 0.0
    %292 = vst.msk [vmem:[#allocation3 + $0xd0] sm:$0x1] %vm278, 0.0
    %293 = vst.msk [vmem:[#allocation3 + $0xe0] sm:$0x1] %vm278, 0.0
    %294 = vst.msk [vmem:[#allocation3 + $0xf0] sm:$0x1] %vm278, 0.0
    %295 = vst.msk [vmem:[#allocation3 + $0x100] sm:$0x1] %vm278, 0.0
    %296 = vst.msk [vmem:[#allocation3 + $0x110] sm:$0x1] %vm278, 0.0
    %297 = vst.msk [vmem:[#allocation3 + $0x120] sm:$0x1] %vm278, 0.0
    %298 = vst.msk [vmem:[#allocation3 + $0x130] sm:$0x1] %vm278, 0.0
    %299 = vst.msk [vmem:[#allocation3 + $0x9] sm:$0x1] %vm278, 0.0
    %300 = vst.msk [vmem:[#allocation3 + $0x19] sm:$0x1] %vm278, 0.0
    %301 = vst.msk [vmem:[#allocation3 + $0x29] sm:$0x1] %vm278, 0.0
    %302 = vst.msk [vmem:[#allocation3 + $0x39] sm:$0x1] %vm278, 0.0
    %303 = vst.msk [vmem:[#allocation3 + $0x49] sm:$0x1] %vm278, 0.0
    %304 = vst.msk [vmem:[#allocation3 + $0x59] sm:$0x1] %vm278, 0.0
    %305 = vst.msk [vmem:[#allocation3 + $0x69] sm:$0x1] %vm278, 0.0
    %306 = vst.msk [vmem:[#allocation3 + $0x79] sm:$0x1] %vm278, 0.0
    %307 = vst.msk [vmem:[#allocation3 + $0x89] sm:$0x1] %vm278, 0.0
    %308 = vst.msk [vmem:[#allocation3 + $0x99] sm:$0x1] %vm278, 0.0
    %309 = vst.msk [vmem:[#allocation3 + $0xa9] sm:$0x1] %vm278, 0.0
    %310 = vst.msk [vmem:[#allocation3 + $0xb9] sm:$0x1] %vm278, 0.0
    %311 = vst.msk [vmem:[#allocation3 + $0xc9] sm:$0x1] %vm278, 0.0
    %312 = vst.msk [vmem:[#allocation3 + $0xd9] sm:$0x1] %vm278, 0.0
    %313 = vst.msk [vmem:[#allocation3 + $0xe9] sm:$0x1] %vm278, 0.0
    %314 = vst.msk [vmem:[#allocation3 + $0xf9] sm:$0x1] %vm278, 0.0
    %315 = vst.msk [vmem:[#allocation3 + $0x109] sm:$0x1] %vm278, 0.0
    %316 = vst.msk [vmem:[#allocation3 + $0x119] sm:$0x1] %vm278, 0.0
    %317 = vst.msk [vmem:[#allocation3 + $0x129] sm:$0x1] %vm278, 0.0
    %318 = vst.msk [vmem:[#allocation3 + $0x139] sm:$0x1] %vm278, 0.0
    %vm319 = vcmask 521216
    %320 = vst.msk [vmem:[#allocation4] sm:$0x3f] %vm319, 0.0
    %321 = vst.msk [vmem:[#allocation4 + $0x30] sm:$0x3f] %vm319, 0.0
    %s322 = scalar_lea.vmem [#allocation4], 40
    %323 = vst.msk [vmem:[%s322] sm:$0x3f] %vm319, 0.0
    %324 = vst.msk [vmem:[%s322 + $0x30] sm:$0x3f] %vm319, 0.0
    %vm325 = vcmask 516096
    %326 = vst.msk [vmem:[#allocation4] sm:$0x1] %vm325, 0.0
    %327 = vst.msk [vmem:[#allocation4 + $0x8] sm:$0x1] %vm325, 0.0
    %328 = vst.msk [vmem:[#allocation4 + $0x10] sm:$0x1] %vm325, 0.0
    %329 = vst.msk [vmem:[#allocation4 + $0x18] sm:$0x1] %vm325, 0.0
    %330 = vst.msk [vmem:[#allocation4 + $0x20] sm:$0x1] %vm325, 0.0
    %331 = vst.msk [vmem:[#allocation4 + $0x28] sm:$0x1] %vm325, 0.0
    %332 = vst.msk [vmem:[#allocation4 + $0x30] sm:$0x1] %vm325, 0.0
    %333 = vst.msk [vmem:[#allocation4 + $0x38] sm:$0x1] %vm325, 0.0
    %334 = vst.msk [vmem:[#allocation4 + $0x40] sm:$0x1] %vm325, 0.0
    %335 = vst.msk [vmem:[#allocation4 + $0x48] sm:$0x1] %vm325, 0.0
    %336 = vst.msk [vmem:[#allocation4 + $0x50] sm:$0x1] %vm325, 0.0
    %337 = vst.msk [vmem:[#allocation4 + $0x58] sm:$0x1] %vm325, 0.0
    %338 = vst.msk [vmem:[#allocation4 + $0x5] sm:$0x1] %vm325, 0.0
    %339 = vst.msk [vmem:[#allocation4 + $0xd] sm:$0x1] %vm325, 0.0
    %340 = vst.msk [vmem:[#allocation4 + $0x15] sm:$0x1] %vm325, 0.0
    %341 = vst.msk [vmem:[#allocation4 + $0x1d] sm:$0x1] %vm325, 0.0
    %342 = vst.msk [vmem:[#allocation4 + $0x25] sm:$0x1] %vm325, 0.0
    %343 = vst.msk [vmem:[#allocation4 + $0x2d] sm:$0x1] %vm325, 0.0
    %344 = vst.msk [vmem:[#allocation4 + $0x35] sm:$0x1] %vm325, 0.0
    %345 = vst.msk [vmem:[#allocation4 + $0x3d] sm:$0x1] %vm325, 0.0
    %346 = vst.msk [vmem:[#allocation4 + $0x45] sm:$0x1] %vm325, 0.0
    %347 = vst.msk [vmem:[#allocation4 + $0x4d] sm:$0x1] %vm325, 0.0
    %348 = vst.msk [vmem:[#allocation4 + $0x55] sm:$0x1] %vm325, 0.0
    %349 = vst.msk [vmem:[#allocation4 + $0x5d] sm:$0x1] %vm325, 0.0
    %v350 = vld [vmem:[#allocation6] sm:$0xff]
    %v351 = vld [vmem:[#allocation6 + $0x8] sm:$0xff]
    %v352 = vld [vmem:[#allocation6 + $0x10] sm:$0xff]
    %v353 = vld [vmem:[#allocation6 + $0x18] sm:$0xff]
    %v354 = vld [vmem:[#allocation6 + $0x20] sm:$0xff]
    %v355 = vld [vmem:[#allocation6 + $0x28] sm:$0xff]
    %v356 = vld [vmem:[#allocation6 + $0x30] sm:$0xff]
    %v357 = vld [vmem:[#allocation6 + $0x38] sm:$0xff]
    %v358 = vld [vmem:[#allocation6 + $0x40] sm:$0xff]
    %v359 = vld [vmem:[#allocation6 + $0x48] sm:$0xff]
    %v360 = vld [vmem:[#allocation6 + $0x50] sm:$0xff]
    %v361 = vld [vmem:[#allocation6 + $0x58] sm:$0xff]
    %v362 = vld [vmem:[#allocation6 + $0x60] sm:$0xff]
    %v363 = vld [vmem:[#allocation6 + $0x68] sm:$0xff]
    %v364 = vld [vmem:[#allocation6 + $0x70] sm:$0xff]
    %v365 = vld [vmem:[#allocation6 + $0x78] sm:$0xff]
    %v366 = vld [vmem:[#allocation6 + $0x80] sm:$0xff]
    %v367 = vld [vmem:[#allocation6 + $0x88] sm:$0xff]
    %v368 = vld [vmem:[#allocation6 + $0x90] sm:$0xff]
    %v369 = vld [vmem:[#allocation6 + $0x98] sm:$0xff]
    %v370 = vld [vmem:[#allocation6 + $0xa0] sm:$0xff]
    %v371 = vld [vmem:[#allocation6 + $0xa8] sm:$0xff]
    %v372 = vld [vmem:[#allocation6 + $0xb0] sm:$0xff]
    %v373 = vld [vmem:[#allocation6 + $0xb8] sm:$0xff]
    %v374 = vld [vmem:[#allocation6 + $0xc0] sm:$0xff]
    %v375 = vld [vmem:[#allocation6 + $0xc8] sm:$0xff]
    %v376 = vld [vmem:[#allocation6 + $0xd0] sm:$0xff]
    %v377 = vld [vmem:[#allocation6 + $0xd8] sm:$0xff]
    %v378 = vld [vmem:[#allocation6 + $0xe0] sm:$0xff]
    %v379 = vld [vmem:[#allocation6 + $0xe8] sm:$0xff]
    %v380 = vld [vmem:[#allocation6 + $0xf0] sm:$0xff]
    %v381 = vld [vmem:[#allocation6 + $0xf8] sm:$0xff]
    %v382 = vld [vmem:[#allocation6 + $0x100] sm:$0xff]
    %v383 = vld [vmem:[#allocation6 + $0x108] sm:$0xff]
    %v384 = vld [vmem:[#allocation6 + $0x110] sm:$0xff]
    %v385 = vld [vmem:[#allocation6 + $0x118] sm:$0xff]
    %v386 = vld [vmem:[#allocation6 + $0x120] sm:$0xff]
    %v387 = vld [vmem:[#allocation6 + $0x128] sm:$0xff]
    %v388 = vld [vmem:[#allocation6 + $0x130] sm:$0xff]
    %v389 = vld [vmem:[#allocation6 + $0x138] sm:$0xff]
    %v390 = vld [vmem:[#allocation6 + $0x140] sm:$0xff]
    %v391 = vld [vmem:[#allocation6 + $0x148] sm:$0xff]
    %v392 = vld [vmem:[#allocation6 + $0x150] sm:$0xff]
    %v393 = vld [vmem:[#allocation6 + $0x158] sm:$0xff]
    %v394 = vld [vmem:[#allocation6 + $0x160] sm:$0xff]
    %v395 = vld [vmem:[#allocation6 + $0x168] sm:$0xff]
    %v396 = vld [vmem:[#allocation6 + $0x170] sm:$0xff]
    %v397 = vld [vmem:[#allocation6 + $0x178] sm:$0xff]
    %v398 = vld [vmem:[#allocation6 + $0x180] sm:$0xff]
    %v399 = vld [vmem:[#allocation6 + $0x188] sm:$0xff]
    %v400 = vld [vmem:[#allocation6 + $0x190] sm:$0xff]
    %v401 = vld [vmem:[#allocation6 + $0x198] sm:$0xff]
    %v402 = vld [vmem:[#allocation6 + $0x1a0] sm:$0xff]
    %v403 = vld [vmem:[#allocation6 + $0x1a8] sm:$0xff]
    %v404 = vld [vmem:[#allocation6 + $0x1b0] sm:$0xff]
    %v405 = vld [vmem:[#allocation6 + $0x1b8] sm:$0xff]
    %v406 = vld [vmem:[#allocation6 + $0x1c0] sm:$0xff]
    %v407 = vld [vmem:[#allocation6 + $0x1c8] sm:$0xff]
    %v408 = vld [vmem:[#allocation6 + $0x1d0] sm:$0xff]
    %v409 = vld [vmem:[#allocation6 + $0x1d8] sm:$0xff]
    %v410 = vld [vmem:[#allocation6 + $0x1e0] sm:$0xff]
    %v411 = vld [vmem:[#allocation6 + $0x1e8] sm:$0xff]
    %v412 = vld [vmem:[#allocation6 + $0x1f0] sm:$0xff]
    %v413 = vld [vmem:[#allocation6 + $0x1f8] sm:$0xff]
    %s414 = scalar_lea.vmem [#allocation2], 24
    %415 = vst.msk [vmem:[%s414 + $0x1] sm:$0xff] %vm179, %v350
    %416 = vst.msk [vmem:[%s414 + $0x9] sm:$0xff] %vm179, %v351
    %417 = vst.msk [vmem:[%s414 + $0x19] sm:$0xff] %vm179, %v352
    %418 = vst.msk [vmem:[%s414 + $0x21] sm:$0xff] %vm179, %v353
    %419 = vst.msk [vmem:[%s414 + $0x31] sm:$0xff] %vm179, %v354
    %420 = vst.msk [vmem:[%s414 + $0x39] sm:$0xff] %vm179, %v355
    %421 = vst.msk [vmem:[%s414 + $0x49] sm:$0xff] %vm179, %v356
    %422 = vst.msk [vmem:[%s414 + $0x51] sm:$0xff] %vm179, %v357
    %423 = vst.msk [vmem:[%s414 + $0x61] sm:$0xff] %vm179, %v358
    %424 = vst.msk [vmem:[%s414 + $0x69] sm:$0xff] %vm179, %v359
    %425 = vst.msk [vmem:[%s414 + $0x79] sm:$0xff] %vm179, %v360
    %426 = vst.msk [vmem:[%s414 + $0x81] sm:$0xff] %vm179, %v361
    %427 = vst.msk [vmem:[%s414 + $0x91] sm:$0xff] %vm179, %v362
    %428 = vst.msk [vmem:[%s414 + $0x99] sm:$0xff] %vm179, %v363
    %429 = vst.msk [vmem:[%s414 + $0xa9] sm:$0xff] %vm179, %v364
    %430 = vst.msk [vmem:[%s414 + $0xb1] sm:$0xff] %vm179, %v365
    %431 = vst.msk [vmem:[%s414 + $0xc1] sm:$0xff] %vm179, %v366
    %432 = vst.msk [vmem:[%s414 + $0xc9] sm:$0xff] %vm179, %v367
    %433 = vst.msk [vmem:[%s414 + $0xd9] sm:$0xff] %vm179, %v368
    %434 = vst.msk [vmem:[%s414 + $0xe1] sm:$0xff] %vm179, %v369
    %435 = vst.msk [vmem:[%s414 + $0xf1] sm:$0xff] %vm179, %v370
    %436 = vst.msk [vmem:[%s414 + $0xf9] sm:$0xff] %vm179, %v371
    %437 = vst.msk [vmem:[%s414 + $0x109] sm:$0xff] %vm179, %v372
    %438 = vst.msk [vmem:[%s414 + $0x111] sm:$0xff] %vm179, %v373
    %439 = vst.msk [vmem:[%s414 + $0x121] sm:$0xff] %vm179, %v374
    %440 = vst.msk [vmem:[%s414 + $0x129] sm:$0xff] %vm179, %v375
    %441 = vst.msk [vmem:[%s414 + $0x139] sm:$0xff] %vm179, %v376
    %442 = vst.msk [vmem:[%s414 + $0x141] sm:$0xff] %vm179, %v377
    %443 = vst.msk [vmem:[%s414 + $0x151] sm:$0xff] %vm179, %v378
    %444 = vst.msk [vmem:[%s414 + $0x159] sm:$0xff] %vm179, %v379
    %445 = vst.msk [vmem:[%s414 + $0x169] sm:$0xff] %vm179, %v380
    %446 = vst.msk [vmem:[%s414 + $0x171] sm:$0xff] %vm179, %v381
    %447 = vst.msk [vmem:[%s414 + $0x1b1] sm:$0xff] %vm179, %v382
    %448 = vst.msk [vmem:[%s414 + $0x1b9] sm:$0xff] %vm179, %v383
    %449 = vst.msk [vmem:[%s414 + $0x1c9] sm:$0xff] %vm179, %v384
    %450 = vst.msk [vmem:[%s414 + $0x1d1] sm:$0xff] %vm179, %v385
    %451 = vst.msk [vmem:[%s414 + $0x1e1] sm:$0xff] %vm179, %v386
    %452 = vst.msk [vmem:[%s414 + $0x1e9] sm:$0xff] %vm179, %v387
    %453 = vst.msk [vmem:[%s414 + $0x1f9] sm:$0xff] %vm179, %v388
    %454 = vst.msk [vmem:[%s414 + $0x201] sm:$0xff] %vm179, %v389
    %455 = vst.msk [vmem:[%s414 + $0x211] sm:$0xff] %vm179, %v390
    %456 = vst.msk [vmem:[%s414 + $0x219] sm:$0xff] %vm179, %v391
    %457 = vst.msk [vmem:[%s414 + $0x229] sm:$0xff] %vm179, %v392
    %458 = vst.msk [vmem:[%s414 + $0x231] sm:$0xff] %vm179, %v393
    %459 = vst.msk [vmem:[%s414 + $0x241] sm:$0xff] %vm179, %v394
    %460 = vst.msk [vmem:[%s414 + $0x249] sm:$0xff] %vm179, %v395
    %461 = vst.msk [vmem:[%s414 + $0x259] sm:$0xff] %vm179, %v396
    %462 = vst.msk [vmem:[%s414 + $0x261] sm:$0xff] %vm179, %v397
    %463 = vst.msk [vmem:[%s414 + $0x271] sm:$0xff] %vm179, %v398
    %464 = vst.msk [vmem:[%s414 + $0x279] sm:$0xff] %vm179, %v399
    %465 = vst.msk [vmem:[%s414 + $0x289] sm:$0xff] %vm179, %v400
    %466 = vst.msk [vmem:[%s414 + $0x291] sm:$0xff] %vm179, %v401
    %467 = vst.msk [vmem:[%s414 + $0x2a1] sm:$0xff] %vm179, %v402
    %468 = vst.msk [vmem:[%s414 + $0x2a9] sm:$0xff] %vm179, %v403
    %469 = vst.msk [vmem:[%s414 + $0x2b9] sm:$0xff] %vm179, %v404
    %470 = vst.msk [vmem:[%s414 + $0x2c1] sm:$0xff] %vm179, %v405
    %471 = vst.msk [vmem:[%s414 + $0x2d1] sm:$0xff] %vm179, %v406
    %472 = vst.msk [vmem:[%s414 + $0x2d9] sm:$0xff] %vm179, %v407
    %473 = vst.msk [vmem:[%s414 + $0x2e9] sm:$0xff] %vm179, %v408
    %474 = vst.msk [vmem:[%s414 + $0x2f1] sm:$0xff] %vm179, %v409
    %475 = vst.msk [vmem:[%s414 + $0x301] sm:$0xff] %vm179, %v410
    %476 = vst.msk [vmem:[%s414 + $0x309] sm:$0xff] %vm179, %v411
    %477 = vst.msk [vmem:[%s414 + $0x319] sm:$0xff] %vm179, %v412
    %478 = vst.msk [vmem:[%s414 + $0x321] sm:$0xff] %vm179, %v413
    %v479 = vld [vmem:[#allocation11] sm:$0x1]
    %v480 = vld [vmem:[#allocation9] sm:$0x1]
    %v481 = vld [vmem:[#allocation2] sm:$0xff]
    %v482 = vld [vmem:[#allocation2 + $0x8] sm:$0xff]
    %v483 = vld [vmem:[#allocation2 + $0x18] sm:$0xff]
    %v484 = vld [vmem:[#allocation2 + $0x20] sm:$0xff]
    %v485 = vld [vmem:[#allocation2 + $0x30] sm:$0xff]
    %v486 = vld [vmem:[#allocation2 + $0x38] sm:$0xff]
    %v487 = vld [vmem:[#allocation2 + $0x48] sm:$0xff]
    %v488 = vld [vmem:[#allocation2 + $0x50] sm:$0xff]
    %v489 = vld [vmem:[#allocation2 + $0x1b0] sm:$0xff]
    %v490 = vld [vmem:[#allocation2 + $0x1b8] sm:$0xff]
    %v491 = vld [vmem:[#allocation2 + $0x1c8] sm:$0xff]
    %v492 = vld [vmem:[#allocation2 + $0x1d0] sm:$0xff]
    %v493 = vld [vmem:[#allocation2 + $0x1e0] sm:$0xff]
    %v494 = vld [vmem:[#allocation2 + $0x1e8] sm:$0xff]
    %v495 = vld [vmem:[#allocation2 + $0x1f8] sm:$0xff]
    %v496 = vld [vmem:[#allocation2 + $0x200] sm:$0xff]
    %498 = vset.pattern.permute.xlu0 0
    %499 = vperm.xlu0 %498, %v481
    %v500 = vpop.permute.xlu0 %499
    %503 = vset.pattern.permute.xlu0 0
    %504 = vperm.xlu0 %503, %v482
    %v505 = vpop.permute.xlu0 %504
    %508 = vset.pattern.permute.xlu0 0
    %509 = vperm.xlu0 %508, %v483
    %v510 = vpop.permute.xlu0 %509
    %513 = vset.pattern.permute.xlu0 0
    %514 = vperm.xlu0 %513, %v484
    %v515 = vpop.permute.xlu0 %514
    %518 = vset.pattern.permute.xlu0 0
    %519 = vperm.xlu0 %518, %v485
    %v520 = vpop.permute.xlu0 %519
    %523 = vset.pattern.permute.xlu0 0
    %524 = vperm.xlu0 %523, %v486
    %v525 = vpop.permute.xlu0 %524
    %528 = vset.pattern.permute.xlu0 0
    %529 = vperm.xlu0 %528, %v487
    %v530 = vpop.permute.xlu0 %529
    %533 = vset.pattern.permute.xlu0 0
    %534 = vperm.xlu0 %533, %v488
    %v535 = vpop.permute.xlu0 %534
    %538 = vset.pattern.permute.xlu0 0
    %539 = vperm.xlu0 %538, %v489
    %v540 = vpop.permute.xlu0 %539
    %543 = vset.pattern.permute.xlu0 0
    %544 = vperm.xlu0 %543, %v490
    %v545 = vpop.permute.xlu0 %544
    %548 = vset.pattern.permute.xlu0 0
    %549 = vperm.xlu0 %548, %v491
    %v550 = vpop.permute.xlu0 %549
    %553 = vset.pattern.permute.xlu0 0
    %554 = vperm.xlu0 %553, %v492
    %v555 = vpop.permute.xlu0 %554
    %558 = vset.pattern.permute.xlu0 0
    %559 = vperm.xlu0 %558, %v493
    %v560 = vpop.permute.xlu0 %559
    %563 = vset.pattern.permute.xlu0 0
    %564 = vperm.xlu0 %563, %v494
    %v565 = vpop.permute.xlu0 %564
    %568 = vset.pattern.permute.xlu0 0
    %569 = vperm.xlu0 %568, %v495
    %v570 = vpop.permute.xlu0 %569
    %573 = vset.pattern.permute.xlu0 0
    %574 = vperm.xlu0 %573, %v496
    %v575 = vpop.permute.xlu0 %574
    %v577 = vlaneseq
    %v578 = vshrl.u32 %v577, 7
    %v579 = vsub.s32 0, %v578
    %v580 = vrot.slane %v480, %v579
    %v581 = vmul.f32 %v500, %v580
    %v582 = vmul.f32 %v505, %v580
    %v583 = vmul.f32 %v510, %v580
    %v584 = vmul.f32 %v515, %v580
    %v585 = vmul.f32 %v520, %v580
    %v586 = vmul.f32 %v525, %v580
    %v587 = vmul.f32 %v530, %v580
    %v588 = vmul.f32 %v535, %v580
    %v589 = vmul.f32 %v540, %v580
    %v590 = vmul.f32 %v545, %v580
    %v591 = vmul.f32 %v550, %v580
    %v592 = vmul.f32 %v555, %v580
    %v593 = vmul.f32 %v560, %v580
    %v594 = vmul.f32 %v565, %v580
    %v595 = vmul.f32 %v570, %v580
    %v596 = vmul.f32 %v575, %v580
    %v597 = vadd.f32 %v581, 0.0
    %v598 = vadd.f32 %v582, 0.0
    %v599 = vadd.f32 %v583, 0.0
    %v600 = vadd.f32 %v584, 0.0
    %v601 = vadd.f32 %v585, 0.0
    %v602 = vadd.f32 %v586, 0.0
    %v603 = vadd.f32 %v587, 0.0
    %v604 = vadd.f32 %v588, 0.0
    %v605 = vadd.f32 %v589, 0.0
    %v606 = vadd.f32 %v590, 0.0
    %v607 = vadd.f32 %v591, 0.0
    %v608 = vadd.f32 %v592, 0.0
    %v609 = vadd.f32 %v593, 0.0
    %v610 = vadd.f32 %v594, 0.0
    %v611 = vadd.f32 %v595, 0.0
    %v612 = vadd.f32 %v596, 0.0
    %v613 = vld [vmem:[#allocation9 + $0x1] sm:$0x1]
    %v614 = vld [vmem:[#allocation2 + $0x1] sm:$0xff]
    %v615 = vld [vmem:[#allocation2 + $0x9] sm:$0xff]
    %v616 = vld [vmem:[#allocation2 + $0x19] sm:$0xff]
    %v617 = vld [vmem:[#allocation2 + $0x21] sm:$0xff]
    %v618 = vld [vmem:[#allocation2 + $0x31] sm:$0xff]
    %v619 = vld [vmem:[#allocation2 + $0x39] sm:$0xff]
    %v620 = vld [vmem:[#allocation2 + $0x49] sm:$0xff]
    %v621 = vld [vmem:[#allocation2 + $0x51] sm:$0xff]
    %v622 = vld [vmem:[#allocation2 + $0x1b1] sm:$0xff]
    %v623 = vld [vmem:[#allocation2 + $0x1b9] sm:$0xff]
    %v624 = vld [vmem:[#allocation2 + $0x1c9] sm:$0xff]
    %v625 = vld [vmem:[#allocation2 + $0x1d1] sm:$0xff]
    %v626 = vld [vmem:[#allocation2 + $0x1e1] sm:$0xff]
    %v627 = vld [vmem:[#allocation2 + $0x1e9] sm:$0xff]
    %v628 = vld [vmem:[#allocation2 + $0x1f9] sm:$0xff]
    %v629 = vld [vmem:[#allocation2 + $0x201] sm:$0xff]
    %631 = vset.pattern.permute.xlu0 0
    %632 = vperm.xlu0 %631, %v614
    %v633 = vpop.permute.xlu0 %632
    %636 = vset.pattern.permute.xlu0 0
    %637 = vperm.xlu0 %636, %v615
    %v638 = vpop.permute.xlu0 %637
    %641 = vset.pattern.permute.xlu0 0
    %642 = vperm.xlu0 %641, %v616
    %v643 = vpop.permute.xlu0 %642
    %646 = vset.pattern.permute.xlu0 0
    %647 = vperm.xlu0 %646, %v617
    %v648 = vpop.permute.xlu0 %647
    %651 = vset.pattern.permute.xlu0 0
    %652 = vperm.xlu0 %651, %v618
    %v653 = vpop.permute.xlu0 %652
    %656 = vset.pattern.permute.xlu0 0
    %657 = vperm.xlu0 %656, %v619
    %v658 = vpop.permute.xlu0 %657
    %661 = vset.pattern.permute.xlu0 0
    %662 = vperm.xlu0 %661, %v620
    %v663 = vpop.permute.xlu0 %662
    %666 = vset.pattern.permute.xlu0 0
    %667 = vperm.xlu0 %666, %v621
    %v668 = vpop.permute.xlu0 %667
    %671 = vset.pattern.permute.xlu0 0
    %672 = vperm.xlu0 %671, %v622
    %v673 = vpop.permute.xlu0 %672
    %676 = vset.pattern.permute.xlu0 0
    %677 = vperm.xlu0 %676, %v623
    %v678 = vpop.permute.xlu0 %677
    %681 = vset.pattern.permute.xlu0 0
    %682 = vperm.xlu0 %681, %v624
    %v683 = vpop.permute.xlu0 %682
    %686 = vset.pattern.permute.xlu0 0
    %687 = vperm.xlu0 %686, %v625
    %v688 = vpop.permute.xlu0 %687
    %691 = vset.pattern.permute.xlu0 0
    %692 = vperm.xlu0 %691, %v626
    %v693 = vpop.permute.xlu0 %692
    %696 = vset.pattern.permute.xlu0 0
    %697 = vperm.xlu0 %696, %v627
    %v698 = vpop.permute.xlu0 %697
    %701 = vset.pattern.permute.xlu0 0
    %702 = vperm.xlu0 %701, %v628
    %v703 = vpop.permute.xlu0 %702
    %706 = vset.pattern.permute.xlu0 0
    %707 = vperm.xlu0 %706, %v629
    %v708 = vpop.permute.xlu0 %707
    %v710 = vlaneseq
    %v711 = vshrl.u32 %v710, 7
    %v712 = vsub.s32 0, %v711
    %v713 = vrot.slane %v613, %v712
    %v714 = vmul.f32 %v633, %v713
    %v715 = vmul.f32 %v638, %v713
    %v716 = vmul.f32 %v643, %v713
    %v717 = vmul.f32 %v648, %v713
    %v718 = vmul.f32 %v653, %v713
    %v719 = vmul.f32 %v658, %v713
    %v720 = vmul.f32 %v663, %v713
    %v721 = vmul.f32 %v668, %v713
    %v722 = vmul.f32 %v673, %v713
    %v723 = vmul.f32 %v678, %v713
    %v724 = vmul.f32 %v683, %v713
    %v725 = vmul.f32 %v688, %v713
    %v726 = vmul.f32 %v693, %v713
    %v727 = vmul.f32 %v698, %v713
    %v728 = vmul.f32 %v703, %v713
    %v729 = vmul.f32 %v708, %v713
    %v730 = vadd.f32 %v597, %v714
    %v731 = vadd.f32 %v598, %v715
    %v732 = vadd.f32 %v599, %v716
    %v733 = vadd.f32 %v600, %v717
    %v734 = vadd.f32 %v601, %v718
    %v735 = vadd.f32 %v602, %v719
    %v736 = vadd.f32 %v603, %v720
    %v737 = vadd.f32 %v604, %v721
    %v738 = vadd.f32 %v605, %v722
    %v739 = vadd.f32 %v606, %v723
    %v740 = vadd.f32 %v607, %v724
    %v741 = vadd.f32 %v608, %v725
    %v742 = vadd.f32 %v609, %v726
    %v743 = vadd.f32 %v610, %v727
    %v744 = vadd.f32 %v611, %v728
    %v745 = vadd.f32 %v612, %v729
    %v746 = vld [vmem:[#allocation9 + $0x2] sm:$0x1]
    %v747 = vld [vmem:[#allocation2 + $0x2] sm:$0xff]
    %v748 = vld [vmem:[#allocation2 + $0xa] sm:$0xff]
    %v749 = vld [vmem:[#allocation2 + $0x1a] sm:$0xff]
    %v750 = vld [vmem:[#allocation2 + $0x22] sm:$0xff]
    %v751 = vld [vmem:[#allocation2 + $0x32] sm:$0xff]
    %v752 = vld [vmem:[#allocation2 + $0x3a] sm:$0xff]
    %v753 = vld [vmem:[#allocation2 + $0x4a] sm:$0xff]
    %v754 = vld [vmem:[#allocation2 + $0x52] sm:$0xff]
    %v755 = vld [vmem:[#allocation2 + $0x1b2] sm:$0xff]
    %v756 = vld [vmem:[#allocation2 + $0x1ba] sm:$0xff]
    %v757 = vld [vmem:[#allocation2 + $0x1ca] sm:$0xff]
    %v758 = vld [vmem:[#allocation2 + $0x1d2] sm:$0xff]
    %v759 = vld [vmem:[#allocation2 + $0x1e2] sm:$0xff]
    %v760 = vld [vmem:[#allocation2 + $0x1ea] sm:$0xff]
    %v761 = vld [vmem:[#allocation2 + $0x1fa] sm:$0xff]
    %v762 = vld [vmem:[#allocation2 + $0x202] sm:$0xff]
    %764 = vset.pattern.permute.xlu0 0
    %765 = vperm.xlu0 %764, %v747
    %v766 = vpop.permute.xlu0 %765
    %769 = vset.pattern.permute.xlu0 0
    %770 = vperm.xlu0 %769, %v748
    %v771 = vpop.permute.xlu0 %770
    %774 = vset.pattern.permute.xlu0 0
    %775 = vperm.xlu0 %774, %v749
    %v776 = vpop.permute.xlu0 %775
    %779 = vset.pattern.permute.xlu0 0
    %780 = vperm.xlu0 %779, %v750
    %v781 = vpop.permute.xlu0 %780
    %784 = vset.pattern.permute.xlu0 0
    %785 = vperm.xlu0 %784, %v751
    %v786 = vpop.permute.xlu0 %785
    %789 = vset.pattern.permute.xlu0 0
    %790 = vperm.xlu0 %789, %v752
    %v791 = vpop.permute.xlu0 %790
    %794 = vset.pattern.permute.xlu0 0
    %795 = vperm.xlu0 %794, %v753
    %v796 = vpop.permute.xlu0 %795
    %799 = vset.pattern.permute.xlu0 0
    %800 = vperm.xlu0 %799, %v754
    %v801 = vpop.permute.xlu0 %800
    %804 = vset.pattern.permute.xlu0 0
    %805 = vperm.xlu0 %804, %v755
    %v806 = vpop.permute.xlu0 %805
    %809 = vset.pattern.permute.xlu0 0
    %810 = vperm.xlu0 %809, %v756
    %v811 = vpop.permute.xlu0 %810
    %814 = vset.pattern.permute.xlu0 0
    %815 = vperm.xlu0 %814, %v757
    %v816 = vpop.permute.xlu0 %815
    %819 = vset.pattern.permute.xlu0 0
    %820 = vperm.xlu0 %819, %v758
    %v821 = vpop.permute.xlu0 %820
    %824 = vset.pattern.permute.xlu0 0
    %825 = vperm.xlu0 %824, %v759
    %v826 = vpop.permute.xlu0 %825
    %829 = vset.pattern.permute.xlu0 0
    %830 = vperm.xlu0 %829, %v760
    %v831 = vpop.permute.xlu0 %830
    %834 = vset.pattern.permute.xlu0 0
    %835 = vperm.xlu0 %834, %v761
    %v836 = vpop.permute.xlu0 %835
    %839 = vset.pattern.permute.xlu0 0
    %840 = vperm.xlu0 %839, %v762
    %v841 = vpop.permute.xlu0 %840
    %v843 = vlaneseq
    %v844 = vshrl.u32 %v843, 7
    %v845 = vsub.s32 0, %v844
    %v846 = vrot.slane %v746, %v845
    %v847 = vmul.f32 %v766, %v846
    %v848 = vmul.f32 %v771, %v846
    %v849 = vmul.f32 %v776, %v846
    %v850 = vmul.f32 %v781, %v846
    %v851 = vmul.f32 %v786, %v846
    %v852 = vmul.f32 %v791, %v846
    %v853 = vmul.f32 %v796, %v846
    %v854 = vmul.f32 %v801, %v846
    %v855 = vmul.f32 %v806, %v846
    %v856 = vmul.f32 %v811, %v846
    %v857 = vmul.f32 %v816, %v846
    %v858 = vmul.f32 %v821, %v846
    %v859 = vmul.f32 %v826, %v846
    %v860 = vmul.f32 %v831, %v846
    %v861 = vmul.f32 %v836, %v846
    %v862 = vmul.f32 %v841, %v846
    %v863 = vadd.f32 %v730, %v847
    %v864 = vadd.f32 %v731, %v848
    %v865 = vadd.f32 %v732, %v849
    %v866 = vadd.f32 %v733, %v850
    %v867 = vadd.f32 %v734, %v851
    %v868 = vadd.f32 %v735, %v852
    %v869 = vadd.f32 %v736, %v853
    %v870 = vadd.f32 %v737, %v854
    %v871 = vadd.f32 %v738, %v855
    %v872 = vadd.f32 %v739, %v856
    %v873 = vadd.f32 %v740, %v857
    %v874 = vadd.f32 %v741, %v858
    %v875 = vadd.f32 %v742, %v859
    %v876 = vadd.f32 %v743, %v860
    %v877 = vadd.f32 %v744, %v861
    %v878 = vadd.f32 %v745, %v862
    %v879 = vld [vmem:[#allocation9 + $0x3] sm:$0x1]
    %v880 = vld [vmem:[%s414] sm:$0xff]
    %v881 = vld [vmem:[%s414 + $0x8] sm:$0xff]
    %v882 = vld [vmem:[%s414 + $0x18] sm:$0xff]
    %v883 = vld [vmem:[%s414 + $0x20] sm:$0xff]
    %v884 = vld [vmem:[%s414 + $0x30] sm:$0xff]
    %v885 = vld [vmem:[%s414 + $0x38] sm:$0xff]
    %v886 = vld [vmem:[%s414 + $0x48] sm:$0xff]
    %v887 = vld [vmem:[%s414 + $0x50] sm:$0xff]
    %v888 = vld [vmem:[%s414 + $0x1b0] sm:$0xff]
    %v889 = vld [vmem:[%s414 + $0x1b8] sm:$0xff]
    %v890 = vld [vmem:[%s414 + $0x1c8] sm:$0xff]
    %v891 = vld [vmem:[%s414 + $0x1d0] sm:$0xff]
    %v892 = vld [vmem:[%s414 + $0x1e0] sm:$0xff]
    %v893 = vld [vmem:[%s414 + $0x1e8] sm:$0xff]
    %v894 = vld [vmem:[%s414 + $0x1f8] sm:$0xff]
    %v895 = vld [vmem:[%s414 + $0x200] sm:$0xff]
    %897 = vset.pattern.permute.xlu0 0
    %898 = vperm.xlu0 %897, %v880
    %v899 = vpop.permute.xlu0 %898
    %902 = vset.pattern.permute.xlu0 0
    %903 = vperm.xlu0 %902, %v881
    %v904 = vpop.permute.xlu0 %903
    %907 = vset.pattern.permute.xlu0 0
    %908 = vperm.xlu0 %907, %v882
    %v909 = vpop.permute.xlu0 %908
    %912 = vset.pattern.permute.xlu0 0
    %913 = vperm.xlu0 %912, %v883
    %v914 = vpop.permute.xlu0 %913
    %917 = vset.pattern.permute.xlu0 0
    %918 = vperm.xlu0 %917, %v884
    %v919 = vpop.permute.xlu0 %918
    %922 = vset.pattern.permute.xlu0 0
    %923 = vperm.xlu0 %922, %v885
    %v924 = vpop.permute.xlu0 %923
    %927 = vset.pattern.permute.xlu0 0
    %928 = vperm.xlu0 %927, %v886
    %v929 = vpop.permute.xlu0 %928
    %932 = vset.pattern.permute.xlu0 0
    %933 = vperm.xlu0 %932, %v887
    %v934 = vpop.permute.xlu0 %933
    %937 = vset.pattern.permute.xlu0 0
    %938 = vperm.xlu0 %937, %v888
    %v939 = vpop.permute.xlu0 %938
    %942 = vset.pattern.permute.xlu0 0
    %943 = vperm.xlu0 %942, %v889
    %v944 = vpop.permute.xlu0 %943
    %947 = vset.pattern.permute.xlu0 0
    %948 = vperm.xlu0 %947, %v890
    %v949 = vpop.permute.xlu0 %948
    %952 = vset.pattern.permute.xlu0 0
    %953 = vperm.xlu0 %952, %v891
    %v954 = vpop.permute.xlu0 %953
    %957 = vset.pattern.permute.xlu0 0
    %958 = vperm.xlu0 %957, %v892
    %v959 = vpop.permute.xlu0 %958
    %962 = vset.pattern.permute.xlu0 0
    %963 = vperm.xlu0 %962, %v893
    %v964 = vpop.permute.xlu0 %963
    %967 = vset.pattern.permute.xlu0 0
    %968 = vperm.xlu0 %967, %v894
    %v969 = vpop.permute.xlu0 %968
    %972 = vset.pattern.permute.xlu0 0
    %973 = vperm.xlu0 %972, %v895
    %v974 = vpop.permute.xlu0 %973
    %v976 = vlaneseq
    %v977 = vshrl.u32 %v976, 7
    %v978 = vsub.s32 0, %v977
    %v979 = vrot.slane %v879, %v978
    %v980 = vmul.f32 %v899, %v979
    %v981 = vmul.f32 %v904, %v979
    %v982 = vmul.f32 %v909, %v979
    %v983 = vmul.f32 %v914, %v979
    %v984 = vmul.f32 %v919, %v979
    %v985 = vmul.f32 %v924, %v979
    %v986 = vmul.f32 %v929, %v979
    %v987 = vmul.f32 %v934, %v979
    %v988 = vmul.f32 %v939, %v979
    %v989 = vmul.f32 %v944, %v979
    %v990 = vmul.f32 %v949, %v979
    %v991 = vmul.f32 %v954, %v979
    %v992 = vmul.f32 %v959, %v979
    %v993 = vmul.f32 %v964, %v979
    %v994 = vmul.f32 %v969, %v979
    %v995 = vmul.f32 %v974, %v979
    %v996 = vadd.f32 %v863, %v980
    %v997 = vadd.f32 %v864, %v981
    %v998 = vadd.f32 %v865, %v982
    %v999 = vadd.f32 %v866, %v983
    %v1000 = vadd.f32 %v867, %v984
    %v1001 = vadd.f32 %v868, %v985
    %v1002 = vadd.f32 %v869, %v986
    %v1003 = vadd.f32 %v870, %v987
    %v1004 = vadd.f32 %v871, %v988
    %v1005 = vadd.f32 %v872, %v989
    %v1006 = vadd.f32 %v873, %v990
    %v1007 = vadd.f32 %v874, %v991
    %v1008 = vadd.f32 %v875, %v992
    %v1009 = vadd.f32 %v876, %v993
    %v1010 = vadd.f32 %v877, %v994
    %v1011 = vadd.f32 %v878, %v995
    %v1012 = vld [vmem:[#allocation9 + $0x4] sm:$0x1]
    %v1013 = vld [vmem:[%s414 + $0x1] sm:$0xff]
    %v1014 = vld [vmem:[%s414 + $0x9] sm:$0xff]
    %v1015 = vld [vmem:[%s414 + $0x19] sm:$0xff]
    %v1016 = vld [vmem:[%s414 + $0x21] sm:$0xff]
    %v1017 = vld [vmem:[%s414 + $0x31] sm:$0xff]
    %v1018 = vld [vmem:[%s414 + $0x39] sm:$0xff]
    %v1019 = vld [vmem:[%s414 + $0x49] sm:$0xff]
    %v1020 = vld [vmem:[%s414 + $0x51] sm:$0xff]
    %v1021 = vld [vmem:[%s414 + $0x1b1] sm:$0xff]
    %v1022 = vld [vmem:[%s414 + $0x1b9] sm:$0xff]
    %v1023 = vld [vmem:[%s414 + $0x1c9] sm:$0xff]
    %v1024 = vld [vmem:[%s414 + $0x1d1] sm:$0xff]
    %v1025 = vld [vmem:[%s414 + $0x1e1] sm:$0xff]
    %v1026 = vld [vmem:[%s414 + $0x1e9] sm:$0xff]
    %v1027 = vld [vmem:[%s414 + $0x1f9] sm:$0xff]
    %v1028 = vld [vmem:[%s414 + $0x201] sm:$0xff]
    %1030 = vset.pattern.permute.xlu0 0
    %1031 = vperm.xlu0 %1030, %v1013
    %v1032 = vpop.permute.xlu0 %1031
    %1035 = vset.pattern.permute.xlu0 0
    %1036 = vperm.xlu0 %1035, %v1014
    %v1037 = vpop.permute.xlu0 %1036
    %1040 = vset.pattern.permute.xlu0 0
    %1041 = vperm.xlu0 %1040, %v1015
    %v1042 = vpop.permute.xlu0 %1041
    %1045 = vset.pattern.permute.xlu0 0
    %1046 = vperm.xlu0 %1045, %v1016
    %v1047 = vpop.permute.xlu0 %1046
    %1050 = vset.pattern.permute.xlu0 0
    %1051 = vperm.xlu0 %1050, %v1017
    %v1052 = vpop.permute.xlu0 %1051
    %1055 = vset.pattern.permute.xlu0 0
    %1056 = vperm.xlu0 %1055, %v1018
    %v1057 = vpop.permute.xlu0 %1056
    %1060 = vset.pattern.permute.xlu0 0
    %1061 = vperm.xlu0 %1060, %v1019
    %v1062 = vpop.permute.xlu0 %1061
    %1065 = vset.pattern.permute.xlu0 0
    %1066 = vperm.xlu0 %1065, %v1020
    %v1067 = vpop.permute.xlu0 %1066
    %1070 = vset.pattern.permute.xlu0 0
    %1071 = vperm.xlu0 %1070, %v1021
    %v1072 = vpop.permute.xlu0 %1071
    %1075 = vset.pattern.permute.xlu0 0
    %1076 = vperm.xlu0 %1075, %v1022
    %v1077 = vpop.permute.xlu0 %1076
    %1080 = vset.pattern.permute.xlu0 0
    %1081 = vperm.xlu0 %1080, %v1023
    %v1082 = vpop.permute.xlu0 %1081
    %1085 = vset.pattern.permute.xlu0 0
    %1086 = vperm.xlu0 %1085, %v1024
    %v1087 = vpop.permute.xlu0 %1086
    %1090 = vset.pattern.permute.xlu0 0
    %1091 = vperm.xlu0 %1090, %v1025
    %v1092 = vpop.permute.xlu0 %1091
    %1095 = vset.pattern.permute.xlu0 0
    %1096 = vperm.xlu0 %1095, %v1026
    %v1097 = vpop.permute.xlu0 %1096
    %1100 = vset.pattern.permute.xlu0 0
    %1101 = vperm.xlu0 %1100, %v1027
    %v1102 = vpop.permute.xlu0 %1101
    %1105 = vset.pattern.permute.xlu0 0
    %1106 = vperm.xlu0 %1105, %v1028
    %v1107 = vpop.permute.xlu0 %1106
    %v1109 = vlaneseq
    %v1110 = vshrl.u32 %v1109, 7
    %v1111 = vsub.s32 0, %v1110
    %v1112 = vrot.slane %v1012, %v1111
    %v1113 = vmul.f32 %v1032, %v1112
    %v1114 = vmul.f32 %v1037, %v1112
    %v1115 = vmul.f32 %v1042, %v1112
    %v1116 = vmul.f32 %v1047, %v1112
    %v1117 = vmul.f32 %v1052, %v1112
    %v1118 = vmul.f32 %v1057, %v1112
    %v1119 = vmul.f32 %v1062, %v1112
    %v1120 = vmul.f32 %v1067, %v1112
    %v1121 = vmul.f32 %v1072, %v1112
    %v1122 = vmul.f32 %v1077, %v1112
    %v1123 = vmul.f32 %v1082, %v1112
    %v1124 = vmul.f32 %v1087, %v1112
    %v1125 = vmul.f32 %v1092, %v1112
    %v1126 = vmul.f32 %v1097, %v1112
    %v1127 = vmul.f32 %v1102, %v1112
    %v1128 = vmul.f32 %v1107, %v1112
    %v1129 = vadd.f32 %v996, %v1113
    %v1130 = vadd.f32 %v997, %v1114
    %v1131 = vadd.f32 %v998, %v1115
    %v1132 = vadd.f32 %v999, %v1116
    %v1133 = vadd.f32 %v1000, %v1117
    %v1134 = vadd.f32 %v1001, %v1118
    %v1135 = vadd.f32 %v1002, %v1119
    %v1136 = vadd.f32 %v1003, %v1120
    %v1137 = vadd.f32 %v1004, %v1121
    %v1138 = vadd.f32 %v1005, %v1122
    %v1139 = vadd.f32 %v1006, %v1123
    %v1140 = vadd.f32 %v1007, %v1124
    %v1141 = vadd.f32 %v1008, %v1125
    %v1142 = vadd.f32 %v1009, %v1126
    %v1143 = vadd.f32 %v1010, %v1127
    %v1144 = vadd.f32 %v1011, %v1128
    %v1145 = vld [vmem:[#allocation9 + $0x5] sm:$0x1]
    %v1146 = vld [vmem:[%s414 + $0x2] sm:$0xff]
    %v1147 = vld [vmem:[%s414 + $0xa] sm:$0xff]
    %v1148 = vld [vmem:[%s414 + $0x1a] sm:$0xff]
    %v1149 = vld [vmem:[%s414 + $0x22] sm:$0xff]
    %v1150 = vld [vmem:[%s414 + $0x32] sm:$0xff]
    %v1151 = vld [vmem:[%s414 + $0x3a] sm:$0xff]
    %v1152 = vld [vmem:[%s414 + $0x4a] sm:$0xff]
    %v1153 = vld [vmem:[%s414 + $0x52] sm:$0xff]
    %v1154 = vld [vmem:[%s414 + $0x1b2] sm:$0xff]
    %v1155 = vld [vmem:[%s414 + $0x1ba] sm:$0xff]
    %v1156 = vld [vmem:[%s414 + $0x1ca] sm:$0xff]
    %v1157 = vld [vmem:[%s414 + $0x1d2] sm:$0xff]
    %v1158 = vld [vmem:[%s414 + $0x1e2] sm:$0xff]
    %v1159 = vld [vmem:[%s414 + $0x1ea] sm:$0xff]
    %v1160 = vld [vmem:[%s414 + $0x1fa] sm:$0xff]
    %v1161 = vld [vmem:[%s414 + $0x202] sm:$0xff]
    %1163 = vset.pattern.permute.xlu0 0
    %1164 = vperm.xlu0 %1163, %v1146
    %v1165 = vpop.permute.xlu0 %1164
    %1168 = vset.pattern.permute.xlu0 0
    %1169 = vperm.xlu0 %1168, %v1147
    %v1170 = vpop.permute.xlu0 %1169
    %1173 = vset.pattern.permute.xlu0 0
    %1174 = vperm.xlu0 %1173, %v1148
    %v1175 = vpop.permute.xlu0 %1174
    %1178 = vset.pattern.permute.xlu0 0
    %1179 = vperm.xlu0 %1178, %v1149
    %v1180 = vpop.permute.xlu0 %1179
    %1183 = vset.pattern.permute.xlu0 0
    %1184 = vperm.xlu0 %1183, %v1150
    %v1185 = vpop.permute.xlu0 %1184
    %1188 = vset.pattern.permute.xlu0 0
    %1189 = vperm.xlu0 %1188, %v1151
    %v1190 = vpop.permute.xlu0 %1189
    %1193 = vset.pattern.permute.xlu0 0
    %1194 = vperm.xlu0 %1193, %v1152
    %v1195 = vpop.permute.xlu0 %1194
    %1198 = vset.pattern.permute.xlu0 0
    %1199 = vperm.xlu0 %1198, %v1153
    %v1200 = vpop.permute.xlu0 %1199
    %1203 = vset.pattern.permute.xlu0 0
    %1204 = vperm.xlu0 %1203, %v1154
    %v1205 = vpop.permute.xlu0 %1204
    %1208 = vset.pattern.permute.xlu0 0
    %1209 = vperm.xlu0 %1208, %v1155
    %v1210 = vpop.permute.xlu0 %1209
    %1213 = vset.pattern.permute.xlu0 0
    %1214 = vperm.xlu0 %1213, %v1156
    %v1215 = vpop.permute.xlu0 %1214
    %1218 = vset.pattern.permute.xlu0 0
    %1219 = vperm.xlu0 %1218, %v1157
    %v1220 = vpop.permute.xlu0 %1219
    %1223 = vset.pattern.permute.xlu0 0
    %1224 = vperm.xlu0 %1223, %v1158
    %v1225 = vpop.permute.xlu0 %1224
    %1228 = vset.pattern.permute.xlu0 0
    %1229 = vperm.xlu0 %1228, %v1159
    %v1230 = vpop.permute.xlu0 %1229
    %1233 = vset.pattern.permute.xlu0 0
    %1234 = vperm.xlu0 %1233, %v1160
    %v1235 = vpop.permute.xlu0 %1234
    %1238 = vset.pattern.permute.xlu0 0
    %1239 = vperm.xlu0 %1238, %v1161
    %v1240 = vpop.permute.xlu0 %1239
    %v1242 = vlaneseq
    %v1243 = vshrl.u32 %v1242, 7
    %v1244 = vsub.s32 0, %v1243
    %v1245 = vrot.slane %v1145, %v1244
    %v1246 = vmul.f32 %v1165, %v1245
    %v1247 = vmul.f32 %v1170, %v1245
    %v1248 = vmul.f32 %v1175, %v1245
    %v1249 = vmul.f32 %v1180, %v1245
    %v1250 = vmul.f32 %v1185, %v1245
    %v1251 = vmul.f32 %v1190, %v1245
    %v1252 = vmul.f32 %v1195, %v1245
    %v1253 = vmul.f32 %v1200, %v1245
    %v1254 = vmul.f32 %v1205, %v1245
    %v1255 = vmul.f32 %v1210, %v1245
    %v1256 = vmul.f32 %v1215, %v1245
    %v1257 = vmul.f32 %v1220, %v1245
    %v1258 = vmul.f32 %v1225, %v1245
    %v1259 = vmul.f32 %v1230, %v1245
    %v1260 = vmul.f32 %v1235, %v1245
    %v1261 = vmul.f32 %v1240, %v1245
    %v1262 = vadd.f32 %v1129, %v1246
    %v1263 = vadd.f32 %v1130, %v1247
    %v1264 = vadd.f32 %v1131, %v1248
    %v1265 = vadd.f32 %v1132, %v1249
    %v1266 = vadd.f32 %v1133, %v1250
    %v1267 = vadd.f32 %v1134, %v1251
    %v1268 = vadd.f32 %v1135, %v1252
    %v1269 = vadd.f32 %v1136, %v1253
    %v1270 = vadd.f32 %v1137, %v1254
    %v1271 = vadd.f32 %v1138, %v1255
    %v1272 = vadd.f32 %v1139, %v1256
    %v1273 = vadd.f32 %v1140, %v1257
    %v1274 = vadd.f32 %v1141, %v1258
    %v1275 = vadd.f32 %v1142, %v1259
    %v1276 = vadd.f32 %v1143, %v1260
    %v1277 = vadd.f32 %v1144, %v1261
    %v1278 = vld [vmem:[#allocation9 + $0x6] sm:$0x1]
    %s1279 = scalar_lea.vmem [#allocation2], 48
    %v1280 = vld [vmem:[%s1279] sm:$0xff]
    %v1281 = vld [vmem:[%s1279 + $0x8] sm:$0xff]
    %v1282 = vld [vmem:[%s1279 + $0x18] sm:$0xff]
    %v1283 = vld [vmem:[%s1279 + $0x20] sm:$0xff]
    %v1284 = vld [vmem:[%s1279 + $0x30] sm:$0xff]
    %v1285 = vld [vmem:[%s1279 + $0x38] sm:$0xff]
    %v1286 = vld [vmem:[%s1279 + $0x48] sm:$0xff]
    %v1287 = vld [vmem:[%s1279 + $0x50] sm:$0xff]
    %v1288 = vld [vmem:[%s1279 + $0x1b0] sm:$0xff]
    %v1289 = vld [vmem:[%s1279 + $0x1b8] sm:$0xff]
    %v1290 = vld [vmem:[%s1279 + $0x1c8] sm:$0xff]
    %v1291 = vld [vmem:[%s1279 + $0x1d0] sm:$0xff]
    %v1292 = vld [vmem:[%s1279 + $0x1e0] sm:$0xff]
    %v1293 = vld [vmem:[%s1279 + $0x1e8] sm:$0xff]
    %v1294 = vld [vmem:[%s1279 + $0x1f8] sm:$0xff]
    %v1295 = vld [vmem:[%s1279 + $0x200] sm:$0xff]
    %1297 = vset.pattern.permute.xlu0 0
    %1298 = vperm.xlu0 %1297, %v1280
    %v1299 = vpop.permute.xlu0 %1298
    %1302 = vset.pattern.permute.xlu0 0
    %1303 = vperm.xlu0 %1302, %v1281
    %v1304 = vpop.permute.xlu0 %1303
    %1307 = vset.pattern.permute.xlu0 0
    %1308 = vperm.xlu0 %1307, %v1282
    %v1309 = vpop.permute.xlu0 %1308
    %1312 = vset.pattern.permute.xlu0 0
    %1313 = vperm.xlu0 %1312, %v1283
    %v1314 = vpop.permute.xlu0 %1313
    %1317 = vset.pattern.permute.xlu0 0
    %1318 = vperm.xlu0 %1317, %v1284
    %v1319 = vpop.permute.xlu0 %1318
    %1322 = vset.pattern.permute.xlu0 0
    %1323 = vperm.xlu0 %1322, %v1285
    %v1324 = vpop.permute.xlu0 %1323
    %1327 = vset.pattern.permute.xlu0 0
    %1328 = vperm.xlu0 %1327, %v1286
    %v1329 = vpop.permute.xlu0 %1328
    %1332 = vset.pattern.permute.xlu0 0
    %1333 = vperm.xlu0 %1332, %v1287
    %v1334 = vpop.permute.xlu0 %1333
    %1337 = vset.pattern.permute.xlu0 0
    %1338 = vperm.xlu0 %1337, %v1288
    %v1339 = vpop.permute.xlu0 %1338
    %1342 = vset.pattern.permute.xlu0 0
    %1343 = vperm.xlu0 %1342, %v1289
    %v1344 = vpop.permute.xlu0 %1343
    %1347 = vset.pattern.permute.xlu0 0
    %1348 = vperm.xlu0 %1347, %v1290
    %v1349 = vpop.permute.xlu0 %1348
    %1352 = vset.pattern.permute.xlu0 0
    %1353 = vperm.xlu0 %1352, %v1291
    %v1354 = vpop.permute.xlu0 %1353
    %1357 = vset.pattern.permute.xlu0 0
    %1358 = vperm.xlu0 %1357, %v1292
    %v1359 = vpop.permute.xlu0 %1358
    %1362 = vset.pattern.permute.xlu0 0
    %1363 = vperm.xlu0 %1362, %v1293
    %v1364 = vpop.permute.xlu0 %1363
    %1367 = vset.pattern.permute.xlu0 0
    %1368 = vperm.xlu0 %1367, %v1294
    %v1369 = vpop.permute.xlu0 %1368
    %1372 = vset.pattern.permute.xlu0 0
    %1373 = vperm.xlu0 %1372, %v1295
    %v1374 = vpop.permute.xlu0 %1373
    %v1376 = vlaneseq
    %v1377 = vshrl.u32 %v1376, 7
    %v1378 = vsub.s32 0, %v1377
    %v1379 = vrot.slane %v1278, %v1378
    %v1380 = vmul.f32 %v1299, %v1379
    %v1381 = vmul.f32 %v1304, %v1379
    %v1382 = vmul.f32 %v1309, %v1379
    %v1383 = vmul.f32 %v1314, %v1379
    %v1384 = vmul.f32 %v1319, %v1379
    %v1385 = vmul.f32 %v1324, %v1379
    %v1386 = vmul.f32 %v1329, %v1379
    %v1387 = vmul.f32 %v1334, %v1379
    %v1388 = vmul.f32 %v1339, %v1379
    %v1389 = vmul.f32 %v1344, %v1379
    %v1390 = vmul.f32 %v1349, %v1379
    %v1391 = vmul.f32 %v1354, %v1379
    %v1392 = vmul.f32 %v1359, %v1379
    %v1393 = vmul.f32 %v1364, %v1379
    %v1394 = vmul.f32 %v1369, %v1379
    %v1395 = vmul.f32 %v1374, %v1379
    %v1396 = vadd.f32 %v1262, %v1380
    %v1397 = vadd.f32 %v1263, %v1381
    %v1398 = vadd.f32 %v1264, %v1382
    %v1399 = vadd.f32 %v1265, %v1383
    %v1400 = vadd.f32 %v1266, %v1384
    %v1401 = vadd.f32 %v1267, %v1385
    %v1402 = vadd.f32 %v1268, %v1386
    %v1403 = vadd.f32 %v1269, %v1387
    %v1404 = vadd.f32 %v1270, %v1388
    %v1405 = vadd.f32 %v1271, %v1389
    %v1406 = vadd.f32 %v1272, %v1390
    %v1407 = vadd.f32 %v1273, %v1391
    %v1408 = vadd.f32 %v1274, %v1392
    %v1409 = vadd.f32 %v1275, %v1393
    %v1410 = vadd.f32 %v1276, %v1394
    %v1411 = vadd.f32 %v1277, %v1395
    %v1412 = vld [vmem:[#allocation9 + $0x7] sm:$0x1]
    %v1413 = vld [vmem:[%s1279 + $0x1] sm:$0xff]
    %v1414 = vld [vmem:[%s1279 + $0x9] sm:$0xff]
    %v1415 = vld [vmem:[%s1279 + $0x19] sm:$0xff]
    %v1416 = vld [vmem:[%s1279 + $0x21] sm:$0xff]
    %v1417 = vld [vmem:[%s1279 + $0x31] sm:$0xff]
    %v1418 = vld [vmem:[%s1279 + $0x39] sm:$0xff]
    %v1419 = vld [vmem:[%s1279 + $0x49] sm:$0xff]
    %v1420 = vld [vmem:[%s1279 + $0x51] sm:$0xff]
    %v1421 = vld [vmem:[%s1279 + $0x1b1] sm:$0xff]
    %v1422 = vld [vmem:[%s1279 + $0x1b9] sm:$0xff]
    %v1423 = vld [vmem:[%s1279 + $0x1c9] sm:$0xff]
    %v1424 = vld [vmem:[%s1279 + $0x1d1] sm:$0xff]
    %v1425 = vld [vmem:[%s1279 + $0x1e1] sm:$0xff]
    %v1426 = vld [vmem:[%s1279 + $0x1e9] sm:$0xff]
    %v1427 = vld [vmem:[%s1279 + $0x1f9] sm:$0xff]
    %v1428 = vld [vmem:[%s1279 + $0x201] sm:$0xff]
    %1430 = vset.pattern.permute.xlu0 0
    %1431 = vperm.xlu0 %1430, %v1413
    %v1432 = vpop.permute.xlu0 %1431
    %1435 = vset.pattern.permute.xlu0 0
    %1436 = vperm.xlu0 %1435, %v1414
    %v1437 = vpop.permute.xlu0 %1436
    %1440 = vset.pattern.permute.xlu0 0
    %1441 = vperm.xlu0 %1440, %v1415
    %v1442 = vpop.permute.xlu0 %1441
    %1445 = vset.pattern.permute.xlu0 0
    %1446 = vperm.xlu0 %1445, %v1416
    %v1447 = vpop.permute.xlu0 %1446
    %1450 = vset.pattern.permute.xlu0 0
    %1451 = vperm.xlu0 %1450, %v1417
    %v1452 = vpop.permute.xlu0 %1451
    %1455 = vset.pattern.permute.xlu0 0
    %1456 = vperm.xlu0 %1455, %v1418
    %v1457 = vpop.permute.xlu0 %1456
    %1460 = vset.pattern.permute.xlu0 0
    %1461 = vperm.xlu0 %1460, %v1419
    %v1462 = vpop.permute.xlu0 %1461
    %1465 = vset.pattern.permute.xlu0 0
    %1466 = vperm.xlu0 %1465, %v1420
    %v1467 = vpop.permute.xlu0 %1466
    %1470 = vset.pattern.permute.xlu0 0
    %1471 = vperm.xlu0 %1470, %v1421
    %v1472 = vpop.permute.xlu0 %1471
    %1475 = vset.pattern.permute.xlu0 0
    %1476 = vperm.xlu0 %1475, %v1422
    %v1477 = vpop.permute.xlu0 %1476
    %1480 = vset.pattern.permute.xlu0 0
    %1481 = vperm.xlu0 %1480, %v1423
    %v1482 = vpop.permute.xlu0 %1481
    %1485 = vset.pattern.permute.xlu0 0
    %1486 = vperm.xlu0 %1485, %v1424
    %v1487 = vpop.permute.xlu0 %1486
    %1490 = vset.pattern.permute.xlu0 0
    %1491 = vperm.xlu0 %1490, %v1425
    %v1492 = vpop.permute.xlu0 %1491
    %1495 = vset.pattern.permute.xlu0 0
    %1496 = vperm.xlu0 %1495, %v1426
    %v1497 = vpop.permute.xlu0 %1496
    %1500 = vset.pattern.permute.xlu0 0
    %1501 = vperm.xlu0 %1500, %v1427
    %v1502 = vpop.permute.xlu0 %1501
    %1505 = vset.pattern.permute.xlu0 0
    %1506 = vperm.xlu0 %1505, %v1428
    %v1507 = vpop.permute.xlu0 %1506
    %v1509 = vlaneseq
    %v1510 = vshrl.u32 %v1509, 7
    %v1511 = vsub.s32 0, %v1510
    %v1512 = vrot.slane %v1412, %v1511
    %v1513 = vmul.f32 %v1432, %v1512
    %v1514 = vmul.f32 %v1437, %v1512
    %v1515 = vmul.f32 %v1442, %v1512
    %v1516 = vmul.f32 %v1447, %v1512
    %v1517 = vmul.f32 %v1452, %v1512
    %v1518 = vmul.f32 %v1457, %v1512
    %v1519 = vmul.f32 %v1462, %v1512
    %v1520 = vmul.f32 %v1467, %v1512
    %v1521 = vmul.f32 %v1472, %v1512
    %v1522 = vmul.f32 %v1477, %v1512
    %v1523 = vmul.f32 %v1482, %v1512
    %v1524 = vmul.f32 %v1487, %v1512
    %v1525 = vmul.f32 %v1492, %v1512
    %v1526 = vmul.f32 %v1497, %v1512
    %v1527 = vmul.f32 %v1502, %v1512
    %v1528 = vmul.f32 %v1507, %v1512
    %v1529 = vadd.f32 %v1396, %v1513
    %v1530 = vadd.f32 %v1397, %v1514
    %v1531 = vadd.f32 %v1398, %v1515
    %v1532 = vadd.f32 %v1399, %v1516
    %v1533 = vadd.f32 %v1400, %v1517
    %v1534 = vadd.f32 %v1401, %v1518
    %v1535 = vadd.f32 %v1402, %v1519
    %v1536 = vadd.f32 %v1403, %v1520
    %v1537 = vadd.f32 %v1404, %v1521
    %v1538 = vadd.f32 %v1405, %v1522
    %v1539 = vadd.f32 %v1406, %v1523
    %v1540 = vadd.f32 %v1407, %v1524
    %v1541 = vadd.f32 %v1408, %v1525
    %v1542 = vadd.f32 %v1409, %v1526
    %v1543 = vadd.f32 %v1410, %v1527
    %v1544 = vadd.f32 %v1411, %v1528
    %v1545 = vld [vmem:[#allocation9 + $0x8] sm:$0x1]
    %v1546 = vld [vmem:[%s1279 + $0x2] sm:$0xff]
    %v1547 = vld [vmem:[%s1279 + $0xa] sm:$0xff]
    %v1548 = vld [vmem:[%s1279 + $0x1a] sm:$0xff]
    %v1549 = vld [vmem:[%s1279 + $0x22] sm:$0xff]
    %v1550 = vld [vmem:[%s1279 + $0x32] sm:$0xff]
    %v1551 = vld [vmem:[%s1279 + $0x3a] sm:$0xff]
    %v1552 = vld [vmem:[%s1279 + $0x4a] sm:$0xff]
    %v1553 = vld [vmem:[%s1279 + $0x52] sm:$0xff]
    %v1554 = vld [vmem:[%s1279 + $0x1b2] sm:$0xff]
    %v1555 = vld [vmem:[%s1279 + $0x1ba] sm:$0xff]
    %v1556 = vld [vmem:[%s1279 + $0x1ca] sm:$0xff]
    %v1557 = vld [vmem:[%s1279 + $0x1d2] sm:$0xff]
    %v1558 = vld [vmem:[%s1279 + $0x1e2] sm:$0xff]
    %v1559 = vld [vmem:[%s1279 + $0x1ea] sm:$0xff]
    %v1560 = vld [vmem:[%s1279 + $0x1fa] sm:$0xff]
    %v1561 = vld [vmem:[%s1279 + $0x202] sm:$0xff]
    %1563 = vset.pattern.permute.xlu0 0
    %1564 = vperm.xlu0 %1563, %v1546
    %v1565 = vpop.permute.xlu0 %1564
    %1568 = vset.pattern.permute.xlu0 0
    %1569 = vperm.xlu0 %1568, %v1547
    %v1570 = vpop.permute.xlu0 %1569
    %1573 = vset.pattern.permute.xlu0 0
    %1574 = vperm.xlu0 %1573, %v1548
    %v1575 = vpop.permute.xlu0 %1574
    %1578 = vset.pattern.permute.xlu0 0
    %1579 = vperm.xlu0 %1578, %v1549
    %v1580 = vpop.permute.xlu0 %1579
    %1583 = vset.pattern.permute.xlu0 0
    %1584 = vperm.xlu0 %1583, %v1550
    %v1585 = vpop.permute.xlu0 %1584
    %1588 = vset.pattern.permute.xlu0 0
    %1589 = vperm.xlu0 %1588, %v1551
    %v1590 = vpop.permute.xlu0 %1589
    %1593 = vset.pattern.permute.xlu0 0
    %1594 = vperm.xlu0 %1593, %v1552
    %v1595 = vpop.permute.xlu0 %1594
    %1598 = vset.pattern.permute.xlu0 0
    %1599 = vperm.xlu0 %1598, %v1553
    %v1600 = vpop.permute.xlu0 %1599
    %1603 = vset.pattern.permute.xlu0 0
    %1604 = vperm.xlu0 %1603, %v1554
    %v1605 = vpop.permute.xlu0 %1604
    %1608 = vset.pattern.permute.xlu0 0
    %1609 = vperm.xlu0 %1608, %v1555
    %v1610 = vpop.permute.xlu0 %1609
    %1613 = vset.pattern.permute.xlu0 0
    %1614 = vperm.xlu0 %1613, %v1556
    %v1615 = vpop.permute.xlu0 %1614
    %1618 = vset.pattern.permute.xlu0 0
    %1619 = vperm.xlu0 %1618, %v1557
    %v1620 = vpop.permute.xlu0 %1619
    %1623 = vset.pattern.permute.xlu0 0
    %1624 = vperm.xlu0 %1623, %v1558
    %v1625 = vpop.permute.xlu0 %1624
    %1628 = vset.pattern.permute.xlu0 0
    %1629 = vperm.xlu0 %1628, %v1559
    %v1630 = vpop.permute.xlu0 %1629
    %1633 = vset.pattern.permute.xlu0 0
    %1634 = vperm.xlu0 %1633, %v1560
    %v1635 = vpop.permute.xlu0 %1634
    %1638 = vset.pattern.permute.xlu0 0
    %1639 = vperm.xlu0 %1638, %v1561
    %v1640 = vpop.permute.xlu0 %1639
    %v1642 = vlaneseq
    %v1643 = vshrl.u32 %v1642, 7
    %v1644 = vsub.s32 0, %v1643
    %v1645 = vrot.slane %v1545, %v1644
    %v1646 = vmul.f32 %v1565, %v1645
    %v1647 = vmul.f32 %v1570, %v1645
    %v1648 = vmul.f32 %v1575, %v1645
    %v1649 = vmul.f32 %v1580, %v1645
    %v1650 = vmul.f32 %v1585, %v1645
    %v1651 = vmul.f32 %v1590, %v1645
    %v1652 = vmul.f32 %v1595, %v1645
    %v1653 = vmul.f32 %v1600, %v1645
    %v1654 = vmul.f32 %v1605, %v1645
    %v1655 = vmul.f32 %v1610, %v1645
    %v1656 = vmul.f32 %v1615, %v1645
    %v1657 = vmul.f32 %v1620, %v1645
    %v1658 = vmul.f32 %v1625, %v1645
    %v1659 = vmul.f32 %v1630, %v1645
    %v1660 = vmul.f32 %v1635, %v1645
    %v1661 = vmul.f32 %v1640, %v1645
    %v1662 = vadd.f32 %v1529, %v1646
    %v1663 = vadd.f32 %v1530, %v1647
    %v1664 = vadd.f32 %v1531, %v1648
    %v1665 = vadd.f32 %v1532, %v1649
    %v1666 = vadd.f32 %v1533, %v1650
    %v1667 = vadd.f32 %v1534, %v1651
    %v1668 = vadd.f32 %v1535, %v1652
    %v1669 = vadd.f32 %v1536, %v1653
    %v1670 = vadd.f32 %v1537, %v1654
    %v1671 = vadd.f32 %v1538, %v1655
    %v1672 = vadd.f32 %v1539, %v1656
    %v1673 = vadd.f32 %v1540, %v1657
    %v1674 = vadd.f32 %v1541, %v1658
    %v1675 = vadd.f32 %v1542, %v1659
    %v1676 = vadd.f32 %v1543, %v1660
    %v1677 = vadd.f32 %v1544, %v1661
    %v1679 = vlaneseq
    %v1680 = vshrl.u32 %v1679, 7
    %v1681 = vsub.s32 0, %v1680
    %v1682 = vrot.slane %v479, %v1681
    %v1684 = vadd.f32 %v1662, %v1682
    %v1685 = vadd.f32 %v1663, %v1682
    %v1686 = vadd.f32 %v1664, %v1682
    %v1687 = vadd.f32 %v1665, %v1682
    %v1688 = vadd.f32 %v1666, %v1682
    %v1689 = vadd.f32 %v1667, %v1682
    %v1690 = vadd.f32 %v1668, %v1682
    %v1691 = vadd.f32 %v1669, %v1682
    %v1692 = vadd.f32 %v1670, %v1682
    %v1693 = vadd.f32 %v1671, %v1682
    %v1694 = vadd.f32 %v1672, %v1682
    %v1695 = vadd.f32 %v1673, %v1682
    %v1696 = vadd.f32 %v1674, %v1682
    %v1697 = vadd.f32 %v1675, %v1682
    %v1698 = vadd.f32 %v1676, %v1682
    %v1699 = vadd.f32 %v1677, %v1682
    %v1700 = vmax.f32 %v1684, 0.0
    %v1701 = vmax.f32 %v1685, 0.0
    %v1702 = vmax.f32 %v1686, 0.0
    %v1703 = vmax.f32 %v1687, 0.0
    %v1704 = vmax.f32 %v1688, 0.0
    %v1705 = vmax.f32 %v1689, 0.0
    %v1706 = vmax.f32 %v1690, 0.0
    %v1707 = vmax.f32 %v1691, 0.0
    %v1708 = vmax.f32 %v1692, 0.0
    %v1709 = vmax.f32 %v1693, 0.0
    %v1710 = vmax.f32 %v1694, 0.0
    %v1711 = vmax.f32 %v1695, 0.0
    %v1712 = vmax.f32 %v1696, 0.0
    %v1713 = vmax.f32 %v1697, 0.0
    %v1714 = vmax.f32 %v1698, 0.0
    %v1715 = vmax.f32 %v1699, 0.0
    %v1716 = vmax.f32 %v1700, %v1702
    %v1717 = vmax.f32 %v1701, %v1703
    %v1718 = vmax.f32 %v1704, %v1706
    %v1719 = vmax.f32 %v1705, %v1707
    %v1720 = vmax.f32 %v1708, %v1710
    %v1721 = vmax.f32 %v1709, %v1711
    %v1722 = vmax.f32 %v1712, %v1714
    %v1723 = vmax.f32 %v1713, %v1715
    %v1732 = vcombine.high %v1716, %v1716
    %v1734 = vunpack.c.l.s4 1983009808
    %v1735 = vunpack.c.0.s8 %v1734
    %v1736 = vlaneseq
    %v1737 = vshrl.u32 %v1736, 7
    %v1738 = vsub.s32 %v1735, %v1737
    %v1739 = vrot.slane %v1716, %v1738
    %v1741 = vunpack.c.l.s4 1983009808
    %v1742 = vunpack.c.0.s8 %v1741
    %v1743 = vlaneseq
    %v1744 = vshrl.u32 %v1743, 7
    %v1745 = vsub.s32 %v1742, %v1744
    %v1746 = vrot.slane %v1732, %v1745
    %v1747 = vcombine.high %v1739, %v1739
    %v1748 = vcombine.high %v1746, %v1746
    %v1749 = vcombine.high %v1717, %v1717
    %v1751 = vunpack.c.l.s4 1983009808
    %v1752 = vunpack.c.0.s8 %v1751
    %v1753 = vlaneseq
    %v1754 = vshrl.u32 %v1753, 7
    %v1755 = vsub.s32 %v1752, %v1754
    %v1756 = vrot.slane %v1717, %v1755
    %v1758 = vunpack.c.l.s4 1983009808
    %v1759 = vunpack.c.0.s8 %v1758
    %v1760 = vlaneseq
    %v1761 = vshrl.u32 %v1760, 7
    %v1762 = vsub.s32 %v1759, %v1761
    %v1763 = vrot.slane %v1749, %v1762
    %v1764 = vcombine.high %v1756, %v1756
    %v1765 = vcombine.high %v1763, %v1763
    %v1766 = vcombine.high %v1718, %v1718
    %v1768 = vunpack.c.l.s4 1983009808
    %v1769 = vunpack.c.0.s8 %v1768
    %v1770 = vlaneseq
    %v1771 = vshrl.u32 %v1770, 7
    %v1772 = vsub.s32 %v1769, %v1771
    %v1773 = vrot.slane %v1718, %v1772
    %v1775 = vunpack.c.l.s4 1983009808
    %v1776 = vunpack.c.0.s8 %v1775
    %v1777 = vlaneseq
    %v1778 = vshrl.u32 %v1777, 7
    %v1779 = vsub.s32 %v1776, %v1778
    %v1780 = vrot.slane %v1766, %v1779
    %v1781 = vcombine.high %v1773, %v1773
    %v1782 = vcombine.high %v1780, %v1780
    %v1783 = vcombine.high %v1719, %v1719
    %v1785 = vunpack.c.l.s4 1983009808
    %v1786 = vunpack.c.0.s8 %v1785
    %v1787 = vlaneseq
    %v1788 = vshrl.u32 %v1787, 7
    %v1789 = vsub.s32 %v1786, %v1788
    %v1790 = vrot.slane %v1719, %v1789
    %v1792 = vunpack.c.l.s4 1983009808
    %v1793 = vunpack.c.0.s8 %v1792
    %v1794 = vlaneseq
    %v1795 = vshrl.u32 %v1794, 7
    %v1796 = vsub.s32 %v1793, %v1795
    %v1797 = vrot.slane %v1783, %v1796
    %v1798 = vcombine.high %v1790, %v1790
    %v1799 = vcombine.high %v1797, %v1797
    %v1800 = vcombine.high %v1720, %v1720
    %v1802 = vunpack.c.l.s4 1983009808
    %v1803 = vunpack.c.0.s8 %v1802
    %v1804 = vlaneseq
    %v1805 = vshrl.u32 %v1804, 7
    %v1806 = vsub.s32 %v1803, %v1805
    %v1807 = vrot.slane %v1720, %v1806
    %v1809 = vunpack.c.l.s4 1983009808
    %v1810 = vunpack.c.0.s8 %v1809
    %v1811 = vlaneseq
    %v1812 = vshrl.u32 %v1811, 7
    %v1813 = vsub.s32 %v1810, %v1812
    %v1814 = vrot.slane %v1800, %v1813
    %v1815 = vcombine.high %v1807, %v1807
    %v1816 = vcombine.high %v1814, %v1814
    %v1817 = vcombine.high %v1721, %v1721
    %v1819 = vunpack.c.l.s4 1983009808
    %v1820 = vunpack.c.0.s8 %v1819
    %v1821 = vlaneseq
    %v1822 = vshrl.u32 %v1821, 7
    %v1823 = vsub.s32 %v1820, %v1822
    %v1824 = vrot.slane %v1721, %v1823
    %v1826 = vunpack.c.l.s4 1983009808
    %v1827 = vunpack.c.0.s8 %v1826
    %v1828 = vlaneseq
    %v1829 = vshrl.u32 %v1828, 7
    %v1830 = vsub.s32 %v1827, %v1829
    %v1831 = vrot.slane %v1817, %v1830
    %v1832 = vcombine.high %v1824, %v1824
    %v1833 = vcombine.high %v1831, %v1831
    %v1834 = vcombine.high %v1722, %v1722
    %v1836 = vunpack.c.l.s4 1983009808
    %v1837 = vunpack.c.0.s8 %v1836
    %v1838 = vlaneseq
    %v1839 = vshrl.u32 %v1838, 7
    %v1840 = vsub.s32 %v1837, %v1839
    %v1841 = vrot.slane %v1722, %v1840
    %v1843 = vunpack.c.l.s4 1983009808
    %v1844 = vunpack.c.0.s8 %v1843
    %v1845 = vlaneseq
    %v1846 = vshrl.u32 %v1845, 7
    %v1847 = vsub.s32 %v1844, %v1846
    %v1848 = vrot.slane %v1834, %v1847
    %v1849 = vcombine.high %v1841, %v1841
    %v1850 = vcombine.high %v1848, %v1848
    %v1851 = vcombine.high %v1723, %v1723
    %v1853 = vunpack.c.l.s4 1983009808
    %v1854 = vunpack.c.0.s8 %v1853
    %v1855 = vlaneseq
    %v1856 = vshrl.u32 %v1855, 7
    %v1857 = vsub.s32 %v1854, %v1856
    %v1858 = vrot.slane %v1723, %v1857
    %v1860 = vunpack.c.l.s4 1983009808
    %v1861 = vunpack.c.0.s8 %v1860
    %v1862 = vlaneseq
    %v1863 = vshrl.u32 %v1862, 7
    %v1864 = vsub.s32 %v1861, %v1863
    %v1865 = vrot.slane %v1851, %v1864
    %v1866 = vcombine.high %v1858, %v1858
    %v1867 = vcombine.high %v1865, %v1865
    %v1900 = vrot.slane %v1739, 7
    %v1901 = vrot.slane %v1900, 2
    %v1902 = vrot.slane %v1747, 7
    %v1903 = vrot.slane %v1902, 2
    %v1904 = vrot.slane %v1746, 7
    %v1905 = vrot.slane %v1904, 2
    %v1906 = vrot.slane %v1748, 7
    %v1907 = vrot.slane %v1906, 2
    %v1908 = vrot.slane %v1756, 7
    %v1909 = vrot.slane %v1908, 2
    %v1910 = vrot.slane %v1764, 7
    %v1911 = vrot.slane %v1910, 2
    %v1912 = vrot.slane %v1763, 7
    %v1913 = vrot.slane %v1912, 2
    %v1914 = vrot.slane %v1765, 7
    %v1915 = vrot.slane %v1914, 2
    %v1916 = vrot.slane %v1773, 7
    %v1917 = vrot.slane %v1916, 2
    %v1918 = vrot.slane %v1781, 7
    %v1919 = vrot.slane %v1918, 2
    %v1920 = vrot.slane %v1780, 7
    %v1921 = vrot.slane %v1920, 2
    %v1922 = vrot.slane %v1782, 7
    %v1923 = vrot.slane %v1922, 2
    %v1924 = vrot.slane %v1790, 7
    %v1925 = vrot.slane %v1924, 2
    %v1926 = vrot.slane %v1798, 7
    %v1927 = vrot.slane %v1926, 2
    %v1928 = vrot.slane %v1797, 7
    %v1929 = vrot.slane %v1928, 2
    %v1930 = vrot.slane %v1799, 7
    %v1931 = vrot.slane %v1930, 2
    %v1932 = vrot.slane %v1807, 7
    %v1933 = vrot.slane %v1932, 2
    %v1934 = vrot.slane %v1815, 7
    %v1935 = vrot.slane %v1934, 2
    %v1936 = vrot.slane %v1814, 7
    %v1937 = vrot.slane %v1936, 2
    %v1938 = vrot.slane %v1816, 7
    %v1939 = vrot.slane %v1938, 2
    %v1940 = vrot.slane %v1824, 7
    %v1941 = vrot.slane %v1940, 2
    %v1942 = vrot.slane %v1832, 7
    %v1943 = vrot.slane %v1942, 2
    %v1944 = vrot.slane %v1831, 7
    %v1945 = vrot.slane %v1944, 2
    %v1946 = vrot.slane %v1833, 7
    %v1947 = vrot.slane %v1946, 2
    %v1948 = vrot.slane %v1841, 7
    %v1949 = vrot.slane %v1948, 2
    %v1950 = vrot.slane %v1849, 7
    %v1951 = vrot.slane %v1950, 2
    %v1952 = vrot.slane %v1848, 7
    %v1953 = vrot.slane %v1952, 2
    %v1954 = vrot.slane %v1850, 7
    %v1955 = vrot.slane %v1954, 2
    %v1956 = vrot.slane %v1858, 7
    %v1957 = vrot.slane %v1956, 2
    %v1958 = vrot.slane %v1866, 7
    %v1959 = vrot.slane %v1958, 2
    %v1960 = vrot.slane %v1865, 7
    %v1961 = vrot.slane %v1960, 2
    %v1962 = vrot.slane %v1867, 7
    %v1963 = vrot.slane %v1962, 2
    %v1996 = vmax.f32 %v1739, %v1901
    %v1997 = vmax.f32 %v1747, %v1903
    %v1998 = vmax.f32 %v1746, %v1905
    %v1999 = vmax.f32 %v1748, %v1907
    %v2000 = vmax.f32 %v1756, %v1909
    %v2001 = vmax.f32 %v1764, %v1911
    %v2002 = vmax.f32 %v1763, %v1913
    %v2003 = vmax.f32 %v1765, %v1915
    %v2004 = vmax.f32 %v1773, %v1917
    %v2005 = vmax.f32 %v1781, %v1919
    %v2006 = vmax.f32 %v1780, %v1921
    %v2007 = vmax.f32 %v1782, %v1923
    %v2008 = vmax.f32 %v1790, %v1925
    %v2009 = vmax.f32 %v1798, %v1927
    %v2010 = vmax.f32 %v1797, %v1929
    %v2011 = vmax.f32 %v1799, %v1931
    %v2012 = vmax.f32 %v1807, %v1933
    %v2013 = vmax.f32 %v1815, %v1935
    %v2014 = vmax.f32 %v1814, %v1937
    %v2015 = vmax.f32 %v1816, %v1939
    %v2016 = vmax.f32 %v1824, %v1941
    %v2017 = vmax.f32 %v1832, %v1943
    %v2018 = vmax.f32 %v1831, %v1945
    %v2019 = vmax.f32 %v1833, %v1947
    %v2020 = vmax.f32 %v1841, %v1949
    %v2021 = vmax.f32 %v1849, %v1951
    %v2022 = vmax.f32 %v1848, %v1953
    %v2023 = vmax.f32 %v1850, %v1955
    %v2024 = vmax.f32 %v1858, %v1957
    %v2025 = vmax.f32 %v1866, %v1959
    %v2026 = vmax.f32 %v1865, %v1961
    %v2027 = vmax.f32 %v1867, %v1963
    %v2060 = vlaneseq
    %v2061 = vshrl.u32 %v2060, 7
    %v2062 = vsub.s32 0, %v2061
    %v2063 = vrot.slane %v1996, %v2062
    %v2064 = vlaneseq
    %v2065 = vshrl.u32 %v2064, 7
    %v2066 = vsub.s32 0, %v2065
    %v2067 = vrot.slane %v1997, %v2066
    %v2068 = vlaneseq
    %v2069 = vshrl.u32 %v2068, 7
    %v2070 = vsub.s32 0, %v2069
    %v2071 = vrot.slane %v1998, %v2070
    %v2072 = vlaneseq
    %v2073 = vshrl.u32 %v2072, 7
    %v2074 = vsub.s32 0, %v2073
    %v2075 = vrot.slane %v1999, %v2074
    %v2076 = vlaneseq
    %v2077 = vshrl.u32 %v2076, 7
    %v2078 = vsub.s32 0, %v2077
    %v2079 = vrot.slane %v2000, %v2078
    %v2080 = vlaneseq
    %v2081 = vshrl.u32 %v2080, 7
    %v2082 = vsub.s32 0, %v2081
    %v2083 = vrot.slane %v2001, %v2082
    %v2084 = vlaneseq
    %v2085 = vshrl.u32 %v2084, 7
    %v2086 = vsub.s32 0, %v2085
    %v2087 = vrot.slane %v2002, %v2086
    %v2088 = vlaneseq
    %v2089 = vshrl.u32 %v2088, 7
    %v2090 = vsub.s32 0, %v2089
    %v2091 = vrot.slane %v2003, %v2090
    %v2092 = vlaneseq
    %v2093 = vshrl.u32 %v2092, 7
    %v2094 = vsub.s32 0, %v2093
    %v2095 = vrot.slane %v2004, %v2094
    %v2096 = vlaneseq
    %v2097 = vshrl.u32 %v2096, 7
    %v2098 = vsub.s32 0, %v2097
    %v2099 = vrot.slane %v2005, %v2098
    %v2100 = vlaneseq
    %v2101 = vshrl.u32 %v2100, 7
    %v2102 = vsub.s32 0, %v2101
    %v2103 = vrot.slane %v2006, %v2102
    %v2104 = vlaneseq
    %v2105 = vshrl.u32 %v2104, 7
    %v2106 = vsub.s32 0, %v2105
    %v2107 = vrot.slane %v2007, %v2106
    %v2108 = vlaneseq
    %v2109 = vshrl.u32 %v2108, 7
    %v2110 = vsub.s32 0, %v2109
    %v2111 = vrot.slane %v2008, %v2110
    %v2112 = vlaneseq
    %v2113 = vshrl.u32 %v2112, 7
    %v2114 = vsub.s32 0, %v2113
    %v2115 = vrot.slane %v2009, %v2114
    %v2116 = vlaneseq
    %v2117 = vshrl.u32 %v2116, 7
    %v2118 = vsub.s32 0, %v2117
    %v2119 = vrot.slane %v2010, %v2118
    %v2120 = vlaneseq
    %v2121 = vshrl.u32 %v2120, 7
    %v2122 = vsub.s32 0, %v2121
    %v2123 = vrot.slane %v2011, %v2122
    %v2124 = vlaneseq
    %v2125 = vshrl.u32 %v2124, 7
    %v2126 = vsub.s32 0, %v2125
    %v2127 = vrot.slane %v2012, %v2126
    %v2128 = vlaneseq
    %v2129 = vshrl.u32 %v2128, 7
    %v2130 = vsub.s32 0, %v2129
    %v2131 = vrot.slane %v2013, %v2130
    %v2132 = vlaneseq
    %v2133 = vshrl.u32 %v2132, 7
    %v2134 = vsub.s32 0, %v2133
    %v2135 = vrot.slane %v2014, %v2134
    %v2136 = vlaneseq
    %v2137 = vshrl.u32 %v2136, 7
    %v2138 = vsub.s32 0, %v2137
    %v2139 = vrot.slane %v2015, %v2138
    %v2140 = vlaneseq
    %v2141 = vshrl.u32 %v2140, 7
    %v2142 = vsub.s32 0, %v2141
    %v2143 = vrot.slane %v2016, %v2142
    %v2144 = vlaneseq
    %v2145 = vshrl.u32 %v2144, 7
    %v2146 = vsub.s32 0, %v2145
    %v2147 = vrot.slane %v2017, %v2146
    %v2148 = vlaneseq
    %v2149 = vshrl.u32 %v2148, 7
    %v2150 = vsub.s32 0, %v2149
    %v2151 = vrot.slane %v2018, %v2150
    %v2152 = vlaneseq
    %v2153 = vshrl.u32 %v2152, 7
    %v2154 = vsub.s32 0, %v2153
    %v2155 = vrot.slane %v2019, %v2154
    %v2156 = vlaneseq
    %v2157 = vshrl.u32 %v2156, 7
    %v2158 = vsub.s32 0, %v2157
    %v2159 = vrot.slane %v2020, %v2158
    %v2160 = vlaneseq
    %v2161 = vshrl.u32 %v2160, 7
    %v2162 = vsub.s32 0, %v2161
    %v2163 = vrot.slane %v2021, %v2162
    %v2164 = vlaneseq
    %v2165 = vshrl.u32 %v2164, 7
    %v2166 = vsub.s32 0, %v2165
    %v2167 = vrot.slane %v2022, %v2166
    %v2168 = vlaneseq
    %v2169 = vshrl.u32 %v2168, 7
    %v2170 = vsub.s32 0, %v2169
    %v2171 = vrot.slane %v2023, %v2170
    %v2172 = vlaneseq
    %v2173 = vshrl.u32 %v2172, 7
    %v2174 = vsub.s32 0, %v2173
    %v2175 = vrot.slane %v2024, %v2174
    %v2176 = vlaneseq
    %v2177 = vshrl.u32 %v2176, 7
    %v2178 = vsub.s32 0, %v2177
    %v2179 = vrot.slane %v2025, %v2178
    %v2180 = vlaneseq
    %v2181 = vshrl.u32 %v2180, 7
    %v2182 = vsub.s32 0, %v2181
    %v2183 = vrot.slane %v2026, %v2182
    %v2184 = vlaneseq
    %v2185 = vshrl.u32 %v2184, 7
    %v2186 = vsub.s32 0, %v2185
    %v2187 = vrot.slane %v2027, %v2186
    %vm2188 = vcmask 1041409
    %v2189 = vsel %vm2188, %v2067, %v2063
    %vm2190 = vcmask 1042434
    %v2191 = vsel %vm2190, %v2071, %v2189
    %vm2192 = vcmask 1043459
    %v2193 = vsel %vm2192, %v2075, %v2191
    %vm2194 = vcmask 1044484
    %v2195 = vsel %vm2194, %v2079, %v2193
    %vm2196 = vcmask 1045509
    %v2197 = vsel %vm2196, %v2083, %v2195
    %vm2198 = vcmask 1046534
    %v2199 = vsel %vm2198, %v2087, %v2197
    %vm2200 = vcmask 1047559
    %v2201 = vsel %vm2200, %v2091, %v2199
    %v2202 = vsel %vm2188, %v2099, %v2095
    %v2203 = vsel %vm2190, %v2103, %v2202
    %v2204 = vsel %vm2192, %v2107, %v2203
    %v2205 = vsel %vm2194, %v2111, %v2204
    %v2206 = vsel %vm2196, %v2115, %v2205
    %v2207 = vsel %vm2198, %v2119, %v2206
    %v2208 = vsel %vm2200, %v2123, %v2207
    %v2209 = vsel %vm2188, %v2131, %v2127
    %v2210 = vsel %vm2190, %v2135, %v2209
    %v2211 = vsel %vm2192, %v2139, %v2210
    %v2212 = vsel %vm2194, %v2143, %v2211
    %v2213 = vsel %vm2196, %v2147, %v2212
    %v2214 = vsel %vm2198, %v2151, %v2213
    %v2215 = vsel %vm2200, %v2155, %v2214
    %v2216 = vsel %vm2188, %v2163, %v2159
    %v2217 = vsel %vm2190, %v2167, %v2216
    %v2218 = vsel %vm2192, %v2171, %v2217
    %v2219 = vsel %vm2194, %v2175, %v2218
    %v2220 = vsel %vm2196, %v2179, %v2219
    %v2221 = vsel %vm2198, %v2183, %v2220
    %v2222 = vsel %vm2200, %v2187, %v2221
    %s2227 = scalar_lea.vmem [#allocation3], 16
    %2228 = vst.msk [vmem:[%s2227 + $0x1] sm:$0xff] %vm267, %v2201
    %2229 = vst.msk [vmem:[%s2227 + $0x11] sm:$0xff] %vm267, %v2208
    %2230 = vst.msk [vmem:[%s2227 + $0xa1] sm:$0xff] %vm267, %v2215
    %2231 = vst.msk [vmem:[%s2227 + $0xb1] sm:$0xff] %vm267, %v2222
    %v2232 = vld [vmem:[#allocation9] sm:$0x1]
    %s2233 = scalar_lea.vmem [#allocation2], 96
    %v2234 = vld [vmem:[%s2233] sm:$0xff]
    %v2235 = vld [vmem:[%s2233 + $0x8] sm:$0xff]
    %v2236 = vld [vmem:[%s2233 + $0x18] sm:$0xff]
    %v2237 = vld [vmem:[%s2233 + $0x20] sm:$0xff]
    %v2238 = vld [vmem:[%s2233 + $0x30] sm:$0xff]
    %v2239 = vld [vmem:[%s2233 + $0x38] sm:$0xff]
    %v2240 = vld [vmem:[%s2233 + $0x48] sm:$0xff]
    %v2241 = vld [vmem:[%s2233 + $0x50] sm:$0xff]
    %v2242 = vld [vmem:[%s2233 + $0x1b0] sm:$0xff]
    %v2243 = vld [vmem:[%s2233 + $0x1b8] sm:$0xff]
    %v2244 = vld [vmem:[%s2233 + $0x1c8] sm:$0xff]
    %v2245 = vld [vmem:[%s2233 + $0x1d0] sm:$0xff]
    %v2246 = vld [vmem:[%s2233 + $0x1e0] sm:$0xff]
    %v2247 = vld [vmem:[%s2233 + $0x1e8] sm:$0xff]
    %v2248 = vld [vmem:[%s2233 + $0x1f8] sm:$0xff]
    %v2249 = vld [vmem:[%s2233 + $0x200] sm:$0xff]
    %2251 = vset.pattern.permute.xlu0 0
    %2252 = vperm.xlu0 %2251, %v2234
    %v2253 = vpop.permute.xlu0 %2252
    %2256 = vset.pattern.permute.xlu0 0
    %2257 = vperm.xlu0 %2256, %v2235
    %v2258 = vpop.permute.xlu0 %2257
    %2261 = vset.pattern.permute.xlu0 0
    %2262 = vperm.xlu0 %2261, %v2236
    %v2263 = vpop.permute.xlu0 %2262
    %2266 = vset.pattern.permute.xlu0 0
    %2267 = vperm.xlu0 %2266, %v2237
    %v2268 = vpop.permute.xlu0 %2267
    %2271 = vset.pattern.permute.xlu0 0
    %2272 = vperm.xlu0 %2271, %v2238
    %v2273 = vpop.permute.xlu0 %2272
    %2276 = vset.pattern.permute.xlu0 0
    %2277 = vperm.xlu0 %2276, %v2239
    %v2278 = vpop.permute.xlu0 %2277
    %2281 = vset.pattern.permute.xlu0 0
    %2282 = vperm.xlu0 %2281, %v2240
    %v2283 = vpop.permute.xlu0 %2282
    %2286 = vset.pattern.permute.xlu0 0
    %2287 = vperm.xlu0 %2286, %v2241
    %v2288 = vpop.permute.xlu0 %2287
    %2291 = vset.pattern.permute.xlu0 0
    %2292 = vperm.xlu0 %2291, %v2242
    %v2293 = vpop.permute.xlu0 %2292
    %2296 = vset.pattern.permute.xlu0 0
    %2297 = vperm.xlu0 %2296, %v2243
    %v2298 = vpop.permute.xlu0 %2297
    %2301 = vset.pattern.permute.xlu0 0
    %2302 = vperm.xlu0 %2301, %v2244
    %v2303 = vpop.permute.xlu0 %2302
    %2306 = vset.pattern.permute.xlu0 0
    %2307 = vperm.xlu0 %2306, %v2245
    %v2308 = vpop.permute.xlu0 %2307
    %2311 = vset.pattern.permute.xlu0 0
    %2312 = vperm.xlu0 %2311, %v2246
    %v2313 = vpop.permute.xlu0 %2312
    %2316 = vset.pattern.permute.xlu0 0
    %2317 = vperm.xlu0 %2316, %v2247
    %v2318 = vpop.permute.xlu0 %2317
    %2321 = vset.pattern.permute.xlu0 0
    %2322 = vperm.xlu0 %2321, %v2248
    %v2323 = vpop.permute.xlu0 %2322
    %2326 = vset.pattern.permute.xlu0 0
    %2327 = vperm.xlu0 %2326, %v2249
    %v2328 = vpop.permute.xlu0 %2327
    %v2330 = vlaneseq
    %v2331 = vshrl.u32 %v2330, 7
    %v2332 = vsub.s32 0, %v2331
    %v2333 = vrot.slane %v2232, %v2332
    %v2334 = vmul.f32 %v2253, %v2333
    %v2335 = vmul.f32 %v2258, %v2333
    %v2336 = vmul.f32 %v2263, %v2333
    %v2337 = vmul.f32 %v2268, %v2333
    %v2338 = vmul.f32 %v2273, %v2333
    %v2339 = vmul.f32 %v2278, %v2333
    %v2340 = vmul.f32 %v2283, %v2333
    %v2341 = vmul.f32 %v2288, %v2333
    %v2342 = vmul.f32 %v2293, %v2333
    %v2343 = vmul.f32 %v2298, %v2333
    %v2344 = vmul.f32 %v2303, %v2333
    %v2345 = vmul.f32 %v2308, %v2333
    %v2346 = vmul.f32 %v2313, %v2333
    %v2347 = vmul.f32 %v2318, %v2333
    %v2348 = vmul.f32 %v2323, %v2333
    %v2349 = vmul.f32 %v2328, %v2333
    %v2350 = vadd.f32 %v2334, 0.0
    %v2351 = vadd.f32 %v2335, 0.0
    %v2352 = vadd.f32 %v2336, 0.0
    %v2353 = vadd.f32 %v2337, 0.0
    %v2354 = vadd.f32 %v2338, 0.0
    %v2355 = vadd.f32 %v2339, 0.0
    %v2356 = vadd.f32 %v2340, 0.0
    %v2357 = vadd.f32 %v2341, 0.0
    %v2358 = vadd.f32 %v2342, 0.0
    %v2359 = vadd.f32 %v2343, 0.0
    %v2360 = vadd.f32 %v2344, 0.0
    %v2361 = vadd.f32 %v2345, 0.0
    %v2362 = vadd.f32 %v2346, 0.0
    %v2363 = vadd.f32 %v2347, 0.0
    %v2364 = vadd.f32 %v2348, 0.0
    %v2365 = vadd.f32 %v2349, 0.0
    %v2366 = vld [vmem:[#allocation9 + $0x1] sm:$0x1]
    %v2367 = vld [vmem:[%s2233 + $0x1] sm:$0xff]
    %v2368 = vld [vmem:[%s2233 + $0x9] sm:$0xff]
    %v2369 = vld [vmem:[%s2233 + $0x19] sm:$0xff]
    %v2370 = vld [vmem:[%s2233 + $0x21] sm:$0xff]
    %v2371 = vld [vmem:[%s2233 + $0x31] sm:$0xff]
    %v2372 = vld [vmem:[%s2233 + $0x39] sm:$0xff]
    %v2373 = vld [vmem:[%s2233 + $0x49] sm:$0xff]
    %v2374 = vld [vmem:[%s2233 + $0x51] sm:$0xff]
    %v2375 = vld [vmem:[%s2233 + $0x1b1] sm:$0xff]
    %v2376 = vld [vmem:[%s2233 + $0x1b9] sm:$0xff]
    %v2377 = vld [vmem:[%s2233 + $0x1c9] sm:$0xff]
    %v2378 = vld [vmem:[%s2233 + $0x1d1] sm:$0xff]
    %v2379 = vld [vmem:[%s2233 + $0x1e1] sm:$0xff]
    %v2380 = vld [vmem:[%s2233 + $0x1e9] sm:$0xff]
    %v2381 = vld [vmem:[%s2233 + $0x1f9] sm:$0xff]
    %v2382 = vld [vmem:[%s2233 + $0x201] sm:$0xff]
    %2384 = vset.pattern.permute.xlu0 0
    %2385 = vperm.xlu0 %2384, %v2367
    %v2386 = vpop.permute.xlu0 %2385
    %2389 = vset.pattern.permute.xlu0 0
    %2390 = vperm.xlu0 %2389, %v2368
    %v2391 = vpop.permute.xlu0 %2390
    %2394 = vset.pattern.permute.xlu0 0
    %2395 = vperm.xlu0 %2394, %v2369
    %v2396 = vpop.permute.xlu0 %2395
    %2399 = vset.pattern.permute.xlu0 0
    %2400 = vperm.xlu0 %2399, %v2370
    %v2401 = vpop.permute.xlu0 %2400
    %2404 = vset.pattern.permute.xlu0 0
    %2405 = vperm.xlu0 %2404, %v2371
    %v2406 = vpop.permute.xlu0 %2405
    %2409 = vset.pattern.permute.xlu0 0
    %2410 = vperm.xlu0 %2409, %v2372
    %v2411 = vpop.permute.xlu0 %2410
    %2414 = vset.pattern.permute.xlu0 0
    %2415 = vperm.xlu0 %2414, %v2373
    %v2416 = vpop.permute.xlu0 %2415
    %2419 = vset.pattern.permute.xlu0 0
    %2420 = vperm.xlu0 %2419, %v2374
    %v2421 = vpop.permute.xlu0 %2420
    %2424 = vset.pattern.permute.xlu0 0
    %2425 = vperm.xlu0 %2424, %v2375
    %v2426 = vpop.permute.xlu0 %2425
    %2429 = vset.pattern.permute.xlu0 0
    %2430 = vperm.xlu0 %2429, %v2376
    %v2431 = vpop.permute.xlu0 %2430
    %2434 = vset.pattern.permute.xlu0 0
    %2435 = vperm.xlu0 %2434, %v2377
    %v2436 = vpop.permute.xlu0 %2435
    %2439 = vset.pattern.permute.xlu0 0
    %2440 = vperm.xlu0 %2439, %v2378
    %v2441 = vpop.permute.xlu0 %2440
    %2444 = vset.pattern.permute.xlu0 0
    %2445 = vperm.xlu0 %2444, %v2379
    %v2446 = vpop.permute.xlu0 %2445
    %2449 = vset.pattern.permute.xlu0 0
    %2450 = vperm.xlu0 %2449, %v2380
    %v2451 = vpop.permute.xlu0 %2450
    %2454 = vset.pattern.permute.xlu0 0
    %2455 = vperm.xlu0 %2454, %v2381
    %v2456 = vpop.permute.xlu0 %2455
    %2459 = vset.pattern.permute.xlu0 0
    %2460 = vperm.xlu0 %2459, %v2382
    %v2461 = vpop.permute.xlu0 %2460
    %v2463 = vlaneseq
    %v2464 = vshrl.u32 %v2463, 7
    %v2465 = vsub.s32 0, %v2464
    %v2466 = vrot.slane %v2366, %v2465
    %v2467 = vmul.f32 %v2386, %v2466
    %v2468 = vmul.f32 %v2391, %v2466
    %v2469 = vmul.f32 %v2396, %v2466
    %v2470 = vmul.f32 %v2401, %v2466
    %v2471 = vmul.f32 %v2406, %v2466
    %v2472 = vmul.f32 %v2411, %v2466
    %v2473 = vmul.f32 %v2416, %v2466
    %v2474 = vmul.f32 %v2421, %v2466
    %v2475 = vmul.f32 %v2426, %v2466
    %v2476 = vmul.f32 %v2431, %v2466
    %v2477 = vmul.f32 %v2436, %v2466
    %v2478 = vmul.f32 %v2441, %v2466
    %v2479 = vmul.f32 %v2446, %v2466
    %v2480 = vmul.f32 %v2451, %v2466
    %v2481 = vmul.f32 %v2456, %v2466
    %v2482 = vmul.f32 %v2461, %v2466
    %v2483 = vadd.f32 %v2350, %v2467
    %v2484 = vadd.f32 %v2351, %v2468
    %v2485 = vadd.f32 %v2352, %v2469
    %v2486 = vadd.f32 %v2353, %v2470
    %v2487 = vadd.f32 %v2354, %v2471
    %v2488 = vadd.f32 %v2355, %v2472
    %v2489 = vadd.f32 %v2356, %v2473
    %v2490 = vadd.f32 %v2357, %v2474
    %v2491 = vadd.f32 %v2358, %v2475
    %v2492 = vadd.f32 %v2359, %v2476
    %v2493 = vadd.f32 %v2360, %v2477
    %v2494 = vadd.f32 %v2361, %v2478
    %v2495 = vadd.f32 %v2362, %v2479
    %v2496 = vadd.f32 %v2363, %v2480
    %v2497 = vadd.f32 %v2364, %v2481
    %v2498 = vadd.f32 %v2365, %v2482
    %v2499 = vld [vmem:[#allocation9 + $0x2] sm:$0x1]
    %v2500 = vld [vmem:[%s2233 + $0x2] sm:$0xff]
    %v2501 = vld [vmem:[%s2233 + $0xa] sm:$0xff]
    %v2502 = vld [vmem:[%s2233 + $0x1a] sm:$0xff]
    %v2503 = vld [vmem:[%s2233 + $0x22] sm:$0xff]
    %v2504 = vld [vmem:[%s2233 + $0x32] sm:$0xff]
    %v2505 = vld [vmem:[%s2233 + $0x3a] sm:$0xff]
    %v2506 = vld [vmem:[%s2233 + $0x4a] sm:$0xff]
    %v2507 = vld [vmem:[%s2233 + $0x52] sm:$0xff]
    %v2508 = vld [vmem:[%s2233 + $0x1b2] sm:$0xff]
    %v2509 = vld [vmem:[%s2233 + $0x1ba] sm:$0xff]
    %v2510 = vld [vmem:[%s2233 + $0x1ca] sm:$0xff]
    %v2511 = vld [vmem:[%s2233 + $0x1d2] sm:$0xff]
    %v2512 = vld [vmem:[%s2233 + $0x1e2] sm:$0xff]
    %v2513 = vld [vmem:[%s2233 + $0x1ea] sm:$0xff]
    %v2514 = vld [vmem:[%s2233 + $0x1fa] sm:$0xff]
    %v2515 = vld [vmem:[%s2233 + $0x202] sm:$0xff]
    %2517 = vset.pattern.permute.xlu0 0
    %2518 = vperm.xlu0 %2517, %v2500
    %v2519 = vpop.permute.xlu0 %2518
    %2522 = vset.pattern.permute.xlu0 0
    %2523 = vperm.xlu0 %2522, %v2501
    %v2524 = vpop.permute.xlu0 %2523
    %2527 = vset.pattern.permute.xlu0 0
    %2528 = vperm.xlu0 %2527, %v2502
    %v2529 = vpop.permute.xlu0 %2528
    %2532 = vset.pattern.permute.xlu0 0
    %2533 = vperm.xlu0 %2532, %v2503
    %v2534 = vpop.permute.xlu0 %2533
    %2537 = vset.pattern.permute.xlu0 0
    %2538 = vperm.xlu0 %2537, %v2504
    %v2539 = vpop.permute.xlu0 %2538
    %2542 = vset.pattern.permute.xlu0 0
    %2543 = vperm.xlu0 %2542, %v2505
    %v2544 = vpop.permute.xlu0 %2543
    %2547 = vset.pattern.permute.xlu0 0
    %2548 = vperm.xlu0 %2547, %v2506
    %v2549 = vpop.permute.xlu0 %2548
    %2552 = vset.pattern.permute.xlu0 0
    %2553 = vperm.xlu0 %2552, %v2507
    %v2554 = vpop.permute.xlu0 %2553
    %2557 = vset.pattern.permute.xlu0 0
    %2558 = vperm.xlu0 %2557, %v2508
    %v2559 = vpop.permute.xlu0 %2558
    %2562 = vset.pattern.permute.xlu0 0
    %2563 = vperm.xlu0 %2562, %v2509
    %v2564 = vpop.permute.xlu0 %2563
    %2567 = vset.pattern.permute.xlu0 0
    %2568 = vperm.xlu0 %2567, %v2510
    %v2569 = vpop.permute.xlu0 %2568
    %2572 = vset.pattern.permute.xlu0 0
    %2573 = vperm.xlu0 %2572, %v2511
    %v2574 = vpop.permute.xlu0 %2573
    %2577 = vset.pattern.permute.xlu0 0
    %2578 = vperm.xlu0 %2577, %v2512
    %v2579 = vpop.permute.xlu0 %2578
    %2582 = vset.pattern.permute.xlu0 0
    %2583 = vperm.xlu0 %2582, %v2513
    %v2584 = vpop.permute.xlu0 %2583
    %2587 = vset.pattern.permute.xlu0 0
    %2588 = vperm.xlu0 %2587, %v2514
    %v2589 = vpop.permute.xlu0 %2588
    %2592 = vset.pattern.permute.xlu0 0
    %2593 = vperm.xlu0 %2592, %v2515
    %v2594 = vpop.permute.xlu0 %2593
    %v2596 = vlaneseq
    %v2597 = vshrl.u32 %v2596, 7
    %v2598 = vsub.s32 0, %v2597
    %v2599 = vrot.slane %v2499, %v2598
    %v2600 = vmul.f32 %v2519, %v2599
    %v2601 = vmul.f32 %v2524, %v2599
    %v2602 = vmul.f32 %v2529, %v2599
    %v2603 = vmul.f32 %v2534, %v2599
    %v2604 = vmul.f32 %v2539, %v2599
    %v2605 = vmul.f32 %v2544, %v2599
    %v2606 = vmul.f32 %v2549, %v2599
    %v2607 = vmul.f32 %v2554, %v2599
    %v2608 = vmul.f32 %v2559, %v2599
    %v2609 = vmul.f32 %v2564, %v2599
    %v2610 = vmul.f32 %v2569, %v2599
    %v2611 = vmul.f32 %v2574, %v2599
    %v2612 = vmul.f32 %v2579, %v2599
    %v2613 = vmul.f32 %v2584, %v2599
    %v2614 = vmul.f32 %v2589, %v2599
    %v2615 = vmul.f32 %v2594, %v2599
    %v2616 = vadd.f32 %v2483, %v2600
    %v2617 = vadd.f32 %v2484, %v2601
    %v2618 = vadd.f32 %v2485, %v2602
    %v2619 = vadd.f32 %v2486, %v2603
    %v2620 = vadd.f32 %v2487, %v2604
    %v2621 = vadd.f32 %v2488, %v2605
    %v2622 = vadd.f32 %v2489, %v2606
    %v2623 = vadd.f32 %v2490, %v2607
    %v2624 = vadd.f32 %v2491, %v2608
    %v2625 = vadd.f32 %v2492, %v2609
    %v2626 = vadd.f32 %v2493, %v2610
    %v2627 = vadd.f32 %v2494, %v2611
    %v2628 = vadd.f32 %v2495, %v2612
    %v2629 = vadd.f32 %v2496, %v2613
    %v2630 = vadd.f32 %v2497, %v2614
    %v2631 = vadd.f32 %v2498, %v2615
    %v2632 = vld [vmem:[#allocation9 + $0x3] sm:$0x1]
    %s2633 = scalar_lea.vmem [#allocation2], 120
    %v2634 = vld [vmem:[%s2633] sm:$0xff]
    %v2635 = vld [vmem:[%s2633 + $0x8] sm:$0xff]
    %v2636 = vld [vmem:[%s2633 + $0x18] sm:$0xff]
    %v2637 = vld [vmem:[%s2633 + $0x20] sm:$0xff]
    %v2638 = vld [vmem:[%s2633 + $0x30] sm:$0xff]
    %v2639 = vld [vmem:[%s2633 + $0x38] sm:$0xff]
    %v2640 = vld [vmem:[%s2633 + $0x48] sm:$0xff]
    %v2641 = vld [vmem:[%s2633 + $0x50] sm:$0xff]
    %v2642 = vld [vmem:[%s2633 + $0x1b0] sm:$0xff]
    %v2643 = vld [vmem:[%s2633 + $0x1b8] sm:$0xff]
    %v2644 = vld [vmem:[%s2633 + $0x1c8] sm:$0xff]
    %v2645 = vld [vmem:[%s2633 + $0x1d0] sm:$0xff]
    %v2646 = vld [vmem:[%s2633 + $0x1e0] sm:$0xff]
    %v2647 = vld [vmem:[%s2633 + $0x1e8] sm:$0xff]
    %v2648 = vld [vmem:[%s2633 + $0x1f8] sm:$0xff]
    %v2649 = vld [vmem:[%s2633 + $0x200] sm:$0xff]
    %2651 = vset.pattern.permute.xlu0 0
    %2652 = vperm.xlu0 %2651, %v2634
    %v2653 = vpop.permute.xlu0 %2652
    %2656 = vset.pattern.permute.xlu0 0
    %2657 = vperm.xlu0 %2656, %v2635
    %v2658 = vpop.permute.xlu0 %2657
    %2661 = vset.pattern.permute.xlu0 0
    %2662 = vperm.xlu0 %2661, %v2636
    %v2663 = vpop.permute.xlu0 %2662
    %2666 = vset.pattern.permute.xlu0 0
    %2667 = vperm.xlu0 %2666, %v2637
    %v2668 = vpop.permute.xlu0 %2667
    %2671 = vset.pattern.permute.xlu0 0
    %2672 = vperm.xlu0 %2671, %v2638
    %v2673 = vpop.permute.xlu0 %2672
    %2676 = vset.pattern.permute.xlu0 0
    %2677 = vperm.xlu0 %2676, %v2639
    %v2678 = vpop.permute.xlu0 %2677
    %2681 = vset.pattern.permute.xlu0 0
    %2682 = vperm.xlu0 %2681, %v2640
    %v2683 = vpop.permute.xlu0 %2682
    %2686 = vset.pattern.permute.xlu0 0
    %2687 = vperm.xlu0 %2686, %v2641
    %v2688 = vpop.permute.xlu0 %2687
    %2691 = vset.pattern.permute.xlu0 0
    %2692 = vperm.xlu0 %2691, %v2642
    %v2693 = vpop.permute.xlu0 %2692
    %2696 = vset.pattern.permute.xlu0 0
    %2697 = vperm.xlu0 %2696, %v2643
    %v2698 = vpop.permute.xlu0 %2697
    %2701 = vset.pattern.permute.xlu0 0
    %2702 = vperm.xlu0 %2701, %v2644
    %v2703 = vpop.permute.xlu0 %2702
    %2706 = vset.pattern.permute.xlu0 0
    %2707 = vperm.xlu0 %2706, %v2645
    %v2708 = vpop.permute.xlu0 %2707
    %2711 = vset.pattern.permute.xlu0 0
    %2712 = vperm.xlu0 %2711, %v2646
    %v2713 = vpop.permute.xlu0 %2712
    %2716 = vset.pattern.permute.xlu0 0
    %2717 = vperm.xlu0 %2716, %v2647
    %v2718 = vpop.permute.xlu0 %2717
    %2721 = vset.pattern.permute.xlu0 0
    %2722 = vperm.xlu0 %2721, %v2648
    %v2723 = vpop.permute.xlu0 %2722
    %2726 = vset.pattern.permute.xlu0 0
    %2727 = vperm.xlu0 %2726, %v2649
    %v2728 = vpop.permute.xlu0 %2727
    %v2730 = vlaneseq
    %v2731 = vshrl.u32 %v2730, 7
    %v2732 = vsub.s32 0, %v2731
    %v2733 = vrot.slane %v2632, %v2732
    %v2734 = vmul.f32 %v2653, %v2733
    %v2735 = vmul.f32 %v2658, %v2733
    %v2736 = vmul.f32 %v2663, %v2733
    %v2737 = vmul.f32 %v2668, %v2733
    %v2738 = vmul.f32 %v2673, %v2733
    %v2739 = vmul.f32 %v2678, %v2733
    %v2740 = vmul.f32 %v2683, %v2733
    %v2741 = vmul.f32 %v2688, %v2733
    %v2742 = vmul.f32 %v2693, %v2733
    %v2743 = vmul.f32 %v2698, %v2733
    %v2744 = vmul.f32 %v2703, %v2733
    %v2745 = vmul.f32 %v2708, %v2733
    %v2746 = vmul.f32 %v2713, %v2733
    %v2747 = vmul.f32 %v2718, %v2733
    %v2748 = vmul.f32 %v2723, %v2733
    %v2749 = vmul.f32 %v2728, %v2733
    %v2750 = vadd.f32 %v2616, %v2734
    %v2751 = vadd.f32 %v2617, %v2735
    %v2752 = vadd.f32 %v2618, %v2736
    %v2753 = vadd.f32 %v2619, %v2737
    %v2754 = vadd.f32 %v2620, %v2738
    %v2755 = vadd.f32 %v2621, %v2739
    %v2756 = vadd.f32 %v2622, %v2740
    %v2757 = vadd.f32 %v2623, %v2741
    %v2758 = vadd.f32 %v2624, %v2742
    %v2759 = vadd.f32 %v2625, %v2743
    %v2760 = vadd.f32 %v2626, %v2744
    %v2761 = vadd.f32 %v2627, %v2745
    %v2762 = vadd.f32 %v2628, %v2746
    %v2763 = vadd.f32 %v2629, %v2747
    %v2764 = vadd.f32 %v2630, %v2748
    %v2765 = vadd.f32 %v2631, %v2749
    %v2766 = vld [vmem:[#allocation9 + $0x4] sm:$0x1]
    %v2767 = vld [vmem:[%s2633 + $0x1] sm:$0xff]
    %v2768 = vld [vmem:[%s2633 + $0x9] sm:$0xff]
    %v2769 = vld [vmem:[%s2633 + $0x19] sm:$0xff]
    %v2770 = vld [vmem:[%s2633 + $0x21] sm:$0xff]
    %v2771 = vld [vmem:[%s2633 + $0x31] sm:$0xff]
    %v2772 = vld [vmem:[%s2633 + $0x39] sm:$0xff]
    %v2773 = vld [vmem:[%s2633 + $0x49] sm:$0xff]
    %v2774 = vld [vmem:[%s2633 + $0x51] sm:$0xff]
    %v2775 = vld [vmem:[%s2633 + $0x1b1] sm:$0xff]
    %v2776 = vld [vmem:[%s2633 + $0x1b9] sm:$0xff]
    %v2777 = vld [vmem:[%s2633 + $0x1c9] sm:$0xff]
    %v2778 = vld [vmem:[%s2633 + $0x1d1] sm:$0xff]
    %v2779 = vld [vmem:[%s2633 + $0x1e1] sm:$0xff]
    %v2780 = vld [vmem:[%s2633 + $0x1e9] sm:$0xff]
    %v2781 = vld [vmem:[%s2633 + $0x1f9] sm:$0xff]
    %v2782 = vld [vmem:[%s2633 + $0x201] sm:$0xff]
    %2784 = vset.pattern.permute.xlu0 0
    %2785 = vperm.xlu0 %2784, %v2767
    %v2786 = vpop.permute.xlu0 %2785
    %2789 = vset.pattern.permute.xlu0 0
    %2790 = vperm.xlu0 %2789, %v2768
    %v2791 = vpop.permute.xlu0 %2790
    %2794 = vset.pattern.permute.xlu0 0
    %2795 = vperm.xlu0 %2794, %v2769
    %v2796 = vpop.permute.xlu0 %2795
    %2799 = vset.pattern.permute.xlu0 0
    %2800 = vperm.xlu0 %2799, %v2770
    %v2801 = vpop.permute.xlu0 %2800
    %2804 = vset.pattern.permute.xlu0 0
    %2805 = vperm.xlu0 %2804, %v2771
    %v2806 = vpop.permute.xlu0 %2805
    %2809 = vset.pattern.permute.xlu0 0
    %2810 = vperm.xlu0 %2809, %v2772
    %v2811 = vpop.permute.xlu0 %2810
    %2814 = vset.pattern.permute.xlu0 0
    %2815 = vperm.xlu0 %2814, %v2773
    %v2816 = vpop.permute.xlu0 %2815
    %2819 = vset.pattern.permute.xlu0 0
    %2820 = vperm.xlu0 %2819, %v2774
    %v2821 = vpop.permute.xlu0 %2820
    %2824 = vset.pattern.permute.xlu0 0
    %2825 = vperm.xlu0 %2824, %v2775
    %v2826 = vpop.permute.xlu0 %2825
    %2829 = vset.pattern.permute.xlu0 0
    %2830 = vperm.xlu0 %2829, %v2776
    %v2831 = vpop.permute.xlu0 %2830
    %2834 = vset.pattern.permute.xlu0 0
    %2835 = vperm.xlu0 %2834, %v2777
    %v2836 = vpop.permute.xlu0 %2835
    %2839 = vset.pattern.permute.xlu0 0
    %2840 = vperm.xlu0 %2839, %v2778
    %v2841 = vpop.permute.xlu0 %2840
    %2844 = vset.pattern.permute.xlu0 0
    %2845 = vperm.xlu0 %2844, %v2779
    %v2846 = vpop.permute.xlu0 %2845
    %2849 = vset.pattern.permute.xlu0 0
    %2850 = vperm.xlu0 %2849, %v2780
    %v2851 = vpop.permute.xlu0 %2850
    %2854 = vset.pattern.permute.xlu0 0
    %2855 = vperm.xlu0 %2854, %v2781
    %v2856 = vpop.permute.xlu0 %2855
    %2859 = vset.pattern.permute.xlu0 0
    %2860 = vperm.xlu0 %2859, %v2782
    %v2861 = vpop.permute.xlu0 %2860
    %v2863 = vlaneseq
    %v2864 = vshrl.u32 %v2863, 7
    %v2865 = vsub.s32 0, %v2864
    %v2866 = vrot.slane %v2766, %v2865
    %v2867 = vmul.f32 %v2786, %v2866
    %v2868 = vmul.f32 %v2791, %v2866
    %v2869 = vmul.f32 %v2796, %v2866
    %v2870 = vmul.f32 %v2801, %v2866
    %v2871 = vmul.f32 %v2806, %v2866
    %v2872 = vmul.f32 %v2811, %v2866
    %v2873 = vmul.f32 %v2816, %v2866
    %v2874 = vmul.f32 %v2821, %v2866
    %v2875 = vmul.f32 %v2826, %v2866
    %v2876 = vmul.f32 %v2831, %v2866
    %v2877 = vmul.f32 %v2836, %v2866
    %v2878 = vmul.f32 %v2841, %v2866
    %v2879 = vmul.f32 %v2846, %v2866
    %v2880 = vmul.f32 %v2851, %v2866
    %v2881 = vmul.f32 %v2856, %v2866
    %v2882 = vmul.f32 %v2861, %v2866
    %v2883 = vadd.f32 %v2750, %v2867
    %v2884 = vadd.f32 %v2751, %v2868
    %v2885 = vadd.f32 %v2752, %v2869
    %v2886 = vadd.f32 %v2753, %v2870
    %v2887 = vadd.f32 %v2754, %v2871
    %v2888 = vadd.f32 %v2755, %v2872
    %v2889 = vadd.f32 %v2756, %v2873
    %v2890 = vadd.f32 %v2757, %v2874
    %v2891 = vadd.f32 %v2758, %v2875
    %v2892 = vadd.f32 %v2759, %v2876
    %v2893 = vadd.f32 %v2760, %v2877
    %v2894 = vadd.f32 %v2761, %v2878
    %v2895 = vadd.f32 %v2762, %v2879
    %v2896 = vadd.f32 %v2763, %v2880
    %v2897 = vadd.f32 %v2764, %v2881
    %v2898 = vadd.f32 %v2765, %v2882
    %v2899 = vld [vmem:[#allocation9 + $0x5] sm:$0x1]
    %v2900 = vld [vmem:[%s2633 + $0x2] sm:$0xff]
    %v2901 = vld [vmem:[%s2633 + $0xa] sm:$0xff]
    %v2902 = vld [vmem:[%s2633 + $0x1a] sm:$0xff]
    %v2903 = vld [vmem:[%s2633 + $0x22] sm:$0xff]
    %v2904 = vld [vmem:[%s2633 + $0x32] sm:$0xff]
    %v2905 = vld [vmem:[%s2633 + $0x3a] sm:$0xff]
    %v2906 = vld [vmem:[%s2633 + $0x4a] sm:$0xff]
    %v2907 = vld [vmem:[%s2633 + $0x52] sm:$0xff]
    %v2908 = vld [vmem:[%s2633 + $0x1b2] sm:$0xff]
    %v2909 = vld [vmem:[%s2633 + $0x1ba] sm:$0xff]
    %v2910 = vld [vmem:[%s2633 + $0x1ca] sm:$0xff]
    %v2911 = vld [vmem:[%s2633 + $0x1d2] sm:$0xff]
    %v2912 = vld [vmem:[%s2633 + $0x1e2] sm:$0xff]
    %v2913 = vld [vmem:[%s2633 + $0x1ea] sm:$0xff]
    %v2914 = vld [vmem:[%s2633 + $0x1fa] sm:$0xff]
    %v2915 = vld [vmem:[%s2633 + $0x202] sm:$0xff]
    %2917 = vset.pattern.permute.xlu0 0
    %2918 = vperm.xlu0 %2917, %v2900
    %v2919 = vpop.permute.xlu0 %2918
    %2922 = vset.pattern.permute.xlu0 0
    %2923 = vperm.xlu0 %2922, %v2901
    %v2924 = vpop.permute.xlu0 %2923
    %2927 = vset.pattern.permute.xlu0 0
    %2928 = vperm.xlu0 %2927, %v2902
    %v2929 = vpop.permute.xlu0 %2928
    %2932 = vset.pattern.permute.xlu0 0
    %2933 = vperm.xlu0 %2932, %v2903
    %v2934 = vpop.permute.xlu0 %2933
    %2937 = vset.pattern.permute.xlu0 0
    %2938 = vperm.xlu0 %2937, %v2904
    %v2939 = vpop.permute.xlu0 %2938
    %2942 = vset.pattern.permute.xlu0 0
    %2943 = vperm.xlu0 %2942, %v2905
    %v2944 = vpop.permute.xlu0 %2943
    %2947 = vset.pattern.permute.xlu0 0
    %2948 = vperm.xlu0 %2947, %v2906
    %v2949 = vpop.permute.xlu0 %2948
    %2952 = vset.pattern.permute.xlu0 0
    %2953 = vperm.xlu0 %2952, %v2907
    %v2954 = vpop.permute.xlu0 %2953
    %2957 = vset.pattern.permute.xlu0 0
    %2958 = vperm.xlu0 %2957, %v2908
    %v2959 = vpop.permute.xlu0 %2958
    %2962 = vset.pattern.permute.xlu0 0
    %2963 = vperm.xlu0 %2962, %v2909
    %v2964 = vpop.permute.xlu0 %2963
    %2967 = vset.pattern.permute.xlu0 0
    %2968 = vperm.xlu0 %2967, %v2910
    %v2969 = vpop.permute.xlu0 %2968
    %2972 = vset.pattern.permute.xlu0 0
    %2973 = vperm.xlu0 %2972, %v2911
    %v2974 = vpop.permute.xlu0 %2973
    %2977 = vset.pattern.permute.xlu0 0
    %2978 = vperm.xlu0 %2977, %v2912
    %v2979 = vpop.permute.xlu0 %2978
    %2982 = vset.pattern.permute.xlu0 0
    %2983 = vperm.xlu0 %2982, %v2913
    %v2984 = vpop.permute.xlu0 %2983
    %2987 = vset.pattern.permute.xlu0 0
    %2988 = vperm.xlu0 %2987, %v2914
    %v2989 = vpop.permute.xlu0 %2988
    %2992 = vset.pattern.permute.xlu0 0
    %2993 = vperm.xlu0 %2992, %v2915
    %v2994 = vpop.permute.xlu0 %2993
    %v2996 = vlaneseq
    %v2997 = vshrl.u32 %v2996, 7
    %v2998 = vsub.s32 0, %v2997
    %v2999 = vrot.slane %v2899, %v2998
    %v3000 = vmul.f32 %v2919, %v2999
    %v3001 = vmul.f32 %v2924, %v2999
    %v3002 = vmul.f32 %v2929, %v2999
    %v3003 = vmul.f32 %v2934, %v2999
    %v3004 = vmul.f32 %v2939, %v2999
    %v3005 = vmul.f32 %v2944, %v2999
    %v3006 = vmul.f32 %v2949, %v2999
    %v3007 = vmul.f32 %v2954, %v2999
    %v3008 = vmul.f32 %v2959, %v2999
    %v3009 = vmul.f32 %v2964, %v2999
    %v3010 = vmul.f32 %v2969, %v2999
    %v3011 = vmul.f32 %v2974, %v2999
    %v3012 = vmul.f32 %v2979, %v2999
    %v3013 = vmul.f32 %v2984, %v2999
    %v3014 = vmul.f32 %v2989, %v2999
    %v3015 = vmul.f32 %v2994, %v2999
    %v3016 = vadd.f32 %v2883, %v3000
    %v3017 = vadd.f32 %v2884, %v3001
    %v3018 = vadd.f32 %v2885, %v3002
    %v3019 = vadd.f32 %v2886, %v3003
    %v3020 = vadd.f32 %v2887, %v3004
    %v3021 = vadd.f32 %v2888, %v3005
    %v3022 = vadd.f32 %v2889, %v3006
    %v3023 = vadd.f32 %v2890, %v3007
    %v3024 = vadd.f32 %v2891, %v3008
    %v3025 = vadd.f32 %v2892, %v3009
    %v3026 = vadd.f32 %v2893, %v3010
    %v3027 = vadd.f32 %v2894, %v3011
    %v3028 = vadd.f32 %v2895, %v3012
    %v3029 = vadd.f32 %v2896, %v3013
    %v3030 = vadd.f32 %v2897, %v3014
    %v3031 = vadd.f32 %v2898, %v3015
    %v3032 = vld [vmem:[#allocation9 + $0x6] sm:$0x1]
    %s3033 = scalar_lea.vmem [#allocation2], 144
    %v3034 = vld [vmem:[%s3033] sm:$0xff]
    %v3035 = vld [vmem:[%s3033 + $0x8] sm:$0xff]
    %v3036 = vld [vmem:[%s3033 + $0x18] sm:$0xff]
    %v3037 = vld [vmem:[%s3033 + $0x20] sm:$0xff]
    %v3038 = vld [vmem:[%s3033 + $0x30] sm:$0xff]
    %v3039 = vld [vmem:[%s3033 + $0x38] sm:$0xff]
    %v3040 = vld [vmem:[%s3033 + $0x48] sm:$0xff]
    %v3041 = vld [vmem:[%s3033 + $0x50] sm:$0xff]
    %v3042 = vld [vmem:[%s3033 + $0x1b0] sm:$0xff]
    %v3043 = vld [vmem:[%s3033 + $0x1b8] sm:$0xff]
    %v3044 = vld [vmem:[%s3033 + $0x1c8] sm:$0xff]
    %v3045 = vld [vmem:[%s3033 + $0x1d0] sm:$0xff]
    %v3046 = vld [vmem:[%s3033 + $0x1e0] sm:$0xff]
    %v3047 = vld [vmem:[%s3033 + $0x1e8] sm:$0xff]
    %v3048 = vld [vmem:[%s3033 + $0x1f8] sm:$0xff]
    %v3049 = vld [vmem:[%s3033 + $0x200] sm:$0xff]
    %3051 = vset.pattern.permute.xlu0 0
    %3052 = vperm.xlu0 %3051, %v3034
    %v3053 = vpop.permute.xlu0 %3052
    %3056 = vset.pattern.permute.xlu0 0
    %3057 = vperm.xlu0 %3056, %v3035
    %v3058 = vpop.permute.xlu0 %3057
    %3061 = vset.pattern.permute.xlu0 0
    %3062 = vperm.xlu0 %3061, %v3036
    %v3063 = vpop.permute.xlu0 %3062
    %3066 = vset.pattern.permute.xlu0 0
    %3067 = vperm.xlu0 %3066, %v3037
    %v3068 = vpop.permute.xlu0 %3067
    %3071 = vset.pattern.permute.xlu0 0
    %3072 = vperm.xlu0 %3071, %v3038
    %v3073 = vpop.permute.xlu0 %3072
    %3076 = vset.pattern.permute.xlu0 0
    %3077 = vperm.xlu0 %3076, %v3039
    %v3078 = vpop.permute.xlu0 %3077
    %3081 = vset.pattern.permute.xlu0 0
    %3082 = vperm.xlu0 %3081, %v3040
    %v3083 = vpop.permute.xlu0 %3082
    %3086 = vset.pattern.permute.xlu0 0
    %3087 = vperm.xlu0 %3086, %v3041
    %v3088 = vpop.permute.xlu0 %3087
    %3091 = vset.pattern.permute.xlu0 0
    %3092 = vperm.xlu0 %3091, %v3042
    %v3093 = vpop.permute.xlu0 %3092
    %3096 = vset.pattern.permute.xlu0 0
    %3097 = vperm.xlu0 %3096, %v3043
    %v3098 = vpop.permute.xlu0 %3097
    %3101 = vset.pattern.permute.xlu0 0
    %3102 = vperm.xlu0 %3101, %v3044
    %v3103 = vpop.permute.xlu0 %3102
    %3106 = vset.pattern.permute.xlu0 0
    %3107 = vperm.xlu0 %3106, %v3045
    %v3108 = vpop.permute.xlu0 %3107
    %3111 = vset.pattern.permute.xlu0 0
    %3112 = vperm.xlu0 %3111, %v3046
    %v3113 = vpop.permute.xlu0 %3112
    %3116 = vset.pattern.permute.xlu0 0
    %3117 = vperm.xlu0 %3116, %v3047
    %v3118 = vpop.permute.xlu0 %3117
    %3121 = vset.pattern.permute.xlu0 0
    %3122 = vperm.xlu0 %3121, %v3048
    %v3123 = vpop.permute.xlu0 %3122
    %3126 = vset.pattern.permute.xlu0 0
    %3127 = vperm.xlu0 %3126, %v3049
    %v3128 = vpop.permute.xlu0 %3127
    %v3130 = vlaneseq
    %v3131 = vshrl.u32 %v3130, 7
    %v3132 = vsub.s32 0, %v3131
    %v3133 = vrot.slane %v3032, %v3132
    %v3134 = vmul.f32 %v3053, %v3133
    %v3135 = vmul.f32 %v3058, %v3133
    %v3136 = vmul.f32 %v3063, %v3133
    %v3137 = vmul.f32 %v3068, %v3133
    %v3138 = vmul.f32 %v3073, %v3133
    %v3139 = vmul.f32 %v3078, %v3133
    %v3140 = vmul.f32 %v3083, %v3133
    %v3141 = vmul.f32 %v3088, %v3133
    %v3142 = vmul.f32 %v3093, %v3133
    %v3143 = vmul.f32 %v3098, %v3133
    %v3144 = vmul.f32 %v3103, %v3133
    %v3145 = vmul.f32 %v3108, %v3133
    %v3146 = vmul.f32 %v3113, %v3133
    %v3147 = vmul.f32 %v3118, %v3133
    %v3148 = vmul.f32 %v3123, %v3133
    %v3149 = vmul.f32 %v3128, %v3133
    %v3150 = vadd.f32 %v3016, %v3134
    %v3151 = vadd.f32 %v3017, %v3135
    %v3152 = vadd.f32 %v3018, %v3136
    %v3153 = vadd.f32 %v3019, %v3137
    %v3154 = vadd.f32 %v3020, %v3138
    %v3155 = vadd.f32 %v3021, %v3139
    %v3156 = vadd.f32 %v3022, %v3140
    %v3157 = vadd.f32 %v3023, %v3141
    %v3158 = vadd.f32 %v3024, %v3142
    %v3159 = vadd.f32 %v3025, %v3143
    %v3160 = vadd.f32 %v3026, %v3144
    %v3161 = vadd.f32 %v3027, %v3145
    %v3162 = vadd.f32 %v3028, %v3146
    %v3163 = vadd.f32 %v3029, %v3147
    %v3164 = vadd.f32 %v3030, %v3148
    %v3165 = vadd.f32 %v3031, %v3149
    %v3166 = vld [vmem:[#allocation9 + $0x7] sm:$0x1]
    %v3167 = vld [vmem:[%s3033 + $0x1] sm:$0xff]
    %v3168 = vld [vmem:[%s3033 + $0x9] sm:$0xff]
    %v3169 = vld [vmem:[%s3033 + $0x19] sm:$0xff]
    %v3170 = vld [vmem:[%s3033 + $0x21] sm:$0xff]
    %v3171 = vld [vmem:[%s3033 + $0x31] sm:$0xff]
    %v3172 = vld [vmem:[%s3033 + $0x39] sm:$0xff]
    %v3173 = vld [vmem:[%s3033 + $0x49] sm:$0xff]
    %v3174 = vld [vmem:[%s3033 + $0x51] sm:$0xff]
    %v3175 = vld [vmem:[%s3033 + $0x1b1] sm:$0xff]
    %v3176 = vld [vmem:[%s3033 + $0x1b9] sm:$0xff]
    %v3177 = vld [vmem:[%s3033 + $0x1c9] sm:$0xff]
    %v3178 = vld [vmem:[%s3033 + $0x1d1] sm:$0xff]
    %v3179 = vld [vmem:[%s3033 + $0x1e1] sm:$0xff]
    %v3180 = vld [vmem:[%s3033 + $0x1e9] sm:$0xff]
    %v3181 = vld [vmem:[%s3033 + $0x1f9] sm:$0xff]
    %v3182 = vld [vmem:[%s3033 + $0x201] sm:$0xff]
    %3184 = vset.pattern.permute.xlu0 0
    %3185 = vperm.xlu0 %3184, %v3167
    %v3186 = vpop.permute.xlu0 %3185
    %3189 = vset.pattern.permute.xlu0 0
    %3190 = vperm.xlu0 %3189, %v3168
    %v3191 = vpop.permute.xlu0 %3190
    %3194 = vset.pattern.permute.xlu0 0
    %3195 = vperm.xlu0 %3194, %v3169
    %v3196 = vpop.permute.xlu0 %3195
    %3199 = vset.pattern.permute.xlu0 0
    %3200 = vperm.xlu0 %3199, %v3170
    %v3201 = vpop.permute.xlu0 %3200
    %3204 = vset.pattern.permute.xlu0 0
    %3205 = vperm.xlu0 %3204, %v3171
    %v3206 = vpop.permute.xlu0 %3205
    %3209 = vset.pattern.permute.xlu0 0
    %3210 = vperm.xlu0 %3209, %v3172
    %v3211 = vpop.permute.xlu0 %3210
    %3214 = vset.pattern.permute.xlu0 0
    %3215 = vperm.xlu0 %3214, %v3173
    %v3216 = vpop.permute.xlu0 %3215
    %3219 = vset.pattern.permute.xlu0 0
    %3220 = vperm.xlu0 %3219, %v3174
    %v3221 = vpop.permute.xlu0 %3220
    %3224 = vset.pattern.permute.xlu0 0
    %3225 = vperm.xlu0 %3224, %v3175
    %v3226 = vpop.permute.xlu0 %3225
    %3229 = vset.pattern.permute.xlu0 0
    %3230 = vperm.xlu0 %3229, %v3176
    %v3231 = vpop.permute.xlu0 %3230
    %3234 = vset.pattern.permute.xlu0 0
    %3235 = vperm.xlu0 %3234, %v3177
    %v3236 = vpop.permute.xlu0 %3235
    %3239 = vset.pattern.permute.xlu0 0
    %3240 = vperm.xlu0 %3239, %v3178
    %v3241 = vpop.permute.xlu0 %3240
    %3244 = vset.pattern.permute.xlu0 0
    %3245 = vperm.xlu0 %3244, %v3179
    %v3246 = vpop.permute.xlu0 %3245
    %3249 = vset.pattern.permute.xlu0 0
    %3250 = vperm.xlu0 %3249, %v3180
    %v3251 = vpop.permute.xlu0 %3250
    %3254 = vset.pattern.permute.xlu0 0
    %3255 = vperm.xlu0 %3254, %v3181
    %v3256 = vpop.permute.xlu0 %3255
    %3259 = vset.pattern.permute.xlu0 0
    %3260 = vperm.xlu0 %3259, %v3182
    %v3261 = vpop.permute.xlu0 %3260
    %v3263 = vlaneseq
    %v3264 = vshrl.u32 %v3263, 7
    %v3265 = vsub.s32 0, %v3264
    %v3266 = vrot.slane %v3166, %v3265
    %v3267 = vmul.f32 %v3186, %v3266
    %v3268 = vmul.f32 %v3191, %v3266
    %v3269 = vmul.f32 %v3196, %v3266
    %v3270 = vmul.f32 %v3201, %v3266
    %v3271 = vmul.f32 %v3206, %v3266
    %v3272 = vmul.f32 %v3211, %v3266
    %v3273 = vmul.f32 %v3216, %v3266
    %v3274 = vmul.f32 %v3221, %v3266
    %v3275 = vmul.f32 %v3226, %v3266
    %v3276 = vmul.f32 %v3231, %v3266
    %v3277 = vmul.f32 %v3236, %v3266
    %v3278 = vmul.f32 %v3241, %v3266
    %v3279 = vmul.f32 %v3246, %v3266
    %v3280 = vmul.f32 %v3251, %v3266
    %v3281 = vmul.f32 %v3256, %v3266
    %v3282 = vmul.f32 %v3261, %v3266
    %v3283 = vadd.f32 %v3150, %v3267
    %v3284 = vadd.f32 %v3151, %v3268
    %v3285 = vadd.f32 %v3152, %v3269
    %v3286 = vadd.f32 %v3153, %v3270
    %v3287 = vadd.f32 %v3154, %v3271
    %v3288 = vadd.f32 %v3155, %v3272
    %v3289 = vadd.f32 %v3156, %v3273
    %v3290 = vadd.f32 %v3157, %v3274
    %v3291 = vadd.f32 %v3158, %v3275
    %v3292 = vadd.f32 %v3159, %v3276
    %v3293 = vadd.f32 %v3160, %v3277
    %v3294 = vadd.f32 %v3161, %v3278
    %v3295 = vadd.f32 %v3162, %v3279
    %v3296 = vadd.f32 %v3163, %v3280
    %v3297 = vadd.f32 %v3164, %v3281
    %v3298 = vadd.f32 %v3165, %v3282
    %v3299 = vld [vmem:[#allocation9 + $0x8] sm:$0x1]
    %v3300 = vld [vmem:[%s3033 + $0x2] sm:$0xff]
    %v3301 = vld [vmem:[%s3033 + $0xa] sm:$0xff]
    %v3302 = vld [vmem:[%s3033 + $0x1a] sm:$0xff]
    %v3303 = vld [vmem:[%s3033 + $0x22] sm:$0xff]
    %v3304 = vld [vmem:[%s3033 + $0x32] sm:$0xff]
    %v3305 = vld [vmem:[%s3033 + $0x3a] sm:$0xff]
    %v3306 = vld [vmem:[%s3033 + $0x4a] sm:$0xff]
    %v3307 = vld [vmem:[%s3033 + $0x52] sm:$0xff]
    %v3308 = vld [vmem:[%s3033 + $0x1b2] sm:$0xff]
    %v3309 = vld [vmem:[%s3033 + $0x1ba] sm:$0xff]
    %v3310 = vld [vmem:[%s3033 + $0x1ca] sm:$0xff]
    %v3311 = vld [vmem:[%s3033 + $0x1d2] sm:$0xff]
    %v3312 = vld [vmem:[%s3033 + $0x1e2] sm:$0xff]
    %v3313 = vld [vmem:[%s3033 + $0x1ea] sm:$0xff]
    %v3314 = vld [vmem:[%s3033 + $0x1fa] sm:$0xff]
    %v3315 = vld [vmem:[%s3033 + $0x202] sm:$0xff]
    %3317 = vset.pattern.permute.xlu0 0
    %3318 = vperm.xlu0 %3317, %v3300
    %v3319 = vpop.permute.xlu0 %3318
    %3322 = vset.pattern.permute.xlu0 0
    %3323 = vperm.xlu0 %3322, %v3301
    %v3324 = vpop.permute.xlu0 %3323
    %3327 = vset.pattern.permute.xlu0 0
    %3328 = vperm.xlu0 %3327, %v3302
    %v3329 = vpop.permute.xlu0 %3328
    %3332 = vset.pattern.permute.xlu0 0
    %3333 = vperm.xlu0 %3332, %v3303
    %v3334 = vpop.permute.xlu0 %3333
    %3337 = vset.pattern.permute.xlu0 0
    %3338 = vperm.xlu0 %3337, %v3304
    %v3339 = vpop.permute.xlu0 %3338
    %3342 = vset.pattern.permute.xlu0 0
    %3343 = vperm.xlu0 %3342, %v3305
    %v3344 = vpop.permute.xlu0 %3343
    %3347 = vset.pattern.permute.xlu0 0
    %3348 = vperm.xlu0 %3347, %v3306
    %v3349 = vpop.permute.xlu0 %3348
    %3352 = vset.pattern.permute.xlu0 0
    %3353 = vperm.xlu0 %3352, %v3307
    %v3354 = vpop.permute.xlu0 %3353
    %3357 = vset.pattern.permute.xlu0 0
    %3358 = vperm.xlu0 %3357, %v3308
    %v3359 = vpop.permute.xlu0 %3358
    %3362 = vset.pattern.permute.xlu0 0
    %3363 = vperm.xlu0 %3362, %v3309
    %v3364 = vpop.permute.xlu0 %3363
    %3367 = vset.pattern.permute.xlu0 0
    %3368 = vperm.xlu0 %3367, %v3310
    %v3369 = vpop.permute.xlu0 %3368
    %3372 = vset.pattern.permute.xlu0 0
    %3373 = vperm.xlu0 %3372, %v3311
    %v3374 = vpop.permute.xlu0 %3373
    %3377 = vset.pattern.permute.xlu0 0
    %3378 = vperm.xlu0 %3377, %v3312
    %v3379 = vpop.permute.xlu0 %3378
    %3382 = vset.pattern.permute.xlu0 0
    %3383 = vperm.xlu0 %3382, %v3313
    %v3384 = vpop.permute.xlu0 %3383
    %3387 = vset.pattern.permute.xlu0 0
    %3388 = vperm.xlu0 %3387, %v3314
    %v3389 = vpop.permute.xlu0 %3388
    %3392 = vset.pattern.permute.xlu0 0
    %3393 = vperm.xlu0 %3392, %v3315
    %v3394 = vpop.permute.xlu0 %3393
    %v3396 = vlaneseq
    %v3397 = vshrl.u32 %v3396, 7
    %v3398 = vsub.s32 0, %v3397
    %v3399 = vrot.slane %v3299, %v3398
    %v3400 = vmul.f32 %v3319, %v3399
    %v3401 = vmul.f32 %v3324, %v3399
    %v3402 = vmul.f32 %v3329, %v3399
    %v3403 = vmul.f32 %v3334, %v3399
    %v3404 = vmul.f32 %v3339, %v3399
    %v3405 = vmul.f32 %v3344, %v3399
    %v3406 = vmul.f32 %v3349, %v3399
    %v3407 = vmul.f32 %v3354, %v3399
    %v3408 = vmul.f32 %v3359, %v3399
    %v3409 = vmul.f32 %v3364, %v3399
    %v3410 = vmul.f32 %v3369, %v3399
    %v3411 = vmul.f32 %v3374, %v3399
    %v3412 = vmul.f32 %v3379, %v3399
    %v3413 = vmul.f32 %v3384, %v3399
    %v3414 = vmul.f32 %v3389, %v3399
    %v3415 = vmul.f32 %v3394, %v3399
    %v3416 = vadd.f32 %v3283, %v3400
    %v3417 = vadd.f32 %v3284, %v3401
    %v3418 = vadd.f32 %v3285, %v3402
    %v3419 = vadd.f32 %v3286, %v3403
    %v3420 = vadd.f32 %v3287, %v3404
    %v3421 = vadd.f32 %v3288, %v3405
    %v3422 = vadd.f32 %v3289, %v3406
    %v3423 = vadd.f32 %v3290, %v3407
    %v3424 = vadd.f32 %v3291, %v3408
    %v3425 = vadd.f32 %v3292, %v3409
    %v3426 = vadd.f32 %v3293, %v3410
    %v3427 = vadd.f32 %v3294, %v3411
    %v3428 = vadd.f32 %v3295, %v3412
    %v3429 = vadd.f32 %v3296, %v3413
    %v3430 = vadd.f32 %v3297, %v3414
    %v3431 = vadd.f32 %v3298, %v3415
    %v3432 = vadd.f32 %v3416, %v1682
    %v3433 = vadd.f32 %v3417, %v1682
    %v3434 = vadd.f32 %v3418, %v1682
    %v3435 = vadd.f32 %v3419, %v1682
    %v3436 = vadd.f32 %v3420, %v1682
    %v3437 = vadd.f32 %v3421, %v1682
    %v3438 = vadd.f32 %v3422, %v1682
    %v3439 = vadd.f32 %v3423, %v1682
    %v3440 = vadd.f32 %v3424, %v1682
    %v3441 = vadd.f32 %v3425, %v1682
    %v3442 = vadd.f32 %v3426, %v1682
    %v3443 = vadd.f32 %v3427, %v1682
    %v3444 = vadd.f32 %v3428, %v1682
    %v3445 = vadd.f32 %v3429, %v1682
    %v3446 = vadd.f32 %v3430, %v1682
    %v3447 = vadd.f32 %v3431, %v1682
    %v3448 = vmax.f32 %v3432, 0.0
    %v3449 = vmax.f32 %v3433, 0.0
    %v3450 = vmax.f32 %v3434, 0.0
    %v3451 = vmax.f32 %v3435, 0.0
    %v3452 = vmax.f32 %v3436, 0.0
    %v3453 = vmax.f32 %v3437, 0.0
    %v3454 = vmax.f32 %v3438, 0.0
    %v3455 = vmax.f32 %v3439, 0.0
    %v3456 = vmax.f32 %v3440, 0.0
    %v3457 = vmax.f32 %v3441, 0.0
    %v3458 = vmax.f32 %v3442, 0.0
    %v3459 = vmax.f32 %v3443, 0.0
    %v3460 = vmax.f32 %v3444, 0.0
    %v3461 = vmax.f32 %v3445, 0.0
    %v3462 = vmax.f32 %v3446, 0.0
    %v3463 = vmax.f32 %v3447, 0.0
    %v3464 = vmax.f32 %v3448, %v3450
    %v3465 = vmax.f32 %v3449, %v3451
    %v3466 = vmax.f32 %v3452, %v3454
    %v3467 = vmax.f32 %v3453, %v3455
    %v3468 = vmax.f32 %v3456, %v3458
    %v3469 = vmax.f32 %v3457, %v3459
    %v3470 = vmax.f32 %v3460, %v3462
    %v3471 = vmax.f32 %v3461, %v3463
    %v3480 = vcombine.high %v3464, %v3464
    %v3482 = vunpack.c.l.s4 1983009808
    %v3483 = vunpack.c.0.s8 %v3482
    %v3484 = vlaneseq
    %v3485 = vshrl.u32 %v3484, 7
    %v3486 = vsub.s32 %v3483, %v3485
    %v3487 = vrot.slane %v3464, %v3486
    %v3489 = vunpack.c.l.s4 1983009808
    %v3490 = vunpack.c.0.s8 %v3489
    %v3491 = vlaneseq
    %v3492 = vshrl.u32 %v3491, 7
    %v3493 = vsub.s32 %v3490, %v3492
    %v3494 = vrot.slane %v3480, %v3493
    %v3495 = vcombine.high %v3487, %v3487
    %v3496 = vcombine.high %v3494, %v3494
    %v3497 = vcombine.high %v3465, %v3465
    %v3499 = vunpack.c.l.s4 1983009808
    %v3500 = vunpack.c.0.s8 %v3499
    %v3501 = vlaneseq
    %v3502 = vshrl.u32 %v3501, 7
    %v3503 = vsub.s32 %v3500, %v3502
    %v3504 = vrot.slane %v3465, %v3503
    %v3506 = vunpack.c.l.s4 1983009808
    %v3507 = vunpack.c.0.s8 %v3506
    %v3508 = vlaneseq
    %v3509 = vshrl.u32 %v3508, 7
    %v3510 = vsub.s32 %v3507, %v3509
    %v3511 = vrot.slane %v3497, %v3510
    %v3512 = vcombine.high %v3504, %v3504
    %v3513 = vcombine.high %v3511, %v3511
    %v3514 = vcombine.high %v3466, %v3466
    %v3516 = vunpack.c.l.s4 1983009808
    %v3517 = vunpack.c.0.s8 %v3516
    %v3518 = vlaneseq
    %v3519 = vshrl.u32 %v3518, 7
    %v3520 = vsub.s32 %v3517, %v3519
    %v3521 = vrot.slane %v3466, %v3520
    %v3523 = vunpack.c.l.s4 1983009808
    %v3524 = vunpack.c.0.s8 %v3523
    %v3525 = vlaneseq
    %v3526 = vshrl.u32 %v3525, 7
    %v3527 = vsub.s32 %v3524, %v3526
    %v3528 = vrot.slane %v3514, %v3527
    %v3529 = vcombine.high %v3521, %v3521
    %v3530 = vcombine.high %v3528, %v3528
    %v3531 = vcombine.high %v3467, %v3467
    %v3533 = vunpack.c.l.s4 1983009808
    %v3534 = vunpack.c.0.s8 %v3533
    %v3535 = vlaneseq
    %v3536 = vshrl.u32 %v3535, 7
    %v3537 = vsub.s32 %v3534, %v3536
    %v3538 = vrot.slane %v3467, %v3537
    %v3540 = vunpack.c.l.s4 1983009808
    %v3541 = vunpack.c.0.s8 %v3540
    %v3542 = vlaneseq
    %v3543 = vshrl.u32 %v3542, 7
    %v3544 = vsub.s32 %v3541, %v3543
    %v3545 = vrot.slane %v3531, %v3544
    %v3546 = vcombine.high %v3538, %v3538
    %v3547 = vcombine.high %v3545, %v3545
    %v3548 = vcombine.high %v3468, %v3468
    %v3550 = vunpack.c.l.s4 1983009808
    %v3551 = vunpack.c.0.s8 %v3550
    %v3552 = vlaneseq
    %v3553 = vshrl.u32 %v3552, 7
    %v3554 = vsub.s32 %v3551, %v3553
    %v3555 = vrot.slane %v3468, %v3554
    %v3557 = vunpack.c.l.s4 1983009808
    %v3558 = vunpack.c.0.s8 %v3557
    %v3559 = vlaneseq
    %v3560 = vshrl.u32 %v3559, 7
    %v3561 = vsub.s32 %v3558, %v3560
    %v3562 = vrot.slane %v3548, %v3561
    %v3563 = vcombine.high %v3555, %v3555
    %v3564 = vcombine.high %v3562, %v3562
    %v3565 = vcombine.high %v3469, %v3469
    %v3567 = vunpack.c.l.s4 1983009808
    %v3568 = vunpack.c.0.s8 %v3567
    %v3569 = vlaneseq
    %v3570 = vshrl.u32 %v3569, 7
    %v3571 = vsub.s32 %v3568, %v3570
    %v3572 = vrot.slane %v3469, %v3571
    %v3574 = vunpack.c.l.s4 1983009808
    %v3575 = vunpack.c.0.s8 %v3574
    %v3576 = vlaneseq
    %v3577 = vshrl.u32 %v3576, 7
    %v3578 = vsub.s32 %v3575, %v3577
    %v3579 = vrot.slane %v3565, %v3578
    %v3580 = vcombine.high %v3572, %v3572
    %v3581 = vcombine.high %v3579, %v3579
    %v3582 = vcombine.high %v3470, %v3470
    %v3584 = vunpack.c.l.s4 1983009808
    %v3585 = vunpack.c.0.s8 %v3584
    %v3586 = vlaneseq
    %v3587 = vshrl.u32 %v3586, 7
    %v3588 = vsub.s32 %v3585, %v3587
    %v3589 = vrot.slane %v3470, %v3588
    %v3591 = vunpack.c.l.s4 1983009808
    %v3592 = vunpack.c.0.s8 %v3591
    %v3593 = vlaneseq
    %v3594 = vshrl.u32 %v3593, 7
    %v3595 = vsub.s32 %v3592, %v3594
    %v3596 = vrot.slane %v3582, %v3595
    %v3597 = vcombine.high %v3589, %v3589
    %v3598 = vcombine.high %v3596, %v3596
    %v3599 = vcombine.high %v3471, %v3471
    %v3601 = vunpack.c.l.s4 1983009808
    %v3602 = vunpack.c.0.s8 %v3601
    %v3603 = vlaneseq
    %v3604 = vshrl.u32 %v3603, 7
    %v3605 = vsub.s32 %v3602, %v3604
    %v3606 = vrot.slane %v3471, %v3605
    %v3608 = vunpack.c.l.s4 1983009808
    %v3609 = vunpack.c.0.s8 %v3608
    %v3610 = vlaneseq
    %v3611 = vshrl.u32 %v3610, 7
    %v3612 = vsub.s32 %v3609, %v3611
    %v3613 = vrot.slane %v3599, %v3612
    %v3614 = vcombine.high %v3606, %v3606
    %v3615 = vcombine.high %v3613, %v3613
    %v3648 = vrot.slane %v3487, 7
    %v3649 = vrot.slane %v3648, 2
    %v3650 = vrot.slane %v3495, 7
    %v3651 = vrot.slane %v3650, 2
    %v3652 = vrot.slane %v3494, 7
    %v3653 = vrot.slane %v3652, 2
    %v3654 = vrot.slane %v3496, 7
    %v3655 = vrot.slane %v3654, 2
    %v3656 = vrot.slane %v3504, 7
    %v3657 = vrot.slane %v3656, 2
    %v3658 = vrot.slane %v3512, 7
    %v3659 = vrot.slane %v3658, 2
    %v3660 = vrot.slane %v3511, 7
    %v3661 = vrot.slane %v3660, 2
    %v3662 = vrot.slane %v3513, 7
    %v3663 = vrot.slane %v3662, 2
    %v3664 = vrot.slane %v3521, 7
    %v3665 = vrot.slane %v3664, 2
    %v3666 = vrot.slane %v3529, 7
    %v3667 = vrot.slane %v3666, 2
    %v3668 = vrot.slane %v3528, 7
    %v3669 = vrot.slane %v3668, 2
    %v3670 = vrot.slane %v3530, 7
    %v3671 = vrot.slane %v3670, 2
    %v3672 = vrot.slane %v3538, 7
    %v3673 = vrot.slane %v3672, 2
    %v3674 = vrot.slane %v3546, 7
    %v3675 = vrot.slane %v3674, 2
    %v3676 = vrot.slane %v3545, 7
    %v3677 = vrot.slane %v3676, 2
    %v3678 = vrot.slane %v3547, 7
    %v3679 = vrot.slane %v3678, 2
    %v3680 = vrot.slane %v3555, 7
    %v3681 = vrot.slane %v3680, 2
    %v3682 = vrot.slane %v3563, 7
    %v3683 = vrot.slane %v3682, 2
    %v3684 = vrot.slane %v3562, 7
    %v3685 = vrot.slane %v3684, 2
    %v3686 = vrot.slane %v3564, 7
    %v3687 = vrot.slane %v3686, 2
    %v3688 = vrot.slane %v3572, 7
    %v3689 = vrot.slane %v3688, 2
    %v3690 = vrot.slane %v3580, 7
    %v3691 = vrot.slane %v3690, 2
    %v3692 = vrot.slane %v3579, 7
    %v3693 = vrot.slane %v3692, 2
    %v3694 = vrot.slane %v3581, 7
    %v3695 = vrot.slane %v3694, 2
    %v3696 = vrot.slane %v3589, 7
    %v3697 = vrot.slane %v3696, 2
    %v3698 = vrot.slane %v3597, 7
    %v3699 = vrot.slane %v3698, 2
    %v3700 = vrot.slane %v3596, 7
    %v3701 = vrot.slane %v3700, 2
    %v3702 = vrot.slane %v3598, 7
    %v3703 = vrot.slane %v3702, 2
    %v3704 = vrot.slane %v3606, 7
    %v3705 = vrot.slane %v3704, 2
    %v3706 = vrot.slane %v3614, 7
    %v3707 = vrot.slane %v3706, 2
    %v3708 = vrot.slane %v3613, 7
    %v3709 = vrot.slane %v3708, 2
    %v3710 = vrot.slane %v3615, 7
    %v3711 = vrot.slane %v3710, 2
    %v3744 = vmax.f32 %v3487, %v3649
    %v3745 = vmax.f32 %v3495, %v3651
    %v3746 = vmax.f32 %v3494, %v3653
    %v3747 = vmax.f32 %v3496, %v3655
    %v3748 = vmax.f32 %v3504, %v3657
    %v3749 = vmax.f32 %v3512, %v3659
    %v3750 = vmax.f32 %v3511, %v3661
    %v3751 = vmax.f32 %v3513, %v3663
    %v3752 = vmax.f32 %v3521, %v3665
    %v3753 = vmax.f32 %v3529, %v3667
    %v3754 = vmax.f32 %v3528, %v3669
    %v3755 = vmax.f32 %v3530, %v3671
    %v3756 = vmax.f32 %v3538, %v3673
    %v3757 = vmax.f32 %v3546, %v3675
    %v3758 = vmax.f32 %v3545, %v3677
    %v3759 = vmax.f32 %v3547, %v3679
    %v3760 = vmax.f32 %v3555, %v3681
    %v3761 = vmax.f32 %v3563, %v3683
    %v3762 = vmax.f32 %v3562, %v3685
    %v3763 = vmax.f32 %v3564, %v3687
    %v3764 = vmax.f32 %v3572, %v3689
    %v3765 = vmax.f32 %v3580, %v3691
    %v3766 = vmax.f32 %v3579, %v3693
    %v3767 = vmax.f32 %v3581, %v3695
    %v3768 = vmax.f32 %v3589, %v3697
    %v3769 = vmax.f32 %v3597, %v3699
    %v3770 = vmax.f32 %v3596, %v3701
    %v3771 = vmax.f32 %v3598, %v3703
    %v3772 = vmax.f32 %v3606, %v3705
    %v3773 = vmax.f32 %v3614, %v3707
    %v3774 = vmax.f32 %v3613, %v3709
    %v3775 = vmax.f32 %v3615, %v3711
    %v3808 = vlaneseq
    %v3809 = vshrl.u32 %v3808, 7
    %v3810 = vsub.s32 0, %v3809
    %v3811 = vrot.slane %v3744, %v3810
    %v3812 = vlaneseq
    %v3813 = vshrl.u32 %v3812, 7
    %v3814 = vsub.s32 0, %v3813
    %v3815 = vrot.slane %v3745, %v3814
    %v3816 = vlaneseq
    %v3817 = vshrl.u32 %v3816, 7
    %v3818 = vsub.s32 0, %v3817
    %v3819 = vrot.slane %v3746, %v3818
    %v3820 = vlaneseq
    %v3821 = vshrl.u32 %v3820, 7
    %v3822 = vsub.s32 0, %v3821
    %v3823 = vrot.slane %v3747, %v3822
    %v3824 = vlaneseq
    %v3825 = vshrl.u32 %v3824, 7
    %v3826 = vsub.s32 0, %v3825
    %v3827 = vrot.slane %v3748, %v3826
    %v3828 = vlaneseq
    %v3829 = vshrl.u32 %v3828, 7
    %v3830 = vsub.s32 0, %v3829
    %v3831 = vrot.slane %v3749, %v3830
    %v3832 = vlaneseq
    %v3833 = vshrl.u32 %v3832, 7
    %v3834 = vsub.s32 0, %v3833
    %v3835 = vrot.slane %v3750, %v3834
    %v3836 = vlaneseq
    %v3837 = vshrl.u32 %v3836, 7
    %v3838 = vsub.s32 0, %v3837
    %v3839 = vrot.slane %v3751, %v3838
    %v3840 = vlaneseq
    %v3841 = vshrl.u32 %v3840, 7
    %v3842 = vsub.s32 0, %v3841
    %v3843 = vrot.slane %v3752, %v3842
    %v3844 = vlaneseq
    %v3845 = vshrl.u32 %v3844, 7
    %v3846 = vsub.s32 0, %v3845
    %v3847 = vrot.slane %v3753, %v3846
    %v3848 = vlaneseq
    %v3849 = vshrl.u32 %v3848, 7
    %v3850 = vsub.s32 0, %v3849
    %v3851 = vrot.slane %v3754, %v3850
    %v3852 = vlaneseq
    %v3853 = vshrl.u32 %v3852, 7
    %v3854 = vsub.s32 0, %v3853
    %v3855 = vrot.slane %v3755, %v3854
    %v3856 = vlaneseq
    %v3857 = vshrl.u32 %v3856, 7
    %v3858 = vsub.s32 0, %v3857
    %v3859 = vrot.slane %v3756, %v3858
    %v3860 = vlaneseq
    %v3861 = vshrl.u32 %v3860, 7
    %v3862 = vsub.s32 0, %v3861
    %v3863 = vrot.slane %v3757, %v3862
    %v3864 = vlaneseq
    %v3865 = vshrl.u32 %v3864, 7
    %v3866 = vsub.s32 0, %v3865
    %v3867 = vrot.slane %v3758, %v3866
    %v3868 = vlaneseq
    %v3869 = vshrl.u32 %v3868, 7
    %v3870 = vsub.s32 0, %v3869
    %v3871 = vrot.slane %v3759, %v3870
    %v3872 = vlaneseq
    %v3873 = vshrl.u32 %v3872, 7
    %v3874 = vsub.s32 0, %v3873
    %v3875 = vrot.slane %v3760, %v3874
    %v3876 = vlaneseq
    %v3877 = vshrl.u32 %v3876, 7
    %v3878 = vsub.s32 0, %v3877
    %v3879 = vrot.slane %v3761, %v3878
    %v3880 = vlaneseq
    %v3881 = vshrl.u32 %v3880, 7
    %v3882 = vsub.s32 0, %v3881
    %v3883 = vrot.slane %v3762, %v3882
    %v3884 = vlaneseq
    %v3885 = vshrl.u32 %v3884, 7
    %v3886 = vsub.s32 0, %v3885
    %v3887 = vrot.slane %v3763, %v3886
    %v3888 = vlaneseq
    %v3889 = vshrl.u32 %v3888, 7
    %v3890 = vsub.s32 0, %v3889
    %v3891 = vrot.slane %v3764, %v3890
    %v3892 = vlaneseq
    %v3893 = vshrl.u32 %v3892, 7
    %v3894 = vsub.s32 0, %v3893
    %v3895 = vrot.slane %v3765, %v3894
    %v3896 = vlaneseq
    %v3897 = vshrl.u32 %v3896, 7
    %v3898 = vsub.s32 0, %v3897
    %v3899 = vrot.slane %v3766, %v3898
    %v3900 = vlaneseq
    %v3901 = vshrl.u32 %v3900, 7
    %v3902 = vsub.s32 0, %v3901
    %v3903 = vrot.slane %v3767, %v3902
    %v3904 = vlaneseq
    %v3905 = vshrl.u32 %v3904, 7
    %v3906 = vsub.s32 0, %v3905
    %v3907 = vrot.slane %v3768, %v3906
    %v3908 = vlaneseq
    %v3909 = vshrl.u32 %v3908, 7
    %v3910 = vsub.s32 0, %v3909
    %v3911 = vrot.slane %v3769, %v3910
    %v3912 = vlaneseq
    %v3913 = vshrl.u32 %v3912, 7
    %v3914 = vsub.s32 0, %v3913
    %v3915 = vrot.slane %v3770, %v3914
    %v3916 = vlaneseq
    %v3917 = vshrl.u32 %v3916, 7
    %v3918 = vsub.s32 0, %v3917
    %v3919 = vrot.slane %v3771, %v3918
    %v3920 = vlaneseq
    %v3921 = vshrl.u32 %v3920, 7
    %v3922 = vsub.s32 0, %v3921
    %v3923 = vrot.slane %v3772, %v3922
    %v3924 = vlaneseq
    %v3925 = vshrl.u32 %v3924, 7
    %v3926 = vsub.s32 0, %v3925
    %v3927 = vrot.slane %v3773, %v3926
    %v3928 = vlaneseq
    %v3929 = vshrl.u32 %v3928, 7
    %v3930 = vsub.s32 0, %v3929
    %v3931 = vrot.slane %v3774, %v3930
    %v3932 = vlaneseq
    %v3933 = vshrl.u32 %v3932, 7
    %v3934 = vsub.s32 0, %v3933
    %v3935 = vrot.slane %v3775, %v3934
    %v3936 = vsel %vm2188, %v3815, %v3811
    %v3937 = vsel %vm2190, %v3819, %v3936
    %v3938 = vsel %vm2192, %v3823, %v3937
    %v3939 = vsel %vm2194, %v3827, %v3938
    %v3940 = vsel %vm2196, %v3831, %v3939
    %v3941 = vsel %vm2198, %v3835, %v3940
    %v3942 = vsel %vm2200, %v3839, %v3941
    %v3943 = vsel %vm2188, %v3847, %v3843
    %v3944 = vsel %vm2190, %v3851, %v3943
    %v3945 = vsel %vm2192, %v3855, %v3944
    %v3946 = vsel %vm2194, %v3859, %v3945
    %v3947 = vsel %vm2196, %v3863, %v3946
    %v3948 = vsel %vm2198, %v3867, %v3947
    %v3949 = vsel %vm2200, %v3871, %v3948
    %v3950 = vsel %vm2188, %v3879, %v3875
    %v3951 = vsel %vm2190, %v3883, %v3950
    %v3952 = vsel %vm2192, %v3887, %v3951
    %v3953 = vsel %vm2194, %v3891, %v3952
    %v3954 = vsel %vm2196, %v3895, %v3953
    %v3955 = vsel %vm2198, %v3899, %v3954
    %v3956 = vsel %vm2200, %v3903, %v3955
    %v3957 = vsel %vm2188, %v3911, %v3907
    %v3958 = vsel %vm2190, %v3915, %v3957
    %v3959 = vsel %vm2192, %v3919, %v3958
    %v3960 = vsel %vm2194, %v3923, %v3959
    %v3961 = vsel %vm2196, %v3927, %v3960
    %v3962 = vsel %vm2198, %v3931, %v3961
    %v3963 = vsel %vm2200, %v3935, %v3962
    %s3968 = scalar_lea.vmem [#allocation3], 48
    %3969 = vst.msk [vmem:[%s3968 + $0x1] sm:$0xff] %vm267, %v3942
    %3970 = vst.msk [vmem:[%s3968 + $0x11] sm:$0xff] %vm267, %v3949
    %3971 = vst.msk [vmem:[%s3968 + $0xa1] sm:$0xff] %vm267, %v3956
    %3972 = vst.msk [vmem:[%s3968 + $0xb1] sm:$0xff] %vm267, %v3963
    %v3973 = vld [vmem:[#allocation9] sm:$0x1]
    %s3974 = scalar_lea.vmem [#allocation2], 192
    %v3975 = vld [vmem:[%s3974] sm:$0xff]
    %v3976 = vld [vmem:[%s3974 + $0x8] sm:$0xff]
    %v3977 = vld [vmem:[%s3974 + $0x18] sm:$0xff]
    %v3978 = vld [vmem:[%s3974 + $0x20] sm:$0xff]
    %v3979 = vld [vmem:[%s3974 + $0x30] sm:$0xff]
    %v3980 = vld [vmem:[%s3974 + $0x38] sm:$0xff]
    %v3981 = vld [vmem:[%s3974 + $0x48] sm:$0xff]
    %v3982 = vld [vmem:[%s3974 + $0x50] sm:$0xff]
    %v3983 = vld [vmem:[%s3974 + $0x1b0] sm:$0xff]
    %v3984 = vld [vmem:[%s3974 + $0x1b8] sm:$0xff]
    %v3985 = vld [vmem:[%s3974 + $0x1c8] sm:$0xff]
    %v3986 = vld [vmem:[%s3974 + $0x1d0] sm:$0xff]
    %v3987 = vld [vmem:[%s3974 + $0x1e0] sm:$0xff]
    %v3988 = vld [vmem:[%s3974 + $0x1e8] sm:$0xff]
    %v3989 = vld [vmem:[%s3974 + $0x1f8] sm:$0xff]
    %v3990 = vld [vmem:[%s3974 + $0x200] sm:$0xff]
    %3992 = vset.pattern.permute.xlu0 0
    %3993 = vperm.xlu0 %3992, %v3975
    %v3994 = vpop.permute.xlu0 %3993
    %3997 = vset.pattern.permute.xlu0 0
    %3998 = vperm.xlu0 %3997, %v3976
    %v3999 = vpop.permute.xlu0 %3998
    %4002 = vset.pattern.permute.xlu0 0
    %4003 = vperm.xlu0 %4002, %v3977
    %v4004 = vpop.permute.xlu0 %4003
    %4007 = vset.pattern.permute.xlu0 0
    %4008 = vperm.xlu0 %4007, %v3978
    %v4009 = vpop.permute.xlu0 %4008
    %4012 = vset.pattern.permute.xlu0 0
    %4013 = vperm.xlu0 %4012, %v3979
    %v4014 = vpop.permute.xlu0 %4013
    %4017 = vset.pattern.permute.xlu0 0
    %4018 = vperm.xlu0 %4017, %v3980
    %v4019 = vpop.permute.xlu0 %4018
    %4022 = vset.pattern.permute.xlu0 0
    %4023 = vperm.xlu0 %4022, %v3981
    %v4024 = vpop.permute.xlu0 %4023
    %4027 = vset.pattern.permute.xlu0 0
    %4028 = vperm.xlu0 %4027, %v3982
    %v4029 = vpop.permute.xlu0 %4028
    %4032 = vset.pattern.permute.xlu0 0
    %4033 = vperm.xlu0 %4032, %v3983
    %v4034 = vpop.permute.xlu0 %4033
    %4037 = vset.pattern.permute.xlu0 0
    %4038 = vperm.xlu0 %4037, %v3984
    %v4039 = vpop.permute.xlu0 %4038
    %4042 = vset.pattern.permute.xlu0 0
    %4043 = vperm.xlu0 %4042, %v3985
    %v4044 = vpop.permute.xlu0 %4043
    %4047 = vset.pattern.permute.xlu0 0
    %4048 = vperm.xlu0 %4047, %v3986
    %v4049 = vpop.permute.xlu0 %4048
    %4052 = vset.pattern.permute.xlu0 0
    %4053 = vperm.xlu0 %4052, %v3987
    %v4054 = vpop.permute.xlu0 %4053
    %4057 = vset.pattern.permute.xlu0 0
    %4058 = vperm.xlu0 %4057, %v3988
    %v4059 = vpop.permute.xlu0 %4058
    %4062 = vset.pattern.permute.xlu0 0
    %4063 = vperm.xlu0 %4062, %v3989
    %v4064 = vpop.permute.xlu0 %4063
    %4067 = vset.pattern.permute.xlu0 0
    %4068 = vperm.xlu0 %4067, %v3990
    %v4069 = vpop.permute.xlu0 %4068
    %v4071 = vlaneseq
    %v4072 = vshrl.u32 %v4071, 7
    %v4073 = vsub.s32 0, %v4072
    %v4074 = vrot.slane %v3973, %v4073
    %v4075 = vmul.f32 %v3994, %v4074
    %v4076 = vmul.f32 %v3999, %v4074
    %v4077 = vmul.f32 %v4004, %v4074
    %v4078 = vmul.f32 %v4009, %v4074
    %v4079 = vmul.f32 %v4014, %v4074
    %v4080 = vmul.f32 %v4019, %v4074
    %v4081 = vmul.f32 %v4024, %v4074
    %v4082 = vmul.f32 %v4029, %v4074
    %v4083 = vmul.f32 %v4034, %v4074
    %v4084 = vmul.f32 %v4039, %v4074
    %v4085 = vmul.f32 %v4044, %v4074
    %v4086 = vmul.f32 %v4049, %v4074
    %v4087 = vmul.f32 %v4054, %v4074
    %v4088 = vmul.f32 %v4059, %v4074
    %v4089 = vmul.f32 %v4064, %v4074
    %v4090 = vmul.f32 %v4069, %v4074
    %v4091 = vadd.f32 %v4075, 0.0
    %v4092 = vadd.f32 %v4076, 0.0
    %v4093 = vadd.f32 %v4077, 0.0
    %v4094 = vadd.f32 %v4078, 0.0
    %v4095 = vadd.f32 %v4079, 0.0
    %v4096 = vadd.f32 %v4080, 0.0
    %v4097 = vadd.f32 %v4081, 0.0
    %v4098 = vadd.f32 %v4082, 0.0
    %v4099 = vadd.f32 %v4083, 0.0
    %v4100 = vadd.f32 %v4084, 0.0
    %v4101 = vadd.f32 %v4085, 0.0
    %v4102 = vadd.f32 %v4086, 0.0
    %v4103 = vadd.f32 %v4087, 0.0
    %v4104 = vadd.f32 %v4088, 0.0
    %v4105 = vadd.f32 %v4089, 0.0
    %v4106 = vadd.f32 %v4090, 0.0
    %v4107 = vld [vmem:[#allocation9 + $0x1] sm:$0x1]
    %v4108 = vld [vmem:[%s3974 + $0x1] sm:$0xff]
    %v4109 = vld [vmem:[%s3974 + $0x9] sm:$0xff]
    %v4110 = vld [vmem:[%s3974 + $0x19] sm:$0xff]
    %v4111 = vld [vmem:[%s3974 + $0x21] sm:$0xff]
    %v4112 = vld [vmem:[%s3974 + $0x31] sm:$0xff]
    %v4113 = vld [vmem:[%s3974 + $0x39] sm:$0xff]
    %v4114 = vld [vmem:[%s3974 + $0x49] sm:$0xff]
    %v4115 = vld [vmem:[%s3974 + $0x51] sm:$0xff]
    %v4116 = vld [vmem:[%s3974 + $0x1b1] sm:$0xff]
    %v4117 = vld [vmem:[%s3974 + $0x1b9] sm:$0xff]
    %v4118 = vld [vmem:[%s3974 + $0x1c9] sm:$0xff]
    %v4119 = vld [vmem:[%s3974 + $0x1d1] sm:$0xff]
    %v4120 = vld [vmem:[%s3974 + $0x1e1] sm:$0xff]
    %v4121 = vld [vmem:[%s3974 + $0x1e9] sm:$0xff]
    %v4122 = vld [vmem:[%s3974 + $0x1f9] sm:$0xff]
    %v4123 = vld [vmem:[%s3974 + $0x201] sm:$0xff]
    %4125 = vset.pattern.permute.xlu0 0
    %4126 = vperm.xlu0 %4125, %v4108
    %v4127 = vpop.permute.xlu0 %4126
    %4130 = vset.pattern.permute.xlu0 0
    %4131 = vperm.xlu0 %4130, %v4109
    %v4132 = vpop.permute.xlu0 %4131
    %4135 = vset.pattern.permute.xlu0 0
    %4136 = vperm.xlu0 %4135, %v4110
    %v4137 = vpop.permute.xlu0 %4136
    %4140 = vset.pattern.permute.xlu0 0
    %4141 = vperm.xlu0 %4140, %v4111
    %v4142 = vpop.permute.xlu0 %4141
    %4145 = vset.pattern.permute.xlu0 0
    %4146 = vperm.xlu0 %4145, %v4112
    %v4147 = vpop.permute.xlu0 %4146
    %4150 = vset.pattern.permute.xlu0 0
    %4151 = vperm.xlu0 %4150, %v4113
    %v4152 = vpop.permute.xlu0 %4151
    %4155 = vset.pattern.permute.xlu0 0
    %4156 = vperm.xlu0 %4155, %v4114
    %v4157 = vpop.permute.xlu0 %4156
    %4160 = vset.pattern.permute.xlu0 0
    %4161 = vperm.xlu0 %4160, %v4115
    %v4162 = vpop.permute.xlu0 %4161
    %4165 = vset.pattern.permute.xlu0 0
    %4166 = vperm.xlu0 %4165, %v4116
    %v4167 = vpop.permute.xlu0 %4166
    %4170 = vset.pattern.permute.xlu0 0
    %4171 = vperm.xlu0 %4170, %v4117
    %v4172 = vpop.permute.xlu0 %4171
    %4175 = vset.pattern.permute.xlu0 0
    %4176 = vperm.xlu0 %4175, %v4118
    %v4177 = vpop.permute.xlu0 %4176
    %4180 = vset.pattern.permute.xlu0 0
    %4181 = vperm.xlu0 %4180, %v4119
    %v4182 = vpop.permute.xlu0 %4181
    %4185 = vset.pattern.permute.xlu0 0
    %4186 = vperm.xlu0 %4185, %v4120
    %v4187 = vpop.permute.xlu0 %4186
    %4190 = vset.pattern.permute.xlu0 0
    %4191 = vperm.xlu0 %4190, %v4121
    %v4192 = vpop.permute.xlu0 %4191
    %4195 = vset.pattern.permute.xlu0 0
    %4196 = vperm.xlu0 %4195, %v4122
    %v4197 = vpop.permute.xlu0 %4196
    %4200 = vset.pattern.permute.xlu0 0
    %4201 = vperm.xlu0 %4200, %v4123
    %v4202 = vpop.permute.xlu0 %4201
    %v4204 = vlaneseq
    %v4205 = vshrl.u32 %v4204, 7
    %v4206 = vsub.s32 0, %v4205
    %v4207 = vrot.slane %v4107, %v4206
    %v4208 = vmul.f32 %v4127, %v4207
    %v4209 = vmul.f32 %v4132, %v4207
    %v4210 = vmul.f32 %v4137, %v4207
    %v4211 = vmul.f32 %v4142, %v4207
    %v4212 = vmul.f32 %v4147, %v4207
    %v4213 = vmul.f32 %v4152, %v4207
    %v4214 = vmul.f32 %v4157, %v4207
    %v4215 = vmul.f32 %v4162, %v4207
    %v4216 = vmul.f32 %v4167, %v4207
    %v4217 = vmul.f32 %v4172, %v4207
    %v4218 = vmul.f32 %v4177, %v4207
    %v4219 = vmul.f32 %v4182, %v4207
    %v4220 = vmul.f32 %v4187, %v4207
    %v4221 = vmul.f32 %v4192, %v4207
    %v4222 = vmul.f32 %v4197, %v4207
    %v4223 = vmul.f32 %v4202, %v4207
    %v4224 = vadd.f32 %v4091, %v4208
    %v4225 = vadd.f32 %v4092, %v4209
    %v4226 = vadd.f32 %v4093, %v4210
    %v4227 = vadd.f32 %v4094, %v4211
    %v4228 = vadd.f32 %v4095, %v4212
    %v4229 = vadd.f32 %v4096, %v4213
    %v4230 = vadd.f32 %v4097, %v4214
    %v4231 = vadd.f32 %v4098, %v4215
    %v4232 = vadd.f32 %v4099, %v4216
    %v4233 = vadd.f32 %v4100, %v4217
    %v4234 = vadd.f32 %v4101, %v4218
    %v4235 = vadd.f32 %v4102, %v4219
    %v4236 = vadd.f32 %v4103, %v4220
    %v4237 = vadd.f32 %v4104, %v4221
    %v4238 = vadd.f32 %v4105, %v4222
    %v4239 = vadd.f32 %v4106, %v4223
    %v4240 = vld [vmem:[#allocation9 + $0x2] sm:$0x1]
    %v4241 = vld [vmem:[%s3974 + $0x2] sm:$0xff]
    %v4242 = vld [vmem:[%s3974 + $0xa] sm:$0xff]
    %v4243 = vld [vmem:[%s3974 + $0x1a] sm:$0xff]
    %v4244 = vld [vmem:[%s3974 + $0x22] sm:$0xff]
    %v4245 = vld [vmem:[%s3974 + $0x32] sm:$0xff]
    %v4246 = vld [vmem:[%s3974 + $0x3a] sm:$0xff]
    %v4247 = vld [vmem:[%s3974 + $0x4a] sm:$0xff]
    %v4248 = vld [vmem:[%s3974 + $0x52] sm:$0xff]
    %v4249 = vld [vmem:[%s3974 + $0x1b2] sm:$0xff]
    %v4250 = vld [vmem:[%s3974 + $0x1ba] sm:$0xff]
    %v4251 = vld [vmem:[%s3974 + $0x1ca] sm:$0xff]
    %v4252 = vld [vmem:[%s3974 + $0x1d2] sm:$0xff]
    %v4253 = vld [vmem:[%s3974 + $0x1e2] sm:$0xff]
    %v4254 = vld [vmem:[%s3974 + $0x1ea] sm:$0xff]
    %v4255 = vld [vmem:[%s3974 + $0x1fa] sm:$0xff]
    %v4256 = vld [vmem:[%s3974 + $0x202] sm:$0xff]
    %4258 = vset.pattern.permute.xlu0 0
    %4259 = vperm.xlu0 %4258, %v4241
    %v4260 = vpop.permute.xlu0 %4259
    %4263 = vset.pattern.permute.xlu0 0
    %4264 = vperm.xlu0 %4263, %v4242
    %v4265 = vpop.permute.xlu0 %4264
    %4268 = vset.pattern.permute.xlu0 0
    %4269 = vperm.xlu0 %4268, %v4243
    %v4270 = vpop.permute.xlu0 %4269
    %4273 = vset.pattern.permute.xlu0 0
    %4274 = vperm.xlu0 %4273, %v4244
    %v4275 = vpop.permute.xlu0 %4274
    %4278 = vset.pattern.permute.xlu0 0
    %4279 = vperm.xlu0 %4278, %v4245
    %v4280 = vpop.permute.xlu0 %4279
    %4283 = vset.pattern.permute.xlu0 0
    %4284 = vperm.xlu0 %4283, %v4246
    %v4285 = vpop.permute.xlu0 %4284
    %4288 = vset.pattern.permute.xlu0 0
    %4289 = vperm.xlu0 %4288, %v4247
    %v4290 = vpop.permute.xlu0 %4289
    %4293 = vset.pattern.permute.xlu0 0
    %4294 = vperm.xlu0 %4293, %v4248
    %v4295 = vpop.permute.xlu0 %4294
    %4298 = vset.pattern.permute.xlu0 0
    %4299 = vperm.xlu0 %4298, %v4249
    %v4300 = vpop.permute.xlu0 %4299
    %4303 = vset.pattern.permute.xlu0 0
    %4304 = vperm.xlu0 %4303, %v4250
    %v4305 = vpop.permute.xlu0 %4304
    %4308 = vset.pattern.permute.xlu0 0
    %4309 = vperm.xlu0 %4308, %v4251
    %v4310 = vpop.permute.xlu0 %4309
    %4313 = vset.pattern.permute.xlu0 0
    %4314 = vperm.xlu0 %4313, %v4252
    %v4315 = vpop.permute.xlu0 %4314
    %4318 = vset.pattern.permute.xlu0 0
    %4319 = vperm.xlu0 %4318, %v4253
    %v4320 = vpop.permute.xlu0 %4319
    %4323 = vset.pattern.permute.xlu0 0
    %4324 = vperm.xlu0 %4323, %v4254
    %v4325 = vpop.permute.xlu0 %4324
    %4328 = vset.pattern.permute.xlu0 0
    %4329 = vperm.xlu0 %4328, %v4255
    %v4330 = vpop.permute.xlu0 %4329
    %4333 = vset.pattern.permute.xlu0 0
    %4334 = vperm.xlu0 %4333, %v4256
    %v4335 = vpop.permute.xlu0 %4334
    %v4337 = vlaneseq
    %v4338 = vshrl.u32 %v4337, 7
    %v4339 = vsub.s32 0, %v4338
    %v4340 = vrot.slane %v4240, %v4339
    %v4341 = vmul.f32 %v4260, %v4340
    %v4342 = vmul.f32 %v4265, %v4340
    %v4343 = vmul.f32 %v4270, %v4340
    %v4344 = vmul.f32 %v4275, %v4340
    %v4345 = vmul.f32 %v4280, %v4340
    %v4346 = vmul.f32 %v4285, %v4340
    %v4347 = vmul.f32 %v4290, %v4340
    %v4348 = vmul.f32 %v4295, %v4340
    %v4349 = vmul.f32 %v4300, %v4340
    %v4350 = vmul.f32 %v4305, %v4340
    %v4351 = vmul.f32 %v4310, %v4340
    %v4352 = vmul.f32 %v4315, %v4340
    %v4353 = vmul.f32 %v4320, %v4340
    %v4354 = vmul.f32 %v4325, %v4340
    %v4355 = vmul.f32 %v4330, %v4340
    %v4356 = vmul.f32 %v4335, %v4340
    %v4357 = vadd.f32 %v4224, %v4341
    %v4358 = vadd.f32 %v4225, %v4342
    %v4359 = vadd.f32 %v4226, %v4343
    %v4360 = vadd.f32 %v4227, %v4344
    %v4361 = vadd.f32 %v4228, %v4345
    %v4362 = vadd.f32 %v4229, %v4346
    %v4363 = vadd.f32 %v4230, %v4347
    %v4364 = vadd.f32 %v4231, %v4348
    %v4365 = vadd.f32 %v4232, %v4349
    %v4366 = vadd.f32 %v4233, %v4350
    %v4367 = vadd.f32 %v4234, %v4351
    %v4368 = vadd.f32 %v4235, %v4352
    %v4369 = vadd.f32 %v4236, %v4353
    %v4370 = vadd.f32 %v4237, %v4354
    %v4371 = vadd.f32 %v4238, %v4355
    %v4372 = vadd.f32 %v4239, %v4356
    %v4373 = vld [vmem:[#allocation9 + $0x3] sm:$0x1]
    %s4374 = scalar_lea.vmem [#allocation2], 216
    %v4375 = vld [vmem:[%s4374] sm:$0xff]
    %v4376 = vld [vmem:[%s4374 + $0x8] sm:$0xff]
    %v4377 = vld [vmem:[%s4374 + $0x18] sm:$0xff]
    %v4378 = vld [vmem:[%s4374 + $0x20] sm:$0xff]
    %v4379 = vld [vmem:[%s4374 + $0x30] sm:$0xff]
    %v4380 = vld [vmem:[%s4374 + $0x38] sm:$0xff]
    %v4381 = vld [vmem:[%s4374 + $0x48] sm:$0xff]
    %v4382 = vld [vmem:[%s4374 + $0x50] sm:$0xff]
    %v4383 = vld [vmem:[%s4374 + $0x1b0] sm:$0xff]
    %v4384 = vld [vmem:[%s4374 + $0x1b8] sm:$0xff]
    %v4385 = vld [vmem:[%s4374 + $0x1c8] sm:$0xff]
    %v4386 = vld [vmem:[%s4374 + $0x1d0] sm:$0xff]
    %v4387 = vld [vmem:[%s4374 + $0x1e0] sm:$0xff]
    %v4388 = vld [vmem:[%s4374 + $0x1e8] sm:$0xff]
    %v4389 = vld [vmem:[%s4374 + $0x1f8] sm:$0xff]
    %v4390 = vld [vmem:[%s4374 + $0x200] sm:$0xff]
    %4392 = vset.pattern.permute.xlu0 0
    %4393 = vperm.xlu0 %4392, %v4375
    %v4394 = vpop.permute.xlu0 %4393
    %4397 = vset.pattern.permute.xlu0 0
    %4398 = vperm.xlu0 %4397, %v4376
    %v4399 = vpop.permute.xlu0 %4398
    %4402 = vset.pattern.permute.xlu0 0
    %4403 = vperm.xlu0 %4402, %v4377
    %v4404 = vpop.permute.xlu0 %4403
    %4407 = vset.pattern.permute.xlu0 0
    %4408 = vperm.xlu0 %4407, %v4378
    %v4409 = vpop.permute.xlu0 %4408
    %4412 = vset.pattern.permute.xlu0 0
    %4413 = vperm.xlu0 %4412, %v4379
    %v4414 = vpop.permute.xlu0 %4413
    %4417 = vset.pattern.permute.xlu0 0
    %4418 = vperm.xlu0 %4417, %v4380
    %v4419 = vpop.permute.xlu0 %4418
    %4422 = vset.pattern.permute.xlu0 0
    %4423 = vperm.xlu0 %4422, %v4381
    %v4424 = vpop.permute.xlu0 %4423
    %4427 = vset.pattern.permute.xlu0 0
    %4428 = vperm.xlu0 %4427, %v4382
    %v4429 = vpop.permute.xlu0 %4428
    %4432 = vset.pattern.permute.xlu0 0
    %4433 = vperm.xlu0 %4432, %v4383
    %v4434 = vpop.permute.xlu0 %4433
    %4437 = vset.pattern.permute.xlu0 0
    %4438 = vperm.xlu0 %4437, %v4384
    %v4439 = vpop.permute.xlu0 %4438
    %4442 = vset.pattern.permute.xlu0 0
    %4443 = vperm.xlu0 %4442, %v4385
    %v4444 = vpop.permute.xlu0 %4443
    %4447 = vset.pattern.permute.xlu0 0
    %4448 = vperm.xlu0 %4447, %v4386
    %v4449 = vpop.permute.xlu0 %4448
    %4452 = vset.pattern.permute.xlu0 0
    %4453 = vperm.xlu0 %4452, %v4387
    %v4454 = vpop.permute.xlu0 %4453
    %4457 = vset.pattern.permute.xlu0 0
    %4458 = vperm.xlu0 %4457, %v4388
    %v4459 = vpop.permute.xlu0 %4458
    %4462 = vset.pattern.permute.xlu0 0
    %4463 = vperm.xlu0 %4462, %v4389
    %v4464 = vpop.permute.xlu0 %4463
    %4467 = vset.pattern.permute.xlu0 0
    %4468 = vperm.xlu0 %4467, %v4390
    %v4469 = vpop.permute.xlu0 %4468
    %v4471 = vlaneseq
    %v4472 = vshrl.u32 %v4471, 7
    %v4473 = vsub.s32 0, %v4472
    %v4474 = vrot.slane %v4373, %v4473
    %v4475 = vmul.f32 %v4394, %v4474
    %v4476 = vmul.f32 %v4399, %v4474
    %v4477 = vmul.f32 %v4404, %v4474
    %v4478 = vmul.f32 %v4409, %v4474
    %v4479 = vmul.f32 %v4414, %v4474
    %v4480 = vmul.f32 %v4419, %v4474
    %v4481 = vmul.f32 %v4424, %v4474
    %v4482 = vmul.f32 %v4429, %v4474
    %v4483 = vmul.f32 %v4434, %v4474
    %v4484 = vmul.f32 %v4439, %v4474
    %v4485 = vmul.f32 %v4444, %v4474
    %v4486 = vmul.f32 %v4449, %v4474
    %v4487 = vmul.f32 %v4454, %v4474
    %v4488 = vmul.f32 %v4459, %v4474
    %v4489 = vmul.f32 %v4464, %v4474
    %v4490 = vmul.f32 %v4469, %v4474
    %v4491 = vadd.f32 %v4357, %v4475
    %v4492 = vadd.f32 %v4358, %v4476
    %v4493 = vadd.f32 %v4359, %v4477
    %v4494 = vadd.f32 %v4360, %v4478
    %v4495 = vadd.f32 %v4361, %v4479
    %v4496 = vadd.f32 %v4362, %v4480
    %v4497 = vadd.f32 %v4363, %v4481
    %v4498 = vadd.f32 %v4364, %v4482
    %v4499 = vadd.f32 %v4365, %v4483
    %v4500 = vadd.f32 %v4366, %v4484
    %v4501 = vadd.f32 %v4367, %v4485
    %v4502 = vadd.f32 %v4368, %v4486
    %v4503 = vadd.f32 %v4369, %v4487
    %v4504 = vadd.f32 %v4370, %v4488
    %v4505 = vadd.f32 %v4371, %v4489
    %v4506 = vadd.f32 %v4372, %v4490
    %v4507 = vld [vmem:[#allocation9 + $0x4] sm:$0x1]
    %v4508 = vld [vmem:[%s4374 + $0x1] sm:$0xff]
    %v4509 = vld [vmem:[%s4374 + $0x9] sm:$0xff]
    %v4510 = vld [vmem:[%s4374 + $0x19] sm:$0xff]
    %v4511 = vld [vmem:[%s4374 + $0x21] sm:$0xff]
    %v4512 = vld [vmem:[%s4374 + $0x31] sm:$0xff]
    %v4513 = vld [vmem:[%s4374 + $0x39] sm:$0xff]
    %v4514 = vld [vmem:[%s4374 + $0x49] sm:$0xff]
    %v4515 = vld [vmem:[%s4374 + $0x51] sm:$0xff]
    %v4516 = vld [vmem:[%s4374 + $0x1b1] sm:$0xff]
    %v4517 = vld [vmem:[%s4374 + $0x1b9] sm:$0xff]
    %v4518 = vld [vmem:[%s4374 + $0x1c9] sm:$0xff]
    %v4519 = vld [vmem:[%s4374 + $0x1d1] sm:$0xff]
    %v4520 = vld [vmem:[%s4374 + $0x1e1] sm:$0xff]
    %v4521 = vld [vmem:[%s4374 + $0x1e9] sm:$0xff]
    %v4522 = vld [vmem:[%s4374 + $0x1f9] sm:$0xff]
    %v4523 = vld [vmem:[%s4374 + $0x201] sm:$0xff]
    %4525 = vset.pattern.permute.xlu0 0
    %4526 = vperm.xlu0 %4525, %v4508
    %v4527 = vpop.permute.xlu0 %4526
    %4530 = vset.pattern.permute.xlu0 0
    %4531 = vperm.xlu0 %4530, %v4509
    %v4532 = vpop.permute.xlu0 %4531
    %4535 = vset.pattern.permute.xlu0 0
    %4536 = vperm.xlu0 %4535, %v4510
    %v4537 = vpop.permute.xlu0 %4536
    %4540 = vset.pattern.permute.xlu0 0
    %4541 = vperm.xlu0 %4540, %v4511
    %v4542 = vpop.permute.xlu0 %4541
    %4545 = vset.pattern.permute.xlu0 0
    %4546 = vperm.xlu0 %4545, %v4512
    %v4547 = vpop.permute.xlu0 %4546
    %4550 = vset.pattern.permute.xlu0 0
    %4551 = vperm.xlu0 %4550, %v4513
    %v4552 = vpop.permute.xlu0 %4551
    %4555 = vset.pattern.permute.xlu0 0
    %4556 = vperm.xlu0 %4555, %v4514
    %v4557 = vpop.permute.xlu0 %4556
    %4560 = vset.pattern.permute.xlu0 0
    %4561 = vperm.xlu0 %4560, %v4515
    %v4562 = vpop.permute.xlu0 %4561
    %4565 = vset.pattern.permute.xlu0 0
    %4566 = vperm.xlu0 %4565, %v4516
    %v4567 = vpop.permute.xlu0 %4566
    %4570 = vset.pattern.permute.xlu0 0
    %4571 = vperm.xlu0 %4570, %v4517
    %v4572 = vpop.permute.xlu0 %4571
    %4575 = vset.pattern.permute.xlu0 0
    %4576 = vperm.xlu0 %4575, %v4518
    %v4577 = vpop.permute.xlu0 %4576
    %4580 = vset.pattern.permute.xlu0 0
    %4581 = vperm.xlu0 %4580, %v4519
    %v4582 = vpop.permute.xlu0 %4581
    %4585 = vset.pattern.permute.xlu0 0
    %4586 = vperm.xlu0 %4585, %v4520
    %v4587 = vpop.permute.xlu0 %4586
    %4590 = vset.pattern.permute.xlu0 0
    %4591 = vperm.xlu0 %4590, %v4521
    %v4592 = vpop.permute.xlu0 %4591
    %4595 = vset.pattern.permute.xlu0 0
    %4596 = vperm.xlu0 %4595, %v4522
    %v4597 = vpop.permute.xlu0 %4596
    %4600 = vset.pattern.permute.xlu0 0
    %4601 = vperm.xlu0 %4600, %v4523
    %v4602 = vpop.permute.xlu0 %4601
    %v4604 = vlaneseq
    %v4605 = vshrl.u32 %v4604, 7
    %v4606 = vsub.s32 0, %v4605
    %v4607 = vrot.slane %v4507, %v4606
    %v4608 = vmul.f32 %v4527, %v4607
    %v4609 = vmul.f32 %v4532, %v4607
    %v4610 = vmul.f32 %v4537, %v4607
    %v4611 = vmul.f32 %v4542, %v4607
    %v4612 = vmul.f32 %v4547, %v4607
    %v4613 = vmul.f32 %v4552, %v4607
    %v4614 = vmul.f32 %v4557, %v4607
    %v4615 = vmul.f32 %v4562, %v4607
    %v4616 = vmul.f32 %v4567, %v4607
    %v4617 = vmul.f32 %v4572, %v4607
    %v4618 = vmul.f32 %v4577, %v4607
    %v4619 = vmul.f32 %v4582, %v4607
    %v4620 = vmul.f32 %v4587, %v4607
    %v4621 = vmul.f32 %v4592, %v4607
    %v4622 = vmul.f32 %v4597, %v4607
    %v4623 = vmul.f32 %v4602, %v4607
    %v4624 = vadd.f32 %v4491, %v4608
    %v4625 = vadd.f32 %v4492, %v4609
    %v4626 = vadd.f32 %v4493, %v4610
    %v4627 = vadd.f32 %v4494, %v4611
    %v4628 = vadd.f32 %v4495, %v4612
    %v4629 = vadd.f32 %v4496, %v4613
    %v4630 = vadd.f32 %v4497, %v4614
    %v4631 = vadd.f32 %v4498, %v4615
    %v4632 = vadd.f32 %v4499, %v4616
    %v4633 = vadd.f32 %v4500, %v4617
    %v4634 = vadd.f32 %v4501, %v4618
    %v4635 = vadd.f32 %v4502, %v4619
    %v4636 = vadd.f32 %v4503, %v4620
    %v4637 = vadd.f32 %v4504, %v4621
    %v4638 = vadd.f32 %v4505, %v4622
    %v4639 = vadd.f32 %v4506, %v4623
    %v4640 = vld [vmem:[#allocation9 + $0x5] sm:$0x1]
    %v4641 = vld [vmem:[%s4374 + $0x2] sm:$0xff]
    %v4642 = vld [vmem:[%s4374 + $0xa] sm:$0xff]
    %v4643 = vld [vmem:[%s4374 + $0x1a] sm:$0xff]
    %v4644 = vld [vmem:[%s4374 + $0x22] sm:$0xff]
    %v4645 = vld [vmem:[%s4374 + $0x32] sm:$0xff]
    %v4646 = vld [vmem:[%s4374 + $0x3a] sm:$0xff]
    %v4647 = vld [vmem:[%s4374 + $0x4a] sm:$0xff]
    %v4648 = vld [vmem:[%s4374 + $0x52] sm:$0xff]
    %v4649 = vld [vmem:[%s4374 + $0x1b2] sm:$0xff]
    %v4650 = vld [vmem:[%s4374 + $0x1ba] sm:$0xff]
    %v4651 = vld [vmem:[%s4374 + $0x1ca] sm:$0xff]
    %v4652 = vld [vmem:[%s4374 + $0x1d2] sm:$0xff]
    %v4653 = vld [vmem:[%s4374 + $0x1e2] sm:$0xff]
    %v4654 = vld [vmem:[%s4374 + $0x1ea] sm:$0xff]
    %v4655 = vld [vmem:[%s4374 + $0x1fa] sm:$0xff]
    %v4656 = vld [vmem:[%s4374 + $0x202] sm:$0xff]
    %4658 = vset.pattern.permute.xlu0 0
    %4659 = vperm.xlu0 %4658, %v4641
    %v4660 = vpop.permute.xlu0 %4659
    %4663 = vset.pattern.permute.xlu0 0
    %4664 = vperm.xlu0 %4663, %v4642
    %v4665 = vpop.permute.xlu0 %4664
    %4668 = vset.pattern.permute.xlu0 0
    %4669 = vperm.xlu0 %4668, %v4643
    %v4670 = vpop.permute.xlu0 %4669
    %4673 = vset.pattern.permute.xlu0 0
    %4674 = vperm.xlu0 %4673, %v4644
    %v4675 = vpop.permute.xlu0 %4674
    %4678 = vset.pattern.permute.xlu0 0
    %4679 = vperm.xlu0 %4678, %v4645
    %v4680 = vpop.permute.xlu0 %4679
    %4683 = vset.pattern.permute.xlu0 0
    %4684 = vperm.xlu0 %4683, %v4646
    %v4685 = vpop.permute.xlu0 %4684
    %4688 = vset.pattern.permute.xlu0 0
    %4689 = vperm.xlu0 %4688, %v4647
    %v4690 = vpop.permute.xlu0 %4689
    %4693 = vset.pattern.permute.xlu0 0
    %4694 = vperm.xlu0 %4693, %v4648
    %v4695 = vpop.permute.xlu0 %4694
    %4698 = vset.pattern.permute.xlu0 0
    %4699 = vperm.xlu0 %4698, %v4649
    %v4700 = vpop.permute.xlu0 %4699
    %4703 = vset.pattern.permute.xlu0 0
    %4704 = vperm.xlu0 %4703, %v4650
    %v4705 = vpop.permute.xlu0 %4704
    %4708 = vset.pattern.permute.xlu0 0
    %4709 = vperm.xlu0 %4708, %v4651
    %v4710 = vpop.permute.xlu0 %4709
    %4713 = vset.pattern.permute.xlu0 0
    %4714 = vperm.xlu0 %4713, %v4652
    %v4715 = vpop.permute.xlu0 %4714
    %4718 = vset.pattern.permute.xlu0 0
    %4719 = vperm.xlu0 %4718, %v4653
    %v4720 = vpop.permute.xlu0 %4719
    %4723 = vset.pattern.permute.xlu0 0
    %4724 = vperm.xlu0 %4723, %v4654
    %v4725 = vpop.permute.xlu0 %4724
    %4728 = vset.pattern.permute.xlu0 0
    %4729 = vperm.xlu0 %4728, %v4655
    %v4730 = vpop.permute.xlu0 %4729
    %4733 = vset.pattern.permute.xlu0 0
    %4734 = vperm.xlu0 %4733, %v4656
    %v4735 = vpop.permute.xlu0 %4734
    %v4737 = vlaneseq
    %v4738 = vshrl.u32 %v4737, 7
    %v4739 = vsub.s32 0, %v4738
    %v4740 = vrot.slane %v4640, %v4739
    %v4741 = vmul.f32 %v4660, %v4740
    %v4742 = vmul.f32 %v4665, %v4740
    %v4743 = vmul.f32 %v4670, %v4740
    %v4744 = vmul.f32 %v4675, %v4740
    %v4745 = vmul.f32 %v4680, %v4740
    %v4746 = vmul.f32 %v4685, %v4740
    %v4747 = vmul.f32 %v4690, %v4740
    %v4748 = vmul.f32 %v4695, %v4740
    %v4749 = vmul.f32 %v4700, %v4740
    %v4750 = vmul.f32 %v4705, %v4740
    %v4751 = vmul.f32 %v4710, %v4740
    %v4752 = vmul.f32 %v4715, %v4740
    %v4753 = vmul.f32 %v4720, %v4740
    %v4754 = vmul.f32 %v4725, %v4740
    %v4755 = vmul.f32 %v4730, %v4740
    %v4756 = vmul.f32 %v4735, %v4740
    %v4757 = vadd.f32 %v4624, %v4741
    %v4758 = vadd.f32 %v4625, %v4742
    %v4759 = vadd.f32 %v4626, %v4743
    %v4760 = vadd.f32 %v4627, %v4744
    %v4761 = vadd.f32 %v4628, %v4745
    %v4762 = vadd.f32 %v4629, %v4746
    %v4763 = vadd.f32 %v4630, %v4747
    %v4764 = vadd.f32 %v4631, %v4748
    %v4765 = vadd.f32 %v4632, %v4749
    %v4766 = vadd.f32 %v4633, %v4750
    %v4767 = vadd.f32 %v4634, %v4751
    %v4768 = vadd.f32 %v4635, %v4752
    %v4769 = vadd.f32 %v4636, %v4753
    %v4770 = vadd.f32 %v4637, %v4754
    %v4771 = vadd.f32 %v4638, %v4755
    %v4772 = vadd.f32 %v4639, %v4756
    %v4773 = vld [vmem:[#allocation9 + $0x6] sm:$0x1]
    %s4774 = scalar_lea.vmem [#allocation2], 240
    %v4775 = vld [vmem:[%s4774] sm:$0xff]
    %v4776 = vld [vmem:[%s4774 + $0x8] sm:$0xff]
    %v4777 = vld [vmem:[%s4774 + $0x18] sm:$0xff]
    %v4778 = vld [vmem:[%s4774 + $0x20] sm:$0xff]
    %v4779 = vld [vmem:[%s4774 + $0x30] sm:$0xff]
    %v4780 = vld [vmem:[%s4774 + $0x38] sm:$0xff]
    %v4781 = vld [vmem:[%s4774 + $0x48] sm:$0xff]
    %v4782 = vld [vmem:[%s4774 + $0x50] sm:$0xff]
    %v4783 = vld [vmem:[%s4774 + $0x1b0] sm:$0xff]
    %v4784 = vld [vmem:[%s4774 + $0x1b8] sm:$0xff]
    %v4785 = vld [vmem:[%s4774 + $0x1c8] sm:$0xff]
    %v4786 = vld [vmem:[%s4774 + $0x1d0] sm:$0xff]
    %v4787 = vld [vmem:[%s4774 + $0x1e0] sm:$0xff]
    %v4788 = vld [vmem:[%s4774 + $0x1e8] sm:$0xff]
    %v4789 = vld [vmem:[%s4774 + $0x1f8] sm:$0xff]
    %v4790 = vld [vmem:[%s4774 + $0x200] sm:$0xff]
    %4792 = vset.pattern.permute.xlu0 0
    %4793 = vperm.xlu0 %4792, %v4775
    %v4794 = vpop.permute.xlu0 %4793
    %4797 = vset.pattern.permute.xlu0 0
    %4798 = vperm.xlu0 %4797, %v4776
    %v4799 = vpop.permute.xlu0 %4798
    %4802 = vset.pattern.permute.xlu0 0
    %4803 = vperm.xlu0 %4802, %v4777
    %v4804 = vpop.permute.xlu0 %4803
    %4807 = vset.pattern.permute.xlu0 0
    %4808 = vperm.xlu0 %4807, %v4778
    %v4809 = vpop.permute.xlu0 %4808
    %4812 = vset.pattern.permute.xlu0 0
    %4813 = vperm.xlu0 %4812, %v4779
    %v4814 = vpop.permute.xlu0 %4813
    %4817 = vset.pattern.permute.xlu0 0
    %4818 = vperm.xlu0 %4817, %v4780
    %v4819 = vpop.permute.xlu0 %4818
    %4822 = vset.pattern.permute.xlu0 0
    %4823 = vperm.xlu0 %4822, %v4781
    %v4824 = vpop.permute.xlu0 %4823
    %4827 = vset.pattern.permute.xlu0 0
    %4828 = vperm.xlu0 %4827, %v4782
    %v4829 = vpop.permute.xlu0 %4828
    %4832 = vset.pattern.permute.xlu0 0
    %4833 = vperm.xlu0 %4832, %v4783
    %v4834 = vpop.permute.xlu0 %4833
    %4837 = vset.pattern.permute.xlu0 0
    %4838 = vperm.xlu0 %4837, %v4784
    %v4839 = vpop.permute.xlu0 %4838
    %4842 = vset.pattern.permute.xlu0 0
    %4843 = vperm.xlu0 %4842, %v4785
    %v4844 = vpop.permute.xlu0 %4843
    %4847 = vset.pattern.permute.xlu0 0
    %4848 = vperm.xlu0 %4847, %v4786
    %v4849 = vpop.permute.xlu0 %4848
    %4852 = vset.pattern.permute.xlu0 0
    %4853 = vperm.xlu0 %4852, %v4787
    %v4854 = vpop.permute.xlu0 %4853
    %4857 = vset.pattern.permute.xlu0 0
    %4858 = vperm.xlu0 %4857, %v4788
    %v4859 = vpop.permute.xlu0 %4858
    %4862 = vset.pattern.permute.xlu0 0
    %4863 = vperm.xlu0 %4862, %v4789
    %v4864 = vpop.permute.xlu0 %4863
    %4867 = vset.pattern.permute.xlu0 0
    %4868 = vperm.xlu0 %4867, %v4790
    %v4869 = vpop.permute.xlu0 %4868
    %v4871 = vlaneseq
    %v4872 = vshrl.u32 %v4871, 7
    %v4873 = vsub.s32 0, %v4872
    %v4874 = vrot.slane %v4773, %v4873
    %v4875 = vmul.f32 %v4794, %v4874
    %v4876 = vmul.f32 %v4799, %v4874
    %v4877 = vmul.f32 %v4804, %v4874
    %v4878 = vmul.f32 %v4809, %v4874
    %v4879 = vmul.f32 %v4814, %v4874
    %v4880 = vmul.f32 %v4819, %v4874
    %v4881 = vmul.f32 %v4824, %v4874
    %v4882 = vmul.f32 %v4829, %v4874
    %v4883 = vmul.f32 %v4834, %v4874
    %v4884 = vmul.f32 %v4839, %v4874
    %v4885 = vmul.f32 %v4844, %v4874
    %v4886 = vmul.f32 %v4849, %v4874
    %v4887 = vmul.f32 %v4854, %v4874
    %v4888 = vmul.f32 %v4859, %v4874
    %v4889 = vmul.f32 %v4864, %v4874
    %v4890 = vmul.f32 %v4869, %v4874
    %v4891 = vadd.f32 %v4757, %v4875
    %v4892 = vadd.f32 %v4758, %v4876
    %v4893 = vadd.f32 %v4759, %v4877
    %v4894 = vadd.f32 %v4760, %v4878
    %v4895 = vadd.f32 %v4761, %v4879
    %v4896 = vadd.f32 %v4762, %v4880
    %v4897 = vadd.f32 %v4763, %v4881
    %v4898 = vadd.f32 %v4764, %v4882
    %v4899 = vadd.f32 %v4765, %v4883
    %v4900 = vadd.f32 %v4766, %v4884
    %v4901 = vadd.f32 %v4767, %v4885
    %v4902 = vadd.f32 %v4768, %v4886
    %v4903 = vadd.f32 %v4769, %v4887
    %v4904 = vadd.f32 %v4770, %v4888
    %v4905 = vadd.f32 %v4771, %v4889
    %v4906 = vadd.f32 %v4772, %v4890
    %v4907 = vld [vmem:[#allocation9 + $0x7] sm:$0x1]
    %v4908 = vld [vmem:[%s4774 + $0x1] sm:$0xff]
    %v4909 = vld [vmem:[%s4774 + $0x9] sm:$0xff]
    %v4910 = vld [vmem:[%s4774 + $0x19] sm:$0xff]
    %v4911 = vld [vmem:[%s4774 + $0x21] sm:$0xff]
    %v4912 = vld [vmem:[%s4774 + $0x31] sm:$0xff]
    %v4913 = vld [vmem:[%s4774 + $0x39] sm:$0xff]
    %v4914 = vld [vmem:[%s4774 + $0x49] sm:$0xff]
    %v4915 = vld [vmem:[%s4774 + $0x51] sm:$0xff]
    %v4916 = vld [vmem:[%s4774 + $0x1b1] sm:$0xff]
    %v4917 = vld [vmem:[%s4774 + $0x1b9] sm:$0xff]
    %v4918 = vld [vmem:[%s4774 + $0x1c9] sm:$0xff]
    %v4919 = vld [vmem:[%s4774 + $0x1d1] sm:$0xff]
    %v4920 = vld [vmem:[%s4774 + $0x1e1] sm:$0xff]
    %v4921 = vld [vmem:[%s4774 + $0x1e9] sm:$0xff]
    %v4922 = vld [vmem:[%s4774 + $0x1f9] sm:$0xff]
    %v4923 = vld [vmem:[%s4774 + $0x201] sm:$0xff]
    %4925 = vset.pattern.permute.xlu0 0
    %4926 = vperm.xlu0 %4925, %v4908
    %v4927 = vpop.permute.xlu0 %4926
    %4930 = vset.pattern.permute.xlu0 0
    %4931 = vperm.xlu0 %4930, %v4909
    %v4932 = vpop.permute.xlu0 %4931
    %4935 = vset.pattern.permute.xlu0 0
    %4936 = vperm.xlu0 %4935, %v4910
    %v4937 = vpop.permute.xlu0 %4936
    %4940 = vset.pattern.permute.xlu0 0
    %4941 = vperm.xlu0 %4940, %v4911
    %v4942 = vpop.permute.xlu0 %4941
    %4945 = vset.pattern.permute.xlu0 0
    %4946 = vperm.xlu0 %4945, %v4912
    %v4947 = vpop.permute.xlu0 %4946
    %4950 = vset.pattern.permute.xlu0 0
    %4951 = vperm.xlu0 %4950, %v4913
    %v4952 = vpop.permute.xlu0 %4951
    %4955 = vset.pattern.permute.xlu0 0
    %4956 = vperm.xlu0 %4955, %v4914
    %v4957 = vpop.permute.xlu0 %4956
    %4960 = vset.pattern.permute.xlu0 0
    %4961 = vperm.xlu0 %4960, %v4915
    %v4962 = vpop.permute.xlu0 %4961
    %4965 = vset.pattern.permute.xlu0 0
    %4966 = vperm.xlu0 %4965, %v4916
    %v4967 = vpop.permute.xlu0 %4966
    %4970 = vset.pattern.permute.xlu0 0
    %4971 = vperm.xlu0 %4970, %v4917
    %v4972 = vpop.permute.xlu0 %4971
    %4975 = vset.pattern.permute.xlu0 0
    %4976 = vperm.xlu0 %4975, %v4918
    %v4977 = vpop.permute.xlu0 %4976
    %4980 = vset.pattern.permute.xlu0 0
    %4981 = vperm.xlu0 %4980, %v4919
    %v4982 = vpop.permute.xlu0 %4981
    %4985 = vset.pattern.permute.xlu0 0
    %4986 = vperm.xlu0 %4985, %v4920
    %v4987 = vpop.permute.xlu0 %4986
    %4990 = vset.pattern.permute.xlu0 0
    %4991 = vperm.xlu0 %4990, %v4921
    %v4992 = vpop.permute.xlu0 %4991
    %4995 = vset.pattern.permute.xlu0 0
    %4996 = vperm.xlu0 %4995, %v4922
    %v4997 = vpop.permute.xlu0 %4996
    %5000 = vset.pattern.permute.xlu0 0
    %5001 = vperm.xlu0 %5000, %v4923
    %v5002 = vpop.permute.xlu0 %5001
    %v5004 = vlaneseq
    %v5005 = vshrl.u32 %v5004, 7
    %v5006 = vsub.s32 0, %v5005
    %v5007 = vrot.slane %v4907, %v5006
    %v5008 = vmul.f32 %v4927, %v5007
    %v5009 = vmul.f32 %v4932, %v5007
    %v5010 = vmul.f32 %v4937, %v5007
    %v5011 = vmul.f32 %v4942, %v5007
    %v5012 = vmul.f32 %v4947, %v5007
    %v5013 = vmul.f32 %v4952, %v5007
    %v5014 = vmul.f32 %v4957, %v5007
    %v5015 = vmul.f32 %v4962, %v5007
    %v5016 = vmul.f32 %v4967, %v5007
    %v5017 = vmul.f32 %v4972, %v5007
    %v5018 = vmul.f32 %v4977, %v5007
    %v5019 = vmul.f32 %v4982, %v5007
    %v5020 = vmul.f32 %v4987, %v5007
    %v5021 = vmul.f32 %v4992, %v5007
    %v5022 = vmul.f32 %v4997, %v5007
    %v5023 = vmul.f32 %v5002, %v5007
    %v5024 = vadd.f32 %v4891, %v5008
    %v5025 = vadd.f32 %v4892, %v5009
    %v5026 = vadd.f32 %v4893, %v5010
    %v5027 = vadd.f32 %v4894, %v5011
    %v5028 = vadd.f32 %v4895, %v5012
    %v5029 = vadd.f32 %v4896, %v5013
    %v5030 = vadd.f32 %v4897, %v5014
    %v5031 = vadd.f32 %v4898, %v5015
    %v5032 = vadd.f32 %v4899, %v5016
    %v5033 = vadd.f32 %v4900, %v5017
    %v5034 = vadd.f32 %v4901, %v5018
    %v5035 = vadd.f32 %v4902, %v5019
    %v5036 = vadd.f32 %v4903, %v5020
    %v5037 = vadd.f32 %v4904, %v5021
    %v5038 = vadd.f32 %v4905, %v5022
    %v5039 = vadd.f32 %v4906, %v5023
    %v5040 = vld [vmem:[#allocation9 + $0x8] sm:$0x1]
    %v5041 = vld [vmem:[%s4774 + $0x2] sm:$0xff]
    %v5042 = vld [vmem:[%s4774 + $0xa] sm:$0xff]
    %v5043 = vld [vmem:[%s4774 + $0x1a] sm:$0xff]
    %v5044 = vld [vmem:[%s4774 + $0x22] sm:$0xff]
    %v5045 = vld [vmem:[%s4774 + $0x32] sm:$0xff]
    %v5046 = vld [vmem:[%s4774 + $0x3a] sm:$0xff]
    %v5047 = vld [vmem:[%s4774 + $0x4a] sm:$0xff]
    %v5048 = vld [vmem:[%s4774 + $0x52] sm:$0xff]
    %v5049 = vld [vmem:[%s4774 + $0x1b2] sm:$0xff]
    %v5050 = vld [vmem:[%s4774 + $0x1ba] sm:$0xff]
    %v5051 = vld [vmem:[%s4774 + $0x1ca] sm:$0xff]
    %v5052 = vld [vmem:[%s4774 + $0x1d2] sm:$0xff]
    %v5053 = vld [vmem:[%s4774 + $0x1e2] sm:$0xff]
    %v5054 = vld [vmem:[%s4774 + $0x1ea] sm:$0xff]
    %v5055 = vld [vmem:[%s4774 + $0x1fa] sm:$0xff]
    %v5056 = vld [vmem:[%s4774 + $0x202] sm:$0xff]
    %5058 = vset.pattern.permute.xlu0 0
    %5059 = vperm.xlu0 %5058, %v5041
    %v5060 = vpop.permute.xlu0 %5059
    %5063 = vset.pattern.permute.xlu0 0
    %5064 = vperm.xlu0 %5063, %v5042
    %v5065 = vpop.permute.xlu0 %5064
    %5068 = vset.pattern.permute.xlu0 0
    %5069 = vperm.xlu0 %5068, %v5043
    %v5070 = vpop.permute.xlu0 %5069
    %5073 = vset.pattern.permute.xlu0 0
    %5074 = vperm.xlu0 %5073, %v5044
    %v5075 = vpop.permute.xlu0 %5074
    %5078 = vset.pattern.permute.xlu0 0
    %5079 = vperm.xlu0 %5078, %v5045
    %v5080 = vpop.permute.xlu0 %5079
    %5083 = vset.pattern.permute.xlu0 0
    %5084 = vperm.xlu0 %5083, %v5046
    %v5085 = vpop.permute.xlu0 %5084
    %5088 = vset.pattern.permute.xlu0 0
    %5089 = vperm.xlu0 %5088, %v5047
    %v5090 = vpop.permute.xlu0 %5089
    %5093 = vset.pattern.permute.xlu0 0
    %5094 = vperm.xlu0 %5093, %v5048
    %v5095 = vpop.permute.xlu0 %5094
    %5098 = vset.pattern.permute.xlu0 0
    %5099 = vperm.xlu0 %5098, %v5049
    %v5100 = vpop.permute.xlu0 %5099
    %5103 = vset.pattern.permute.xlu0 0
    %5104 = vperm.xlu0 %5103, %v5050
    %v5105 = vpop.permute.xlu0 %5104
    %5108 = vset.pattern.permute.xlu0 0
    %5109 = vperm.xlu0 %5108, %v5051
    %v5110 = vpop.permute.xlu0 %5109
    %5113 = vset.pattern.permute.xlu0 0
    %5114 = vperm.xlu0 %5113, %v5052
    %v5115 = vpop.permute.xlu0 %5114
    %5118 = vset.pattern.permute.xlu0 0
    %5119 = vperm.xlu0 %5118, %v5053
    %v5120 = vpop.permute.xlu0 %5119
    %5123 = vset.pattern.permute.xlu0 0
    %5124 = vperm.xlu0 %5123, %v5054
    %v5125 = vpop.permute.xlu0 %5124
    %5128 = vset.pattern.permute.xlu0 0
    %5129 = vperm.xlu0 %5128, %v5055
    %v5130 = vpop.permute.xlu0 %5129
    %5133 = vset.pattern.permute.xlu0 0
    %5134 = vperm.xlu0 %5133, %v5056
    %v5135 = vpop.permute.xlu0 %5134
    %v5137 = vlaneseq
    %v5138 = vshrl.u32 %v5137, 7
    %v5139 = vsub.s32 0, %v5138
    %v5140 = vrot.slane %v5040, %v5139
    %v5141 = vmul.f32 %v5060, %v5140
    %v5142 = vmul.f32 %v5065, %v5140
    %v5143 = vmul.f32 %v5070, %v5140
    %v5144 = vmul.f32 %v5075, %v5140
    %v5145 = vmul.f32 %v5080, %v5140
    %v5146 = vmul.f32 %v5085, %v5140
    %v5147 = vmul.f32 %v5090, %v5140
    %v5148 = vmul.f32 %v5095, %v5140
    %v5149 = vmul.f32 %v5100, %v5140
    %v5150 = vmul.f32 %v5105, %v5140
    %v5151 = vmul.f32 %v5110, %v5140
    %v5152 = vmul.f32 %v5115, %v5140
    %v5153 = vmul.f32 %v5120, %v5140
    %v5154 = vmul.f32 %v5125, %v5140
    %v5155 = vmul.f32 %v5130, %v5140
    %v5156 = vmul.f32 %v5135, %v5140
    %v5157 = vadd.f32 %v5024, %v5141
    %v5158 = vadd.f32 %v5025, %v5142
    %v5159 = vadd.f32 %v5026, %v5143
    %v5160 = vadd.f32 %v5027, %v5144
    %v5161 = vadd.f32 %v5028, %v5145
    %v5162 = vadd.f32 %v5029, %v5146
    %v5163 = vadd.f32 %v5030, %v5147
    %v5164 = vadd.f32 %v5031, %v5148
    %v5165 = vadd.f32 %v5032, %v5149
    %v5166 = vadd.f32 %v5033, %v5150
    %v5167 = vadd.f32 %v5034, %v5151
    %v5168 = vadd.f32 %v5035, %v5152
    %v5169 = vadd.f32 %v5036, %v5153
    %v5170 = vadd.f32 %v5037, %v5154
    %v5171 = vadd.f32 %v5038, %v5155
    %v5172 = vadd.f32 %v5039, %v5156
    %v5173 = vadd.f32 %v5157, %v1682
    %v5174 = vadd.f32 %v5158, %v1682
    %v5175 = vadd.f32 %v5159, %v1682
    %v5176 = vadd.f32 %v5160, %v1682
    %v5177 = vadd.f32 %v5161, %v1682
    %v5178 = vadd.f32 %v5162, %v1682
    %v5179 = vadd.f32 %v5163, %v1682
    %v5180 = vadd.f32 %v5164, %v1682
    %v5181 = vadd.f32 %v5165, %v1682
    %v5182 = vadd.f32 %v5166, %v1682
    %v5183 = vadd.f32 %v5167, %v1682
    %v5184 = vadd.f32 %v5168, %v1682
    %v5185 = vadd.f32 %v5169, %v1682
    %v5186 = vadd.f32 %v5170, %v1682
    %v5187 = vadd.f32 %v5171, %v1682
    %v5188 = vadd.f32 %v5172, %v1682
    %v5189 = vmax.f32 %v5173, 0.0
    %v5190 = vmax.f32 %v5174, 0.0
    %v5191 = vmax.f32 %v5175, 0.0
    %v5192 = vmax.f32 %v5176, 0.0
    %v5193 = vmax.f32 %v5177, 0.0
    %v5194 = vmax.f32 %v5178, 0.0
    %v5195 = vmax.f32 %v5179, 0.0
    %v5196 = vmax.f32 %v5180, 0.0
    %v5197 = vmax.f32 %v5181, 0.0
    %v5198 = vmax.f32 %v5182, 0.0
    %v5199 = vmax.f32 %v5183, 0.0
    %v5200 = vmax.f32 %v5184, 0.0
    %v5201 = vmax.f32 %v5185, 0.0
    %v5202 = vmax.f32 %v5186, 0.0
    %v5203 = vmax.f32 %v5187, 0.0
    %v5204 = vmax.f32 %v5188, 0.0
    %v5205 = vmax.f32 %v5189, %v5191
    %v5206 = vmax.f32 %v5190, %v5192
    %v5207 = vmax.f32 %v5193, %v5195
    %v5208 = vmax.f32 %v5194, %v5196
    %v5209 = vmax.f32 %v5197, %v5199
    %v5210 = vmax.f32 %v5198, %v5200
    %v5211 = vmax.f32 %v5201, %v5203
    %v5212 = vmax.f32 %v5202, %v5204
    %v5221 = vcombine.high %v5205, %v5205
    %v5223 = vunpack.c.l.s4 1983009808
    %v5224 = vunpack.c.0.s8 %v5223
    %v5225 = vlaneseq
    %v5226 = vshrl.u32 %v5225, 7
    %v5227 = vsub.s32 %v5224, %v5226
    %v5228 = vrot.slane %v5205, %v5227
    %v5230 = vunpack.c.l.s4 1983009808
    %v5231 = vunpack.c.0.s8 %v5230
    %v5232 = vlaneseq
    %v5233 = vshrl.u32 %v5232, 7
    %v5234 = vsub.s32 %v5231, %v5233
    %v5235 = vrot.slane %v5221, %v5234
    %v5236 = vcombine.high %v5228, %v5228
    %v5237 = vcombine.high %v5235, %v5235
    %v5238 = vcombine.high %v5206, %v5206
    %v5240 = vunpack.c.l.s4 1983009808
    %v5241 = vunpack.c.0.s8 %v5240
    %v5242 = vlaneseq
    %v5243 = vshrl.u32 %v5242, 7
    %v5244 = vsub.s32 %v5241, %v5243
    %v5245 = vrot.slane %v5206, %v5244
    %v5247 = vunpack.c.l.s4 1983009808
    %v5248 = vunpack.c.0.s8 %v5247
    %v5249 = vlaneseq
    %v5250 = vshrl.u32 %v5249, 7
    %v5251 = vsub.s32 %v5248, %v5250
    %v5252 = vrot.slane %v5238, %v5251
    %v5253 = vcombine.high %v5245, %v5245
    %v5254 = vcombine.high %v5252, %v5252
    %v5255 = vcombine.high %v5207, %v5207
    %v5257 = vunpack.c.l.s4 1983009808
    %v5258 = vunpack.c.0.s8 %v5257
    %v5259 = vlaneseq
    %v5260 = vshrl.u32 %v5259, 7
    %v5261 = vsub.s32 %v5258, %v5260
    %v5262 = vrot.slane %v5207, %v5261
    %v5264 = vunpack.c.l.s4 1983009808
    %v5265 = vunpack.c.0.s8 %v5264
    %v5266 = vlaneseq
    %v5267 = vshrl.u32 %v5266, 7
    %v5268 = vsub.s32 %v5265, %v5267
    %v5269 = vrot.slane %v5255, %v5268
    %v5270 = vcombine.high %v5262, %v5262
    %v5271 = vcombine.high %v5269, %v5269
    %v5272 = vcombine.high %v5208, %v5208
    %v5274 = vunpack.c.l.s4 1983009808
    %v5275 = vunpack.c.0.s8 %v5274
    %v5276 = vlaneseq
    %v5277 = vshrl.u32 %v5276, 7
    %v5278 = vsub.s32 %v5275, %v5277
    %v5279 = vrot.slane %v5208, %v5278
    %v5281 = vunpack.c.l.s4 1983009808
    %v5282 = vunpack.c.0.s8 %v5281
    %v5283 = vlaneseq
    %v5284 = vshrl.u32 %v5283, 7
    %v5285 = vsub.s32 %v5282, %v5284
    %v5286 = vrot.slane %v5272, %v5285
    %v5287 = vcombine.high %v5279, %v5279
    %v5288 = vcombine.high %v5286, %v5286
    %v5289 = vcombine.high %v5209, %v5209
    %v5291 = vunpack.c.l.s4 1983009808
    %v5292 = vunpack.c.0.s8 %v5291
    %v5293 = vlaneseq
    %v5294 = vshrl.u32 %v5293, 7
    %v5295 = vsub.s32 %v5292, %v5294
    %v5296 = vrot.slane %v5209, %v5295
    %v5298 = vunpack.c.l.s4 1983009808
    %v5299 = vunpack.c.0.s8 %v5298
    %v5300 = vlaneseq
    %v5301 = vshrl.u32 %v5300, 7
    %v5302 = vsub.s32 %v5299, %v5301
    %v5303 = vrot.slane %v5289, %v5302
    %v5304 = vcombine.high %v5296, %v5296
    %v5305 = vcombine.high %v5303, %v5303
    %v5306 = vcombine.high %v5210, %v5210
    %v5308 = vunpack.c.l.s4 1983009808
    %v5309 = vunpack.c.0.s8 %v5308
    %v5310 = vlaneseq
    %v5311 = vshrl.u32 %v5310, 7
    %v5312 = vsub.s32 %v5309, %v5311
    %v5313 = vrot.slane %v5210, %v5312
    %v5315 = vunpack.c.l.s4 1983009808
    %v5316 = vunpack.c.0.s8 %v5315
    %v5317 = vlaneseq
    %v5318 = vshrl.u32 %v5317, 7
    %v5319 = vsub.s32 %v5316, %v5318
    %v5320 = vrot.slane %v5306, %v5319
    %v5321 = vcombine.high %v5313, %v5313
    %v5322 = vcombine.high %v5320, %v5320
    %v5323 = vcombine.high %v5211, %v5211
    %v5325 = vunpack.c.l.s4 1983009808
    %v5326 = vunpack.c.0.s8 %v5325
    %v5327 = vlaneseq
    %v5328 = vshrl.u32 %v5327, 7
    %v5329 = vsub.s32 %v5326, %v5328
    %v5330 = vrot.slane %v5211, %v5329
    %v5332 = vunpack.c.l.s4 1983009808
    %v5333 = vunpack.c.0.s8 %v5332
    %v5334 = vlaneseq
    %v5335 = vshrl.u32 %v5334, 7
    %v5336 = vsub.s32 %v5333, %v5335
    %v5337 = vrot.slane %v5323, %v5336
    %v5338 = vcombine.high %v5330, %v5330
    %v5339 = vcombine.high %v5337, %v5337
    %v5340 = vcombine.high %v5212, %v5212
    %v5342 = vunpack.c.l.s4 1983009808
    %v5343 = vunpack.c.0.s8 %v5342
    %v5344 = vlaneseq
    %v5345 = vshrl.u32 %v5344, 7
    %v5346 = vsub.s32 %v5343, %v5345
    %v5347 = vrot.slane %v5212, %v5346
    %v5349 = vunpack.c.l.s4 1983009808
    %v5350 = vunpack.c.0.s8 %v5349
    %v5351 = vlaneseq
    %v5352 = vshrl.u32 %v5351, 7
    %v5353 = vsub.s32 %v5350, %v5352
    %v5354 = vrot.slane %v5340, %v5353
    %v5355 = vcombine.high %v5347, %v5347
    %v5356 = vcombine.high %v5354, %v5354
    %v5389 = vrot.slane %v5228, 7
    %v5390 = vrot.slane %v5389, 2
    %v5391 = vrot.slane %v5236, 7
    %v5392 = vrot.slane %v5391, 2
    %v5393 = vrot.slane %v5235, 7
    %v5394 = vrot.slane %v5393, 2
    %v5395 = vrot.slane %v5237, 7
    %v5396 = vrot.slane %v5395, 2
    %v5397 = vrot.slane %v5245, 7
    %v5398 = vrot.slane %v5397, 2
    %v5399 = vrot.slane %v5253, 7
    %v5400 = vrot.slane %v5399, 2
    %v5401 = vrot.slane %v5252, 7
    %v5402 = vrot.slane %v5401, 2
    %v5403 = vrot.slane %v5254, 7
    %v5404 = vrot.slane %v5403, 2
    %v5405 = vrot.slane %v5262, 7
    %v5406 = vrot.slane %v5405, 2
    %v5407 = vrot.slane %v5270, 7
    %v5408 = vrot.slane %v5407, 2
    %v5409 = vrot.slane %v5269, 7
    %v5410 = vrot.slane %v5409, 2
    %v5411 = vrot.slane %v5271, 7
    %v5412 = vrot.slane %v5411, 2
    %v5413 = vrot.slane %v5279, 7
    %v5414 = vrot.slane %v5413, 2
    %v5415 = vrot.slane %v5287, 7
    %v5416 = vrot.slane %v5415, 2
    %v5417 = vrot.slane %v5286, 7
    %v5418 = vrot.slane %v5417, 2
    %v5419 = vrot.slane %v5288, 7
    %v5420 = vrot.slane %v5419, 2
    %v5421 = vrot.slane %v5296, 7
    %v5422 = vrot.slane %v5421, 2
    %v5423 = vrot.slane %v5304, 7
    %v5424 = vrot.slane %v5423, 2
    %v5425 = vrot.slane %v5303, 7
    %v5426 = vrot.slane %v5425, 2
    %v5427 = vrot.slane %v5305, 7
    %v5428 = vrot.slane %v5427, 2
    %v5429 = vrot.slane %v5313, 7
    %v5430 = vrot.slane %v5429, 2
    %v5431 = vrot.slane %v5321, 7
    %v5432 = vrot.slane %v5431, 2
    %v5433 = vrot.slane %v5320, 7
    %v5434 = vrot.slane %v5433, 2
    %v5435 = vrot.slane %v5322, 7
    %v5436 = vrot.slane %v5435, 2
    %v5437 = vrot.slane %v5330, 7
    %v5438 = vrot.slane %v5437, 2
    %v5439 = vrot.slane %v5338, 7
    %v5440 = vrot.slane %v5439, 2
    %v5441 = vrot.slane %v5337, 7
    %v5442 = vrot.slane %v5441, 2
    %v5443 = vrot.slane %v5339, 7
    %v5444 = vrot.slane %v5443, 2
    %v5445 = vrot.slane %v5347, 7
    %v5446 = vrot.slane %v5445, 2
    %v5447 = vrot.slane %v5355, 7
    %v5448 = vrot.slane %v5447, 2
    %v5449 = vrot.slane %v5354, 7
    %v5450 = vrot.slane %v5449, 2
    %v5451 = vrot.slane %v5356, 7
    %v5452 = vrot.slane %v5451, 2
    %v5485 = vmax.f32 %v5228, %v5390
    %v5486 = vmax.f32 %v5236, %v5392
    %v5487 = vmax.f32 %v5235, %v5394
    %v5488 = vmax.f32 %v5237, %v5396
    %v5489 = vmax.f32 %v5245, %v5398
    %v5490 = vmax.f32 %v5253, %v5400
    %v5491 = vmax.f32 %v5252, %v5402
    %v5492 = vmax.f32 %v5254, %v5404
    %v5493 = vmax.f32 %v5262, %v5406
    %v5494 = vmax.f32 %v5270, %v5408
    %v5495 = vmax.f32 %v5269, %v5410
    %v5496 = vmax.f32 %v5271, %v5412
    %v5497 = vmax.f32 %v5279, %v5414
    %v5498 = vmax.f32 %v5287, %v5416
    %v5499 = vmax.f32 %v5286, %v5418
    %v5500 = vmax.f32 %v5288, %v5420
    %v5501 = vmax.f32 %v5296, %v5422
    %v5502 = vmax.f32 %v5304, %v5424
    %v5503 = vmax.f32 %v5303, %v5426
    %v5504 = vmax.f32 %v5305, %v5428
    %v5505 = vmax.f32 %v5313, %v5430
    %v5506 = vmax.f32 %v5321, %v5432
    %v5507 = vmax.f32 %v5320, %v5434
    %v5508 = vmax.f32 %v5322, %v5436
    %v5509 = vmax.f32 %v5330, %v5438
    %v5510 = vmax.f32 %v5338, %v5440
    %v5511 = vmax.f32 %v5337, %v5442
    %v5512 = vmax.f32 %v5339, %v5444
    %v5513 = vmax.f32 %v5347, %v5446
    %v5514 = vmax.f32 %v5355, %v5448
    %v5515 = vmax.f32 %v5354, %v5450
    %v5516 = vmax.f32 %v5356, %v5452
    %v5549 = vlaneseq
    %v5550 = vshrl.u32 %v5549, 7
    %v5551 = vsub.s32 0, %v5550
    %v5552 = vrot.slane %v5485, %v5551
    %v5553 = vlaneseq
    %v5554 = vshrl.u32 %v5553, 7
    %v5555 = vsub.s32 0, %v5554
    %v5556 = vrot.slane %v5486, %v5555
    %v5557 = vlaneseq
    %v5558 = vshrl.u32 %v5557, 7
    %v5559 = vsub.s32 0, %v5558
    %v5560 = vrot.slane %v5487, %v5559
    %v5561 = vlaneseq
    %v5562 = vshrl.u32 %v5561, 7
    %v5563 = vsub.s32 0, %v5562
    %v5564 = vrot.slane %v5488, %v5563
    %v5565 = vlaneseq
    %v5566 = vshrl.u32 %v5565, 7
    %v5567 = vsub.s32 0, %v5566
    %v5568 = vrot.slane %v5489, %v5567
    %v5569 = vlaneseq
    %v5570 = vshrl.u32 %v5569, 7
    %v5571 = vsub.s32 0, %v5570
    %v5572 = vrot.slane %v5490, %v5571
    %v5573 = vlaneseq
    %v5574 = vshrl.u32 %v5573, 7
    %v5575 = vsub.s32 0, %v5574
    %v5576 = vrot.slane %v5491, %v5575
    %v5577 = vlaneseq
    %v5578 = vshrl.u32 %v5577, 7
    %v5579 = vsub.s32 0, %v5578
    %v5580 = vrot.slane %v5492, %v5579
    %v5581 = vlaneseq
    %v5582 = vshrl.u32 %v5581, 7
    %v5583 = vsub.s32 0, %v5582
    %v5584 = vrot.slane %v5493, %v5583
    %v5585 = vlaneseq
    %v5586 = vshrl.u32 %v5585, 7
    %v5587 = vsub.s32 0, %v5586
    %v5588 = vrot.slane %v5494, %v5587
    %v5589 = vlaneseq
    %v5590 = vshrl.u32 %v5589, 7
    %v5591 = vsub.s32 0, %v5590
    %v5592 = vrot.slane %v5495, %v5591
    %v5593 = vlaneseq
    %v5594 = vshrl.u32 %v5593, 7
    %v5595 = vsub.s32 0, %v5594
    %v5596 = vrot.slane %v5496, %v5595
    %v5597 = vlaneseq
    %v5598 = vshrl.u32 %v5597, 7
    %v5599 = vsub.s32 0, %v5598
    %v5600 = vrot.slane %v5497, %v5599
    %v5601 = vlaneseq
    %v5602 = vshrl.u32 %v5601, 7
    %v5603 = vsub.s32 0, %v5602
    %v5604 = vrot.slane %v5498, %v5603
    %v5605 = vlaneseq
    %v5606 = vshrl.u32 %v5605, 7
    %v5607 = vsub.s32 0, %v5606
    %v5608 = vrot.slane %v5499, %v5607
    %v5609 = vlaneseq
    %v5610 = vshrl.u32 %v5609, 7
    %v5611 = vsub.s32 0, %v5610
    %v5612 = vrot.slane %v5500, %v5611
    %v5613 = vlaneseq
    %v5614 = vshrl.u32 %v5613, 7
    %v5615 = vsub.s32 0, %v5614
    %v5616 = vrot.slane %v5501, %v5615
    %v5617 = vlaneseq
    %v5618 = vshrl.u32 %v5617, 7
    %v5619 = vsub.s32 0, %v5618
    %v5620 = vrot.slane %v5502, %v5619
    %v5621 = vlaneseq
    %v5622 = vshrl.u32 %v5621, 7
    %v5623 = vsub.s32 0, %v5622
    %v5624 = vrot.slane %v5503, %v5623
    %v5625 = vlaneseq
    %v5626 = vshrl.u32 %v5625, 7
    %v5627 = vsub.s32 0, %v5626
    %v5628 = vrot.slane %v5504, %v5627
    %v5629 = vlaneseq
    %v5630 = vshrl.u32 %v5629, 7
    %v5631 = vsub.s32 0, %v5630
    %v5632 = vrot.slane %v5505, %v5631
    %v5633 = vlaneseq
    %v5634 = vshrl.u32 %v5633, 7
    %v5635 = vsub.s32 0, %v5634
    %v5636 = vrot.slane %v5506, %v5635
    %v5637 = vlaneseq
    %v5638 = vshrl.u32 %v5637, 7
    %v5639 = vsub.s32 0, %v5638
    %v5640 = vrot.slane %v5507, %v5639
    %v5641 = vlaneseq
    %v5642 = vshrl.u32 %v5641, 7
    %v5643 = vsub.s32 0, %v5642
    %v5644 = vrot.slane %v5508, %v5643
    %v5645 = vlaneseq
    %v5646 = vshrl.u32 %v5645, 7
    %v5647 = vsub.s32 0, %v5646
    %v5648 = vrot.slane %v5509, %v5647
    %v5649 = vlaneseq
    %v5650 = vshrl.u32 %v5649, 7
    %v5651 = vsub.s32 0, %v5650
    %v5652 = vrot.slane %v5510, %v5651
    %v5653 = vlaneseq
    %v5654 = vshrl.u32 %v5653, 7
    %v5655 = vsub.s32 0, %v5654
    %v5656 = vrot.slane %v5511, %v5655
    %v5657 = vlaneseq
    %v5658 = vshrl.u32 %v5657, 7
    %v5659 = vsub.s32 0, %v5658
    %v5660 = vrot.slane %v5512, %v5659
    %v5661 = vlaneseq
    %v5662 = vshrl.u32 %v5661, 7
    %v5663 = vsub.s32 0, %v5662
    %v5664 = vrot.slane %v5513, %v5663
    %v5665 = vlaneseq
    %v5666 = vshrl.u32 %v5665, 7
    %v5667 = vsub.s32 0, %v5666
    %v5668 = vrot.slane %v5514, %v5667
    %v5669 = vlaneseq
    %v5670 = vshrl.u32 %v5669, 7
    %v5671 = vsub.s32 0, %v5670
    %v5672 = vrot.slane %v5515, %v5671
    %v5673 = vlaneseq
    %v5674 = vshrl.u32 %v5673, 7
    %v5675 = vsub.s32 0, %v5674
    %v5676 = vrot.slane %v5516, %v5675
    %v5677 = vsel %vm2188, %v5556, %v5552
    %v5678 = vsel %vm2190, %v5560, %v5677
    %v5679 = vsel %vm2192, %v5564, %v5678
    %v5680 = vsel %vm2194, %v5568, %v5679
    %v5681 = vsel %vm2196, %v5572, %v5680
    %v5682 = vsel %vm2198, %v5576, %v5681
    %v5683 = vsel %vm2200, %v5580, %v5682
    %v5684 = vsel %vm2188, %v5588, %v5584
    %v5685 = vsel %vm2190, %v5592, %v5684
    %v5686 = vsel %vm2192, %v5596, %v5685
    %v5687 = vsel %vm2194, %v5600, %v5686
    %v5688 = vsel %vm2196, %v5604, %v5687
    %v5689 = vsel %vm2198, %v5608, %v5688
    %v5690 = vsel %vm2200, %v5612, %v5689
    %v5691 = vsel %vm2188, %v5620, %v5616
    %v5692 = vsel %vm2190, %v5624, %v5691
    %v5693 = vsel %vm2192, %v5628, %v5692
    %v5694 = vsel %vm2194, %v5632, %v5693
    %v5695 = vsel %vm2196, %v5636, %v5694
    %v5696 = vsel %vm2198, %v5640, %v5695
    %v5697 = vsel %vm2200, %v5644, %v5696
    %v5698 = vsel %vm2188, %v5652, %v5648
    %v5699 = vsel %vm2190, %v5656, %v5698
    %v5700 = vsel %vm2192, %v5660, %v5699
    %v5701 = vsel %vm2194, %v5664, %v5700
    %v5702 = vsel %vm2196, %v5668, %v5701
    %v5703 = vsel %vm2198, %v5672, %v5702
    %v5704 = vsel %vm2200, %v5676, %v5703
    %s5709 = scalar_lea.vmem [#allocation3], 80
    %5710 = vst.msk [vmem:[%s5709 + $0x1] sm:$0xff] %vm267, %v5683
    %5711 = vst.msk [vmem:[%s5709 + $0x11] sm:$0xff] %vm267, %v5690
    %5712 = vst.msk [vmem:[%s5709 + $0xa1] sm:$0xff] %vm267, %v5697
    %5713 = vst.msk [vmem:[%s5709 + $0xb1] sm:$0xff] %vm267, %v5704
    %v5714 = vld [vmem:[#allocation9] sm:$0x1]
    %s5715 = scalar_lea.vmem [#allocation2], 288
    %v5716 = vld [vmem:[%s5715] sm:$0xff]
    %v5717 = vld [vmem:[%s5715 + $0x8] sm:$0xff]
    %v5718 = vld [vmem:[%s5715 + $0x18] sm:$0xff]
    %v5719 = vld [vmem:[%s5715 + $0x20] sm:$0xff]
    %v5720 = vld [vmem:[%s5715 + $0x30] sm:$0xff]
    %v5721 = vld [vmem:[%s5715 + $0x38] sm:$0xff]
    %v5722 = vld [vmem:[%s5715 + $0x48] sm:$0xff]
    %v5723 = vld [vmem:[%s5715 + $0x50] sm:$0xff]
    %v5724 = vld [vmem:[%s5715 + $0x1b0] sm:$0xff]
    %v5725 = vld [vmem:[%s5715 + $0x1b8] sm:$0xff]
    %v5726 = vld [vmem:[%s5715 + $0x1c8] sm:$0xff]
    %v5727 = vld [vmem:[%s5715 + $0x1d0] sm:$0xff]
    %v5728 = vld [vmem:[%s5715 + $0x1e0] sm:$0xff]
    %v5729 = vld [vmem:[%s5715 + $0x1e8] sm:$0xff]
    %v5730 = vld [vmem:[%s5715 + $0x1f8] sm:$0xff]
    %v5731 = vld [vmem:[%s5715 + $0x200] sm:$0xff]
    %5733 = vset.pattern.permute.xlu0 0
    %5734 = vperm.xlu0 %5733, %v5716
    %v5735 = vpop.permute.xlu0 %5734
    %5738 = vset.pattern.permute.xlu0 0
    %5739 = vperm.xlu0 %5738, %v5717
    %v5740 = vpop.permute.xlu0 %5739
    %5743 = vset.pattern.permute.xlu0 0
    %5744 = vperm.xlu0 %5743, %v5718
    %v5745 = vpop.permute.xlu0 %5744
    %5748 = vset.pattern.permute.xlu0 0
    %5749 = vperm.xlu0 %5748, %v5719
    %v5750 = vpop.permute.xlu0 %5749
    %5753 = vset.pattern.permute.xlu0 0
    %5754 = vperm.xlu0 %5753, %v5720
    %v5755 = vpop.permute.xlu0 %5754
    %5758 = vset.pattern.permute.xlu0 0
    %5759 = vperm.xlu0 %5758, %v5721
    %v5760 = vpop.permute.xlu0 %5759
    %5763 = vset.pattern.permute.xlu0 0
    %5764 = vperm.xlu0 %5763, %v5722
    %v5765 = vpop.permute.xlu0 %5764
    %5768 = vset.pattern.permute.xlu0 0
    %5769 = vperm.xlu0 %5768, %v5723
    %v5770 = vpop.permute.xlu0 %5769
    %5773 = vset.pattern.permute.xlu0 0
    %5774 = vperm.xlu0 %5773, %v5724
    %v5775 = vpop.permute.xlu0 %5774
    %5778 = vset.pattern.permute.xlu0 0
    %5779 = vperm.xlu0 %5778, %v5725
    %v5780 = vpop.permute.xlu0 %5779
    %5783 = vset.pattern.permute.xlu0 0
    %5784 = vperm.xlu0 %5783, %v5726
    %v5785 = vpop.permute.xlu0 %5784
    %5788 = vset.pattern.permute.xlu0 0
    %5789 = vperm.xlu0 %5788, %v5727
    %v5790 = vpop.permute.xlu0 %5789
    %5793 = vset.pattern.permute.xlu0 0
    %5794 = vperm.xlu0 %5793, %v5728
    %v5795 = vpop.permute.xlu0 %5794
    %5798 = vset.pattern.permute.xlu0 0
    %5799 = vperm.xlu0 %5798, %v5729
    %v5800 = vpop.permute.xlu0 %5799
    %5803 = vset.pattern.permute.xlu0 0
    %5804 = vperm.xlu0 %5803, %v5730
    %v5805 = vpop.permute.xlu0 %5804
    %5808 = vset.pattern.permute.xlu0 0
    %5809 = vperm.xlu0 %5808, %v5731
    %v5810 = vpop.permute.xlu0 %5809
    %v5812 = vlaneseq
    %v5813 = vshrl.u32 %v5812, 7
    %v5814 = vsub.s32 0, %v5813
    %v5815 = vrot.slane %v5714, %v5814
    %v5816 = vmul.f32 %v5735, %v5815
    %v5817 = vmul.f32 %v5740, %v5815
    %v5818 = vmul.f32 %v5745, %v5815
    %v5819 = vmul.f32 %v5750, %v5815
    %v5820 = vmul.f32 %v5755, %v5815
    %v5821 = vmul.f32 %v5760, %v5815
    %v5822 = vmul.f32 %v5765, %v5815
    %v5823 = vmul.f32 %v5770, %v5815
    %v5824 = vmul.f32 %v5775, %v5815
    %v5825 = vmul.f32 %v5780, %v5815
    %v5826 = vmul.f32 %v5785, %v5815
    %v5827 = vmul.f32 %v5790, %v5815
    %v5828 = vmul.f32 %v5795, %v5815
    %v5829 = vmul.f32 %v5800, %v5815
    %v5830 = vmul.f32 %v5805, %v5815
    %v5831 = vmul.f32 %v5810, %v5815
    %v5832 = vadd.f32 %v5816, 0.0
    %v5833 = vadd.f32 %v5817, 0.0
    %v5834 = vadd.f32 %v5818, 0.0
    %v5835 = vadd.f32 %v5819, 0.0
    %v5836 = vadd.f32 %v5820, 0.0
    %v5837 = vadd.f32 %v5821, 0.0
    %v5838 = vadd.f32 %v5822, 0.0
    %v5839 = vadd.f32 %v5823, 0.0
    %v5840 = vadd.f32 %v5824, 0.0
    %v5841 = vadd.f32 %v5825, 0.0
    %v5842 = vadd.f32 %v5826, 0.0
    %v5843 = vadd.f32 %v5827, 0.0
    %v5844 = vadd.f32 %v5828, 0.0
    %v5845 = vadd.f32 %v5829, 0.0
    %v5846 = vadd.f32 %v5830, 0.0
    %v5847 = vadd.f32 %v5831, 0.0
    %v5848 = vld [vmem:[#allocation9 + $0x1] sm:$0x1]
    %v5849 = vld [vmem:[%s5715 + $0x1] sm:$0xff]
    %v5850 = vld [vmem:[%s5715 + $0x9] sm:$0xff]
    %v5851 = vld [vmem:[%s5715 + $0x19] sm:$0xff]
    %v5852 = vld [vmem:[%s5715 + $0x21] sm:$0xff]
    %v5853 = vld [vmem:[%s5715 + $0x31] sm:$0xff]
    %v5854 = vld [vmem:[%s5715 + $0x39] sm:$0xff]
    %v5855 = vld [vmem:[%s5715 + $0x49] sm:$0xff]
    %v5856 = vld [vmem:[%s5715 + $0x51] sm:$0xff]
    %v5857 = vld [vmem:[%s5715 + $0x1b1] sm:$0xff]
    %v5858 = vld [vmem:[%s5715 + $0x1b9] sm:$0xff]
    %v5859 = vld [vmem:[%s5715 + $0x1c9] sm:$0xff]
    %v5860 = vld [vmem:[%s5715 + $0x1d1] sm:$0xff]
    %v5861 = vld [vmem:[%s5715 + $0x1e1] sm:$0xff]
    %v5862 = vld [vmem:[%s5715 + $0x1e9] sm:$0xff]
    %v5863 = vld [vmem:[%s5715 + $0x1f9] sm:$0xff]
    %v5864 = vld [vmem:[%s5715 + $0x201] sm:$0xff]
    %5866 = vset.pattern.permute.xlu0 0
    %5867 = vperm.xlu0 %5866, %v5849
    %v5868 = vpop.permute.xlu0 %5867
    %5871 = vset.pattern.permute.xlu0 0
    %5872 = vperm.xlu0 %5871, %v5850
    %v5873 = vpop.permute.xlu0 %5872
    %5876 = vset.pattern.permute.xlu0 0
    %5877 = vperm.xlu0 %5876, %v5851
    %v5878 = vpop.permute.xlu0 %5877
    %5881 = vset.pattern.permute.xlu0 0
    %5882 = vperm.xlu0 %5881, %v5852
    %v5883 = vpop.permute.xlu0 %5882
    %5886 = vset.pattern.permute.xlu0 0
    %5887 = vperm.xlu0 %5886, %v5853
    %v5888 = vpop.permute.xlu0 %5887
    %5891 = vset.pattern.permute.xlu0 0
    %5892 = vperm.xlu0 %5891, %v5854
    %v5893 = vpop.permute.xlu0 %5892
    %5896 = vset.pattern.permute.xlu0 0
    %5897 = vperm.xlu0 %5896, %v5855
    %v5898 = vpop.permute.xlu0 %5897
    %5901 = vset.pattern.permute.xlu0 0
    %5902 = vperm.xlu0 %5901, %v5856
    %v5903 = vpop.permute.xlu0 %5902
    %5906 = vset.pattern.permute.xlu0 0
    %5907 = vperm.xlu0 %5906, %v5857
    %v5908 = vpop.permute.xlu0 %5907
    %5911 = vset.pattern.permute.xlu0 0
    %5912 = vperm.xlu0 %5911, %v5858
    %v5913 = vpop.permute.xlu0 %5912
    %5916 = vset.pattern.permute.xlu0 0
    %5917 = vperm.xlu0 %5916, %v5859
    %v5918 = vpop.permute.xlu0 %5917
    %5921 = vset.pattern.permute.xlu0 0
    %5922 = vperm.xlu0 %5921, %v5860
    %v5923 = vpop.permute.xlu0 %5922
    %5926 = vset.pattern.permute.xlu0 0
    %5927 = vperm.xlu0 %5926, %v5861
    %v5928 = vpop.permute.xlu0 %5927
    %5931 = vset.pattern.permute.xlu0 0
    %5932 = vperm.xlu0 %5931, %v5862
    %v5933 = vpop.permute.xlu0 %5932
    %5936 = vset.pattern.permute.xlu0 0
    %5937 = vperm.xlu0 %5936, %v5863
    %v5938 = vpop.permute.xlu0 %5937
    %5941 = vset.pattern.permute.xlu0 0
    %5942 = vperm.xlu0 %5941, %v5864
    %v5943 = vpop.permute.xlu0 %5942
    %v5945 = vlaneseq
    %v5946 = vshrl.u32 %v5945, 7
    %v5947 = vsub.s32 0, %v5946
    %v5948 = vrot.slane %v5848, %v5947
    %v5949 = vmul.f32 %v5868, %v5948
    %v5950 = vmul.f32 %v5873, %v5948
    %v5951 = vmul.f32 %v5878, %v5948
    %v5952 = vmul.f32 %v5883, %v5948
    %v5953 = vmul.f32 %v5888, %v5948
    %v5954 = vmul.f32 %v5893, %v5948
    %v5955 = vmul.f32 %v5898, %v5948
    %v5956 = vmul.f32 %v5903, %v5948
    %v5957 = vmul.f32 %v5908, %v5948
    %v5958 = vmul.f32 %v5913, %v5948
    %v5959 = vmul.f32 %v5918, %v5948
    %v5960 = vmul.f32 %v5923, %v5948
    %v5961 = vmul.f32 %v5928, %v5948
    %v5962 = vmul.f32 %v5933, %v5948
    %v5963 = vmul.f32 %v5938, %v5948
    %v5964 = vmul.f32 %v5943, %v5948
    %v5965 = vadd.f32 %v5832, %v5949
    %v5966 = vadd.f32 %v5833, %v5950
    %v5967 = vadd.f32 %v5834, %v5951
    %v5968 = vadd.f32 %v5835, %v5952
    %v5969 = vadd.f32 %v5836, %v5953
    %v5970 = vadd.f32 %v5837, %v5954
    %v5971 = vadd.f32 %v5838, %v5955
    %v5972 = vadd.f32 %v5839, %v5956
    %v5973 = vadd.f32 %v5840, %v5957
    %v5974 = vadd.f32 %v5841, %v5958
    %v5975 = vadd.f32 %v5842, %v5959
    %v5976 = vadd.f32 %v5843, %v5960
    %v5977 = vadd.f32 %v5844, %v5961
    %v5978 = vadd.f32 %v5845, %v5962
    %v5979 = vadd.f32 %v5846, %v5963
    %v5980 = vadd.f32 %v5847, %v5964
    %v5981 = vld [vmem:[#allocation9 + $0x2] sm:$0x1]
    %v5982 = vld [vmem:[%s5715 + $0x2] sm:$0xff]
    %v5983 = vld [vmem:[%s5715 + $0xa] sm:$0xff]
    %v5984 = vld [vmem:[%s5715 + $0x1a] sm:$0xff]
    %v5985 = vld [vmem:[%s5715 + $0x22] sm:$0xff]
    %v5986 = vld [vmem:[%s5715 + $0x32] sm:$0xff]
    %v5987 = vld [vmem:[%s5715 + $0x3a] sm:$0xff]
    %v5988 = vld [vmem:[%s5715 + $0x4a] sm:$0xff]
    %v5989 = vld [vmem:[%s5715 + $0x52] sm:$0xff]
    %v5990 = vld [vmem:[%s5715 + $0x1b2] sm:$0xff]
    %v5991 = vld [vmem:[%s5715 + $0x1ba] sm:$0xff]
    %v5992 = vld [vmem:[%s5715 + $0x1ca] sm:$0xff]
    %v5993 = vld [vmem:[%s5715 + $0x1d2] sm:$0xff]
    %v5994 = vld [vmem:[%s5715 + $0x1e2] sm:$0xff]
    %v5995 = vld [vmem:[%s5715 + $0x1ea] sm:$0xff]
    %v5996 = vld [vmem:[%s5715 + $0x1fa] sm:$0xff]
    %v5997 = vld [vmem:[%s5715 + $0x202] sm:$0xff]
    %5999 = vset.pattern.permute.xlu0 0
    %6000 = vperm.xlu0 %5999, %v5982
    %v6001 = vpop.permute.xlu0 %6000
    %6004 = vset.pattern.permute.xlu0 0
    %6005 = vperm.xlu0 %6004, %v5983
    %v6006 = vpop.permute.xlu0 %6005
    %6009 = vset.pattern.permute.xlu0 0
    %6010 = vperm.xlu0 %6009, %v5984
    %v6011 = vpop.permute.xlu0 %6010
    %6014 = vset.pattern.permute.xlu0 0
    %6015 = vperm.xlu0 %6014, %v5985
    %v6016 = vpop.permute.xlu0 %6015
    %6019 = vset.pattern.permute.xlu0 0
    %6020 = vperm.xlu0 %6019, %v5986
    %v6021 = vpop.permute.xlu0 %6020
    %6024 = vset.pattern.permute.xlu0 0
    %6025 = vperm.xlu0 %6024, %v5987
    %v6026 = vpop.permute.xlu0 %6025
    %6029 = vset.pattern.permute.xlu0 0
    %6030 = vperm.xlu0 %6029, %v5988
    %v6031 = vpop.permute.xlu0 %6030
    %6034 = vset.pattern.permute.xlu0 0
    %6035 = vperm.xlu0 %6034, %v5989
    %v6036 = vpop.permute.xlu0 %6035
    %6039 = vset.pattern.permute.xlu0 0
    %6040 = vperm.xlu0 %6039, %v5990
    %v6041 = vpop.permute.xlu0 %6040
    %6044 = vset.pattern.permute.xlu0 0
    %6045 = vperm.xlu0 %6044, %v5991
    %v6046 = vpop.permute.xlu0 %6045
    %6049 = vset.pattern.permute.xlu0 0
    %6050 = vperm.xlu0 %6049, %v5992
    %v6051 = vpop.permute.xlu0 %6050
    %6054 = vset.pattern.permute.xlu0 0
    %6055 = vperm.xlu0 %6054, %v5993
    %v6056 = vpop.permute.xlu0 %6055
    %6059 = vset.pattern.permute.xlu0 0
    %6060 = vperm.xlu0 %6059, %v5994
    %v6061 = vpop.permute.xlu0 %6060
    %6064 = vset.pattern.permute.xlu0 0
    %6065 = vperm.xlu0 %6064, %v5995
    %v6066 = vpop.permute.xlu0 %6065
    %6069 = vset.pattern.permute.xlu0 0
    %6070 = vperm.xlu0 %6069, %v5996
    %v6071 = vpop.permute.xlu0 %6070
    %6074 = vset.pattern.permute.xlu0 0
    %6075 = vperm.xlu0 %6074, %v5997
    %v6076 = vpop.permute.xlu0 %6075
    %v6078 = vlaneseq
    %v6079 = vshrl.u32 %v6078, 7
    %v6080 = vsub.s32 0, %v6079
    %v6081 = vrot.slane %v5981, %v6080
    %v6082 = vmul.f32 %v6001, %v6081
    %v6083 = vmul.f32 %v6006, %v6081
    %v6084 = vmul.f32 %v6011, %v6081
    %v6085 = vmul.f32 %v6016, %v6081
    %v6086 = vmul.f32 %v6021, %v6081
    %v6087 = vmul.f32 %v6026, %v6081
    %v6088 = vmul.f32 %v6031, %v6081
    %v6089 = vmul.f32 %v6036, %v6081
    %v6090 = vmul.f32 %v6041, %v6081
    %v6091 = vmul.f32 %v6046, %v6081
    %v6092 = vmul.f32 %v6051, %v6081
    %v6093 = vmul.f32 %v6056, %v6081
    %v6094 = vmul.f32 %v6061, %v6081
    %v6095 = vmul.f32 %v6066, %v6081
    %v6096 = vmul.f32 %v6071, %v6081
    %v6097 = vmul.f32 %v6076, %v6081
    %v6098 = vadd.f32 %v5965, %v6082
    %v6099 = vadd.f32 %v5966, %v6083
    %v6100 = vadd.f32 %v5967, %v6084
    %v6101 = vadd.f32 %v5968, %v6085
    %v6102 = vadd.f32 %v5969, %v6086
    %v6103 = vadd.f32 %v5970, %v6087
    %v6104 = vadd.f32 %v5971, %v6088
    %v6105 = vadd.f32 %v5972, %v6089
    %v6106 = vadd.f32 %v5973, %v6090
    %v6107 = vadd.f32 %v5974, %v6091
    %v6108 = vadd.f32 %v5975, %v6092
    %v6109 = vadd.f32 %v5976, %v6093
    %v6110 = vadd.f32 %v5977, %v6094
    %v6111 = vadd.f32 %v5978, %v6095
    %v6112 = vadd.f32 %v5979, %v6096
    %v6113 = vadd.f32 %v5980, %v6097
    %v6114 = vld [vmem:[#allocation9 + $0x3] sm:$0x1]
    %s6115 = scalar_lea.vmem [#allocation2], 312
    %v6116 = vld [vmem:[%s6115] sm:$0xff]
    %v6117 = vld [vmem:[%s6115 + $0x8] sm:$0xff]
    %v6118 = vld [vmem:[%s6115 + $0x18] sm:$0xff]
    %v6119 = vld [vmem:[%s6115 + $0x20] sm:$0xff]
    %v6120 = vld [vmem:[%s6115 + $0x30] sm:$0xff]
    %v6121 = vld [vmem:[%s6115 + $0x38] sm:$0xff]
    %v6122 = vld [vmem:[%s6115 + $0x48] sm:$0xff]
    %v6123 = vld [vmem:[%s6115 + $0x50] sm:$0xff]
    %v6124 = vld [vmem:[%s6115 + $0x1b0] sm:$0xff]
    %v6125 = vld [vmem:[%s6115 + $0x1b8] sm:$0xff]
    %v6126 = vld [vmem:[%s6115 + $0x1c8] sm:$0xff]
    %v6127 = vld [vmem:[%s6115 + $0x1d0] sm:$0xff]
    %v6128 = vld [vmem:[%s6115 + $0x1e0] sm:$0xff]
    %v6129 = vld [vmem:[%s6115 + $0x1e8] sm:$0xff]
    %v6130 = vld [vmem:[%s6115 + $0x1f8] sm:$0xff]
    %v6131 = vld [vmem:[%s6115 + $0x200] sm:$0xff]
    %6133 = vset.pattern.permute.xlu0 0
    %6134 = vperm.xlu0 %6133, %v6116
    %v6135 = vpop.permute.xlu0 %6134
    %6138 = vset.pattern.permute.xlu0 0
    %6139 = vperm.xlu0 %6138, %v6117
    %v6140 = vpop.permute.xlu0 %6139
    %6143 = vset.pattern.permute.xlu0 0
    %6144 = vperm.xlu0 %6143, %v6118
    %v6145 = vpop.permute.xlu0 %6144
    %6148 = vset.pattern.permute.xlu0 0
    %6149 = vperm.xlu0 %6148, %v6119
    %v6150 = vpop.permute.xlu0 %6149
    %6153 = vset.pattern.permute.xlu0 0
    %6154 = vperm.xlu0 %6153, %v6120
    %v6155 = vpop.permute.xlu0 %6154
    %6158 = vset.pattern.permute.xlu0 0
    %6159 = vperm.xlu0 %6158, %v6121
    %v6160 = vpop.permute.xlu0 %6159
    %6163 = vset.pattern.permute.xlu0 0
    %6164 = vperm.xlu0 %6163, %v6122
    %v6165 = vpop.permute.xlu0 %6164
    %6168 = vset.pattern.permute.xlu0 0
    %6169 = vperm.xlu0 %6168, %v6123
    %v6170 = vpop.permute.xlu0 %6169
    %6173 = vset.pattern.permute.xlu0 0
    %6174 = vperm.xlu0 %6173, %v6124
    %v6175 = vpop.permute.xlu0 %6174
    %6178 = vset.pattern.permute.xlu0 0
    %6179 = vperm.xlu0 %6178, %v6125
    %v6180 = vpop.permute.xlu0 %6179
    %6183 = vset.pattern.permute.xlu0 0
    %6184 = vperm.xlu0 %6183, %v6126
    %v6185 = vpop.permute.xlu0 %6184
    %6188 = vset.pattern.permute.xlu0 0
    %6189 = vperm.xlu0 %6188, %v6127
    %v6190 = vpop.permute.xlu0 %6189
    %6193 = vset.pattern.permute.xlu0 0
    %6194 = vperm.xlu0 %6193, %v6128
    %v6195 = vpop.permute.xlu0 %6194
    %6198 = vset.pattern.permute.xlu0 0
    %6199 = vperm.xlu0 %6198, %v6129
    %v6200 = vpop.permute.xlu0 %6199
    %6203 = vset.pattern.permute.xlu0 0
    %6204 = vperm.xlu0 %6203, %v6130
    %v6205 = vpop.permute.xlu0 %6204
    %6208 = vset.pattern.permute.xlu0 0
    %6209 = vperm.xlu0 %6208, %v6131
    %v6210 = vpop.permute.xlu0 %6209
    %v6212 = vlaneseq
    %v6213 = vshrl.u32 %v6212, 7
    %v6214 = vsub.s32 0, %v6213
    %v6215 = vrot.slane %v6114, %v6214
    %v6216 = vmul.f32 %v6135, %v6215
    %v6217 = vmul.f32 %v6140, %v6215
    %v6218 = vmul.f32 %v6145, %v6215
    %v6219 = vmul.f32 %v6150, %v6215
    %v6220 = vmul.f32 %v6155, %v6215
    %v6221 = vmul.f32 %v6160, %v6215
    %v6222 = vmul.f32 %v6165, %v6215
    %v6223 = vmul.f32 %v6170, %v6215
    %v6224 = vmul.f32 %v6175, %v6215
    %v6225 = vmul.f32 %v6180, %v6215
    %v6226 = vmul.f32 %v6185, %v6215
    %v6227 = vmul.f32 %v6190, %v6215
    %v6228 = vmul.f32 %v6195, %v6215
    %v6229 = vmul.f32 %v6200, %v6215
    %v6230 = vmul.f32 %v6205, %v6215
    %v6231 = vmul.f32 %v6210, %v6215
    %v6232 = vadd.f32 %v6098, %v6216
    %v6233 = vadd.f32 %v6099, %v6217
    %v6234 = vadd.f32 %v6100, %v6218
    %v6235 = vadd.f32 %v6101, %v6219
    %v6236 = vadd.f32 %v6102, %v6220
    %v6237 = vadd.f32 %v6103, %v6221
    %v6238 = vadd.f32 %v6104, %v6222
    %v6239 = vadd.f32 %v6105, %v6223
    %v6240 = vadd.f32 %v6106, %v6224
    %v6241 = vadd.f32 %v6107, %v6225
    %v6242 = vadd.f32 %v6108, %v6226
    %v6243 = vadd.f32 %v6109, %v6227
    %v6244 = vadd.f32 %v6110, %v6228
    %v6245 = vadd.f32 %v6111, %v6229
    %v6246 = vadd.f32 %v6112, %v6230
    %v6247 = vadd.f32 %v6113, %v6231
    %v6248 = vld [vmem:[#allocation9 + $0x4] sm:$0x1]
    %v6249 = vld [vmem:[%s6115 + $0x1] sm:$0xff]
    %v6250 = vld [vmem:[%s6115 + $0x9] sm:$0xff]
    %v6251 = vld [vmem:[%s6115 + $0x19] sm:$0xff]
    %v6252 = vld [vmem:[%s6115 + $0x21] sm:$0xff]
    %v6253 = vld [vmem:[%s6115 + $0x31] sm:$0xff]
    %v6254 = vld [vmem:[%s6115 + $0x39] sm:$0xff]
    %v6255 = vld [vmem:[%s6115 + $0x49] sm:$0xff]
    %v6256 = vld [vmem:[%s6115 + $0x51] sm:$0xff]
    %v6257 = vld [vmem:[%s6115 + $0x1b1] sm:$0xff]
    %v6258 = vld [vmem:[%s6115 + $0x1b9] sm:$0xff]
    %v6259 = vld [vmem:[%s6115 + $0x1c9] sm:$0xff]
    %v6260 = vld [vmem:[%s6115 + $0x1d1] sm:$0xff]
    %v6261 = vld [vmem:[%s6115 + $0x1e1] sm:$0xff]
    %v6262 = vld [vmem:[%s6115 + $0x1e9] sm:$0xff]
    %v6263 = vld [vmem:[%s6115 + $0x1f9] sm:$0xff]
    %v6264 = vld [vmem:[%s6115 + $0x201] sm:$0xff]
    %6266 = vset.pattern.permute.xlu0 0
    %6267 = vperm.xlu0 %6266, %v6249
    %v6268 = vpop.permute.xlu0 %6267
    %6271 = vset.pattern.permute.xlu0 0
    %6272 = vperm.xlu0 %6271, %v6250
    %v6273 = vpop.permute.xlu0 %6272
    %6276 = vset.pattern.permute.xlu0 0
    %6277 = vperm.xlu0 %6276, %v6251
    %v6278 = vpop.permute.xlu0 %6277
    %6281 = vset.pattern.permute.xlu0 0
    %6282 = vperm.xlu0 %6281, %v6252
    %v6283 = vpop.permute.xlu0 %6282
    %6286 = vset.pattern.permute.xlu0 0
    %6287 = vperm.xlu0 %6286, %v6253
    %v6288 = vpop.permute.xlu0 %6287
    %6291 = vset.pattern.permute.xlu0 0
    %6292 = vperm.xlu0 %6291, %v6254
    %v6293 = vpop.permute.xlu0 %6292
    %6296 = vset.pattern.permute.xlu0 0
    %6297 = vperm.xlu0 %6296, %v6255
    %v6298 = vpop.permute.xlu0 %6297
    %6301 = vset.pattern.permute.xlu0 0
    %6302 = vperm.xlu0 %6301, %v6256
    %v6303 = vpop.permute.xlu0 %6302
    %6306 = vset.pattern.permute.xlu0 0
    %6307 = vperm.xlu0 %6306, %v6257
    %v6308 = vpop.permute.xlu0 %6307
    %6311 = vset.pattern.permute.xlu0 0
    %6312 = vperm.xlu0 %6311, %v6258
    %v6313 = vpop.permute.xlu0 %6312
    %6316 = vset.pattern.permute.xlu0 0
    %6317 = vperm.xlu0 %6316, %v6259
    %v6318 = vpop.permute.xlu0 %6317
    %6321 = vset.pattern.permute.xlu0 0
    %6322 = vperm.xlu0 %6321, %v6260
    %v6323 = vpop.permute.xlu0 %6322
    %6326 = vset.pattern.permute.xlu0 0
    %6327 = vperm.xlu0 %6326, %v6261
    %v6328 = vpop.permute.xlu0 %6327
    %6331 = vset.pattern.permute.xlu0 0
    %6332 = vperm.xlu0 %6331, %v6262
    %v6333 = vpop.permute.xlu0 %6332
    %6336 = vset.pattern.permute.xlu0 0
    %6337 = vperm.xlu0 %6336, %v6263
    %v6338 = vpop.permute.xlu0 %6337
    %6341 = vset.pattern.permute.xlu0 0
    %6342 = vperm.xlu0 %6341, %v6264
    %v6343 = vpop.permute.xlu0 %6342
    %v6345 = vlaneseq
    %v6346 = vshrl.u32 %v6345, 7
    %v6347 = vsub.s32 0, %v6346
    %v6348 = vrot.slane %v6248, %v6347
    %v6349 = vmul.f32 %v6268, %v6348
    %v6350 = vmul.f32 %v6273, %v6348
    %v6351 = vmul.f32 %v6278, %v6348
    %v6352 = vmul.f32 %v6283, %v6348
    %v6353 = vmul.f32 %v6288, %v6348
    %v6354 = vmul.f32 %v6293, %v6348
    %v6355 = vmul.f32 %v6298, %v6348
    %v6356 = vmul.f32 %v6303, %v6348
    %v6357 = vmul.f32 %v6308, %v6348
    %v6358 = vmul.f32 %v6313, %v6348
    %v6359 = vmul.f32 %v6318, %v6348
    %v6360 = vmul.f32 %v6323, %v6348
    %v6361 = vmul.f32 %v6328, %v6348
    %v6362 = vmul.f32 %v6333, %v6348
    %v6363 = vmul.f32 %v6338, %v6348
    %v6364 = vmul.f32 %v6343, %v6348
    %v6365 = vadd.f32 %v6232, %v6349
    %v6366 = vadd.f32 %v6233, %v6350
    %v6367 = vadd.f32 %v6234, %v6351
    %v6368 = vadd.f32 %v6235, %v6352
    %v6369 = vadd.f32 %v6236, %v6353
    %v6370 = vadd.f32 %v6237, %v6354
    %v6371 = vadd.f32 %v6238, %v6355
    %v6372 = vadd.f32 %v6239, %v6356
    %v6373 = vadd.f32 %v6240, %v6357
    %v6374 = vadd.f32 %v6241, %v6358
    %v6375 = vadd.f32 %v6242, %v6359
    %v6376 = vadd.f32 %v6243, %v6360
    %v6377 = vadd.f32 %v6244, %v6361
    %v6378 = vadd.f32 %v6245, %v6362
    %v6379 = vadd.f32 %v6246, %v6363
    %v6380 = vadd.f32 %v6247, %v6364
    %v6381 = vld [vmem:[#allocation9 + $0x5] sm:$0x1]
    %v6382 = vld [vmem:[%s6115 + $0x2] sm:$0xff]
    %v6383 = vld [vmem:[%s6115 + $0xa] sm:$0xff]
    %v6384 = vld [vmem:[%s6115 + $0x1a] sm:$0xff]
    %v6385 = vld [vmem:[%s6115 + $0x22] sm:$0xff]
    %v6386 = vld [vmem:[%s6115 + $0x32] sm:$0xff]
    %v6387 = vld [vmem:[%s6115 + $0x3a] sm:$0xff]
    %v6388 = vld [vmem:[%s6115 + $0x4a] sm:$0xff]
    %v6389 = vld [vmem:[%s6115 + $0x52] sm:$0xff]
    %v6390 = vld [vmem:[%s6115 + $0x1b2] sm:$0xff]
    %v6391 = vld [vmem:[%s6115 + $0x1ba] sm:$0xff]
    %v6392 = vld [vmem:[%s6115 + $0x1ca] sm:$0xff]
    %v6393 = vld [vmem:[%s6115 + $0x1d2] sm:$0xff]
    %v6394 = vld [vmem:[%s6115 + $0x1e2] sm:$0xff]
    %v6395 = vld [vmem:[%s6115 + $0x1ea] sm:$0xff]
    %v6396 = vld [vmem:[%s6115 + $0x1fa] sm:$0xff]
    %v6397 = vld [vmem:[%s6115 + $0x202] sm:$0xff]
    %6399 = vset.pattern.permute.xlu0 0
    %6400 = vperm.xlu0 %6399, %v6382
    %v6401 = vpop.permute.xlu0 %6400
    %6404 = vset.pattern.permute.xlu0 0
    %6405 = vperm.xlu0 %6404, %v6383
    %v6406 = vpop.permute.xlu0 %6405
    %6409 = vset.pattern.permute.xlu0 0
    %6410 = vperm.xlu0 %6409, %v6384
    %v6411 = vpop.permute.xlu0 %6410
    %6414 = vset.pattern.permute.xlu0 0
    %6415 = vperm.xlu0 %6414, %v6385
    %v6416 = vpop.permute.xlu0 %6415
    %6419 = vset.pattern.permute.xlu0 0
    %6420 = vperm.xlu0 %6419, %v6386
    %v6421 = vpop.permute.xlu0 %6420
    %6424 = vset.pattern.permute.xlu0 0
    %6425 = vperm.xlu0 %6424, %v6387
    %v6426 = vpop.permute.xlu0 %6425
    %6429 = vset.pattern.permute.xlu0 0
    %6430 = vperm.xlu0 %6429, %v6388
    %v6431 = vpop.permute.xlu0 %6430
    %6434 = vset.pattern.permute.xlu0 0
    %6435 = vperm.xlu0 %6434, %v6389
    %v6436 = vpop.permute.xlu0 %6435
    %6439 = vset.pattern.permute.xlu0 0
    %6440 = vperm.xlu0 %6439, %v6390
    %v6441 = vpop.permute.xlu0 %6440
    %6444 = vset.pattern.permute.xlu0 0
    %6445 = vperm.xlu0 %6444, %v6391
    %v6446 = vpop.permute.xlu0 %6445
    %6449 = vset.pattern.permute.xlu0 0
    %6450 = vperm.xlu0 %6449, %v6392
    %v6451 = vpop.permute.xlu0 %6450
    %6454 = vset.pattern.permute.xlu0 0
    %6455 = vperm.xlu0 %6454, %v6393
    %v6456 = vpop.permute.xlu0 %6455
    %6459 = vset.pattern.permute.xlu0 0
    %6460 = vperm.xlu0 %6459, %v6394
    %v6461 = vpop.permute.xlu0 %6460
    %6464 = vset.pattern.permute.xlu0 0
    %6465 = vperm.xlu0 %6464, %v6395
    %v6466 = vpop.permute.xlu0 %6465
    %6469 = vset.pattern.permute.xlu0 0
    %6470 = vperm.xlu0 %6469, %v6396
    %v6471 = vpop.permute.xlu0 %6470
    %6474 = vset.pattern.permute.xlu0 0
    %6475 = vperm.xlu0 %6474, %v6397
    %v6476 = vpop.permute.xlu0 %6475
    %v6478 = vlaneseq
    %v6479 = vshrl.u32 %v6478, 7
    %v6480 = vsub.s32 0, %v6479
    %v6481 = vrot.slane %v6381, %v6480
    %v6482 = vmul.f32 %v6401, %v6481
    %v6483 = vmul.f32 %v6406, %v6481
    %v6484 = vmul.f32 %v6411, %v6481
    %v6485 = vmul.f32 %v6416, %v6481
    %v6486 = vmul.f32 %v6421, %v6481
    %v6487 = vmul.f32 %v6426, %v6481
    %v6488 = vmul.f32 %v6431, %v6481
    %v6489 = vmul.f32 %v6436, %v6481
    %v6490 = vmul.f32 %v6441, %v6481
    %v6491 = vmul.f32 %v6446, %v6481
    %v6492 = vmul.f32 %v6451, %v6481
    %v6493 = vmul.f32 %v6456, %v6481
    %v6494 = vmul.f32 %v6461, %v6481
    %v6495 = vmul.f32 %v6466, %v6481
    %v6496 = vmul.f32 %v6471, %v6481
    %v6497 = vmul.f32 %v6476, %v6481
    %v6498 = vadd.f32 %v6365, %v6482
    %v6499 = vadd.f32 %v6366, %v6483
    %v6500 = vadd.f32 %v6367, %v6484
    %v6501 = vadd.f32 %v6368, %v6485
    %v6502 = vadd.f32 %v6369, %v6486
    %v6503 = vadd.f32 %v6370, %v6487
    %v6504 = vadd.f32 %v6371, %v6488
    %v6505 = vadd.f32 %v6372, %v6489
    %v6506 = vadd.f32 %v6373, %v6490
    %v6507 = vadd.f32 %v6374, %v6491
    %v6508 = vadd.f32 %v6375, %v6492
    %v6509 = vadd.f32 %v6376, %v6493
    %v6510 = vadd.f32 %v6377, %v6494
    %v6511 = vadd.f32 %v6378, %v6495
    %v6512 = vadd.f32 %v6379, %v6496
    %v6513 = vadd.f32 %v6380, %v6497
    %v6514 = vld [vmem:[#allocation9 + $0x6] sm:$0x1]
    %s6515 = scalar_lea.vmem [#allocation2], 336
    %v6516 = vld [vmem:[%s6515] sm:$0xff]
    %v6517 = vld [vmem:[%s6515 + $0x8] sm:$0xff]
    %v6518 = vld [vmem:[%s6515 + $0x18] sm:$0xff]
    %v6519 = vld [vmem:[%s6515 + $0x20] sm:$0xff]
    %v6520 = vld [vmem:[%s6515 + $0x30] sm:$0xff]
    %v6521 = vld [vmem:[%s6515 + $0x38] sm:$0xff]
    %v6522 = vld [vmem:[%s6515 + $0x48] sm:$0xff]
    %v6523 = vld [vmem:[%s6515 + $0x50] sm:$0xff]
    %v6524 = vld [vmem:[%s6515 + $0x1b0] sm:$0xff]
    %v6525 = vld [vmem:[%s6515 + $0x1b8] sm:$0xff]
    %v6526 = vld [vmem:[%s6515 + $0x1c8] sm:$0xff]
    %v6527 = vld [vmem:[%s6515 + $0x1d0] sm:$0xff]
    %v6528 = vld [vmem:[%s6515 + $0x1e0] sm:$0xff]
    %v6529 = vld [vmem:[%s6515 + $0x1e8] sm:$0xff]
    %v6530 = vld [vmem:[%s6515 + $0x1f8] sm:$0xff]
    %v6531 = vld [vmem:[%s6515 + $0x200] sm:$0xff]
    %6533 = vset.pattern.permute.xlu0 0
    %6534 = vperm.xlu0 %6533, %v6516
    %v6535 = vpop.permute.xlu0 %6534
    %6538 = vset.pattern.permute.xlu0 0
    %6539 = vperm.xlu0 %6538, %v6517
    %v6540 = vpop.permute.xlu0 %6539
    %6543 = vset.pattern.permute.xlu0 0
    %6544 = vperm.xlu0 %6543, %v6518
    %v6545 = vpop.permute.xlu0 %6544
    %6548 = vset.pattern.permute.xlu0 0
    %6549 = vperm.xlu0 %6548, %v6519
    %v6550 = vpop.permute.xlu0 %6549
    %6553 = vset.pattern.permute.xlu0 0
    %6554 = vperm.xlu0 %6553, %v6520
    %v6555 = vpop.permute.xlu0 %6554
    %6558 = vset.pattern.permute.xlu0 0
    %6559 = vperm.xlu0 %6558, %v6521
    %v6560 = vpop.permute.xlu0 %6559
    %6563 = vset.pattern.permute.xlu0 0
    %6564 = vperm.xlu0 %6563, %v6522
    %v6565 = vpop.permute.xlu0 %6564
    %6568 = vset.pattern.permute.xlu0 0
    %6569 = vperm.xlu0 %6568, %v6523
    %v6570 = vpop.permute.xlu0 %6569
    %6573 = vset.pattern.permute.xlu0 0
    %6574 = vperm.xlu0 %6573, %v6524
    %v6575 = vpop.permute.xlu0 %6574
    %6578 = vset.pattern.permute.xlu0 0
    %6579 = vperm.xlu0 %6578, %v6525
    %v6580 = vpop.permute.xlu0 %6579
    %6583 = vset.pattern.permute.xlu0 0
    %6584 = vperm.xlu0 %6583, %v6526
    %v6585 = vpop.permute.xlu0 %6584
    %6588 = vset.pattern.permute.xlu0 0
    %6589 = vperm.xlu0 %6588, %v6527
    %v6590 = vpop.permute.xlu0 %6589
    %6593 = vset.pattern.permute.xlu0 0
    %6594 = vperm.xlu0 %6593, %v6528
    %v6595 = vpop.permute.xlu0 %6594
    %6598 = vset.pattern.permute.xlu0 0
    %6599 = vperm.xlu0 %6598, %v6529
    %v6600 = vpop.permute.xlu0 %6599
    %6603 = vset.pattern.permute.xlu0 0
    %6604 = vperm.xlu0 %6603, %v6530
    %v6605 = vpop.permute.xlu0 %6604
    %6608 = vset.pattern.permute.xlu0 0
    %6609 = vperm.xlu0 %6608, %v6531
    %v6610 = vpop.permute.xlu0 %6609
    %v6612 = vlaneseq
    %v6613 = vshrl.u32 %v6612, 7
    %v6614 = vsub.s32 0, %v6613
    %v6615 = vrot.slane %v6514, %v6614
    %v6616 = vmul.f32 %v6535, %v6615
    %v6617 = vmul.f32 %v6540, %v6615
    %v6618 = vmul.f32 %v6545, %v6615
    %v6619 = vmul.f32 %v6550, %v6615
    %v6620 = vmul.f32 %v6555, %v6615
    %v6621 = vmul.f32 %v6560, %v6615
    %v6622 = vmul.f32 %v6565, %v6615
    %v6623 = vmul.f32 %v6570, %v6615
    %v6624 = vmul.f32 %v6575, %v6615
    %v6625 = vmul.f32 %v6580, %v6615
    %v6626 = vmul.f32 %v6585, %v6615
    %v6627 = vmul.f32 %v6590, %v6615
    %v6628 = vmul.f32 %v6595, %v6615
    %v6629 = vmul.f32 %v6600, %v6615
    %v6630 = vmul.f32 %v6605, %v6615
    %v6631 = vmul.f32 %v6610, %v6615
    %v6632 = vadd.f32 %v6498, %v6616
    %v6633 = vadd.f32 %v6499, %v6617
    %v6634 = vadd.f32 %v6500, %v6618
    %v6635 = vadd.f32 %v6501, %v6619
    %v6636 = vadd.f32 %v6502, %v6620
    %v6637 = vadd.f32 %v6503, %v6621
    %v6638 = vadd.f32 %v6504, %v6622
    %v6639 = vadd.f32 %v6505, %v6623
    %v6640 = vadd.f32 %v6506, %v6624
    %v6641 = vadd.f32 %v6507, %v6625
    %v6642 = vadd.f32 %v6508, %v6626
    %v6643 = vadd.f32 %v6509, %v6627
    %v6644 = vadd.f32 %v6510, %v6628
    %v6645 = vadd.f32 %v6511, %v6629
    %v6646 = vadd.f32 %v6512, %v6630
    %v6647 = vadd.f32 %v6513, %v6631
    %v6648 = vld [vmem:[#allocation9 + $0x7] sm:$0x1]
    %v6649 = vld [vmem:[%s6515 + $0x1] sm:$0xff]
    %v6650 = vld [vmem:[%s6515 + $0x9] sm:$0xff]
    %v6651 = vld [vmem:[%s6515 + $0x19] sm:$0xff]
    %v6652 = vld [vmem:[%s6515 + $0x21] sm:$0xff]
    %v6653 = vld [vmem:[%s6515 + $0x31] sm:$0xff]
    %v6654 = vld [vmem:[%s6515 + $0x39] sm:$0xff]
    %v6655 = vld [vmem:[%s6515 + $0x49] sm:$0xff]
    %v6656 = vld [vmem:[%s6515 + $0x51] sm:$0xff]
    %v6657 = vld [vmem:[%s6515 + $0x1b1] sm:$0xff]
    %v6658 = vld [vmem:[%s6515 + $0x1b9] sm:$0xff]
    %v6659 = vld [vmem:[%s6515 + $0x1c9] sm:$0xff]
    %v6660 = vld [vmem:[%s6515 + $0x1d1] sm:$0xff]
    %v6661 = vld [vmem:[%s6515 + $0x1e1] sm:$0xff]
    %v6662 = vld [vmem:[%s6515 + $0x1e9] sm:$0xff]
    %v6663 = vld [vmem:[%s6515 + $0x1f9] sm:$0xff]
    %v6664 = vld [vmem:[%s6515 + $0x201] sm:$0xff]
    %6666 = vset.pattern.permute.xlu0 0
    %6667 = vperm.xlu0 %6666, %v6649
    %v6668 = vpop.permute.xlu0 %6667
    %6671 = vset.pattern.permute.xlu0 0
    %6672 = vperm.xlu0 %6671, %v6650
    %v6673 = vpop.permute.xlu0 %6672
    %6676 = vset.pattern.permute.xlu0 0
    %6677 = vperm.xlu0 %6676, %v6651
    %v6678 = vpop.permute.xlu0 %6677
    %6681 = vset.pattern.permute.xlu0 0
    %6682 = vperm.xlu0 %6681, %v6652
    %v6683 = vpop.permute.xlu0 %6682
    %6686 = vset.pattern.permute.xlu0 0
    %6687 = vperm.xlu0 %6686, %v6653
    %v6688 = vpop.permute.xlu0 %6687
    %6691 = vset.pattern.permute.xlu0 0
    %6692 = vperm.xlu0 %6691, %v6654
    %v6693 = vpop.permute.xlu0 %6692
    %6696 = vset.pattern.permute.xlu0 0
    %6697 = vperm.xlu0 %6696, %v6655
    %v6698 = vpop.permute.xlu0 %6697
    %6701 = vset.pattern.permute.xlu0 0
    %6702 = vperm.xlu0 %6701, %v6656
    %v6703 = vpop.permute.xlu0 %6702
    %6706 = vset.pattern.permute.xlu0 0
    %6707 = vperm.xlu0 %6706, %v6657
    %v6708 = vpop.permute.xlu0 %6707
    %6711 = vset.pattern.permute.xlu0 0
    %6712 = vperm.xlu0 %6711, %v6658
    %v6713 = vpop.permute.xlu0 %6712
    %6716 = vset.pattern.permute.xlu0 0
    %6717 = vperm.xlu0 %6716, %v6659
    %v6718 = vpop.permute.xlu0 %6717
    %6721 = vset.pattern.permute.xlu0 0
    %6722 = vperm.xlu0 %6721, %v6660
    %v6723 = vpop.permute.xlu0 %6722
    %6726 = vset.pattern.permute.xlu0 0
    %6727 = vperm.xlu0 %6726, %v6661
    %v6728 = vpop.permute.xlu0 %6727
    %6731 = vset.pattern.permute.xlu0 0
    %6732 = vperm.xlu0 %6731, %v6662
    %v6733 = vpop.permute.xlu0 %6732
    %6736 = vset.pattern.permute.xlu0 0
    %6737 = vperm.xlu0 %6736, %v6663
    %v6738 = vpop.permute.xlu0 %6737
    %6741 = vset.pattern.permute.xlu0 0
    %6742 = vperm.xlu0 %6741, %v6664
    %v6743 = vpop.permute.xlu0 %6742
    %v6745 = vlaneseq
    %v6746 = vshrl.u32 %v6745, 7
    %v6747 = vsub.s32 0, %v6746
    %v6748 = vrot.slane %v6648, %v6747
    %v6749 = vmul.f32 %v6668, %v6748
    %v6750 = vmul.f32 %v6673, %v6748
    %v6751 = vmul.f32 %v6678, %v6748
    %v6752 = vmul.f32 %v6683, %v6748
    %v6753 = vmul.f32 %v6688, %v6748
    %v6754 = vmul.f32 %v6693, %v6748
    %v6755 = vmul.f32 %v6698, %v6748
    %v6756 = vmul.f32 %v6703, %v6748
    %v6757 = vmul.f32 %v6708, %v6748
    %v6758 = vmul.f32 %v6713, %v6748
    %v6759 = vmul.f32 %v6718, %v6748
    %v6760 = vmul.f32 %v6723, %v6748
    %v6761 = vmul.f32 %v6728, %v6748
    %v6762 = vmul.f32 %v6733, %v6748
    %v6763 = vmul.f32 %v6738, %v6748
    %v6764 = vmul.f32 %v6743, %v6748
    %v6765 = vadd.f32 %v6632, %v6749
    %v6766 = vadd.f32 %v6633, %v6750
    %v6767 = vadd.f32 %v6634, %v6751
    %v6768 = vadd.f32 %v6635, %v6752
    %v6769 = vadd.f32 %v6636, %v6753
    %v6770 = vadd.f32 %v6637, %v6754
    %v6771 = vadd.f32 %v6638, %v6755
    %v6772 = vadd.f32 %v6639, %v6756
    %v6773 = vadd.f32 %v6640, %v6757
    %v6774 = vadd.f32 %v6641, %v6758
    %v6775 = vadd.f32 %v6642, %v6759
    %v6776 = vadd.f32 %v6643, %v6760
    %v6777 = vadd.f32 %v6644, %v6761
    %v6778 = vadd.f32 %v6645, %v6762
    %v6779 = vadd.f32 %v6646, %v6763
    %v6780 = vadd.f32 %v6647, %v6764
    %v6781 = vld [vmem:[#allocation9 + $0x8] sm:$0x1]
    %v6782 = vld [vmem:[%s6515 + $0x2] sm:$0xff]
    %v6783 = vld [vmem:[%s6515 + $0xa] sm:$0xff]
    %v6784 = vld [vmem:[%s6515 + $0x1a] sm:$0xff]
    %v6785 = vld [vmem:[%s6515 + $0x22] sm:$0xff]
    %v6786 = vld [vmem:[%s6515 + $0x32] sm:$0xff]
    %v6787 = vld [vmem:[%s6515 + $0x3a] sm:$0xff]
    %v6788 = vld [vmem:[%s6515 + $0x4a] sm:$0xff]
    %v6789 = vld [vmem:[%s6515 + $0x52] sm:$0xff]
    %v6790 = vld [vmem:[%s6515 + $0x1b2] sm:$0xff]
    %v6791 = vld [vmem:[%s6515 + $0x1ba] sm:$0xff]
    %v6792 = vld [vmem:[%s6515 + $0x1ca] sm:$0xff]
    %v6793 = vld [vmem:[%s6515 + $0x1d2] sm:$0xff]
    %v6794 = vld [vmem:[%s6515 + $0x1e2] sm:$0xff]
    %v6795 = vld [vmem:[%s6515 + $0x1ea] sm:$0xff]
    %v6796 = vld [vmem:[%s6515 + $0x1fa] sm:$0xff]
    %v6797 = vld [vmem:[%s6515 + $0x202] sm:$0xff]
    %6799 = vset.pattern.permute.xlu0 0
    %6800 = vperm.xlu0 %6799, %v6782
    %v6801 = vpop.permute.xlu0 %6800
    %6804 = vset.pattern.permute.xlu0 0
    %6805 = vperm.xlu0 %6804, %v6783
    %v6806 = vpop.permute.xlu0 %6805
    %6809 = vset.pattern.permute.xlu0 0
    %6810 = vperm.xlu0 %6809, %v6784
    %v6811 = vpop.permute.xlu0 %6810
    %6814 = vset.pattern.permute.xlu0 0
    %6815 = vperm.xlu0 %6814, %v6785
    %v6816 = vpop.permute.xlu0 %6815
    %6819 = vset.pattern.permute.xlu0 0
    %6820 = vperm.xlu0 %6819, %v6786
    %v6821 = vpop.permute.xlu0 %6820
    %6824 = vset.pattern.permute.xlu0 0
    %6825 = vperm.xlu0 %6824, %v6787
    %v6826 = vpop.permute.xlu0 %6825
    %6829 = vset.pattern.permute.xlu0 0
    %6830 = vperm.xlu0 %6829, %v6788
    %v6831 = vpop.permute.xlu0 %6830
    %6834 = vset.pattern.permute.xlu0 0
    %6835 = vperm.xlu0 %6834, %v6789
    %v6836 = vpop.permute.xlu0 %6835
    %6839 = vset.pattern.permute.xlu0 0
    %6840 = vperm.xlu0 %6839, %v6790
    %v6841 = vpop.permute.xlu0 %6840
    %6844 = vset.pattern.permute.xlu0 0
    %6845 = vperm.xlu0 %6844, %v6791
    %v6846 = vpop.permute.xlu0 %6845
    %6849 = vset.pattern.permute.xlu0 0
    %6850 = vperm.xlu0 %6849, %v6792
    %v6851 = vpop.permute.xlu0 %6850
    %6854 = vset.pattern.permute.xlu0 0
    %6855 = vperm.xlu0 %6854, %v6793
    %v6856 = vpop.permute.xlu0 %6855
    %6859 = vset.pattern.permute.xlu0 0
    %6860 = vperm.xlu0 %6859, %v6794
    %v6861 = vpop.permute.xlu0 %6860
    %6864 = vset.pattern.permute.xlu0 0
    %6865 = vperm.xlu0 %6864, %v6795
    %v6866 = vpop.permute.xlu0 %6865
    %6869 = vset.pattern.permute.xlu0 0
    %6870 = vperm.xlu0 %6869, %v6796
    %v6871 = vpop.permute.xlu0 %6870
    %6874 = vset.pattern.permute.xlu0 0
    %6875 = vperm.xlu0 %6874, %v6797
    %v6876 = vpop.permute.xlu0 %6875
    %v6878 = vlaneseq
    %v6879 = vshrl.u32 %v6878, 7
    %v6880 = vsub.s32 0, %v6879
    %v6881 = vrot.slane %v6781, %v6880
    %v6882 = vmul.f32 %v6801, %v6881
    %v6883 = vmul.f32 %v6806, %v6881
    %v6884 = vmul.f32 %v6811, %v6881
    %v6885 = vmul.f32 %v6816, %v6881
    %v6886 = vmul.f32 %v6821, %v6881
    %v6887 = vmul.f32 %v6826, %v6881
    %v6888 = vmul.f32 %v6831, %v6881
    %v6889 = vmul.f32 %v6836, %v6881
    %v6890 = vmul.f32 %v6841, %v6881
    %v6891 = vmul.f32 %v6846, %v6881
    %v6892 = vmul.f32 %v6851, %v6881
    %v6893 = vmul.f32 %v6856, %v6881
    %v6894 = vmul.f32 %v6861, %v6881
    %v6895 = vmul.f32 %v6866, %v6881
    %v6896 = vmul.f32 %v6871, %v6881
    %v6897 = vmul.f32 %v6876, %v6881
    %v6898 = vadd.f32 %v6765, %v6882
    %v6899 = vadd.f32 %v6766, %v6883
    %v6900 = vadd.f32 %v6767, %v6884
    %v6901 = vadd.f32 %v6768, %v6885
    %v6902 = vadd.f32 %v6769, %v6886
    %v6903 = vadd.f32 %v6770, %v6887
    %v6904 = vadd.f32 %v6771, %v6888
    %v6905 = vadd.f32 %v6772, %v6889
    %v6906 = vadd.f32 %v6773, %v6890
    %v6907 = vadd.f32 %v6774, %v6891
    %v6908 = vadd.f32 %v6775, %v6892
    %v6909 = vadd.f32 %v6776, %v6893
    %v6910 = vadd.f32 %v6777, %v6894
    %v6911 = vadd.f32 %v6778, %v6895
    %v6912 = vadd.f32 %v6779, %v6896
    %v6913 = vadd.f32 %v6780, %v6897
    %v6914 = vadd.f32 %v6898, %v1682
    %v6915 = vadd.f32 %v6899, %v1682
    %v6916 = vadd.f32 %v6900, %v1682
    %v6917 = vadd.f32 %v6901, %v1682
    %v6918 = vadd.f32 %v6902, %v1682
    %v6919 = vadd.f32 %v6903, %v1682
    %v6920 = vadd.f32 %v6904, %v1682
    %v6921 = vadd.f32 %v6905, %v1682
    %v6922 = vadd.f32 %v6906, %v1682
    %v6923 = vadd.f32 %v6907, %v1682
    %v6924 = vadd.f32 %v6908, %v1682
    %v6925 = vadd.f32 %v6909, %v1682
    %v6926 = vadd.f32 %v6910, %v1682
    %v6927 = vadd.f32 %v6911, %v1682
    %v6928 = vadd.f32 %v6912, %v1682
    %v6929 = vadd.f32 %v6913, %v1682
    %v6930 = vmax.f32 %v6914, 0.0
    %v6931 = vmax.f32 %v6915, 0.0
    %v6932 = vmax.f32 %v6916, 0.0
    %v6933 = vmax.f32 %v6917, 0.0
    %v6934 = vmax.f32 %v6918, 0.0
    %v6935 = vmax.f32 %v6919, 0.0
    %v6936 = vmax.f32 %v6920, 0.0
    %v6937 = vmax.f32 %v6921, 0.0
    %v6938 = vmax.f32 %v6922, 0.0
    %v6939 = vmax.f32 %v6923, 0.0
    %v6940 = vmax.f32 %v6924, 0.0
    %v6941 = vmax.f32 %v6925, 0.0
    %v6942 = vmax.f32 %v6926, 0.0
    %v6943 = vmax.f32 %v6927, 0.0
    %v6944 = vmax.f32 %v6928, 0.0
    %v6945 = vmax.f32 %v6929, 0.0
    %v6946 = vmax.f32 %v6930, %v6932
    %v6947 = vmax.f32 %v6931, %v6933
    %v6948 = vmax.f32 %v6934, %v6936
    %v6949 = vmax.f32 %v6935, %v6937
    %v6950 = vmax.f32 %v6938, %v6940
    %v6951 = vmax.f32 %v6939, %v6941
    %v6952 = vmax.f32 %v6942, %v6944
    %v6953 = vmax.f32 %v6943, %v6945
    %v6962 = vcombine.high %v6946, %v6946
    %v6964 = vunpack.c.l.s4 1983009808
    %v6965 = vunpack.c.0.s8 %v6964
    %v6966 = vlaneseq
    %v6967 = vshrl.u32 %v6966, 7
    %v6968 = vsub.s32 %v6965, %v6967
    %v6969 = vrot.slane %v6946, %v6968
    %v6971 = vunpack.c.l.s4 1983009808
    %v6972 = vunpack.c.0.s8 %v6971
    %v6973 = vlaneseq
    %v6974 = vshrl.u32 %v6973, 7
    %v6975 = vsub.s32 %v6972, %v6974
    %v6976 = vrot.slane %v6962, %v6975
    %v6977 = vcombine.high %v6969, %v6969
    %v6978 = vcombine.high %v6976, %v6976
    %v6979 = vcombine.high %v6947, %v6947
    %v6981 = vunpack.c.l.s4 1983009808
    %v6982 = vunpack.c.0.s8 %v6981
    %v6983 = vlaneseq
    %v6984 = vshrl.u32 %v6983, 7
    %v6985 = vsub.s32 %v6982, %v6984
    %v6986 = vrot.slane %v6947, %v6985
    %v6988 = vunpack.c.l.s4 1983009808
    %v6989 = vunpack.c.0.s8 %v6988
    %v6990 = vlaneseq
    %v6991 = vshrl.u32 %v6990, 7
    %v6992 = vsub.s32 %v6989, %v6991
    %v6993 = vrot.slane %v6979, %v6992
    %v6994 = vcombine.high %v6986, %v6986
    %v6995 = vcombine.high %v6993, %v6993
    %v6996 = vcombine.high %v6948, %v6948
    %v6998 = vunpack.c.l.s4 1983009808
    %v6999 = vunpack.c.0.s8 %v6998
    %v7000 = vlaneseq
    %v7001 = vshrl.u32 %v7000, 7
    %v7002 = vsub.s32 %v6999, %v7001
    %v7003 = vrot.slane %v6948, %v7002
    %v7005 = vunpack.c.l.s4 1983009808
    %v7006 = vunpack.c.0.s8 %v7005
    %v7007 = vlaneseq
    %v7008 = vshrl.u32 %v7007, 7
    %v7009 = vsub.s32 %v7006, %v7008
    %v7010 = vrot.slane %v6996, %v7009
    %v7011 = vcombine.high %v7003, %v7003
    %v7012 = vcombine.high %v7010, %v7010
    %v7013 = vcombine.high %v6949, %v6949
    %v7015 = vunpack.c.l.s4 1983009808
    %v7016 = vunpack.c.0.s8 %v7015
    %v7017 = vlaneseq
    %v7018 = vshrl.u32 %v7017, 7
    %v7019 = vsub.s32 %v7016, %v7018
    %v7020 = vrot.slane %v6949, %v7019
    %v7022 = vunpack.c.l.s4 1983009808
    %v7023 = vunpack.c.0.s8 %v7022
    %v7024 = vlaneseq
    %v7025 = vshrl.u32 %v7024, 7
    %v7026 = vsub.s32 %v7023, %v7025
    %v7027 = vrot.slane %v7013, %v7026
    %v7028 = vcombine.high %v7020, %v7020
    %v7029 = vcombine.high %v7027, %v7027
    %v7030 = vcombine.high %v6950, %v6950
    %v7032 = vunpack.c.l.s4 1983009808
    %v7033 = vunpack.c.0.s8 %v7032
    %v7034 = vlaneseq
    %v7035 = vshrl.u32 %v7034, 7
    %v7036 = vsub.s32 %v7033, %v7035
    %v7037 = vrot.slane %v6950, %v7036
    %v7039 = vunpack.c.l.s4 1983009808
    %v7040 = vunpack.c.0.s8 %v7039
    %v7041 = vlaneseq
    %v7042 = vshrl.u32 %v7041, 7
    %v7043 = vsub.s32 %v7040, %v7042
    %v7044 = vrot.slane %v7030, %v7043
    %v7045 = vcombine.high %v7037, %v7037
    %v7046 = vcombine.high %v7044, %v7044
    %v7047 = vcombine.high %v6951, %v6951
    %v7049 = vunpack.c.l.s4 1983009808
    %v7050 = vunpack.c.0.s8 %v7049
    %v7051 = vlaneseq
    %v7052 = vshrl.u32 %v7051, 7
    %v7053 = vsub.s32 %v7050, %v7052
    %v7054 = vrot.slane %v6951, %v7053
    %v7056 = vunpack.c.l.s4 1983009808
    %v7057 = vunpack.c.0.s8 %v7056
    %v7058 = vlaneseq
    %v7059 = vshrl.u32 %v7058, 7
    %v7060 = vsub.s32 %v7057, %v7059
    %v7061 = vrot.slane %v7047, %v7060
    %v7062 = vcombine.high %v7054, %v7054
    %v7063 = vcombine.high %v7061, %v7061
    %v7064 = vcombine.high %v6952, %v6952
    %v7066 = vunpack.c.l.s4 1983009808
    %v7067 = vunpack.c.0.s8 %v7066
    %v7068 = vlaneseq
    %v7069 = vshrl.u32 %v7068, 7
    %v7070 = vsub.s32 %v7067, %v7069
    %v7071 = vrot.slane %v6952, %v7070
    %v7073 = vunpack.c.l.s4 1983009808
    %v7074 = vunpack.c.0.s8 %v7073
    %v7075 = vlaneseq
    %v7076 = vshrl.u32 %v7075, 7
    %v7077 = vsub.s32 %v7074, %v7076
    %v7078 = vrot.slane %v7064, %v7077
    %v7079 = vcombine.high %v7071, %v7071
    %v7080 = vcombine.high %v7078, %v7078
    %v7081 = vcombine.high %v6953, %v6953
    %v7083 = vunpack.c.l.s4 1983009808
    %v7084 = vunpack.c.0.s8 %v7083
    %v7085 = vlaneseq
    %v7086 = vshrl.u32 %v7085, 7
    %v7087 = vsub.s32 %v7084, %v7086
    %v7088 = vrot.slane %v6953, %v7087
    %v7090 = vunpack.c.l.s4 1983009808
    %v7091 = vunpack.c.0.s8 %v7090
    %v7092 = vlaneseq
    %v7093 = vshrl.u32 %v7092, 7
    %v7094 = vsub.s32 %v7091, %v7093
    %v7095 = vrot.slane %v7081, %v7094
    %v7096 = vcombine.high %v7088, %v7088
    %v7097 = vcombine.high %v7095, %v7095
    %v7130 = vrot.slane %v6969, 7
    %v7131 = vrot.slane %v7130, 2
    %v7132 = vrot.slane %v6977, 7
    %v7133 = vrot.slane %v7132, 2
    %v7134 = vrot.slane %v6976, 7
    %v7135 = vrot.slane %v7134, 2
    %v7136 = vrot.slane %v6978, 7
    %v7137 = vrot.slane %v7136, 2
    %v7138 = vrot.slane %v6986, 7
    %v7139 = vrot.slane %v7138, 2
    %v7140 = vrot.slane %v6994, 7
    %v7141 = vrot.slane %v7140, 2
    %v7142 = vrot.slane %v6993, 7
    %v7143 = vrot.slane %v7142, 2
    %v7144 = vrot.slane %v6995, 7
    %v7145 = vrot.slane %v7144, 2
    %v7146 = vrot.slane %v7003, 7
    %v7147 = vrot.slane %v7146, 2
    %v7148 = vrot.slane %v7011, 7
    %v7149 = vrot.slane %v7148, 2
    %v7150 = vrot.slane %v7010, 7
    %v7151 = vrot.slane %v7150, 2
    %v7152 = vrot.slane %v7012, 7
    %v7153 = vrot.slane %v7152, 2
    %v7154 = vrot.slane %v7020, 7
    %v7155 = vrot.slane %v7154, 2
    %v7156 = vrot.slane %v7028, 7
    %v7157 = vrot.slane %v7156, 2
    %v7158 = vrot.slane %v7027, 7
    %v7159 = vrot.slane %v7158, 2
    %v7160 = vrot.slane %v7029, 7
    %v7161 = vrot.slane %v7160, 2
    %v7162 = vrot.slane %v7037, 7
    %v7163 = vrot.slane %v7162, 2
    %v7164 = vrot.slane %v7045, 7
    %v7165 = vrot.slane %v7164, 2
    %v7166 = vrot.slane %v7044, 7
    %v7167 = vrot.slane %v7166, 2
    %v7168 = vrot.slane %v7046, 7
    %v7169 = vrot.slane %v7168, 2
    %v7170 = vrot.slane %v7054, 7
    %v7171 = vrot.slane %v7170, 2
    %v7172 = vrot.slane %v7062, 7
    %v7173 = vrot.slane %v7172, 2
    %v7174 = vrot.slane %v7061, 7
    %v7175 = vrot.slane %v7174, 2
    %v7176 = vrot.slane %v7063, 7
    %v7177 = vrot.slane %v7176, 2
    %v7178 = vrot.slane %v7071, 7
    %v7179 = vrot.slane %v7178, 2
    %v7180 = vrot.slane %v7079, 7
    %v7181 = vrot.slane %v7180, 2
    %v7182 = vrot.slane %v7078, 7
    %v7183 = vrot.slane %v7182, 2
    %v7184 = vrot.slane %v7080, 7
    %v7185 = vrot.slane %v7184, 2
    %v7186 = vrot.slane %v7088, 7
    %v7187 = vrot.slane %v7186, 2
    %v7188 = vrot.slane %v7096, 7
    %v7189 = vrot.slane %v7188, 2
    %v7190 = vrot.slane %v7095, 7
    %v7191 = vrot.slane %v7190, 2
    %v7192 = vrot.slane %v7097, 7
    %v7193 = vrot.slane %v7192, 2
    %v7226 = vmax.f32 %v6969, %v7131
    %v7227 = vmax.f32 %v6977, %v7133
    %v7228 = vmax.f32 %v6976, %v7135
    %v7229 = vmax.f32 %v6978, %v7137
    %v7230 = vmax.f32 %v6986, %v7139
    %v7231 = vmax.f32 %v6994, %v7141
    %v7232 = vmax.f32 %v6993, %v7143
    %v7233 = vmax.f32 %v6995, %v7145
    %v7234 = vmax.f32 %v7003, %v7147
    %v7235 = vmax.f32 %v7011, %v7149
    %v7236 = vmax.f32 %v7010, %v7151
    %v7237 = vmax.f32 %v7012, %v7153
    %v7238 = vmax.f32 %v7020, %v7155
    %v7239 = vmax.f32 %v7028, %v7157
    %v7240 = vmax.f32 %v7027, %v7159
    %v7241 = vmax.f32 %v7029, %v7161
    %v7242 = vmax.f32 %v7037, %v7163
    %v7243 = vmax.f32 %v7045, %v7165
    %v7244 = vmax.f32 %v7044, %v7167
    %v7245 = vmax.f32 %v7046, %v7169
    %v7246 = vmax.f32 %v7054, %v7171
    %v7247 = vmax.f32 %v7062, %v7173
    %v7248 = vmax.f32 %v7061, %v7175
    %v7249 = vmax.f32 %v7063, %v7177
    %v7250 = vmax.f32 %v7071, %v7179
    %v7251 = vmax.f32 %v7079, %v7181
    %v7252 = vmax.f32 %v7078, %v7183
    %v7253 = vmax.f32 %v7080, %v7185
    %v7254 = vmax.f32 %v7088, %v7187
    %v7255 = vmax.f32 %v7096, %v7189
    %v7256 = vmax.f32 %v7095, %v7191
    %v7257 = vmax.f32 %v7097, %v7193
    %v7290 = vlaneseq
    %v7291 = vshrl.u32 %v7290, 7
    %v7292 = vsub.s32 0, %v7291
    %v7293 = vrot.slane %v7226, %v7292
    %v7294 = vlaneseq
    %v7295 = vshrl.u32 %v7294, 7
    %v7296 = vsub.s32 0, %v7295
    %v7297 = vrot.slane %v7227, %v7296
    %v7298 = vlaneseq
    %v7299 = vshrl.u32 %v7298, 7
    %v7300 = vsub.s32 0, %v7299
    %v7301 = vrot.slane %v7228, %v7300
    %v7302 = vlaneseq
    %v7303 = vshrl.u32 %v7302, 7
    %v7304 = vsub.s32 0, %v7303
    %v7305 = vrot.slane %v7229, %v7304
    %v7306 = vlaneseq
    %v7307 = vshrl.u32 %v7306, 7
    %v7308 = vsub.s32 0, %v7307
    %v7309 = vrot.slane %v7230, %v7308
    %v7310 = vlaneseq
    %v7311 = vshrl.u32 %v7310, 7
    %v7312 = vsub.s32 0, %v7311
    %v7313 = vrot.slane %v7231, %v7312
    %v7314 = vlaneseq
    %v7315 = vshrl.u32 %v7314, 7
    %v7316 = vsub.s32 0, %v7315
    %v7317 = vrot.slane %v7232, %v7316
    %v7318 = vlaneseq
    %v7319 = vshrl.u32 %v7318, 7
    %v7320 = vsub.s32 0, %v7319
    %v7321 = vrot.slane %v7233, %v7320
    %v7322 = vlaneseq
    %v7323 = vshrl.u32 %v7322, 7
    %v7324 = vsub.s32 0, %v7323
    %v7325 = vrot.slane %v7234, %v7324
    %v7326 = vlaneseq
    %v7327 = vshrl.u32 %v7326, 7
    %v7328 = vsub.s32 0, %v7327
    %v7329 = vrot.slane %v7235, %v7328
    %v7330 = vlaneseq
    %v7331 = vshrl.u32 %v7330, 7
    %v7332 = vsub.s32 0, %v7331
    %v7333 = vrot.slane %v7236, %v7332
    %v7334 = vlaneseq
    %v7335 = vshrl.u32 %v7334, 7
    %v7336 = vsub.s32 0, %v7335
    %v7337 = vrot.slane %v7237, %v7336
    %v7338 = vlaneseq
    %v7339 = vshrl.u32 %v7338, 7
    %v7340 = vsub.s32 0, %v7339
    %v7341 = vrot.slane %v7238, %v7340
    %v7342 = vlaneseq
    %v7343 = vshrl.u32 %v7342, 7
    %v7344 = vsub.s32 0, %v7343
    %v7345 = vrot.slane %v7239, %v7344
    %v7346 = vlaneseq
    %v7347 = vshrl.u32 %v7346, 7
    %v7348 = vsub.s32 0, %v7347
    %v7349 = vrot.slane %v7240, %v7348
    %v7350 = vlaneseq
    %v7351 = vshrl.u32 %v7350, 7
    %v7352 = vsub.s32 0, %v7351
    %v7353 = vrot.slane %v7241, %v7352
    %v7354 = vlaneseq
    %v7355 = vshrl.u32 %v7354, 7
    %v7356 = vsub.s32 0, %v7355
    %v7357 = vrot.slane %v7242, %v7356
    %v7358 = vlaneseq
    %v7359 = vshrl.u32 %v7358, 7
    %v7360 = vsub.s32 0, %v7359
    %v7361 = vrot.slane %v7243, %v7360
    %v7362 = vlaneseq
    %v7363 = vshrl.u32 %v7362, 7
    %v7364 = vsub.s32 0, %v7363
    %v7365 = vrot.slane %v7244, %v7364
    %v7366 = vlaneseq
    %v7367 = vshrl.u32 %v7366, 7
    %v7368 = vsub.s32 0, %v7367
    %v7369 = vrot.slane %v7245, %v7368
    %v7370 = vlaneseq
    %v7371 = vshrl.u32 %v7370, 7
    %v7372 = vsub.s32 0, %v7371
    %v7373 = vrot.slane %v7246, %v7372
    %v7374 = vlaneseq
    %v7375 = vshrl.u32 %v7374, 7
    %v7376 = vsub.s32 0, %v7375
    %v7377 = vrot.slane %v7247, %v7376
    %v7378 = vlaneseq
    %v7379 = vshrl.u32 %v7378, 7
    %v7380 = vsub.s32 0, %v7379
    %v7381 = vrot.slane %v7248, %v7380
    %v7382 = vlaneseq
    %v7383 = vshrl.u32 %v7382, 7
    %v7384 = vsub.s32 0, %v7383
    %v7385 = vrot.slane %v7249, %v7384
    %v7386 = vlaneseq
    %v7387 = vshrl.u32 %v7386, 7
    %v7388 = vsub.s32 0, %v7387
    %v7389 = vrot.slane %v7250, %v7388
    %v7390 = vlaneseq
    %v7391 = vshrl.u32 %v7390, 7
    %v7392 = vsub.s32 0, %v7391
    %v7393 = vrot.slane %v7251, %v7392
    %v7394 = vlaneseq
    %v7395 = vshrl.u32 %v7394, 7
    %v7396 = vsub.s32 0, %v7395
    %v7397 = vrot.slane %v7252, %v7396
    %v7398 = vlaneseq
    %v7399 = vshrl.u32 %v7398, 7
    %v7400 = vsub.s32 0, %v7399
    %v7401 = vrot.slane %v7253, %v7400
    %v7402 = vlaneseq
    %v7403 = vshrl.u32 %v7402, 7
    %v7404 = vsub.s32 0, %v7403
    %v7405 = vrot.slane %v7254, %v7404
    %v7406 = vlaneseq
    %v7407 = vshrl.u32 %v7406, 7
    %v7408 = vsub.s32 0, %v7407
    %v7409 = vrot.slane %v7255, %v7408
    %v7410 = vlaneseq
    %v7411 = vshrl.u32 %v7410, 7
    %v7412 = vsub.s32 0, %v7411
    %v7413 = vrot.slane %v7256, %v7412
    %v7414 = vlaneseq
    %v7415 = vshrl.u32 %v7414, 7
    %v7416 = vsub.s32 0, %v7415
    %v7417 = vrot.slane %v7257, %v7416
    %v7418 = vsel %vm2188, %v7297, %v7293
    %v7419 = vsel %vm2190, %v7301, %v7418
    %v7420 = vsel %vm2192, %v7305, %v7419
    %v7421 = vsel %vm2194, %v7309, %v7420
    %v7422 = vsel %vm2196, %v7313, %v7421
    %v7423 = vsel %vm2198, %v7317, %v7422
    %v7424 = vsel %vm2200, %v7321, %v7423
    %v7425 = vsel %vm2188, %v7329, %v7325
    %v7426 = vsel %vm2190, %v7333, %v7425
    %v7427 = vsel %vm2192, %v7337, %v7426
    %v7428 = vsel %vm2194, %v7341, %v7427
    %v7429 = vsel %vm2196, %v7345, %v7428
    %v7430 = vsel %vm2198, %v7349, %v7429
    %v7431 = vsel %vm2200, %v7353, %v7430
    %v7432 = vsel %vm2188, %v7361, %v7357
    %v7433 = vsel %vm2190, %v7365, %v7432
    %v7434 = vsel %vm2192, %v7369, %v7433
    %v7435 = vsel %vm2194, %v7373, %v7434
    %v7436 = vsel %vm2196, %v7377, %v7435
    %v7437 = vsel %vm2198, %v7381, %v7436
    %v7438 = vsel %vm2200, %v7385, %v7437
    %v7439 = vsel %vm2188, %v7393, %v7389
    %v7440 = vsel %vm2190, %v7397, %v7439
    %v7441 = vsel %vm2192, %v7401, %v7440
    %v7442 = vsel %vm2194, %v7405, %v7441
    %v7443 = vsel %vm2196, %v7409, %v7442
    %v7444 = vsel %vm2198, %v7413, %v7443
    %v7445 = vsel %vm2200, %v7417, %v7444
    %s7450 = scalar_lea.vmem [#allocation3], 112
    %7451 = vst.msk [vmem:[%s7450 + $0x1] sm:$0xff] %vm267, %v7424
    %7452 = vst.msk [vmem:[%s7450 + $0x11] sm:$0xff] %vm267, %v7431
    %7453 = vst.msk [vmem:[%s7450 + $0xa1] sm:$0xff] %vm267, %v7438
    %7454 = vst.msk [vmem:[%s7450 + $0xb1] sm:$0xff] %vm267, %v7445
    %v7455 = vld [vmem:[#allocation3] sm:$0xff]
    %v7456 = vld [vmem:[#allocation3 + $0x10] sm:$0xff]
    %v7457 = vld [vmem:[#allocation3 + $0x20] sm:$0xff]
    %v7458 = vld [vmem:[#allocation3 + $0x30] sm:$0xff]
    %v7459 = vld [vmem:[#allocation3 + $0x40] sm:$0xff]
    %v7460 = vld [vmem:[#allocation3 + $0x50] sm:$0xff]
    %v7461 = vld [vmem:[#allocation3 + $0x60] sm:$0xff]
    %v7462 = vld [vmem:[#allocation3 + $0x70] sm:$0xff]
    %v7463 = vld [vmem:[#allocation3 + $0xa0] sm:$0xff]
    %v7464 = vld [vmem:[#allocation3 + $0xb0] sm:$0xff]
    %v7465 = vld [vmem:[#allocation3 + $0xc0] sm:$0xff]
    %v7466 = vld [vmem:[#allocation3 + $0xd0] sm:$0xff]
    %v7467 = vld [vmem:[#allocation3 + $0xe0] sm:$0xff]
    %v7468 = vld [vmem:[#allocation3 + $0xf0] sm:$0xff]
    %v7469 = vld [vmem:[#allocation3 + $0x100] sm:$0xff]
    %v7470 = vld [vmem:[#allocation3 + $0x110] sm:$0xff]
    %v7471 = vpack.c.bf16 %v7456, %v7455
    %v7472 = vpack.c.bf16 %v7458, %v7457
    %v7473 = vpack.c.bf16 %v7460, %v7459
    %v7474 = vpack.c.bf16 %v7462, %v7461
    %v7475 = vpack.c.bf16 %v7464, %v7463
    %v7476 = vpack.c.bf16 %v7466, %v7465
    %v7477 = vpack.c.bf16 %v7468, %v7467
    %v7478 = vpack.c.bf16 %v7470, %v7469
    %v7479 = vld [vmem:[#allocation12] sm:$0xf]
    %v7480 = vld [vmem:[#allocation12 + $0x4] sm:$0xf]
    %v7481 = vld [vmem:[#allocation12 + $0x8] sm:$0xf]
    %v7482 = vld [vmem:[#allocation12 + $0xc] sm:$0xf]
    %v7483 = vld [vmem:[#allocation3 + $0x1] sm:$0xff]
    %v7484 = vld [vmem:[#allocation3 + $0x11] sm:$0xff]
    %v7485 = vld [vmem:[#allocation3 + $0x21] sm:$0xff]
    %v7486 = vld [vmem:[#allocation3 + $0x31] sm:$0xff]
    %v7487 = vld [vmem:[#allocation3 + $0x41] sm:$0xff]
    %v7488 = vld [vmem:[#allocation3 + $0x51] sm:$0xff]
    %v7489 = vld [vmem:[#allocation3 + $0x61] sm:$0xff]
    %v7490 = vld [vmem:[#allocation3 + $0x71] sm:$0xff]
    %v7491 = vld [vmem:[#allocation3 + $0xa1] sm:$0xff]
    %v7492 = vld [vmem:[#allocation3 + $0xb1] sm:$0xff]
    %v7493 = vld [vmem:[#allocation3 + $0xc1] sm:$0xff]
    %v7494 = vld [vmem:[#allocation3 + $0xd1] sm:$0xff]
    %v7495 = vld [vmem:[#allocation3 + $0xe1] sm:$0xff]
    %v7496 = vld [vmem:[#allocation3 + $0xf1] sm:$0xff]
    %v7497 = vld [vmem:[#allocation3 + $0x101] sm:$0xff]
    %v7498 = vld [vmem:[#allocation3 + $0x111] sm:$0xff]
    %v7499 = vpack.c.bf16 %v7484, %v7483
    %v7500 = vpack.c.bf16 %v7486, %v7485
    %v7501 = vpack.c.bf16 %v7488, %v7487
    %v7502 = vpack.c.bf16 %v7490, %v7489
    %v7503 = vpack.c.bf16 %v7492, %v7491
    %v7504 = vpack.c.bf16 %v7494, %v7493
    %v7505 = vpack.c.bf16 %v7496, %v7495
    %v7506 = vpack.c.bf16 %v7498, %v7497
    %v7507 = vld [vmem:[#allocation12 + $0x10] sm:$0xf]
    %v7508 = vld [vmem:[#allocation12 + $0x14] sm:$0xf]
    %v7509 = vld [vmem:[#allocation12 + $0x18] sm:$0xf]
    %v7510 = vld [vmem:[#allocation12 + $0x1c] sm:$0xf]
    %v7515 = vunpack.c.l.b16 %v7507
    %v7516 = vunpack.c.l.b16 %v7508
    %v7517 = vunpack.c.l.b16 %v7509
    %v7518 = vunpack.c.l.b16 %v7510
    %v7519 = vpack.c.b16 %v7516, %v7515
    %v7520 = vpack.c.b16 %v7518, %v7517
    %v7524 = vsel %vm267, %v7499, 0
    %v7527 = vsel %vm267, %v7500, 0
    %v7530 = vsel %vm267, %v7501, 0
    %v7533 = vsel %vm267, %v7502, 0
    %v7536 = vsel %vm267, %v7503, 0
    %v7539 = vsel %vm267, %v7504, 0
    %v7542 = vsel %vm267, %v7505, 0
    %v7545 = vsel %vm267, %v7506, 0
    %7547 = vmatprep.subr.bf16.mxu0 0
    %7548 = vmatpush1.bf16.msra.mxu0 %v7519
    %7549 = vmatprep.subr.bf16.mxu0 0
    %7550 = vmatpush1.bf16.msra.mxu0 %v7520
    %7551 = vmatprep.subr.bf16.mxu0 0
    %7552 = vmatpush1.bf16.msra.mxu0 0
    %7553 = vmatprep.subr.bf16.mxu0 0
    %7554 = vmatpush1.bf16.msra.mxu0 0
    %7555 = vmatprep.subr.bf16.mxu0 0
    %7556 = vmatpush1.bf16.msra.mxu0 0
    %7557 = vmatprep.subr.bf16.mxu0 0
    %7558 = vmatpush1.bf16.msra.mxu0 0
    %7559 = vmatprep.subr.bf16.mxu0 0
    %7560 = vmatpush1.bf16.msra.mxu0 0
    %7561 = vmatprep.subr.bf16.mxu0 0
    %7562 = vmatpush1.bf16.msra.mxu0 0
    %7563 = vmatprep.subr.bf16.mxu0 0
    %7564 = vmatpush1.bf16.msra.mxu0 0
    %7565 = vmatprep.subr.bf16.mxu0 0
    %7566 = vmatpush1.bf16.msra.mxu0 0
    %7567 = vmatprep.subr.bf16.mxu0 0
    %7568 = vmatpush1.bf16.msra.mxu0 0
    %7569 = vmatprep.subr.bf16.mxu0 0
    %7570 = vmatpush1.bf16.msra.mxu0 0
    %7571 = vmatprep.subr.bf16.mxu0 0
    %7572 = vmatpush1.bf16.msra.mxu0 0
    %7573 = vmatprep.subr.bf16.mxu0 0
    %7574 = vmatpush1.bf16.msra.mxu0 0
    %7575 = vmatprep.subr.bf16.mxu0 0
    %7576 = vmatpush1.bf16.msra.mxu0 0
    %7577 = vmatprep.subr.bf16.mxu0 0
    %7578 = vmatpush1.bf16.msra.mxu0 0
    %7579 = vmatprep.mubr.bf16.mxu0 0
    %7580 = vmatmul.mubr.bf16.gmra.mrb[0].mxu0 %v7524
    %v7581 = vpop.f32.mrb[0].mxu0
    %v7582 = vadd.f32 0.0, %v7581
    %v7583 = vpop.f32.mrb[0].mxu0
    %v7584 = vpop.f32.mrb[0].mxu0
    %v7585 = vadd.f32 0.0, %v7584
    %v7586 = vpop.f32.mrb[0].mxu0
    %7587 = vmatprep.mubr.bf16.mxu0 0
    %7588 = vmatmul.mubr.bf16.gmra.mrb[0].mxu0 %v7527
    %v7589 = vpop.f32.mrb[0].mxu0
    %v7590 = vadd.f32 0.0, %v7589
    %v7591 = vpop.f32.mrb[0].mxu0
    %v7592 = vpop.f32.mrb[0].mxu0
    %v7593 = vadd.f32 0.0, %v7592
    %v7594 = vpop.f32.mrb[0].mxu0
    %7595 = vmatprep.mubr.bf16.mxu0 0
    %7596 = vmatmul.mubr.bf16.gmra.mrb[0].mxu0 %v7530
    %v7597 = vpop.f32.mrb[0].mxu0
    %v7598 = vadd.f32 0.0, %v7597
    %v7599 = vpop.f32.mrb[0].mxu0
    %v7600 = vpop.f32.mrb[0].mxu0
    %v7601 = vadd.f32 0.0, %v7600
    %v7602 = vpop.f32.mrb[0].mxu0
    %7603 = vmatprep.mubr.bf16.mxu0 0
    %7604 = vmatmul.mubr.bf16.gmra.mrb[0].mxu0 %v7533
    %v7605 = vpop.f32.mrb[0].mxu0
    %v7606 = vadd.f32 0.0, %v7605
    %v7607 = vpop.f32.mrb[0].mxu0
    %v7608 = vpop.f32.mrb[0].mxu0
    %v7609 = vadd.f32 0.0, %v7608
    %v7610 = vpop.f32.mrb[0].mxu0
    %7611 = vmatprep.mubr.bf16.mxu0 0
    %7612 = vmatmul.mubr.bf16.gmra.mrb[0].mxu0 %v7536
    %v7613 = vpop.f32.mrb[0].mxu0
    %v7614 = vadd.f32 0.0, %v7613
    %v7615 = vpop.f32.mrb[0].mxu0
    %v7616 = vpop.f32.mrb[0].mxu0
    %v7617 = vadd.f32 0.0, %v7616
    %v7618 = vpop.f32.mrb[0].mxu0
    %7619 = vmatprep.mubr.bf16.mxu0 0
    %7620 = vmatmul.mubr.bf16.gmra.mrb[0].mxu0 %v7539
    %v7621 = vpop.f32.mrb[0].mxu0
    %v7622 = vadd.f32 0.0, %v7621
    %v7623 = vpop.f32.mrb[0].mxu0
    %v7624 = vpop.f32.mrb[0].mxu0
    %v7625 = vadd.f32 0.0, %v7624
    %v7626 = vpop.f32.mrb[0].mxu0
    %7627 = vmatprep.mubr.bf16.mxu0 0
    %7628 = vmatmul.mubr.bf16.gmra.mrb[0].mxu0 %v7542
    %v7629 = vpop.f32.mrb[0].mxu0
    %v7630 = vadd.f32 0.0, %v7629
    %v7631 = vpop.f32.mrb[0].mxu0
    %v7632 = vpop.f32.mrb[0].mxu0
    %v7633 = vadd.f32 0.0, %v7632
    %v7634 = vpop.f32.mrb[0].mxu0
    %7635 = vmatprep.mubr.bf16.mxu0 0
    %7636 = vmatmul.mubr.bf16.gmra.mrb[0].mxu0 %v7545
    %v7637 = vpop.f32.mrb[0].mxu0
    %v7638 = vadd.f32 0.0, %v7637
    %v7639 = vpop.f32.mrb[0].mxu0
    %v7640 = vpop.f32.mrb[0].mxu0
    %v7641 = vadd.f32 0.0, %v7640
    %v7642 = vpop.f32.mrb[0].mxu0
    %7643 = vdwg.mxu0
    %v7648 = vunpack.c.l.b16 %v7479
    %v7649 = vunpack.c.l.b16 %v7480
    %v7650 = vunpack.c.l.b16 %v7481
    %v7651 = vunpack.c.l.b16 %v7482
    %v7652 = vpack.c.b16 %v7649, %v7648
    %v7653 = vpack.c.b16 %v7651, %v7650
    %v7657 = vsel %vm267, %v7471, 0
    %v7660 = vsel %vm267, %v7472, 0
    %v7663 = vsel %vm267, %v7473, 0
    %v7666 = vsel %vm267, %v7474, 0
    %v7669 = vsel %vm267, %v7475, 0
    %v7672 = vsel %vm267, %v7476, 0
    %v7675 = vsel %vm267, %v7477, 0
    %v7678 = vsel %vm267, %v7478, 0
    %7680 = vmatprep.subr.bf16.mxu0 0
    %7681 = vmatpush1.bf16.msra.mxu0 %v7652
    %7682 = vmatprep.subr.bf16.mxu0 0
    %7683 = vmatpush1.bf16.msra.mxu0 %v7653
    %7684 = vmatprep.subr.bf16.mxu0 0
    %7685 = vmatpush1.bf16.msra.mxu0 0
    %7686 = vmatprep.subr.bf16.mxu0 0
    %7687 = vmatpush1.bf16.msra.mxu0 0
    %7688 = vmatprep.subr.bf16.mxu0 0
    %7689 = vmatpush1.bf16.msra.mxu0 0
    %7690 = vmatprep.subr.bf16.mxu0 0
    %7691 = vmatpush1.bf16.msra.mxu0 0
    %7692 = vmatprep.subr.bf16.mxu0 0
    %7693 = vmatpush1.bf16.msra.mxu0 0
    %7694 = vmatprep.subr.bf16.mxu0 0
    %7695 = vmatpush1.bf16.msra.mxu0 0
    %7696 = vmatprep.subr.bf16.mxu0 0
    %7697 = vmatpush1.bf16.msra.mxu0 0
    %7698 = vmatprep.subr.bf16.mxu0 0
    %7699 = vmatpush1.bf16.msra.mxu0 0
    %7700 = vmatprep.subr.bf16.mxu0 0
    %7701 = vmatpush1.bf16.msra.mxu0 0
    %7702 = vmatprep.subr.bf16.mxu0 0
    %7703 = vmatpush1.bf16.msra.mxu0 0
    %7704 = vmatprep.subr.bf16.mxu0 0
    %7705 = vmatpush1.bf16.msra.mxu0 0
    %7706 = vmatprep.subr.bf16.mxu0 0
    %7707 = vmatpush1.bf16.msra.mxu0 0
    %7708 = vmatprep.subr.bf16.mxu0 0
    %7709 = vmatpush1.bf16.msra.mxu0 0
    %7710 = vmatprep.subr.bf16.mxu0 0
    %7711 = vmatpush1.bf16.msra.mxu0 0
    %7712 = vmatprep.mubr.bf16.mxu0 0
    %7713 = vmatmul.mubr.bf16.gmra.mrb[0].mxu0 %v7657
    %v7714 = vpop.f32.mrb[0].mxu0
    %v7715 = vadd.f32 %v7582, %v7714
    %v7716 = vpop.f32.mrb[0].mxu0
    %v7717 = vpop.f32.mrb[0].mxu0
    %v7718 = vadd.f32 %v7585, %v7717
    %v7719 = vpop.f32.mrb[0].mxu0
    %7720 = vmatprep.mubr.bf16.mxu0 0
    %7721 = vmatmul.mubr.bf16.gmra.mrb[0].mxu0 %v7660
    %v7722 = vpop.f32.mrb[0].mxu0
    %v7723 = vadd.f32 %v7590, %v7722
    %v7724 = vpop.f32.mrb[0].mxu0
    %v7725 = vpop.f32.mrb[0].mxu0
    %v7726 = vadd.f32 %v7593, %v7725
    %v7727 = vpop.f32.mrb[0].mxu0
    %7728 = vmatprep.mubr.bf16.mxu0 0
    %7729 = vmatmul.mubr.bf16.gmra.mrb[0].mxu0 %v7663
    %v7730 = vpop.f32.mrb[0].mxu0
    %v7731 = vadd.f32 %v7598, %v7730
    %v7732 = vpop.f32.mrb[0].mxu0
    %v7733 = vpop.f32.mrb[0].mxu0
    %v7734 = vadd.f32 %v7601, %v7733
    %v7735 = vpop.f32.mrb[0].mxu0
    %7736 = vmatprep.mubr.bf16.mxu0 0
    %7737 = vmatmul.mubr.bf16.gmra.mrb[0].mxu0 %v7666
    %v7738 = vpop.f32.mrb[0].mxu0
    %v7739 = vadd.f32 %v7606, %v7738
    %v7740 = vpop.f32.mrb[0].mxu0
    %v7741 = vpop.f32.mrb[0].mxu0
    %v7742 = vadd.f32 %v7609, %v7741
    %v7743 = vpop.f32.mrb[0].mxu0
    %7744 = vmatprep.mubr.bf16.mxu0 0
    %7745 = vmatmul.mubr.bf16.gmra.mrb[0].mxu0 %v7669
    %v7746 = vpop.f32.mrb[0].mxu0
    %v7747 = vadd.f32 %v7614, %v7746
    %v7748 = vpop.f32.mrb[0].mxu0
    %v7749 = vpop.f32.mrb[0].mxu0
    %v7750 = vadd.f32 %v7617, %v7749
    %v7751 = vpop.f32.mrb[0].mxu0
    %7752 = vmatprep.mubr.bf16.mxu0 0
    %7753 = vmatmul.mubr.bf16.gmra.mrb[0].mxu0 %v7672
    %v7754 = vpop.f32.mrb[0].mxu0
    %v7755 = vadd.f32 %v7622, %v7754
    %v7756 = vpop.f32.mrb[0].mxu0
    %v7757 = vpop.f32.mrb[0].mxu0
    %v7758 = vadd.f32 %v7625, %v7757
    %v7759 = vpop.f32.mrb[0].mxu0
    %7760 = vmatprep.mubr.bf16.mxu0 0
    %7761 = vmatmul.mubr.bf16.gmra.mrb[0].mxu0 %v7675
    %v7762 = vpop.f32.mrb[0].mxu0
    %v7763 = vadd.f32 %v7630, %v7762
    %v7764 = vpop.f32.mrb[0].mxu0
    %v7765 = vpop.f32.mrb[0].mxu0
    %v7766 = vadd.f32 %v7633, %v7765
    %v7767 = vpop.f32.mrb[0].mxu0
    %7768 = vmatprep.mubr.bf16.mxu0 0
    %7769 = vmatmul.mubr.bf16.gmra.mrb[0].mxu0 %v7678
    %v7770 = vpop.f32.mrb[0].mxu0
    %v7771 = vadd.f32 %v7638, %v7770
    %v7772 = vpop.f32.mrb[0].mxu0
    %v7773 = vpop.f32.mrb[0].mxu0
    %v7774 = vadd.f32 %v7641, %v7773
    %v7775 = vpop.f32.mrb[0].mxu0
    %7776 = vdwg.mxu0
    %v7777 = vld [vmem:[#allocation3 + $0x2] sm:$0xff]
    %v7778 = vld [vmem:[#allocation3 + $0x12] sm:$0xff]
    %v7779 = vld [vmem:[#allocation3 + $0x22] sm:$0xff]
    %v7780 = vld [vmem:[#allocation3 + $0x32] sm:$0xff]
    %v7781 = vld [vmem:[#allocation3 + $0x42] sm:$0xff]
    %v7782 = vld [vmem:[#allocation3 + $0x52] sm:$0xff]
    %v7783 = vld [vmem:[#allocation3 + $0x62] sm:$0xff]
    %v7784 = vld [vmem:[#allocation3 + $0x72] sm:$0xff]
    %v7785 = vld [vmem:[#allocation3 + $0xa2] sm:$0xff]
    %v7786 = vld [vmem:[#allocation3 + $0xb2] sm:$0xff]
    %v7787 = vld [vmem:[#allocation3 + $0xc2] sm:$0xff]
    %v7788 = vld [vmem:[#allocation3 + $0xd2] sm:$0xff]
    %v7789 = vld [vmem:[#allocation3 + $0xe2] sm:$0xff]
    %v7790 = vld [vmem:[#allocation3 + $0xf2] sm:$0xff]
    %v7791 = vld [vmem:[#allocation3 + $0x102] sm:$0xff]
    %v7792 = vld [vmem:[#allocation3 + $0x112] sm:$0xff]
    %v7793 = vpack.c.bf16 %v7778, %v7777
    %v7794 = vpack.c.bf16 %v7780, %v7779
    %v7795 = vpack.c.bf16 %v7782, %v7781
    %v7796 = vpack.c.bf16 %v7784, %v7783
    %v7797 = vpack.c.bf16 %v7786, %v7785
    %v7798 = vpack.c.bf16 %v7788, %v7787
    %v7799 = vpack.c.bf16 %v7790, %v7789
    %v7800 = vpack.c.bf16 %v7792, %v7791
    %v7801 = vld [vmem:[#allocation12 + $0x20] sm:$0xf]
    %v7802 = vld [vmem:[#allocation12 + $0x24] sm:$0xf]
    %v7803 = vld [vmem:[#allocation12 + $0x28] sm:$0xf]
    %v7804 = vld [vmem:[#allocation12 + $0x2c] sm:$0xf]
    %v7809 = vunpack.c.l.b16 %v7801
    %v7810 = vunpack.c.l.b16 %v7802
    %v7811 = vunpack.c.l.b16 %v7803
    %v7812 = vunpack.c.l.b16 %v7804
    %v7813 = vpack.c.b16 %v7810, %v7809
    %v7814 = vpack.c.b16 %v7812, %v7811
    %v7818 = vsel %vm267, %v7793, 0
    %v7821 = vsel %vm267, %v7794, 0
    %v7824 = vsel %vm267, %v7795, 0
    %v7827 = vsel %vm267, %v7796, 0
    %v7830 = vsel %vm267, %v7797, 0
    %v7833 = vsel %vm267, %v7798, 0
    %v7836 = vsel %vm267, %v7799, 0
    %v7839 = vsel %vm267, %v7800, 0
    %7841 = vmatprep.subr.bf16.mxu0 0
    %7842 = vmatpush1.bf16.msra.mxu0 %v7813
    %7843 = vmatprep.subr.bf16.mxu0 0
    %7844 = vmatpush1.bf16.msra.mxu0 %v7814
    %7845 = vmatprep.subr.bf16.mxu0 0
    %7846 = vmatpush1.bf16.msra.mxu0 0
    %7847 = vmatprep.subr.bf16.mxu0 0
    %7848 = vmatpush1.bf16.msra.mxu0 0
    %7849 = vmatprep.subr.bf16.mxu0 0
    %7850 = vmatpush1.bf16.msra.mxu0 0
    %7851 = vmatprep.subr.bf16.mxu0 0
    %7852 = vmatpush1.bf16.msra.mxu0 0
    %7853 = vmatprep.subr.bf16.mxu0 0
    %7854 = vmatpush1.bf16.msra.mxu0 0
    %7855 = vmatprep.subr.bf16.mxu0 0
    %7856 = vmatpush1.bf16.msra.mxu0 0
    %7857 = vmatprep.subr.bf16.mxu0 0
    %7858 = vmatpush1.bf16.msra.mxu0 0
    %7859 = vmatprep.subr.bf16.mxu0 0
    %7860 = vmatpush1.bf16.msra.mxu0 0
    %7861 = vmatprep.subr.bf16.mxu0 0
    %7862 = vmatpush1.bf16.msra.mxu0 0
    %7863 = vmatprep.subr.bf16.mxu0 0
    %7864 = vmatpush1.bf16.msra.mxu0 0
    %7865 = vmatprep.subr.bf16.mxu0 0
    %7866 = vmatpush1.bf16.msra.mxu0 0
    %7867 = vmatprep.subr.bf16.mxu0 0
    %7868 = vmatpush1.bf16.msra.mxu0 0
    %7869 = vmatprep.subr.bf16.mxu0 0
    %7870 = vmatpush1.bf16.msra.mxu0 0
    %7871 = vmatprep.subr.bf16.mxu0 0
    %7872 = vmatpush1.bf16.msra.mxu0 0
    %7873 = vmatprep.mubr.bf16.mxu0 0
    %7874 = vmatmul.mubr.bf16.gmra.mrb[0].mxu0 %v7818
    %v7875 = vpop.f32.mrb[0].mxu0
    %v7876 = vadd.f32 0.0, %v7875
    %v7877 = vpop.f32.mrb[0].mxu0
    %v7878 = vpop.f32.mrb[0].mxu0
    %v7879 = vadd.f32 0.0, %v7878
    %v7880 = vpop.f32.mrb[0].mxu0
    %7881 = vmatprep.mubr.bf16.mxu0 0
    %7882 = vmatmul.mubr.bf16.gmra.mrb[0].mxu0 %v7821
    %v7883 = vpop.f32.mrb[0].mxu0
    %v7884 = vadd.f32 0.0, %v7883
    %v7885 = vpop.f32.mrb[0].mxu0
    %v7886 = vpop.f32.mrb[0].mxu0
    %v7887 = vadd.f32 0.0, %v7886
    %v7888 = vpop.f32.mrb[0].mxu0
    %7889 = vmatprep.mubr.bf16.mxu0 0
    %7890 = vmatmul.mubr.bf16.gmra.mrb[0].mxu0 %v7824
    %v7891 = vpop.f32.mrb[0].mxu0
    %v7892 = vadd.f32 0.0, %v7891
    %v7893 = vpop.f32.mrb[0].mxu0
    %v7894 = vpop.f32.mrb[0].mxu0
    %v7895 = vadd.f32 0.0, %v7894
    %v7896 = vpop.f32.mrb[0].mxu0
    %7897 = vmatprep.mubr.bf16.mxu0 0
    %7898 = vmatmul.mubr.bf16.gmra.mrb[0].mxu0 %v7827
    %v7899 = vpop.f32.mrb[0].mxu0
    %v7900 = vadd.f32 0.0, %v7899
    %v7901 = vpop.f32.mrb[0].mxu0
    %v7902 = vpop.f32.mrb[0].mxu0
    %v7903 = vadd.f32 0.0, %v7902
    %v7904 = vpop.f32.mrb[0].mxu0
    %7905 = vmatprep.mubr.bf16.mxu0 0
    %7906 = vmatmul.mubr.bf16.gmra.mrb[0].mxu0 %v7830
    %v7907 = vpop.f32.mrb[0].mxu0
    %v7908 = vadd.f32 0.0, %v7907
    %v7909 = vpop.f32.mrb[0].mxu0
    %v7910 = vpop.f32.mrb[0].mxu0
    %v7911 = vadd.f32 0.0, %v7910
    %v7912 = vpop.f32.mrb[0].mxu0
    %7913 = vmatprep.mubr.bf16.mxu0 0
    %7914 = vmatmul.mubr.bf16.gmra.mrb[0].mxu0 %v7833
    %v7915 = vpop.f32.mrb[0].mxu0
    %v7916 = vadd.f32 0.0, %v7915
    %v7917 = vpop.f32.mrb[0].mxu0
    %v7918 = vpop.f32.mrb[0].mxu0
    %v7919 = vadd.f32 0.0, %v7918
    %v7920 = vpop.f32.mrb[0].mxu0
    %7921 = vmatprep.mubr.bf16.mxu0 0
    %7922 = vmatmul.mubr.bf16.gmra.mrb[0].mxu0 %v7836
    %v7923 = vpop.f32.mrb[0].mxu0
    %v7924 = vadd.f32 0.0, %v7923
    %v7925 = vpop.f32.mrb[0].mxu0
    %v7926 = vpop.f32.mrb[0].mxu0
    %v7927 = vadd.f32 0.0, %v7926
    %v7928 = vpop.f32.mrb[0].mxu0
    %7929 = vmatprep.mubr.bf16.mxu0 0
    %7930 = vmatmul.mubr.bf16.gmra.mrb[0].mxu0 %v7839
    %v7931 = vpop.f32.mrb[0].mxu0
    %v7932 = vadd.f32 0.0, %v7931
    %v7933 = vpop.f32.mrb[0].mxu0
    %v7934 = vpop.f32.mrb[0].mxu0
    %v7935 = vadd.f32 0.0, %v7934
    %v7936 = vpop.f32.mrb[0].mxu0
    %7937 = vdwg.mxu0
    %v7938 = vadd.f32 %v7715, %v7876
    %v7939 = vadd.f32 %v7718, %v7879
    %v7940 = vadd.f32 %v7723, %v7884
    %v7941 = vadd.f32 %v7726, %v7887
    %v7942 = vadd.f32 %v7731, %v7892
    %v7943 = vadd.f32 %v7734, %v7895
    %v7944 = vadd.f32 %v7739, %v7900
    %v7945 = vadd.f32 %v7742, %v7903
    %v7946 = vadd.f32 %v7747, %v7908
    %v7947 = vadd.f32 %v7750, %v7911
    %v7948 = vadd.f32 %v7755, %v7916
    %v7949 = vadd.f32 %v7758, %v7919
    %v7950 = vadd.f32 %v7763, %v7924
    %v7951 = vadd.f32 %v7766, %v7927
    %v7952 = vadd.f32 %v7771, %v7932
    %v7953 = vadd.f32 %v7774, %v7935
    %v7954 = vld [vmem:[%s2227] sm:$0xff]
    %v7955 = vld [vmem:[%s2227 + $0x10] sm:$0xff]
    %v7956 = vld [vmem:[%s2227 + $0x20] sm:$0xff]
    %v7957 = vld [vmem:[%s2227 + $0x30] sm:$0xff]
    %v7958 = vld [vmem:[%s2227 + $0x40] sm:$0xff]
    %v7959 = vld [vmem:[%s2227 + $0x50] sm:$0xff]
    %v7960 = vld [vmem:[%s2227 + $0x60] sm:$0xff]
    %v7961 = vld [vmem:[%s2227 + $0x70] sm:$0xff]
    %v7962 = vld [vmem:[%s2227 + $0xa0] sm:$0xff]
    %v7963 = vld [vmem:[%s2227 + $0xb0] sm:$0xff]
    %v7964 = vld [vmem:[%s2227 + $0xc0] sm:$0xff]
    %v7965 = vld [vmem:[%s2227 + $0xd0] sm:$0xff]
    %v7966 = vld [vmem:[%s2227 + $0xe0] sm:$0xff]
    %v7967 = vld [vmem:[%s2227 + $0xf0] sm:$0xff]
    %v7968 = vld [vmem:[%s2227 + $0x100] sm:$0xff]
    %v7969 = vld [vmem:[%s2227 + $0x110] sm:$0xff]
    %v7970 = vpack.c.bf16 %v7955, %v7954
    %v7971 = vpack.c.bf16 %v7957, %v7956
    %v7972 = vpack.c.bf16 %v7959, %v7958
    %v7973 = vpack.c.bf16 %v7961, %v7960
    %v7974 = vpack.c.bf16 %v7963, %v7962
    %v7975 = vpack.c.bf16 %v7965, %v7964
    %v7976 = vpack.c.bf16 %v7967, %v7966
    %v7977 = vpack.c.bf16 %v7969, %v7968
    %v7978 = vld [vmem:[#allocation12 + $0x30] sm:$0xf]
    %v7979 = vld [vmem:[#allocation12 + $0x34] sm:$0xf]
    %v7980 = vld [vmem:[#allocation12 + $0x38] sm:$0xf]
    %v7981 = vld [vmem:[#allocation12 + $0x3c] sm:$0xf]
    %v7986 = vunpack.c.l.b16 %v7978
    %v7987 = vunpack.c.l.b16 %v7979
    %v7988 = vunpack.c.l.b16 %v7980
    %v7989 = vunpack.c.l.b16 %v7981
    %v7990 = vpack.c.b16 %v7987, %v7986
    %v7991 = vpack.c.b16 %v7989, %v7988
    %v7995 = vsel %vm267, %v7970, 0
    %v7998 = vsel %vm267, %v7971, 0
    %v8001 = vsel %vm267, %v7972, 0
    %v8004 = vsel %vm267, %v7973, 0
    %v8007 = vsel %vm267, %v7974, 0
    %v8010 = vsel %vm267, %v7975, 0
    %v8013 = vsel %vm267, %v7976, 0
    %v8016 = vsel %vm267, %v7977, 0
    %8018 = vmatprep.subr.bf16.mxu0 0
    %8019 = vmatpush1.bf16.msra.mxu0 %v7990
    %8020 = vmatprep.subr.bf16.mxu0 0
    %8021 = vmatpush1.bf16.msra.mxu0 %v7991
    %8022 = vmatprep.subr.bf16.mxu0 0
    %8023 = vmatpush1.bf16.msra.mxu0 0
    %8024 = vmatprep.subr.bf16.mxu0 0
    %8025 = vmatpush1.bf16.msra.mxu0 0
    %8026 = vmatprep.subr.bf16.mxu0 0
    %8027 = vmatpush1.bf16.msra.mxu0 0
    %8028 = vmatprep.subr.bf16.mxu0 0
    %8029 = vmatpush1.bf16.msra.mxu0 0
    %8030 = vmatprep.subr.bf16.mxu0 0
    %8031 = vmatpush1.bf16.msra.mxu0 0
    %8032 = vmatprep.subr.bf16.mxu0 0
    %8033 = vmatpush1.bf16.msra.mxu0 0
    %8034 = vmatprep.subr.bf16.mxu0 0
    %8035 = vmatpush1.bf16.msra.mxu0 0
    %8036 = vmatprep.subr.bf16.mxu0 0
    %8037 = vmatpush1.bf16.msra.mxu0 0
    %8038 = vmatprep.subr.bf16.mxu0 0
    %8039 = vmatpush1.bf16.msra.mxu0 0
    %8040 = vmatprep.subr.bf16.mxu0 0
    %8041 = vmatpush1.bf16.msra.mxu0 0
    %8042 = vmatprep.subr.bf16.mxu0 0
    %8043 = vmatpush1.bf16.msra.mxu0 0
    %8044 = vmatprep.subr.bf16.mxu0 0
    %8045 = vmatpush1.bf16.msra.mxu0 0
    %8046 = vmatprep.subr.bf16.mxu0 0
    %8047 = vmatpush1.bf16.msra.mxu0 0
    %8048 = vmatprep.subr.bf16.mxu0 0
    %8049 = vmatpush1.bf16.msra.mxu0 0
    %8050 = vmatprep.mubr.bf16.mxu0 0
    %8051 = vmatmul.mubr.bf16.gmra.mrb[0].mxu0 %v7995
    %v8052 = vpop.f32.mrb[0].mxu0
    %v8053 = vadd.f32 0.0, %v8052
    %v8054 = vpop.f32.mrb[0].mxu0
    %v8055 = vpop.f32.mrb[0].mxu0
    %v8056 = vadd.f32 0.0, %v8055
    %v8057 = vpop.f32.mrb[0].mxu0
    %8058 = vmatprep.mubr.bf16.mxu0 0
    %8059 = vmatmul.mubr.bf16.gmra.mrb[0].mxu0 %v7998
    %v8060 = vpop.f32.mrb[0].mxu0
    %v8061 = vadd.f32 0.0, %v8060
    %v8062 = vpop.f32.mrb[0].mxu0
    %v8063 = vpop.f32.mrb[0].mxu0
    %v8064 = vadd.f32 0.0, %v8063
    %v8065 = vpop.f32.mrb[0].mxu0
    %8066 = vmatprep.mubr.bf16.mxu0 0
    %8067 = vmatmul.mubr.bf16.gmra.mrb[0].mxu0 %v8001
    %v8068 = vpop.f32.mrb[0].mxu0
    %v8069 = vadd.f32 0.0, %v8068
    %v8070 = vpop.f32.mrb[0].mxu0
    %v8071 = vpop.f32.mrb[0].mxu0
    %v8072 = vadd.f32 0.0, %v8071
    %v8073 = vpop.f32.mrb[0].mxu0
    %8074 = vmatprep.mubr.bf16.mxu0 0
    %8075 = vmatmul.mubr.bf16.gmra.mrb[0].mxu0 %v8004
    %v8076 = vpop.f32.mrb[0].mxu0
    %v8077 = vadd.f32 0.0, %v8076
    %v8078 = vpop.f32.mrb[0].mxu0
    %v8079 = vpop.f32.mrb[0].mxu0
    %v8080 = vadd.f32 0.0, %v8079
    %v8081 = vpop.f32.mrb[0].mxu0
    %8082 = vmatprep.mubr.bf16.mxu0 0
    %8083 = vmatmul.mubr.bf16.gmra.mrb[0].mxu0 %v8007
    %v8084 = vpop.f32.mrb[0].mxu0
    %v8085 = vadd.f32 0.0, %v8084
    %v8086 = vpop.f32.mrb[0].mxu0
    %v8087 = vpop.f32.mrb[0].mxu0
    %v8088 = vadd.f32 0.0, %v8087
    %v8089 = vpop.f32.mrb[0].mxu0
    %8090 = vmatprep.mubr.bf16.mxu0 0
    %8091 = vmatmul.mubr.bf16.gmra.mrb[0].mxu0 %v8010
    %v8092 = vpop.f32.mrb[0].mxu0
    %v8093 = vadd.f32 0.0, %v8092
    %v8094 = vpop.f32.mrb[0].mxu0
    %v8095 = vpop.f32.mrb[0].mxu0
    %v8096 = vadd.f32 0.0, %v8095
    %v8097 = vpop.f32.mrb[0].mxu0
    %8098 = vmatprep.mubr.bf16.mxu0 0
    %8099 = vmatmul.mubr.bf16.gmra.mrb[0].mxu0 %v8013
    %v8100 = vpop.f32.mrb[0].mxu0
    %v8101 = vadd.f32 0.0, %v8100
    %v8102 = vpop.f32.mrb[0].mxu0
    %v8103 = vpop.f32.mrb[0].mxu0
    %v8104 = vadd.f32 0.0, %v8103
    %v8105 = vpop.f32.mrb[0].mxu0
    %8106 = vmatprep.mubr.bf16.mxu0 0
    %8107 = vmatmul.mubr.bf16.gmra.mrb[0].mxu0 %v8016
    %v8108 = vpop.f32.mrb[0].mxu0
    %v8109 = vadd.f32 0.0, %v8108
    %v8110 = vpop.f32.mrb[0].mxu0
    %v8111 = vpop.f32.mrb[0].mxu0
    %v8112 = vadd.f32 0.0, %v8111
    %v8113 = vpop.f32.mrb[0].mxu0
    %8114 = vdwg.mxu0
    %v8115 = vadd.f32 %v7938, %v8053
    %v8116 = vadd.f32 %v7939, %v8056
    %v8117 = vadd.f32 %v7940, %v8061
    %v8118 = vadd.f32 %v7941, %v8064
    %v8119 = vadd.f32 %v7942, %v8069
    %v8120 = vadd.f32 %v7943, %v8072
    %v8121 = vadd.f32 %v7944, %v8077
    %v8122 = vadd.f32 %v7945, %v8080
    %v8123 = vadd.f32 %v7946, %v8085
    %v8124 = vadd.f32 %v7947, %v8088
    %v8125 = vadd.f32 %v7948, %v8093
    %v8126 = vadd.f32 %v7949, %v8096
    %v8127 = vadd.f32 %v7950, %v8101
    %v8128 = vadd.f32 %v7951, %v8104
    %v8129 = vadd.f32 %v7952, %v8109
    %v8130 = vadd.f32 %v7953, %v8112
    %v8131 = vld [vmem:[%s2227 + $0x1] sm:$0xff]
    %v8132 = vld [vmem:[%s2227 + $0x11] sm:$0xff]
    %v8133 = vld [vmem:[%s2227 + $0x21] sm:$0xff]
    %v8134 = vld [vmem:[%s2227 + $0x31] sm:$0xff]
    %v8135 = vld [vmem:[%s2227 + $0x41] sm:$0xff]
    %v8136 = vld [vmem:[%s2227 + $0x51] sm:$0xff]
    %v8137 = vld [vmem:[%s2227 + $0x61] sm:$0xff]
    %v8138 = vld [vmem:[%s2227 + $0x71] sm:$0xff]
    %v8139 = vld [vmem:[%s2227 + $0xa1] sm:$0xff]
    %v8140 = vld [vmem:[%s2227 + $0xb1] sm:$0xff]
    %v8141 = vld [vmem:[%s2227 + $0xc1] sm:$0xff]
    %v8142 = vld [vmem:[%s2227 + $0xd1] sm:$0xff]
    %v8143 = vld [vmem:[%s2227 + $0xe1] sm:$0xff]
    %v8144 = vld [vmem:[%s2227 + $0xf1] sm:$0xff]
    %v8145 = vld [vmem:[%s2227 + $0x101] sm:$0xff]
    %v8146 = vld [vmem:[%s2227 + $0x111] sm:$0xff]
    %v8147 = vpack.c.bf16 %v8132, %v8131
    %v8148 = vpack.c.bf16 %v8134, %v8133
    %v8149 = vpack.c.bf16 %v8136, %v8135
    %v8150 = vpack.c.bf16 %v8138, %v8137
    %v8151 = vpack.c.bf16 %v8140, %v8139
    %v8152 = vpack.c.bf16 %v8142, %v8141
    %v8153 = vpack.c.bf16 %v8144, %v8143
    %v8154 = vpack.c.bf16 %v8146, %v8145
    %v8155 = vld [vmem:[#allocation12 + $0x40] sm:$0xf]
    %v8156 = vld [vmem:[#allocation12 + $0x44] sm:$0xf]
    %v8157 = vld [vmem:[#allocation12 + $0x48] sm:$0xf]
    %v8158 = vld [vmem:[#allocation12 + $0x4c] sm:$0xf]
    %v8163 = vunpack.c.l.b16 %v8155
    %v8164 = vunpack.c.l.b16 %v8156
    %v8165 = vunpack.c.l.b16 %v8157
    %v8166 = vunpack.c.l.b16 %v8158
    %v8167 = vpack.c.b16 %v8164, %v8163
    %v8168 = vpack.c.b16 %v8166, %v8165
    %v8172 = vsel %vm267, %v8147, 0
    %v8175 = vsel %vm267, %v8148, 0
    %v8178 = vsel %vm267, %v8149, 0
    %v8181 = vsel %vm267, %v8150, 0
    %v8184 = vsel %vm267, %v8151, 0
    %v8187 = vsel %vm267, %v8152, 0
    %v8190 = vsel %vm267, %v8153, 0
    %v8193 = vsel %vm267, %v8154, 0
    %8195 = vmatprep.subr.bf16.mxu0 0
    %8196 = vmatpush1.bf16.msra.mxu0 %v8167
    %8197 = vmatprep.subr.bf16.mxu0 0
    %8198 = vmatpush1.bf16.msra.mxu0 %v8168
    %8199 = vmatprep.subr.bf16.mxu0 0
    %8200 = vmatpush1.bf16.msra.mxu0 0
    %8201 = vmatprep.subr.bf16.mxu0 0
    %8202 = vmatpush1.bf16.msra.mxu0 0
    %8203 = vmatprep.subr.bf16.mxu0 0
    %8204 = vmatpush1.bf16.msra.mxu0 0
    %8205 = vmatprep.subr.bf16.mxu0 0
    %8206 = vmatpush1.bf16.msra.mxu0 0
    %8207 = vmatprep.subr.bf16.mxu0 0
    %8208 = vmatpush1.bf16.msra.mxu0 0
    %8209 = vmatprep.subr.bf16.mxu0 0
    %8210 = vmatpush1.bf16.msra.mxu0 0
    %8211 = vmatprep.subr.bf16.mxu0 0
    %8212 = vmatpush1.bf16.msra.mxu0 0
    %8213 = vmatprep.subr.bf16.mxu0 0
    %8214 = vmatpush1.bf16.msra.mxu0 0
    %8215 = vmatprep.subr.bf16.mxu0 0
    %8216 = vmatpush1.bf16.msra.mxu0 0
    %8217 = vmatprep.subr.bf16.mxu0 0
    %8218 = vmatpush1.bf16.msra.mxu0 0
    %8219 = vmatprep.subr.bf16.mxu0 0
    %8220 = vmatpush1.bf16.msra.mxu0 0
    %8221 = vmatprep.subr.bf16.mxu0 0
    %8222 = vmatpush1.bf16.msra.mxu0 0
    %8223 = vmatprep.subr.bf16.mxu0 0
    %8224 = vmatpush1.bf16.msra.mxu0 0
    %8225 = vmatprep.subr.bf16.mxu0 0
    %8226 = vmatpush1.bf16.msra.mxu0 0
    %8227 = vmatprep.mubr.bf16.mxu0 0
    %8228 = vmatmul.mubr.bf16.gmra.mrb[0].mxu0 %v8172
    %v8229 = vpop.f32.mrb[0].mxu0
    %v8230 = vadd.f32 0.0, %v8229
    %v8231 = vpop.f32.mrb[0].mxu0
    %v8232 = vpop.f32.mrb[0].mxu0
    %v8233 = vadd.f32 0.0, %v8232
    %v8234 = vpop.f32.mrb[0].mxu0
    %8235 = vmatprep.mubr.bf16.mxu0 0
    %8236 = vmatmul.mubr.bf16.gmra.mrb[0].mxu0 %v8175
    %v8237 = vpop.f32.mrb[0].mxu0
    %v8238 = vadd.f32 0.0, %v8237
    %v8239 = vpop.f32.mrb[0].mxu0
    %v8240 = vpop.f32.mrb[0].mxu0
    %v8241 = vadd.f32 0.0, %v8240
    %v8242 = vpop.f32.mrb[0].mxu0
    %8243 = vmatprep.mubr.bf16.mxu0 0
    %8244 = vmatmul.mubr.bf16.gmra.mrb[0].mxu0 %v8178
    %v8245 = vpop.f32.mrb[0].mxu0
    %v8246 = vadd.f32 0.0, %v8245
    %v8247 = vpop.f32.mrb[0].mxu0
    %v8248 = vpop.f32.mrb[0].mxu0
    %v8249 = vadd.f32 0.0, %v8248
    %v8250 = vpop.f32.mrb[0].mxu0
    %8251 = vmatprep.mubr.bf16.mxu0 0
    %8252 = vmatmul.mubr.bf16.gmra.mrb[0].mxu0 %v8181
    %v8253 = vpop.f32.mrb[0].mxu0
    %v8254 = vadd.f32 0.0, %v8253
    %v8255 = vpop.f32.mrb[0].mxu0
    %v8256 = vpop.f32.mrb[0].mxu0
    %v8257 = vadd.f32 0.0, %v8256
    %v8258 = vpop.f32.mrb[0].mxu0
    %8259 = vmatprep.mubr.bf16.mxu0 0
    %8260 = vmatmul.mubr.bf16.gmra.mrb[0].mxu0 %v8184
    %v8261 = vpop.f32.mrb[0].mxu0
    %v8262 = vadd.f32 0.0, %v8261
    %v8263 = vpop.f32.mrb[0].mxu0
    %v8264 = vpop.f32.mrb[0].mxu0
    %v8265 = vadd.f32 0.0, %v8264
    %v8266 = vpop.f32.mrb[0].mxu0
    %8267 = vmatprep.mubr.bf16.mxu0 0
    %8268 = vmatmul.mubr.bf16.gmra.mrb[0].mxu0 %v8187
    %v8269 = vpop.f32.mrb[0].mxu0
    %v8270 = vadd.f32 0.0, %v8269
    %v8271 = vpop.f32.mrb[0].mxu0
    %v8272 = vpop.f32.mrb[0].mxu0
    %v8273 = vadd.f32 0.0, %v8272
    %v8274 = vpop.f32.mrb[0].mxu0
    %8275 = vmatprep.mubr.bf16.mxu0 0
    %8276 = vmatmul.mubr.bf16.gmra.mrb[0].mxu0 %v8190
    %v8277 = vpop.f32.mrb[0].mxu0
    %v8278 = vadd.f32 0.0, %v8277
    %v8279 = vpop.f32.mrb[0].mxu0
    %v8280 = vpop.f32.mrb[0].mxu0
    %v8281 = vadd.f32 0.0, %v8280
    %v8282 = vpop.f32.mrb[0].mxu0
    %8283 = vmatprep.mubr.bf16.mxu0 0
    %8284 = vmatmul.mubr.bf16.gmra.mrb[0].mxu0 %v8193
    %v8285 = vpop.f32.mrb[0].mxu0
    %v8286 = vadd.f32 0.0, %v8285
    %v8287 = vpop.f32.mrb[0].mxu0
    %v8288 = vpop.f32.mrb[0].mxu0
    %v8289 = vadd.f32 0.0, %v8288
    %v8290 = vpop.f32.mrb[0].mxu0
    %8291 = vdwg.mxu0
    %v8292 = vadd.f32 %v8115, %v8230
    %v8293 = vadd.f32 %v8116, %v8233
    %v8294 = vadd.f32 %v8117, %v8238
    %v8295 = vadd.f32 %v8118, %v8241
    %v8296 = vadd.f32 %v8119, %v8246
    %v8297 = vadd.f32 %v8120, %v8249
    %v8298 = vadd.f32 %v8121, %v8254
    %v8299 = vadd.f32 %v8122, %v8257
    %v8300 = vadd.f32 %v8123, %v8262
    %v8301 = vadd.f32 %v8124, %v8265
    %v8302 = vadd.f32 %v8125, %v8270
    %v8303 = vadd.f32 %v8126, %v8273
    %v8304 = vadd.f32 %v8127, %v8278
    %v8305 = vadd.f32 %v8128, %v8281
    %v8306 = vadd.f32 %v8129, %v8286
    %v8307 = vadd.f32 %v8130, %v8289
    %v8308 = vld [vmem:[%s2227 + $0x2] sm:$0xff]
    %v8309 = vld [vmem:[%s2227 + $0x12] sm:$0xff]
    %v8310 = vld [vmem:[%s2227 + $0x22] sm:$0xff]
    %v8311 = vld [vmem:[%s2227 + $0x32] sm:$0xff]
    %v8312 = vld [vmem:[%s2227 + $0x42] sm:$0xff]
    %v8313 = vld [vmem:[%s2227 + $0x52] sm:$0xff]
    %v8314 = vld [vmem:[%s2227 + $0x62] sm:$0xff]
    %v8315 = vld [vmem:[%s2227 + $0x72] sm:$0xff]
    %v8316 = vld [vmem:[%s2227 + $0xa2] sm:$0xff]
    %v8317 = vld [vmem:[%s2227 + $0xb2] sm:$0xff]
    %v8318 = vld [vmem:[%s2227 + $0xc2] sm:$0xff]
    %v8319 = vld [vmem:[%s2227 + $0xd2] sm:$0xff]
    %v8320 = vld [vmem:[%s2227 + $0xe2] sm:$0xff]
    %v8321 = vld [vmem:[%s2227 + $0xf2] sm:$0xff]
    %v8322 = vld [vmem:[%s2227 + $0x102] sm:$0xff]
    %v8323 = vld [vmem:[%s2227 + $0x112] sm:$0xff]
    %v8324 = vpack.c.bf16 %v8309, %v8308
    %v8325 = vpack.c.bf16 %v8311, %v8310
    %v8326 = vpack.c.bf16 %v8313, %v8312
    %v8327 = vpack.c.bf16 %v8315, %v8314
    %v8328 = vpack.c.bf16 %v8317, %v8316
    %v8329 = vpack.c.bf16 %v8319, %v8318
    %v8330 = vpack.c.bf16 %v8321, %v8320
    %v8331 = vpack.c.bf16 %v8323, %v8322
    %v8332 = vld [vmem:[#allocation12 + $0x50] sm:$0xf]
    %v8333 = vld [vmem:[#allocation12 + $0x54] sm:$0xf]
    %v8334 = vld [vmem:[#allocation12 + $0x58] sm:$0xf]
    %v8335 = vld [vmem:[#allocation12 + $0x5c] sm:$0xf]
    %v8340 = vunpack.c.l.b16 %v8332
    %v8341 = vunpack.c.l.b16 %v8333
    %v8342 = vunpack.c.l.b16 %v8334
    %v8343 = vunpack.c.l.b16 %v8335
    %v8344 = vpack.c.b16 %v8341, %v8340
    %v8345 = vpack.c.b16 %v8343, %v8342
    %v8349 = vsel %vm267, %v8324, 0
    %v8352 = vsel %vm267, %v8325, 0
    %v8355 = vsel %vm267, %v8326, 0
    %v8358 = vsel %vm267, %v8327, 0
    %v8361 = vsel %vm267, %v8328, 0
    %v8364 = vsel %vm267, %v8329, 0
    %v8367 = vsel %vm267, %v8330, 0
    %v8370 = vsel %vm267, %v8331, 0
    %8372 = vmatprep.subr.bf16.mxu0 0
    %8373 = vmatpush1.bf16.msra.mxu0 %v8344
    %8374 = vmatprep.subr.bf16.mxu0 0
    %8375 = vmatpush1.bf16.msra.mxu0 %v8345
    %8376 = vmatprep.subr.bf16.mxu0 0
    %8377 = vmatpush1.bf16.msra.mxu0 0
    %8378 = vmatprep.subr.bf16.mxu0 0
    %8379 = vmatpush1.bf16.msra.mxu0 0
    %8380 = vmatprep.subr.bf16.mxu0 0
    %8381 = vmatpush1.bf16.msra.mxu0 0
    %8382 = vmatprep.subr.bf16.mxu0 0
    %8383 = vmatpush1.bf16.msra.mxu0 0
    %8384 = vmatprep.subr.bf16.mxu0 0
    %8385 = vmatpush1.bf16.msra.mxu0 0
    %8386 = vmatprep.subr.bf16.mxu0 0
    %8387 = vmatpush1.bf16.msra.mxu0 0
    %8388 = vmatprep.subr.bf16.mxu0 0
    %8389 = vmatpush1.bf16.msra.mxu0 0
    %8390 = vmatprep.subr.bf16.mxu0 0
    %8391 = vmatpush1.bf16.msra.mxu0 0
    %8392 = vmatprep.subr.bf16.mxu0 0
    %8393 = vmatpush1.bf16.msra.mxu0 0
    %8394 = vmatprep.subr.bf16.mxu0 0
    %8395 = vmatpush1.bf16.msra.mxu0 0
    %8396 = vmatprep.subr.bf16.mxu0 0
    %8397 = vmatpush1.bf16.msra.mxu0 0
    %8398 = vmatprep.subr.bf16.mxu0 0
    %8399 = vmatpush1.bf16.msra.mxu0 0
    %8400 = vmatprep.subr.bf16.mxu0 0
    %8401 = vmatpush1.bf16.msra.mxu0 0
    %8402 = vmatprep.subr.bf16.mxu0 0
    %8403 = vmatpush1.bf16.msra.mxu0 0
    %8404 = vmatprep.mubr.bf16.mxu0 0
    %8405 = vmatmul.mubr.bf16.gmra.mrb[0].mxu0 %v8349
    %v8406 = vpop.f32.mrb[0].mxu0
    %v8407 = vadd.f32 0.0, %v8406
    %v8408 = vpop.f32.mrb[0].mxu0
    %v8409 = vpop.f32.mrb[0].mxu0
    %v8410 = vadd.f32 0.0, %v8409
    %v8411 = vpop.f32.mrb[0].mxu0
    %8412 = vmatprep.mubr.bf16.mxu0 0
    %8413 = vmatmul.mubr.bf16.gmra.mrb[0].mxu0 %v8352
    %v8414 = vpop.f32.mrb[0].mxu0
    %v8415 = vadd.f32 0.0, %v8414
    %v8416 = vpop.f32.mrb[0].mxu0
    %v8417 = vpop.f32.mrb[0].mxu0
    %v8418 = vadd.f32 0.0, %v8417
    %v8419 = vpop.f32.mrb[0].mxu0
    %8420 = vmatprep.mubr.bf16.mxu0 0
    %8421 = vmatmul.mubr.bf16.gmra.mrb[0].mxu0 %v8355
    %v8422 = vpop.f32.mrb[0].mxu0
    %v8423 = vadd.f32 0.0, %v8422
    %v8424 = vpop.f32.mrb[0].mxu0
    %v8425 = vpop.f32.mrb[0].mxu0
    %v8426 = vadd.f32 0.0, %v8425
    %v8427 = vpop.f32.mrb[0].mxu0
    %8428 = vmatprep.mubr.bf16.mxu0 0
    %8429 = vmatmul.mubr.bf16.gmra.mrb[0].mxu0 %v8358
    %v8430 = vpop.f32.mrb[0].mxu0
    %v8431 = vadd.f32 0.0, %v8430
    %v8432 = vpop.f32.mrb[0].mxu0
    %v8433 = vpop.f32.mrb[0].mxu0
    %v8434 = vadd.f32 0.0, %v8433
    %v8435 = vpop.f32.mrb[0].mxu0
    %8436 = vmatprep.mubr.bf16.mxu0 0
    %8437 = vmatmul.mubr.bf16.gmra.mrb[0].mxu0 %v8361
    %v8438 = vpop.f32.mrb[0].mxu0
    %v8439 = vadd.f32 0.0, %v8438
    %v8440 = vpop.f32.mrb[0].mxu0
    %v8441 = vpop.f32.mrb[0].mxu0
    %v8442 = vadd.f32 0.0, %v8441
    %v8443 = vpop.f32.mrb[0].mxu0
    %8444 = vmatprep.mubr.bf16.mxu0 0
    %8445 = vmatmul.mubr.bf16.gmra.mrb[0].mxu0 %v8364
    %v8446 = vpop.f32.mrb[0].mxu0
    %v8447 = vadd.f32 0.0, %v8446
    %v8448 = vpop.f32.mrb[0].mxu0
    %v8449 = vpop.f32.mrb[0].mxu0
    %v8450 = vadd.f32 0.0, %v8449
    %v8451 = vpop.f32.mrb[0].mxu0
    %8452 = vmatprep.mubr.bf16.mxu0 0
    %8453 = vmatmul.mubr.bf16.gmra.mrb[0].mxu0 %v8367
    %v8454 = vpop.f32.mrb[0].mxu0
    %v8455 = vadd.f32 0.0, %v8454
    %v8456 = vpop.f32.mrb[0].mxu0
    %v8457 = vpop.f32.mrb[0].mxu0
    %v8458 = vadd.f32 0.0, %v8457
    %v8459 = vpop.f32.mrb[0].mxu0
    %8460 = vmatprep.mubr.bf16.mxu0 0
    %8461 = vmatmul.mubr.bf16.gmra.mrb[0].mxu0 %v8370
    %v8462 = vpop.f32.mrb[0].mxu0
    %v8463 = vadd.f32 0.0, %v8462
    %v8464 = vpop.f32.mrb[0].mxu0
    %v8465 = vpop.f32.mrb[0].mxu0
    %v8466 = vadd.f32 0.0, %v8465
    %v8467 = vpop.f32.mrb[0].mxu0
    %8468 = vdwg.mxu0
    %v8469 = vadd.f32 %v8292, %v8407
    %v8470 = vadd.f32 %v8293, %v8410
    %v8471 = vadd.f32 %v8294, %v8415
    %v8472 = vadd.f32 %v8295, %v8418
    %v8473 = vadd.f32 %v8296, %v8423
    %v8474 = vadd.f32 %v8297, %v8426
    %v8475 = vadd.f32 %v8298, %v8431
    %v8476 = vadd.f32 %v8299, %v8434
    %v8477 = vadd.f32 %v8300, %v8439
    %v8478 = vadd.f32 %v8301, %v8442
    %v8479 = vadd.f32 %v8302, %v8447
    %v8480 = vadd.f32 %v8303, %v8450
    %v8481 = vadd.f32 %v8304, %v8455
    %v8482 = vadd.f32 %v8305, %v8458
    %v8483 = vadd.f32 %v8306, %v8463
    %v8484 = vadd.f32 %v8307, %v8466
    %s8485 = scalar_lea.vmem [#allocation3], 32
    %v8486 = vld [vmem:[%s8485] sm:$0xff]
    %v8487 = vld [vmem:[%s8485 + $0x10] sm:$0xff]
    %v8488 = vld [vmem:[%s8485 + $0x20] sm:$0xff]
    %v8489 = vld [vmem:[%s8485 + $0x30] sm:$0xff]
    %v8490 = vld [vmem:[%s8485 + $0x40] sm:$0xff]
    %v8491 = vld [vmem:[%s8485 + $0x50] sm:$0xff]
    %v8492 = vld [vmem:[%s8485 + $0x60] sm:$0xff]
    %v8493 = vld [vmem:[%s8485 + $0x70] sm:$0xff]
    %v8494 = vld [vmem:[%s8485 + $0xa0] sm:$0xff]
    %v8495 = vld [vmem:[%s8485 + $0xb0] sm:$0xff]
    %v8496 = vld [vmem:[%s8485 + $0xc0] sm:$0xff]
    %v8497 = vld [vmem:[%s8485 + $0xd0] sm:$0xff]
    %v8498 = vld [vmem:[%s8485 + $0xe0] sm:$0xff]
    %v8499 = vld [vmem:[%s8485 + $0xf0] sm:$0xff]
    %v8500 = vld [vmem:[%s8485 + $0x100] sm:$0xff]
    %v8501 = vld [vmem:[%s8485 + $0x110] sm:$0xff]
    %v8502 = vpack.c.bf16 %v8487, %v8486
    %v8503 = vpack.c.bf16 %v8489, %v8488
    %v8504 = vpack.c.bf16 %v8491, %v8490
    %v8505 = vpack.c.bf16 %v8493, %v8492
    %v8506 = vpack.c.bf16 %v8495, %v8494
    %v8507 = vpack.c.bf16 %v8497, %v8496
    %v8508 = vpack.c.bf16 %v8499, %v8498
    %v8509 = vpack.c.bf16 %v8501, %v8500
    %v8510 = vld [vmem:[#allocation12 + $0x60] sm:$0xf]
    %v8511 = vld [vmem:[#allocation12 + $0x64] sm:$0xf]
    %v8512 = vld [vmem:[#allocation12 + $0x68] sm:$0xf]
    %v8513 = vld [vmem:[#allocation12 + $0x6c] sm:$0xf]
    %v8518 = vunpack.c.l.b16 %v8510
    %v8519 = vunpack.c.l.b16 %v8511
    %v8520 = vunpack.c.l.b16 %v8512
    %v8521 = vunpack.c.l.b16 %v8513
    %v8522 = vpack.c.b16 %v8519, %v8518
    %v8523 = vpack.c.b16 %v8521, %v8520
    %v8527 = vsel %vm267, %v8502, 0
    %v8530 = vsel %vm267, %v8503, 0
    %v8533 = vsel %vm267, %v8504, 0
    %v8536 = vsel %vm267, %v8505, 0
    %v8539 = vsel %vm267, %v8506, 0
    %v8542 = vsel %vm267, %v8507, 0
    %v8545 = vsel %vm267, %v8508, 0
    %v8548 = vsel %vm267, %v8509, 0
    %8550 = vmatprep.subr.bf16.mxu0 0
    %8551 = vmatpush1.bf16.msra.mxu0 %v8522
    %8552 = vmatprep.subr.bf16.mxu0 0
    %8553 = vmatpush1.bf16.msra.mxu0 %v8523
    %8554 = vmatprep.subr.bf16.mxu0 0
    %8555 = vmatpush1.bf16.msra.mxu0 0
    %8556 = vmatprep.subr.bf16.mxu0 0
    %8557 = vmatpush1.bf16.msra.mxu0 0
    %8558 = vmatprep.subr.bf16.mxu0 0
    %8559 = vmatpush1.bf16.msra.mxu0 0
    %8560 = vmatprep.subr.bf16.mxu0 0
    %8561 = vmatpush1.bf16.msra.mxu0 0
    %8562 = vmatprep.subr.bf16.mxu0 0
    %8563 = vmatpush1.bf16.msra.mxu0 0
    %8564 = vmatprep.subr.bf16.mxu0 0
    %8565 = vmatpush1.bf16.msra.mxu0 0
    %8566 = vmatprep.subr.bf16.mxu0 0
    %8567 = vmatpush1.bf16.msra.mxu0 0
    %8568 = vmatprep.subr.bf16.mxu0 0
    %8569 = vmatpush1.bf16.msra.mxu0 0
    %8570 = vmatprep.subr.bf16.mxu0 0
    %8571 = vmatpush1.bf16.msra.mxu0 0
    %8572 = vmatprep.subr.bf16.mxu0 0
    %8573 = vmatpush1.bf16.msra.mxu0 0
    %8574 = vmatprep.subr.bf16.mxu0 0
    %8575 = vmatpush1.bf16.msra.mxu0 0
    %8576 = vmatprep.subr.bf16.mxu0 0
    %8577 = vmatpush1.bf16.msra.mxu0 0
    %8578 = vmatprep.subr.bf16.mxu0 0
    %8579 = vmatpush1.bf16.msra.mxu0 0
    %8580 = vmatprep.subr.bf16.mxu0 0
    %8581 = vmatpush1.bf16.msra.mxu0 0
    %8582 = vmatprep.mubr.bf16.mxu0 0
    %8583 = vmatmul.mubr.bf16.gmra.mrb[0].mxu0 %v8527
    %v8584 = vpop.f32.mrb[0].mxu0
    %v8585 = vadd.f32 0.0, %v8584
    %v8586 = vpop.f32.mrb[0].mxu0
    %v8587 = vpop.f32.mrb[0].mxu0
    %v8588 = vadd.f32 0.0, %v8587
    %v8589 = vpop.f32.mrb[0].mxu0
    %8590 = vmatprep.mubr.bf16.mxu0 0
    %8591 = vmatmul.mubr.bf16.gmra.mrb[0].mxu0 %v8530
    %v8592 = vpop.f32.mrb[0].mxu0
    %v8593 = vadd.f32 0.0, %v8592
    %v8594 = vpop.f32.mrb[0].mxu0
    %v8595 = vpop.f32.mrb[0].mxu0
    %v8596 = vadd.f32 0.0, %v8595
    %v8597 = vpop.f32.mrb[0].mxu0
    %8598 = vmatprep.mubr.bf16.mxu0 0
    %8599 = vmatmul.mubr.bf16.gmra.mrb[0].mxu0 %v8533
    %v8600 = vpop.f32.mrb[0].mxu0
    %v8601 = vadd.f32 0.0, %v8600
    %v8602 = vpop.f32.mrb[0].mxu0
    %v8603 = vpop.f32.mrb[0].mxu0
    %v8604 = vadd.f32 0.0, %v8603
    %v8605 = vpop.f32.mrb[0].mxu0
    %8606 = vmatprep.mubr.bf16.mxu0 0
    %8607 = vmatmul.mubr.bf16.gmra.mrb[0].mxu0 %v8536
    %v8608 = vpop.f32.mrb[0].mxu0
    %v8609 = vadd.f32 0.0, %v8608
    %v8610 = vpop.f32.mrb[0].mxu0
    %v8611 = vpop.f32.mrb[0].mxu0
    %v8612 = vadd.f32 0.0, %v8611
    %v8613 = vpop.f32.mrb[0].mxu0
    %8614 = vmatprep.mubr.bf16.mxu0 0
    %8615 = vmatmul.mubr.bf16.gmra.mrb[0].mxu0 %v8539
    %v8616 = vpop.f32.mrb[0].mxu0
    %v8617 = vadd.f32 0.0, %v8616
    %v8618 = vpop.f32.mrb[0].mxu0
    %v8619 = vpop.f32.mrb[0].mxu0
    %v8620 = vadd.f32 0.0, %v8619
    %v8621 = vpop.f32.mrb[0].mxu0
    %8622 = vmatprep.mubr.bf16.mxu0 0
    %8623 = vmatmul.mubr.bf16.gmra.mrb[0].mxu0 %v8542
    %v8624 = vpop.f32.mrb[0].mxu0
    %v8625 = vadd.f32 0.0, %v8624
    %v8626 = vpop.f32.mrb[0].mxu0
    %v8627 = vpop.f32.mrb[0].mxu0
    %v8628 = vadd.f32 0.0, %v8627
    %v8629 = vpop.f32.mrb[0].mxu0
    %8630 = vmatprep.mubr.bf16.mxu0 0
    %8631 = vmatmul.mubr.bf16.gmra.mrb[0].mxu0 %v8545
    %v8632 = vpop.f32.mrb[0].mxu0
    %v8633 = vadd.f32 0.0, %v8632
    %v8634 = vpop.f32.mrb[0].mxu0
    %v8635 = vpop.f32.mrb[0].mxu0
    %v8636 = vadd.f32 0.0, %v8635
    %v8637 = vpop.f32.mrb[0].mxu0
    %8638 = vmatprep.mubr.bf16.mxu0 0
    %8639 = vmatmul.mubr.bf16.gmra.mrb[0].mxu0 %v8548
    %v8640 = vpop.f32.mrb[0].mxu0
    %v8641 = vadd.f32 0.0, %v8640
    %v8642 = vpop.f32.mrb[0].mxu0
    %v8643 = vpop.f32.mrb[0].mxu0
    %v8644 = vadd.f32 0.0, %v8643
    %v8645 = vpop.f32.mrb[0].mxu0
    %8646 = vdwg.mxu0
    %v8647 = vadd.f32 %v8469, %v8585
    %v8648 = vadd.f32 %v8470, %v8588
    %v8649 = vadd.f32 %v8471, %v8593
    %v8650 = vadd.f32 %v8472, %v8596
    %v8651 = vadd.f32 %v8473, %v8601
    %v8652 = vadd.f32 %v8474, %v8604
    %v8653 = vadd.f32 %v8475, %v8609
    %v8654 = vadd.f32 %v8476, %v8612
    %v8655 = vadd.f32 %v8477, %v8617
    %v8656 = vadd.f32 %v8478, %v8620
    %v8657 = vadd.f32 %v8479, %v8625
    %v8658 = vadd.f32 %v8480, %v8628
    %v8659 = vadd.f32 %v8481, %v8633
    %v8660 = vadd.f32 %v8482, %v8636
    %v8661 = vadd.f32 %v8483, %v8641
    %v8662 = vadd.f32 %v8484, %v8644
    %v8663 = vld [vmem:[%s8485 + $0x1] sm:$0xff]
    %v8664 = vld [vmem:[%s8485 + $0x11] sm:$0xff]
    %v8665 = vld [vmem:[%s8485 + $0x21] sm:$0xff]
    %v8666 = vld [vmem:[%s8485 + $0x31] sm:$0xff]
    %v8667 = vld [vmem:[%s8485 + $0x41] sm:$0xff]
    %v8668 = vld [vmem:[%s8485 + $0x51] sm:$0xff]
    %v8669 = vld [vmem:[%s8485 + $0x61] sm:$0xff]
    %v8670 = vld [vmem:[%s8485 + $0x71] sm:$0xff]
    %v8671 = vld [vmem:[%s8485 + $0xa1] sm:$0xff]
    %v8672 = vld [vmem:[%s8485 + $0xb1] sm:$0xff]
    %v8673 = vld [vmem:[%s8485 + $0xc1] sm:$0xff]
    %v8674 = vld [vmem:[%s8485 + $0xd1] sm:$0xff]
    %v8675 = vld [vmem:[%s8485 + $0xe1] sm:$0xff]
    %v8676 = vld [vmem:[%s8485 + $0xf1] sm:$0xff]
    %v8677 = vld [vmem:[%s8485 + $0x101] sm:$0xff]
    %v8678 = vld [vmem:[%s8485 + $0x111] sm:$0xff]
    %v8679 = vpack.c.bf16 %v8664, %v8663
    %v8680 = vpack.c.bf16 %v8666, %v8665
    %v8681 = vpack.c.bf16 %v8668, %v8667
    %v8682 = vpack.c.bf16 %v8670, %v8669
    %v8683 = vpack.c.bf16 %v8672, %v8671
    %v8684 = vpack.c.bf16 %v8674, %v8673
    %v8685 = vpack.c.bf16 %v8676, %v8675
    %v8686 = vpack.c.bf16 %v8678, %v8677
    %v8687 = vld [vmem:[#allocation12 + $0x70] sm:$0xf]
    %v8688 = vld [vmem:[#allocation12 + $0x74] sm:$0xf]
    %v8689 = vld [vmem:[#allocation12 + $0x78] sm:$0xf]
    %v8690 = vld [vmem:[#allocation12 + $0x7c] sm:$0xf]
    %v8695 = vunpack.c.l.b16 %v8687
    %v8696 = vunpack.c.l.b16 %v8688
    %v8697 = vunpack.c.l.b16 %v8689
    %v8698 = vunpack.c.l.b16 %v8690
    %v8699 = vpack.c.b16 %v8696, %v8695
    %v8700 = vpack.c.b16 %v8698, %v8697
    %v8704 = vsel %vm267, %v8679, 0
    %v8707 = vsel %vm267, %v8680, 0
    %v8710 = vsel %vm267, %v8681, 0
    %v8713 = vsel %vm267, %v8682, 0
    %v8716 = vsel %vm267, %v8683, 0
    %v8719 = vsel %vm267, %v8684, 0
    %v8722 = vsel %vm267, %v8685, 0
    %v8725 = vsel %vm267, %v8686, 0
    %8727 = vmatprep.subr.bf16.mxu0 0
    %8728 = vmatpush1.bf16.msra.mxu0 %v8699
    %8729 = vmatprep.subr.bf16.mxu0 0
    %8730 = vmatpush1.bf16.msra.mxu0 %v8700
    %8731 = vmatprep.subr.bf16.mxu0 0
    %8732 = vmatpush1.bf16.msra.mxu0 0
    %8733 = vmatprep.subr.bf16.mxu0 0
    %8734 = vmatpush1.bf16.msra.mxu0 0
    %8735 = vmatprep.subr.bf16.mxu0 0
    %8736 = vmatpush1.bf16.msra.mxu0 0
    %8737 = vmatprep.subr.bf16.mxu0 0
    %8738 = vmatpush1.bf16.msra.mxu0 0
    %8739 = vmatprep.subr.bf16.mxu0 0
    %8740 = vmatpush1.bf16.msra.mxu0 0
    %8741 = vmatprep.subr.bf16.mxu0 0
    %8742 = vmatpush1.bf16.msra.mxu0 0
    %8743 = vmatprep.subr.bf16.mxu0 0
    %8744 = vmatpush1.bf16.msra.mxu0 0
    %8745 = vmatprep.subr.bf16.mxu0 0
    %8746 = vmatpush1.bf16.msra.mxu0 0
    %8747 = vmatprep.subr.bf16.mxu0 0
    %8748 = vmatpush1.bf16.msra.mxu0 0
    %8749 = vmatprep.subr.bf16.mxu0 0
    %8750 = vmatpush1.bf16.msra.mxu0 0
    %8751 = vmatprep.subr.bf16.mxu0 0
    %8752 = vmatpush1.bf16.msra.mxu0 0
    %8753 = vmatprep.subr.bf16.mxu0 0
    %8754 = vmatpush1.bf16.msra.mxu0 0
    %8755 = vmatprep.subr.bf16.mxu0 0
    %8756 = vmatpush1.bf16.msra.mxu0 0
    %8757 = vmatprep.subr.bf16.mxu0 0
    %8758 = vmatpush1.bf16.msra.mxu0 0
    %8759 = vmatprep.mubr.bf16.mxu0 0
    %8760 = vmatmul.mubr.bf16.gmra.mrb[0].mxu0 %v8704
    %v8761 = vpop.f32.mrb[0].mxu0
    %v8762 = vadd.f32 0.0, %v8761
    %v8763 = vpop.f32.mrb[0].mxu0
    %v8764 = vpop.f32.mrb[0].mxu0
    %v8765 = vadd.f32 0.0, %v8764
    %v8766 = vpop.f32.mrb[0].mxu0
    %8767 = vmatprep.mubr.bf16.mxu0 0
    %8768 = vmatmul.mubr.bf16.gmra.mrb[0].mxu0 %v8707
    %v8769 = vpop.f32.mrb[0].mxu0
    %v8770 = vadd.f32 0.0, %v8769
    %v8771 = vpop.f32.mrb[0].mxu0
    %v8772 = vpop.f32.mrb[0].mxu0
    %v8773 = vadd.f32 0.0, %v8772
    %v8774 = vpop.f32.mrb[0].mxu0
    %8775 = vmatprep.mubr.bf16.mxu0 0
    %8776 = vmatmul.mubr.bf16.gmra.mrb[0].mxu0 %v8710
    %v8777 = vpop.f32.mrb[0].mxu0
    %v8778 = vadd.f32 0.0, %v8777
    %v8779 = vpop.f32.mrb[0].mxu0
    %v8780 = vpop.f32.mrb[0].mxu0
    %v8781 = vadd.f32 0.0, %v8780
    %v8782 = vpop.f32.mrb[0].mxu0
    %8783 = vmatprep.mubr.bf16.mxu0 0
    %8784 = vmatmul.mubr.bf16.gmra.mrb[0].mxu0 %v8713
    %v8785 = vpop.f32.mrb[0].mxu0
    %v8786 = vadd.f32 0.0, %v8785
    %v8787 = vpop.f32.mrb[0].mxu0
    %v8788 = vpop.f32.mrb[0].mxu0
    %v8789 = vadd.f32 0.0, %v8788
    %v8790 = vpop.f32.mrb[0].mxu0
    %8791 = vmatprep.mubr.bf16.mxu0 0
    %8792 = vmatmul.mubr.bf16.gmra.mrb[0].mxu0 %v8716
    %v8793 = vpop.f32.mrb[0].mxu0
    %v8794 = vadd.f32 0.0, %v8793
    %v8795 = vpop.f32.mrb[0].mxu0
    %v8796 = vpop.f32.mrb[0].mxu0
    %v8797 = vadd.f32 0.0, %v8796
    %v8798 = vpop.f32.mrb[0].mxu0
    %8799 = vmatprep.mubr.bf16.mxu0 0
    %8800 = vmatmul.mubr.bf16.gmra.mrb[0].mxu0 %v8719
    %v8801 = vpop.f32.mrb[0].mxu0
    %v8802 = vadd.f32 0.0, %v8801
    %v8803 = vpop.f32.mrb[0].mxu0
    %v8804 = vpop.f32.mrb[0].mxu0
    %v8805 = vadd.f32 0.0, %v8804
    %v8806 = vpop.f32.mrb[0].mxu0
    %8807 = vmatprep.mubr.bf16.mxu0 0
    %8808 = vmatmul.mubr.bf16.gmra.mrb[0].mxu0 %v8722
    %v8809 = vpop.f32.mrb[0].mxu0
    %v8810 = vadd.f32 0.0, %v8809
    %v8811 = vpop.f32.mrb[0].mxu0
    %v8812 = vpop.f32.mrb[0].mxu0
    %v8813 = vadd.f32 0.0, %v8812
    %v8814 = vpop.f32.mrb[0].mxu0
    %8815 = vmatprep.mubr.bf16.mxu0 0
    %8816 = vmatmul.mubr.bf16.gmra.mrb[0].mxu0 %v8725
    %v8817 = vpop.f32.mrb[0].mxu0
    %v8818 = vadd.f32 0.0, %v8817
    %v8819 = vpop.f32.mrb[0].mxu0
    %v8820 = vpop.f32.mrb[0].mxu0
    %v8821 = vadd.f32 0.0, %v8820
    %v8822 = vpop.f32.mrb[0].mxu0
    %8823 = vdwg.mxu0
    %v8824 = vadd.f32 %v8647, %v8762
    %v8825 = vadd.f32 %v8648, %v8765
    %v8826 = vadd.f32 %v8649, %v8770
    %v8827 = vadd.f32 %v8650, %v8773
    %v8828 = vadd.f32 %v8651, %v8778
    %v8829 = vadd.f32 %v8652, %v8781
    %v8830 = vadd.f32 %v8653, %v8786
    %v8831 = vadd.f32 %v8654, %v8789
    %v8832 = vadd.f32 %v8655, %v8794
    %v8833 = vadd.f32 %v8656, %v8797
    %v8834 = vadd.f32 %v8657, %v8802
    %v8835 = vadd.f32 %v8658, %v8805
    %v8836 = vadd.f32 %v8659, %v8810
    %v8837 = vadd.f32 %v8660, %v8813
    %v8838 = vadd.f32 %v8661, %v8818
    %v8839 = vadd.f32 %v8662, %v8821
    %v8840 = vld [vmem:[%s8485 + $0x2] sm:$0xff]
    %v8841 = vld [vmem:[%s8485 + $0x12] sm:$0xff]
    %v8842 = vld [vmem:[%s8485 + $0x22] sm:$0xff]
    %v8843 = vld [vmem:[%s8485 + $0x32] sm:$0xff]
    %v8844 = vld [vmem:[%s8485 + $0x42] sm:$0xff]
    %v8845 = vld [vmem:[%s8485 + $0x52] sm:$0xff]
    %v8846 = vld [vmem:[%s8485 + $0x62] sm:$0xff]
    %v8847 = vld [vmem:[%s8485 + $0x72] sm:$0xff]
    %v8848 = vld [vmem:[%s8485 + $0xa2] sm:$0xff]
    %v8849 = vld [vmem:[%s8485 + $0xb2] sm:$0xff]
    %v8850 = vld [vmem:[%s8485 + $0xc2] sm:$0xff]
    %v8851 = vld [vmem:[%s8485 + $0xd2] sm:$0xff]
    %v8852 = vld [vmem:[%s8485 + $0xe2] sm:$0xff]
    %v8853 = vld [vmem:[%s8485 + $0xf2] sm:$0xff]
    %v8854 = vld [vmem:[%s8485 + $0x102] sm:$0xff]
    %v8855 = vld [vmem:[%s8485 + $0x112] sm:$0xff]
    %v8856 = vpack.c.bf16 %v8841, %v8840
    %v8857 = vpack.c.bf16 %v8843, %v8842
    %v8858 = vpack.c.bf16 %v8845, %v8844
    %v8859 = vpack.c.bf16 %v8847, %v8846
    %v8860 = vpack.c.bf16 %v8849, %v8848
    %v8861 = vpack.c.bf16 %v8851, %v8850
    %v8862 = vpack.c.bf16 %v8853, %v8852
    %v8863 = vpack.c.bf16 %v8855, %v8854
    %v8864 = vld [vmem:[#allocation12 + $0x80] sm:$0xf]
    %v8865 = vld [vmem:[#allocation12 + $0x84] sm:$0xf]
    %v8866 = vld [vmem:[#allocation12 + $0x88] sm:$0xf]
    %v8867 = vld [vmem:[#allocation12 + $0x8c] sm:$0xf]
    %v8872 = vunpack.c.l.b16 %v8864
    %v8873 = vunpack.c.l.b16 %v8865
    %v8874 = vunpack.c.l.b16 %v8866
    %v8875 = vunpack.c.l.b16 %v8867
    %v8876 = vpack.c.b16 %v8873, %v8872
    %v8877 = vpack.c.b16 %v8875, %v8874
    %v8881 = vsel %vm267, %v8856, 0
    %v8884 = vsel %vm267, %v8857, 0
    %v8887 = vsel %vm267, %v8858, 0
    %v8890 = vsel %vm267, %v8859, 0
    %v8893 = vsel %vm267, %v8860, 0
    %v8896 = vsel %vm267, %v8861, 0
    %v8899 = vsel %vm267, %v8862, 0
    %v8902 = vsel %vm267, %v8863, 0
    %8904 = vmatprep.subr.bf16.mxu0 0
    %8905 = vmatpush1.bf16.msra.mxu0 %v8876
    %8906 = vmatprep.subr.bf16.mxu0 0
    %8907 = vmatpush1.bf16.msra.mxu0 %v8877
    %8908 = vmatprep.subr.bf16.mxu0 0
    %8909 = vmatpush1.bf16.msra.mxu0 0
    %8910 = vmatprep.subr.bf16.mxu0 0
    %8911 = vmatpush1.bf16.msra.mxu0 0
    %8912 = vmatprep.subr.bf16.mxu0 0
    %8913 = vmatpush1.bf16.msra.mxu0 0
    %8914 = vmatprep.subr.bf16.mxu0 0
    %8915 = vmatpush1.bf16.msra.mxu0 0
    %8916 = vmatprep.subr.bf16.mxu0 0
    %8917 = vmatpush1.bf16.msra.mxu0 0
    %8918 = vmatprep.subr.bf16.mxu0 0
    %8919 = vmatpush1.bf16.msra.mxu0 0
    %8920 = vmatprep.subr.bf16.mxu0 0
    %8921 = vmatpush1.bf16.msra.mxu0 0
    %8922 = vmatprep.subr.bf16.mxu0 0
    %8923 = vmatpush1.bf16.msra.mxu0 0
    %8924 = vmatprep.subr.bf16.mxu0 0
    %8925 = vmatpush1.bf16.msra.mxu0 0
    %8926 = vmatprep.subr.bf16.mxu0 0
    %8927 = vmatpush1.bf16.msra.mxu0 0
    %8928 = vmatprep.subr.bf16.mxu0 0
    %8929 = vmatpush1.bf16.msra.mxu0 0
    %8930 = vmatprep.subr.bf16.mxu0 0
    %8931 = vmatpush1.bf16.msra.mxu0 0
    %8932 = vmatprep.subr.bf16.mxu0 0
    %8933 = vmatpush1.bf16.msra.mxu0 0
    %8934 = vmatprep.subr.bf16.mxu0 0
    %8935 = vmatpush1.bf16.msra.mxu0 0
    %8936 = vmatprep.mubr.bf16.mxu0 0
    %8937 = vmatmul.mubr.bf16.gmra.mrb[0].mxu0 %v8881
    %v8938 = vpop.f32.mrb[0].mxu0
    %v8939 = vadd.f32 0.0, %v8938
    %v8940 = vpop.f32.mrb[0].mxu0
    %v8941 = vpop.f32.mrb[0].mxu0
    %v8942 = vadd.f32 0.0, %v8941
    %v8943 = vpop.f32.mrb[0].mxu0
    %8944 = vmatprep.mubr.bf16.mxu0 0
    %8945 = vmatmul.mubr.bf16.gmra.mrb[0].mxu0 %v8884
    %v8946 = vpop.f32.mrb[0].mxu0
    %v8947 = vadd.f32 0.0, %v8946
    %v8948 = vpop.f32.mrb[0].mxu0
    %v8949 = vpop.f32.mrb[0].mxu0
    %v8950 = vadd.f32 0.0, %v8949
    %v8951 = vpop.f32.mrb[0].mxu0
    %8952 = vmatprep.mubr.bf16.mxu0 0
    %8953 = vmatmul.mubr.bf16.gmra.mrb[0].mxu0 %v8887
    %v8954 = vpop.f32.mrb[0].mxu0
    %v8955 = vadd.f32 0.0, %v8954
    %v8956 = vpop.f32.mrb[0].mxu0
    %v8957 = vpop.f32.mrb[0].mxu0
    %v8958 = vadd.f32 0.0, %v8957
    %v8959 = vpop.f32.mrb[0].mxu0
    %8960 = vmatprep.mubr.bf16.mxu0 0
    %8961 = vmatmul.mubr.bf16.gmra.mrb[0].mxu0 %v8890
    %v8962 = vpop.f32.mrb[0].mxu0
    %v8963 = vadd.f32 0.0, %v8962
    %v8964 = vpop.f32.mrb[0].mxu0
    %v8965 = vpop.f32.mrb[0].mxu0
    %v8966 = vadd.f32 0.0, %v8965
    %v8967 = vpop.f32.mrb[0].mxu0
    %8968 = vmatprep.mubr.bf16.mxu0 0
    %8969 = vmatmul.mubr.bf16.gmra.mrb[0].mxu0 %v8893
    %v8970 = vpop.f32.mrb[0].mxu0
    %v8971 = vadd.f32 0.0, %v8970
    %v8972 = vpop.f32.mrb[0].mxu0
    %v8973 = vpop.f32.mrb[0].mxu0
    %v8974 = vadd.f32 0.0, %v8973
    %v8975 = vpop.f32.mrb[0].mxu0
    %8976 = vmatprep.mubr.bf16.mxu0 0
    %8977 = vmatmul.mubr.bf16.gmra.mrb[0].mxu0 %v8896
    %v8978 = vpop.f32.mrb[0].mxu0
    %v8979 = vadd.f32 0.0, %v8978
    %v8980 = vpop.f32.mrb[0].mxu0
    %v8981 = vpop.f32.mrb[0].mxu0
    %v8982 = vadd.f32 0.0, %v8981
    %v8983 = vpop.f32.mrb[0].mxu0
    %8984 = vmatprep.mubr.bf16.mxu0 0
    %8985 = vmatmul.mubr.bf16.gmra.mrb[0].mxu0 %v8899
    %v8986 = vpop.f32.mrb[0].mxu0
    %v8987 = vadd.f32 0.0, %v8986
    %v8988 = vpop.f32.mrb[0].mxu0
    %v8989 = vpop.f32.mrb[0].mxu0
    %v8990 = vadd.f32 0.0, %v8989
    %v8991 = vpop.f32.mrb[0].mxu0
    %8992 = vmatprep.mubr.bf16.mxu0 0
    %8993 = vmatmul.mubr.bf16.gmra.mrb[0].mxu0 %v8902
    %v8994 = vpop.f32.mrb[0].mxu0
    %v8995 = vadd.f32 0.0, %v8994
    %v8996 = vpop.f32.mrb[0].mxu0
    %v8997 = vpop.f32.mrb[0].mxu0
    %v8998 = vadd.f32 0.0, %v8997
    %v8999 = vpop.f32.mrb[0].mxu0
    %9000 = vdwg.mxu0
    %v9001 = vadd.f32 %v8824, %v8939
    %v9002 = vadd.f32 %v8825, %v8942
    %v9003 = vadd.f32 %v8826, %v8947
    %v9004 = vadd.f32 %v8827, %v8950
    %v9005 = vadd.f32 %v8828, %v8955
    %v9006 = vadd.f32 %v8829, %v8958
    %v9007 = vadd.f32 %v8830, %v8963
    %v9008 = vadd.f32 %v8831, %v8966
    %v9009 = vadd.f32 %v8832, %v8971
    %v9010 = vadd.f32 %v8833, %v8974
    %v9011 = vadd.f32 %v8834, %v8979
    %v9012 = vadd.f32 %v8835, %v8982
    %v9013 = vadd.f32 %v8836, %v8987
    %v9014 = vadd.f32 %v8837, %v8990
    %v9015 = vadd.f32 %v8838, %v8995
    %v9016 = vadd.f32 %v8839, %v8998
    %v9017 = vld [vmem:[#allocation14] sm:$0x1]
    %v9019 = vlaneseq
    %v9020 = vshrl.u32 %v9019, 7
    %v9021 = vsub.s32 0, %v9020
    %v9022 = vrot.slane %v9017, %v9021
    %v9024 = vadd.f32 %v9001, %v9022
    %v9025 = vadd.f32 %v9002, %v9022
    %v9026 = vadd.f32 %v9003, %v9022
    %v9027 = vadd.f32 %v9004, %v9022
    %v9028 = vadd.f32 %v9005, %v9022
    %v9029 = vadd.f32 %v9006, %v9022
    %v9030 = vadd.f32 %v9007, %v9022
    %v9031 = vadd.f32 %v9008, %v9022
    %v9032 = vadd.f32 %v9009, %v9022
    %v9033 = vadd.f32 %v9010, %v9022
    %v9034 = vadd.f32 %v9011, %v9022
    %v9035 = vadd.f32 %v9012, %v9022
    %v9036 = vadd.f32 %v9013, %v9022
    %v9037 = vadd.f32 %v9014, %v9022
    %v9038 = vadd.f32 %v9015, %v9022
    %v9039 = vadd.f32 %v9016, %v9022
    %v9040 = vmax.f32 %v9024, 0.0
    %v9041 = vmax.f32 %v9025, 0.0
    %v9042 = vmax.f32 %v9026, 0.0
    %v9043 = vmax.f32 %v9027, 0.0
    %v9044 = vmax.f32 %v9028, 0.0
    %v9045 = vmax.f32 %v9029, 0.0
    %v9046 = vmax.f32 %v9030, 0.0
    %v9047 = vmax.f32 %v9031, 0.0
    %v9048 = vmax.f32 %v9032, 0.0
    %v9049 = vmax.f32 %v9033, 0.0
    %v9050 = vmax.f32 %v9034, 0.0
    %v9051 = vmax.f32 %v9035, 0.0
    %v9052 = vmax.f32 %v9036, 0.0
    %v9053 = vmax.f32 %v9037, 0.0
    %v9054 = vmax.f32 %v9038, 0.0
    %v9055 = vmax.f32 %v9039, 0.0
    %v9056 = vmax.f32 %v9040, %v9041
    %v9057 = vmax.f32 %v9042, %v9043
    %v9058 = vmax.f32 %v9044, %v9045
    %v9059 = vmax.f32 %v9046, %v9047
    %v9060 = vmax.f32 %v9048, %v9049
    %v9061 = vmax.f32 %v9050, %v9051
    %v9062 = vmax.f32 %v9052, %v9053
    %v9063 = vmax.f32 %v9054, %v9055
    %v9072 = vcombine.high %v9056, %v9056
    %v9074 = vunpack.c.l.s4 1983009808
    %v9075 = vunpack.c.0.s8 %v9074
    %v9076 = vlaneseq
    %v9077 = vshrl.u32 %v9076, 7
    %v9078 = vsub.s32 %v9075, %v9077
    %v9079 = vrot.slane %v9056, %v9078
    %v9081 = vunpack.c.l.s4 1983009808
    %v9082 = vunpack.c.0.s8 %v9081
    %v9083 = vlaneseq
    %v9084 = vshrl.u32 %v9083, 7
    %v9085 = vsub.s32 %v9082, %v9084
    %v9086 = vrot.slane %v9072, %v9085
    %v9087 = vcombine.high %v9079, %v9079
    %v9088 = vcombine.high %v9086, %v9086
    %v9089 = vcombine.high %v9057, %v9057
    %v9091 = vunpack.c.l.s4 1983009808
    %v9092 = vunpack.c.0.s8 %v9091
    %v9093 = vlaneseq
    %v9094 = vshrl.u32 %v9093, 7
    %v9095 = vsub.s32 %v9092, %v9094
    %v9096 = vrot.slane %v9057, %v9095
    %v9098 = vunpack.c.l.s4 1983009808
    %v9099 = vunpack.c.0.s8 %v9098
    %v9100 = vlaneseq
    %v9101 = vshrl.u32 %v9100, 7
    %v9102 = vsub.s32 %v9099, %v9101
    %v9103 = vrot.slane %v9089, %v9102
    %v9104 = vcombine.high %v9096, %v9096
    %v9105 = vcombine.high %v9103, %v9103
    %v9106 = vcombine.high %v9058, %v9058
    %v9108 = vunpack.c.l.s4 1983009808
    %v9109 = vunpack.c.0.s8 %v9108
    %v9110 = vlaneseq
    %v9111 = vshrl.u32 %v9110, 7
    %v9112 = vsub.s32 %v9109, %v9111
    %v9113 = vrot.slane %v9058, %v9112
    %v9115 = vunpack.c.l.s4 1983009808
    %v9116 = vunpack.c.0.s8 %v9115
    %v9117 = vlaneseq
    %v9118 = vshrl.u32 %v9117, 7
    %v9119 = vsub.s32 %v9116, %v9118
    %v9120 = vrot.slane %v9106, %v9119
    %v9121 = vcombine.high %v9113, %v9113
    %v9122 = vcombine.high %v9120, %v9120
    %v9123 = vcombine.high %v9059, %v9059
    %v9125 = vunpack.c.l.s4 1983009808
    %v9126 = vunpack.c.0.s8 %v9125
    %v9127 = vlaneseq
    %v9128 = vshrl.u32 %v9127, 7
    %v9129 = vsub.s32 %v9126, %v9128
    %v9130 = vrot.slane %v9059, %v9129
    %v9132 = vunpack.c.l.s4 1983009808
    %v9133 = vunpack.c.0.s8 %v9132
    %v9134 = vlaneseq
    %v9135 = vshrl.u32 %v9134, 7
    %v9136 = vsub.s32 %v9133, %v9135
    %v9137 = vrot.slane %v9123, %v9136
    %v9138 = vcombine.high %v9130, %v9130
    %v9139 = vcombine.high %v9137, %v9137
    %v9140 = vcombine.high %v9060, %v9060
    %v9142 = vunpack.c.l.s4 1983009808
    %v9143 = vunpack.c.0.s8 %v9142
    %v9144 = vlaneseq
    %v9145 = vshrl.u32 %v9144, 7
    %v9146 = vsub.s32 %v9143, %v9145
    %v9147 = vrot.slane %v9060, %v9146
    %v9149 = vunpack.c.l.s4 1983009808
    %v9150 = vunpack.c.0.s8 %v9149
    %v9151 = vlaneseq
    %v9152 = vshrl.u32 %v9151, 7
    %v9153 = vsub.s32 %v9150, %v9152
    %v9154 = vrot.slane %v9140, %v9153
    %v9155 = vcombine.high %v9147, %v9147
    %v9156 = vcombine.high %v9154, %v9154
    %v9157 = vcombine.high %v9061, %v9061
    %v9159 = vunpack.c.l.s4 1983009808
    %v9160 = vunpack.c.0.s8 %v9159
    %v9161 = vlaneseq
    %v9162 = vshrl.u32 %v9161, 7
    %v9163 = vsub.s32 %v9160, %v9162
    %v9164 = vrot.slane %v9061, %v9163
    %v9166 = vunpack.c.l.s4 1983009808
    %v9167 = vunpack.c.0.s8 %v9166
    %v9168 = vlaneseq
    %v9169 = vshrl.u32 %v9168, 7
    %v9170 = vsub.s32 %v9167, %v9169
    %v9171 = vrot.slane %v9157, %v9170
    %v9172 = vcombine.high %v9164, %v9164
    %v9173 = vcombine.high %v9171, %v9171
    %v9174 = vcombine.high %v9062, %v9062
    %v9176 = vunpack.c.l.s4 1983009808
    %v9177 = vunpack.c.0.s8 %v9176
    %v9178 = vlaneseq
    %v9179 = vshrl.u32 %v9178, 7
    %v9180 = vsub.s32 %v9177, %v9179
    %v9181 = vrot.slane %v9062, %v9180
    %v9183 = vunpack.c.l.s4 1983009808
    %v9184 = vunpack.c.0.s8 %v9183
    %v9185 = vlaneseq
    %v9186 = vshrl.u32 %v9185, 7
    %v9187 = vsub.s32 %v9184, %v9186
    %v9188 = vrot.slane %v9174, %v9187
    %v9189 = vcombine.high %v9181, %v9181
    %v9190 = vcombine.high %v9188, %v9188
    %v9191 = vcombine.high %v9063, %v9063
    %v9193 = vunpack.c.l.s4 1983009808
    %v9194 = vunpack.c.0.s8 %v9193
    %v9195 = vlaneseq
    %v9196 = vshrl.u32 %v9195, 7
    %v9197 = vsub.s32 %v9194, %v9196
    %v9198 = vrot.slane %v9063, %v9197
    %v9200 = vunpack.c.l.s4 1983009808
    %v9201 = vunpack.c.0.s8 %v9200
    %v9202 = vlaneseq
    %v9203 = vshrl.u32 %v9202, 7
    %v9204 = vsub.s32 %v9201, %v9203
    %v9205 = vrot.slane %v9191, %v9204
    %v9206 = vcombine.high %v9198, %v9198
    %v9207 = vcombine.high %v9205, %v9205
    %v9240 = vrot.slane %v9079, 7
    %v9241 = vrot.slane %v9240, 2
    %v9242 = vrot.slane %v9087, 7
    %v9243 = vrot.slane %v9242, 2
    %v9244 = vrot.slane %v9086, 7
    %v9245 = vrot.slane %v9244, 2
    %v9246 = vrot.slane %v9088, 7
    %v9247 = vrot.slane %v9246, 2
    %v9248 = vrot.slane %v9096, 7
    %v9249 = vrot.slane %v9248, 2
    %v9250 = vrot.slane %v9104, 7
    %v9251 = vrot.slane %v9250, 2
    %v9252 = vrot.slane %v9103, 7
    %v9253 = vrot.slane %v9252, 2
    %v9254 = vrot.slane %v9105, 7
    %v9255 = vrot.slane %v9254, 2
    %v9256 = vrot.slane %v9113, 7
    %v9257 = vrot.slane %v9256, 2
    %v9258 = vrot.slane %v9121, 7
    %v9259 = vrot.slane %v9258, 2
    %v9260 = vrot.slane %v9120, 7
    %v9261 = vrot.slane %v9260, 2
    %v9262 = vrot.slane %v9122, 7
    %v9263 = vrot.slane %v9262, 2
    %v9264 = vrot.slane %v9130, 7
    %v9265 = vrot.slane %v9264, 2
    %v9266 = vrot.slane %v9138, 7
    %v9267 = vrot.slane %v9266, 2
    %v9268 = vrot.slane %v9137, 7
    %v9269 = vrot.slane %v9268, 2
    %v9270 = vrot.slane %v9139, 7
    %v9271 = vrot.slane %v9270, 2
    %v9272 = vrot.slane %v9147, 7
    %v9273 = vrot.slane %v9272, 2
    %v9274 = vrot.slane %v9155, 7
    %v9275 = vrot.slane %v9274, 2
    %v9276 = vrot.slane %v9154, 7
    %v9277 = vrot.slane %v9276, 2
    %v9278 = vrot.slane %v9156, 7
    %v9279 = vrot.slane %v9278, 2
    %v9280 = vrot.slane %v9164, 7
    %v9281 = vrot.slane %v9280, 2
    %v9282 = vrot.slane %v9172, 7
    %v9283 = vrot.slane %v9282, 2
    %v9284 = vrot.slane %v9171, 7
    %v9285 = vrot.slane %v9284, 2
    %v9286 = vrot.slane %v9173, 7
    %v9287 = vrot.slane %v9286, 2
    %v9288 = vrot.slane %v9181, 7
    %v9289 = vrot.slane %v9288, 2
    %v9290 = vrot.slane %v9189, 7
    %v9291 = vrot.slane %v9290, 2
    %v9292 = vrot.slane %v9188, 7
    %v9293 = vrot.slane %v9292, 2
    %v9294 = vrot.slane %v9190, 7
    %v9295 = vrot.slane %v9294, 2
    %v9296 = vrot.slane %v9198, 7
    %v9297 = vrot.slane %v9296, 2
    %v9298 = vrot.slane %v9206, 7
    %v9299 = vrot.slane %v9298, 2
    %v9300 = vrot.slane %v9205, 7
    %v9301 = vrot.slane %v9300, 2
    %v9302 = vrot.slane %v9207, 7
    %v9303 = vrot.slane %v9302, 2
    %v9336 = vmax.f32 %v9079, %v9241
    %v9337 = vmax.f32 %v9087, %v9243
    %v9338 = vmax.f32 %v9086, %v9245
    %v9339 = vmax.f32 %v9088, %v9247
    %v9340 = vmax.f32 %v9096, %v9249
    %v9341 = vmax.f32 %v9104, %v9251
    %v9342 = vmax.f32 %v9103, %v9253
    %v9343 = vmax.f32 %v9105, %v9255
    %v9344 = vmax.f32 %v9113, %v9257
    %v9345 = vmax.f32 %v9121, %v9259
    %v9346 = vmax.f32 %v9120, %v9261
    %v9347 = vmax.f32 %v9122, %v9263
    %v9348 = vmax.f32 %v9130, %v9265
    %v9349 = vmax.f32 %v9138, %v9267
    %v9350 = vmax.f32 %v9137, %v9269
    %v9351 = vmax.f32 %v9139, %v9271
    %v9352 = vmax.f32 %v9147, %v9273
    %v9353 = vmax.f32 %v9155, %v9275
    %v9354 = vmax.f32 %v9154, %v9277
    %v9355 = vmax.f32 %v9156, %v9279
    %v9356 = vmax.f32 %v9164, %v9281
    %v9357 = vmax.f32 %v9172, %v9283
    %v9358 = vmax.f32 %v9171, %v9285
    %v9359 = vmax.f32 %v9173, %v9287
    %v9360 = vmax.f32 %v9181, %v9289
    %v9361 = vmax.f32 %v9189, %v9291
    %v9362 = vmax.f32 %v9188, %v9293
    %v9363 = vmax.f32 %v9190, %v9295
    %v9364 = vmax.f32 %v9198, %v9297
    %v9365 = vmax.f32 %v9206, %v9299
    %v9366 = vmax.f32 %v9205, %v9301
    %v9367 = vmax.f32 %v9207, %v9303
    %v9400 = vlaneseq
    %v9401 = vshrl.u32 %v9400, 7
    %v9402 = vsub.s32 0, %v9401
    %v9403 = vrot.slane %v9336, %v9402
    %v9404 = vlaneseq
    %v9405 = vshrl.u32 %v9404, 7
    %v9406 = vsub.s32 0, %v9405
    %v9407 = vrot.slane %v9337, %v9406
    %v9408 = vlaneseq
    %v9409 = vshrl.u32 %v9408, 7
    %v9410 = vsub.s32 0, %v9409
    %v9411 = vrot.slane %v9338, %v9410
    %v9412 = vlaneseq
    %v9413 = vshrl.u32 %v9412, 7
    %v9414 = vsub.s32 0, %v9413
    %v9415 = vrot.slane %v9339, %v9414
    %v9416 = vlaneseq
    %v9417 = vshrl.u32 %v9416, 7
    %v9418 = vsub.s32 0, %v9417
    %v9419 = vrot.slane %v9340, %v9418
    %v9420 = vlaneseq
    %v9421 = vshrl.u32 %v9420, 7
    %v9422 = vsub.s32 0, %v9421
    %v9423 = vrot.slane %v9341, %v9422
    %v9424 = vlaneseq
    %v9425 = vshrl.u32 %v9424, 7
    %v9426 = vsub.s32 0, %v9425
    %v9427 = vrot.slane %v9342, %v9426
    %v9428 = vlaneseq
    %v9429 = vshrl.u32 %v9428, 7
    %v9430 = vsub.s32 0, %v9429
    %v9431 = vrot.slane %v9343, %v9430
    %v9432 = vlaneseq
    %v9433 = vshrl.u32 %v9432, 7
    %v9434 = vsub.s32 0, %v9433
    %v9435 = vrot.slane %v9344, %v9434
    %v9436 = vlaneseq
    %v9437 = vshrl.u32 %v9436, 7
    %v9438 = vsub.s32 0, %v9437
    %v9439 = vrot.slane %v9345, %v9438
    %v9440 = vlaneseq
    %v9441 = vshrl.u32 %v9440, 7
    %v9442 = vsub.s32 0, %v9441
    %v9443 = vrot.slane %v9346, %v9442
    %v9444 = vlaneseq
    %v9445 = vshrl.u32 %v9444, 7
    %v9446 = vsub.s32 0, %v9445
    %v9447 = vrot.slane %v9347, %v9446
    %v9448 = vlaneseq
    %v9449 = vshrl.u32 %v9448, 7
    %v9450 = vsub.s32 0, %v9449
    %v9451 = vrot.slane %v9348, %v9450
    %v9452 = vlaneseq
    %v9453 = vshrl.u32 %v9452, 7
    %v9454 = vsub.s32 0, %v9453
    %v9455 = vrot.slane %v9349, %v9454
    %v9456 = vlaneseq
    %v9457 = vshrl.u32 %v9456, 7
    %v9458 = vsub.s32 0, %v9457
    %v9459 = vrot.slane %v9350, %v9458
    %v9460 = vlaneseq
    %v9461 = vshrl.u32 %v9460, 7
    %v9462 = vsub.s32 0, %v9461
    %v9463 = vrot.slane %v9351, %v9462
    %v9464 = vlaneseq
    %v9465 = vshrl.u32 %v9464, 7
    %v9466 = vsub.s32 0, %v9465
    %v9467 = vrot.slane %v9352, %v9466
    %v9468 = vlaneseq
    %v9469 = vshrl.u32 %v9468, 7
    %v9470 = vsub.s32 0, %v9469
    %v9471 = vrot.slane %v9353, %v9470
    %v9472 = vlaneseq
    %v9473 = vshrl.u32 %v9472, 7
    %v9474 = vsub.s32 0, %v9473
    %v9475 = vrot.slane %v9354, %v9474
    %v9476 = vlaneseq
    %v9477 = vshrl.u32 %v9476, 7
    %v9478 = vsub.s32 0, %v9477
    %v9479 = vrot.slane %v9355, %v9478
    %v9480 = vlaneseq
    %v9481 = vshrl.u32 %v9480, 7
    %v9482 = vsub.s32 0, %v9481
    %v9483 = vrot.slane %v9356, %v9482
    %v9484 = vlaneseq
    %v9485 = vshrl.u32 %v9484, 7
    %v9486 = vsub.s32 0, %v9485
    %v9487 = vrot.slane %v9357, %v9486
    %v9488 = vlaneseq
    %v9489 = vshrl.u32 %v9488, 7
    %v9490 = vsub.s32 0, %v9489
    %v9491 = vrot.slane %v9358, %v9490
    %v9492 = vlaneseq
    %v9493 = vshrl.u32 %v9492, 7
    %v9494 = vsub.s32 0, %v9493
    %v9495 = vrot.slane %v9359, %v9494
    %v9496 = vlaneseq
    %v9497 = vshrl.u32 %v9496, 7
    %v9498 = vsub.s32 0, %v9497
    %v9499 = vrot.slane %v9360, %v9498
    %v9500 = vlaneseq
    %v9501 = vshrl.u32 %v9500, 7
    %v9502 = vsub.s32 0, %v9501
    %v9503 = vrot.slane %v9361, %v9502
    %v9504 = vlaneseq
    %v9505 = vshrl.u32 %v9504, 7
    %v9506 = vsub.s32 0, %v9505
    %v9507 = vrot.slane %v9362, %v9506
    %v9508 = vlaneseq
    %v9509 = vshrl.u32 %v9508, 7
    %v9510 = vsub.s32 0, %v9509
    %v9511 = vrot.slane %v9363, %v9510
    %v9512 = vlaneseq
    %v9513 = vshrl.u32 %v9512, 7
    %v9514 = vsub.s32 0, %v9513
    %v9515 = vrot.slane %v9364, %v9514
    %v9516 = vlaneseq
    %v9517 = vshrl.u32 %v9516, 7
    %v9518 = vsub.s32 0, %v9517
    %v9519 = vrot.slane %v9365, %v9518
    %v9520 = vlaneseq
    %v9521 = vshrl.u32 %v9520, 7
    %v9522 = vsub.s32 0, %v9521
    %v9523 = vrot.slane %v9366, %v9522
    %v9524 = vlaneseq
    %v9525 = vshrl.u32 %v9524, 7
    %v9526 = vsub.s32 0, %v9525
    %v9527 = vrot.slane %v9367, %v9526
    %v9528 = vsel %vm2188, %v9407, %v9403
    %v9529 = vsel %vm2190, %v9411, %v9528
    %v9530 = vsel %vm2192, %v9415, %v9529
    %v9531 = vsel %vm2188, %v9423, %v9419
    %v9532 = vsel %vm2190, %v9427, %v9531
    %v9533 = vsel %vm2192, %v9431, %v9532
    %v9534 = vsel %vm2188, %v9439, %v9435
    %v9535 = vsel %vm2190, %v9443, %v9534
    %v9536 = vsel %vm2192, %v9447, %v9535
    %v9537 = vsel %vm2188, %v9455, %v9451
    %v9538 = vsel %vm2190, %v9459, %v9537
    %v9539 = vsel %vm2192, %v9463, %v9538
    %v9540 = vsel %vm2188, %v9471, %v9467
    %v9541 = vsel %vm2190, %v9475, %v9540
    %v9542 = vsel %vm2192, %v9479, %v9541
    %v9543 = vsel %vm2188, %v9487, %v9483
    %v9544 = vsel %vm2190, %v9491, %v9543
    %v9545 = vsel %vm2192, %v9495, %v9544
    %v9546 = vsel %vm2188, %v9503, %v9499
    %v9547 = vsel %vm2190, %v9507, %v9546
    %v9548 = vsel %vm2192, %v9511, %v9547
    %v9549 = vsel %vm2188, %v9519, %v9515
    %v9550 = vsel %vm2190, %v9523, %v9549
    %v9551 = vsel %vm2192, %v9527, %v9550
    %s9560 = scalar_lea.vmem [#allocation4], 8
    %vm9561 = vcmask 519168
    %9562 = vst.msk [vmem:[%s9560 + $0x1] sm:$0xf] %vm9561, %v9530
    %9563 = vst.msk [vmem:[%s9560 + $0x9] sm:$0xf] %vm9561, %v9533
    %9564 = vst.msk [vmem:[%s9560 + $0x11] sm:$0xf] %vm9561, %v9536
    %9565 = vst.msk [vmem:[%s9560 + $0x19] sm:$0xf] %vm9561, %v9539
    %9566 = vst.msk [vmem:[%s9560 + $0x31] sm:$0xf] %vm9561, %v9542
    %9567 = vst.msk [vmem:[%s9560 + $0x39] sm:$0xf] %vm9561, %v9545
    %9568 = vst.msk [vmem:[%s9560 + $0x41] sm:$0xf] %vm9561, %v9548
    %9569 = vst.msk [vmem:[%s9560 + $0x49] sm:$0xf] %vm9561, %v9551
    %v9570 = vld [vmem:[#allocation4] sm:$0xf]
    %v9571 = vld [vmem:[#allocation4 + $0x8] sm:$0xf]
    %v9572 = vld [vmem:[#allocation4 + $0x10] sm:$0xf]
    %v9573 = vld [vmem:[#allocation4 + $0x18] sm:$0xf]
    %v9574 = vld [vmem:[#allocation4 + $0x30] sm:$0xf]
    %v9575 = vld [vmem:[#allocation4 + $0x38] sm:$0xf]
    %v9576 = vld [vmem:[#allocation4 + $0x40] sm:$0xf]
    %v9577 = vld [vmem:[#allocation4 + $0x48] sm:$0xf]
    %v9586 = vcombine.low %v9570, %v9571
    %v9587 = vcombine.low %v9572, %v9573
    %v9588 = vcombine.low %v9574, %v9575
    %v9589 = vcombine.low %v9576, %v9577
    %v9594 = vpack.c.bf16 %v9587, %v9586
    %v9595 = vpack.c.bf16 %v9589, %v9588
    %v9596 = vld [vmem:[#allocation15] sm:$0xf]
    %v9597 = vld [vmem:[#allocation15 + $0x4] sm:$0xf]
    %v9598 = vld [vmem:[#allocation15 + $0x8] sm:$0xf]
    %v9599 = vld [vmem:[#allocation15 + $0xc] sm:$0xf]
    %v9600 = vld [vmem:[#allocation15 + $0x10] sm:$0xf]
    %v9601 = vld [vmem:[#allocation15 + $0x14] sm:$0xf]
    %v9602 = vld [vmem:[#allocation15 + $0x18] sm:$0xf]
    %v9603 = vld [vmem:[#allocation15 + $0x1c] sm:$0xf]
    %v9604 = vld [vmem:[#allocation4 + $0x1] sm:$0xf]
    %v9605 = vld [vmem:[#allocation4 + $0x9] sm:$0xf]
    %v9606 = vld [vmem:[#allocation4 + $0x11] sm:$0xf]
    %v9607 = vld [vmem:[#allocation4 + $0x19] sm:$0xf]
    %v9608 = vld [vmem:[#allocation4 + $0x31] sm:$0xf]
    %v9609 = vld [vmem:[#allocation4 + $0x39] sm:$0xf]
    %v9610 = vld [vmem:[#allocation4 + $0x41] sm:$0xf]
    %v9611 = vld [vmem:[#allocation4 + $0x49] sm:$0xf]
    %v9620 = vcombine.low %v9604, %v9605
    %v9621 = vcombine.low %v9606, %v9607
    %v9622 = vcombine.low %v9608, %v9609
    %v9623 = vcombine.low %v9610, %v9611
    %v9628 = vpack.c.bf16 %v9621, %v9620
    %v9629 = vpack.c.bf16 %v9623, %v9622
    %v9630 = vld [vmem:[#allocation15 + $0x20] sm:$0xf]
    %v9631 = vld [vmem:[#allocation15 + $0x24] sm:$0xf]
    %v9632 = vld [vmem:[#allocation15 + $0x28] sm:$0xf]
    %v9633 = vld [vmem:[#allocation15 + $0x2c] sm:$0xf]
    %v9634 = vld [vmem:[#allocation15 + $0x30] sm:$0xf]
    %v9635 = vld [vmem:[#allocation15 + $0x34] sm:$0xf]
    %v9636 = vld [vmem:[#allocation15 + $0x38] sm:$0xf]
    %v9637 = vld [vmem:[#allocation15 + $0x3c] sm:$0xf]
    %v9646 = vunpack.c.l.b16 %v9630
    %v9647 = vunpack.c.l.b16 %v9631
    %v9648 = vunpack.c.l.b16 %v9632
    %v9649 = vunpack.c.l.b16 %v9633
    %v9650 = vunpack.c.l.b16 %v9634
    %v9651 = vunpack.c.l.b16 %v9635
    %v9652 = vunpack.c.l.b16 %v9636
    %v9653 = vunpack.c.l.b16 %v9637
    %v9654 = vpack.c.b16 %v9647, %v9646
    %v9655 = vpack.c.b16 %v9649, %v9648
    %v9656 = vpack.c.b16 %v9651, %v9650
    %v9657 = vpack.c.b16 %v9653, %v9652
    %vm9662 = vcmask 523264
    %v9664 = vsel %vm9662, %v9628, 0
    %v9667 = vsel %vm9662, %v9629, 0
    %9669 = vmatprep.subr.bf16.mxu0 0
    %9670 = vmatpush1.bf16.msra.mxu0 %v9654
    %9671 = vmatprep.subr.bf16.mxu0 0
    %9672 = vmatpush1.bf16.msra.mxu0 %v9655
    %9673 = vmatprep.subr.bf16.mxu0 0
    %9674 = vmatpush1.bf16.msra.mxu0 %v9656
    %9675 = vmatprep.subr.bf16.mxu0 0
    %9676 = vmatpush1.bf16.msra.mxu0 %v9657
    %9677 = vmatprep.subr.bf16.mxu0 0
    %9678 = vmatpush1.bf16.msra.mxu0 0
    %9679 = vmatprep.subr.bf16.mxu0 0
    %9680 = vmatpush1.bf16.msra.mxu0 0
    %9681 = vmatprep.subr.bf16.mxu0 0
    %9682 = vmatpush1.bf16.msra.mxu0 0
    %9683 = vmatprep.subr.bf16.mxu0 0
    %9684 = vmatpush1.bf16.msra.mxu0 0
    %9685 = vmatprep.subr.bf16.mxu0 0
    %9686 = vmatpush1.bf16.msra.mxu0 0
    %9687 = vmatprep.subr.bf16.mxu0 0
    %9688 = vmatpush1.bf16.msra.mxu0 0
    %9689 = vmatprep.subr.bf16.mxu0 0
    %9690 = vmatpush1.bf16.msra.mxu0 0
    %9691 = vmatprep.subr.bf16.mxu0 0
    %9692 = vmatpush1.bf16.msra.mxu0 0
    %9693 = vmatprep.subr.bf16.mxu0 0
    %9694 = vmatpush1.bf16.msra.mxu0 0
    %9695 = vmatprep.subr.bf16.mxu0 0
    %9696 = vmatpush1.bf16.msra.mxu0 0
    %9697 = vmatprep.subr.bf16.mxu0 0
    %9698 = vmatpush1.bf16.msra.mxu0 0
    %9699 = vmatprep.subr.bf16.mxu0 0
    %9700 = vmatpush1.bf16.msra.mxu0 0
    %9701 = vmatprep.mubr.bf16.mxu0 0
    %9702 = vmatmul.mubr.bf16.gmra.mrb[0].mxu0 %v9664
    %v9703 = vpop.f32.mrb[0].mxu0
    %v9704 = vadd.f32 0.0, %v9703
    %v9705 = vpop.f32.mrb[0].mxu0
    %v9706 = vpop.f32.mrb[0].mxu0
    %v9707 = vadd.f32 0.0, %v9706
    %v9708 = vpop.f32.mrb[0].mxu0
    %9709 = vmatprep.mubr.bf16.mxu0 0
    %9710 = vmatmul.mubr.bf16.gmra.mrb[0].mxu0 %v9667
    %v9711 = vpop.f32.mrb[0].mxu0
    %v9712 = vadd.f32 0.0, %v9711
    %v9713 = vpop.f32.mrb[0].mxu0
    %v9714 = vpop.f32.mrb[0].mxu0
    %v9715 = vadd.f32 0.0, %v9714
    %v9716 = vpop.f32.mrb[0].mxu0
    %9717 = vdwg.mxu0
    %v9726 = vunpack.c.l.b16 %v9596
    %v9727 = vunpack.c.l.b16 %v9597
    %v9728 = vunpack.c.l.b16 %v9598
    %v9729 = vunpack.c.l.b16 %v9599
    %v9730 = vunpack.c.l.b16 %v9600
    %v9731 = vunpack.c.l.b16 %v9601
    %v9732 = vunpack.c.l.b16 %v9602
    %v9733 = vunpack.c.l.b16 %v9603
    %v9734 = vpack.c.b16 %v9727, %v9726
    %v9735 = vpack.c.b16 %v9729, %v9728
    %v9736 = vpack.c.b16 %v9731, %v9730
    %v9737 = vpack.c.b16 %v9733, %v9732
    %v9743 = vsel %vm9662, %v9594, 0
    %v9746 = vsel %vm9662, %v9595, 0
    %9748 = vmatprep.subr.bf16.mxu0 0
    %9749 = vmatpush1.bf16.msra.mxu0 %v9734
    %9750 = vmatprep.subr.bf16.mxu0 0
    %9751 = vmatpush1.bf16.msra.mxu0 %v9735
    %9752 = vmatprep.subr.bf16.mxu0 0
    %9753 = vmatpush1.bf16.msra.mxu0 %v9736
    %9754 = vmatprep.subr.bf16.mxu0 0
    %9755 = vmatpush1.bf16.msra.mxu0 %v9737
    %9756 = vmatprep.subr.bf16.mxu0 0
    %9757 = vmatpush1.bf16.msra.mxu0 0
    %9758 = vmatprep.subr.bf16.mxu0 0
    %9759 = vmatpush1.bf16.msra.mxu0 0
    %9760 = vmatprep.subr.bf16.mxu0 0
    %9761 = vmatpush1.bf16.msra.mxu0 0
    %9762 = vmatprep.subr.bf16.mxu0 0
    %9763 = vmatpush1.bf16.msra.mxu0 0
    %9764 = vmatprep.subr.bf16.mxu0 0
    %9765 = vmatpush1.bf16.msra.mxu0 0
    %9766 = vmatprep.subr.bf16.mxu0 0
    %9767 = vmatpush1.bf16.msra.mxu0 0
    %9768 = vmatprep.subr.bf16.mxu0 0
    %9769 = vmatpush1.bf16.msra.mxu0 0
    %9770 = vmatprep.subr.bf16.mxu0 0
    %9771 = vmatpush1.bf16.msra.mxu0 0
    %9772 = vmatprep.subr.bf16.mxu0 0
    %9773 = vmatpush1.bf16.msra.mxu0 0
    %9774 = vmatprep.subr.bf16.mxu0 0
    %9775 = vmatpush1.bf16.msra.mxu0 0
    %9776 = vmatprep.subr.bf16.mxu0 0
    %9777 = vmatpush1.bf16.msra.mxu0 0
    %9778 = vmatprep.subr.bf16.mxu0 0
    %9779 = vmatpush1.bf16.msra.mxu0 0
    %9780 = vmatprep.mubr.bf16.mxu0 0
    %9781 = vmatmul.mubr.bf16.gmra.mrb[0].mxu0 %v9743
    %v9782 = vpop.f32.mrb[0].mxu0
    %v9783 = vadd.f32 %v9704, %v9782
    %v9784 = vpop.f32.mrb[0].mxu0
    %v9785 = vpop.f32.mrb[0].mxu0
    %v9786 = vadd.f32 %v9707, %v9785
    %v9787 = vpop.f32.mrb[0].mxu0
    %9788 = vmatprep.mubr.bf16.mxu0 0
    %9789 = vmatmul.mubr.bf16.gmra.mrb[0].mxu0 %v9746
    %v9790 = vpop.f32.mrb[0].mxu0
    %v9791 = vadd.f32 %v9712, %v9790
    %v9792 = vpop.f32.mrb[0].mxu0
    %v9793 = vpop.f32.mrb[0].mxu0
    %v9794 = vadd.f32 %v9715, %v9793
    %v9795 = vpop.f32.mrb[0].mxu0
    %9796 = vdwg.mxu0
    %v9797 = vld [vmem:[#allocation4 + $0x2] sm:$0xf]
    %v9798 = vld [vmem:[#allocation4 + $0xa] sm:$0xf]
    %v9799 = vld [vmem:[#allocation4 + $0x12] sm:$0xf]
    %v9800 = vld [vmem:[#allocation4 + $0x1a] sm:$0xf]
    %v9801 = vld [vmem:[#allocation4 + $0x32] sm:$0xf]
    %v9802 = vld [vmem:[#allocation4 + $0x3a] sm:$0xf]
    %v9803 = vld [vmem:[#allocation4 + $0x42] sm:$0xf]
    %v9804 = vld [vmem:[#allocation4 + $0x4a] sm:$0xf]
    %v9813 = vcombine.low %v9797, %v9798
    %v9814 = vcombine.low %v9799, %v9800
    %v9815 = vcombine.low %v9801, %v9802
    %v9816 = vcombine.low %v9803, %v9804
    %v9821 = vpack.c.bf16 %v9814, %v9813
    %v9822 = vpack.c.bf16 %v9816, %v9815
    %v9823 = vld [vmem:[#allocation15 + $0x40] sm:$0xf]
    %v9824 = vld [vmem:[#allocation15 + $0x44] sm:$0xf]
    %v9825 = vld [vmem:[#allocation15 + $0x48] sm:$0xf]
    %v9826 = vld [vmem:[#allocation15 + $0x4c] sm:$0xf]
    %v9827 = vld [vmem:[#allocation15 + $0x50] sm:$0xf]
    %v9828 = vld [vmem:[#allocation15 + $0x54] sm:$0xf]
    %v9829 = vld [vmem:[#allocation15 + $0x58] sm:$0xf]
    %v9830 = vld [vmem:[#allocation15 + $0x5c] sm:$0xf]
    %v9839 = vunpack.c.l.b16 %v9823
    %v9840 = vunpack.c.l.b16 %v9824
    %v9841 = vunpack.c.l.b16 %v9825
    %v9842 = vunpack.c.l.b16 %v9826
    %v9843 = vunpack.c.l.b16 %v9827
    %v9844 = vunpack.c.l.b16 %v9828
    %v9845 = vunpack.c.l.b16 %v9829
    %v9846 = vunpack.c.l.b16 %v9830
    %v9847 = vpack.c.b16 %v9840, %v9839
    %v9848 = vpack.c.b16 %v9842, %v9841
    %v9849 = vpack.c.b16 %v9844, %v9843
    %v9850 = vpack.c.b16 %v9846, %v9845
    %v9856 = vsel %vm9662, %v9821, 0
    %v9859 = vsel %vm9662, %v9822, 0
    %9861 = vmatprep.subr.bf16.mxu0 0
    %9862 = vmatpush1.bf16.msra.mxu0 %v9847
    %9863 = vmatprep.subr.bf16.mxu0 0
    %9864 = vmatpush1.bf16.msra.mxu0 %v9848
    %9865 = vmatprep.subr.bf16.mxu0 0
    %9866 = vmatpush1.bf16.msra.mxu0 %v9849
    %9867 = vmatprep.subr.bf16.mxu0 0
    %9868 = vmatpush1.bf16.msra.mxu0 %v9850
    %9869 = vmatprep.subr.bf16.mxu0 0
    %9870 = vmatpush1.bf16.msra.mxu0 0
    %9871 = vmatprep.subr.bf16.mxu0 0
    %9872 = vmatpush1.bf16.msra.mxu0 0
    %9873 = vmatprep.subr.bf16.mxu0 0
    %9874 = vmatpush1.bf16.msra.mxu0 0
    %9875 = vmatprep.subr.bf16.mxu0 0
    %9876 = vmatpush1.bf16.msra.mxu0 0
    %9877 = vmatprep.subr.bf16.mxu0 0
    %9878 = vmatpush1.bf16.msra.mxu0 0
    %9879 = vmatprep.subr.bf16.mxu0 0
    %9880 = vmatpush1.bf16.msra.mxu0 0
    %9881 = vmatprep.subr.bf16.mxu0 0
    %9882 = vmatpush1.bf16.msra.mxu0 0
    %9883 = vmatprep.subr.bf16.mxu0 0
    %9884 = vmatpush1.bf16.msra.mxu0 0
    %9885 = vmatprep.subr.bf16.mxu0 0
    %9886 = vmatpush1.bf16.msra.mxu0 0
    %9887 = vmatprep.subr.bf16.mxu0 0
    %9888 = vmatpush1.bf16.msra.mxu0 0
    %9889 = vmatprep.subr.bf16.mxu0 0
    %9890 = vmatpush1.bf16.msra.mxu0 0
    %9891 = vmatprep.subr.bf16.mxu0 0
    %9892 = vmatpush1.bf16.msra.mxu0 0
    %9893 = vmatprep.mubr.bf16.mxu0 0
    %9894 = vmatmul.mubr.bf16.gmra.mrb[0].mxu0 %v9856
    %v9895 = vpop.f32.mrb[0].mxu0
    %v9896 = vadd.f32 0.0, %v9895
    %v9897 = vpop.f32.mrb[0].mxu0
    %v9898 = vpop.f32.mrb[0].mxu0
    %v9899 = vadd.f32 0.0, %v9898
    %v9900 = vpop.f32.mrb[0].mxu0
    %9901 = vmatprep.mubr.bf16.mxu0 0
    %9902 = vmatmul.mubr.bf16.gmra.mrb[0].mxu0 %v9859
    %v9903 = vpop.f32.mrb[0].mxu0
    %v9904 = vadd.f32 0.0, %v9903
    %v9905 = vpop.f32.mrb[0].mxu0
    %v9906 = vpop.f32.mrb[0].mxu0
    %v9907 = vadd.f32 0.0, %v9906
    %v9908 = vpop.f32.mrb[0].mxu0
    %9909 = vdwg.mxu0
    %v9910 = vadd.f32 %v9783, %v9896
    %v9911 = vadd.f32 %v9786, %v9899
    %v9912 = vadd.f32 %v9791, %v9904
    %v9913 = vadd.f32 %v9794, %v9907
    %v9914 = vld [vmem:[%s9560] sm:$0xf]
    %v9915 = vld [vmem:[%s9560 + $0x8] sm:$0xf]
    %v9916 = vld [vmem:[%s9560 + $0x10] sm:$0xf]
    %v9917 = vld [vmem:[%s9560 + $0x18] sm:$0xf]
    %v9918 = vld [vmem:[%s9560 + $0x30] sm:$0xf]
    %v9919 = vld [vmem:[%s9560 + $0x38] sm:$0xf]
    %v9920 = vld [vmem:[%s9560 + $0x40] sm:$0xf]
    %v9921 = vld [vmem:[%s9560 + $0x48] sm:$0xf]
    %v9930 = vcombine.low %v9914, %v9915
    %v9931 = vcombine.low %v9916, %v9917
    %v9932 = vcombine.low %v9918, %v9919
    %v9933 = vcombine.low %v9920, %v9921
    %v9938 = vpack.c.bf16 %v9931, %v9930
    %v9939 = vpack.c.bf16 %v9933, %v9932
    %v9940 = vld [vmem:[#allocation15 + $0x60] sm:$0xf]
    %v9941 = vld [vmem:[#allocation15 + $0x64] sm:$0xf]
    %v9942 = vld [vmem:[#allocation15 + $0x68] sm:$0xf]
    %v9943 = vld [vmem:[#allocation15 + $0x6c] sm:$0xf]
    %v9944 = vld [vmem:[#allocation15 + $0x70] sm:$0xf]
    %v9945 = vld [vmem:[#allocation15 + $0x74] sm:$0xf]
    %v9946 = vld [vmem:[#allocation15 + $0x78] sm:$0xf]
    %v9947 = vld [vmem:[#allocation15 + $0x7c] sm:$0xf]
    %v9956 = vunpack.c.l.b16 %v9940
    %v9957 = vunpack.c.l.b16 %v9941
    %v9958 = vunpack.c.l.b16 %v9942
    %v9959 = vunpack.c.l.b16 %v9943
    %v9960 = vunpack.c.l.b16 %v9944
    %v9961 = vunpack.c.l.b16 %v9945
    %v9962 = vunpack.c.l.b16 %v9946
    %v9963 = vunpack.c.l.b16 %v9947
    %v9964 = vpack.c.b16 %v9957, %v9956
    %v9965 = vpack.c.b16 %v9959, %v9958
    %v9966 = vpack.c.b16 %v9961, %v9960
    %v9967 = vpack.c.b16 %v9963, %v9962
    %v9973 = vsel %vm9662, %v9938, 0
    %v9976 = vsel %vm9662, %v9939, 0
    %9978 = vmatprep.subr.bf16.mxu0 0
    %9979 = vmatpush1.bf16.msra.mxu0 %v9964
    %9980 = vmatprep.subr.bf16.mxu0 0
    %9981 = vmatpush1.bf16.msra.mxu0 %v9965
    %9982 = vmatprep.subr.bf16.mxu0 0
    %9983 = vmatpush1.bf16.msra.mxu0 %v9966
    %9984 = vmatprep.subr.bf16.mxu0 0
    %9985 = vmatpush1.bf16.msra.mxu0 %v9967
    %9986 = vmatprep.subr.bf16.mxu0 0
    %9987 = vmatpush1.bf16.msra.mxu0 0
    %9988 = vmatprep.subr.bf16.mxu0 0
    %9989 = vmatpush1.bf16.msra.mxu0 0
    %9990 = vmatprep.subr.bf16.mxu0 0
    %9991 = vmatpush1.bf16.msra.mxu0 0
    %9992 = vmatprep.subr.bf16.mxu0 0
    %9993 = vmatpush1.bf16.msra.mxu0 0
    %9994 = vmatprep.subr.bf16.mxu0 0
    %9995 = vmatpush1.bf16.msra.mxu0 0
    %9996 = vmatprep.subr.bf16.mxu0 0
    %9997 = vmatpush1.bf16.msra.mxu0 0
    %9998 = vmatprep.subr.bf16.mxu0 0
    %9999 = vmatpush1.bf16.msra.mxu0 0
    %10000 = vmatprep.subr.bf16.mxu0 0
    %10001 = vmatpush1.bf16.msra.mxu0 0
    %10002 = vmatprep.subr.bf16.mxu0 0
    %10003 = vmatpush1.bf16.msra.mxu0 0
    %10004 = vmatprep.subr.bf16.mxu0 0
    %10005 = vmatpush1.bf16.msra.mxu0 0
    %10006 = vmatprep.subr.bf16.mxu0 0
    %10007 = vmatpush1.bf16.msra.mxu0 0
    %10008 = vmatprep.subr.bf16.mxu0 0
    %10009 = vmatpush1.bf16.msra.mxu0 0
    %10010 = vmatprep.mubr.bf16.mxu0 0
    %10011 = vmatmul.mubr.bf16.gmra.mrb[0].mxu0 %v9973
    %v10012 = vpop.f32.mrb[0].mxu0
    %v10013 = vadd.f32 0.0, %v10012
    %v10014 = vpop.f32.mrb[0].mxu0
    %v10015 = vpop.f32.mrb[0].mxu0
    %v10016 = vadd.f32 0.0, %v10015
    %v10017 = vpop.f32.mrb[0].mxu0
    %10018 = vmatprep.mubr.bf16.mxu0 0
    %10019 = vmatmul.mubr.bf16.gmra.mrb[0].mxu0 %v9976
    %v10020 = vpop.f32.mrb[0].mxu0
    %v10021 = vadd.f32 0.0, %v10020
    %v10022 = vpop.f32.mrb[0].mxu0
    %v10023 = vpop.f32.mrb[0].mxu0
    %v10024 = vadd.f32 0.0, %v10023
    %v10025 = vpop.f32.mrb[0].mxu0
    %10026 = vdwg.mxu0
    %v10027 = vadd.f32 %v9910, %v10013
    %v10028 = vadd.f32 %v9911, %v10016
    %v10029 = vadd.f32 %v9912, %v10021
    %v10030 = vadd.f32 %v9913, %v10024
    %v10031 = vld [vmem:[%s9560 + $0x1] sm:$0xf]
    %v10032 = vld [vmem:[%s9560 + $0x9] sm:$0xf]
    %v10033 = vld [vmem:[%s9560 + $0x11] sm:$0xf]
    %v10034 = vld [vmem:[%s9560 + $0x19] sm:$0xf]
    %v10035 = vld [vmem:[%s9560 + $0x31] sm:$0xf]
    %v10036 = vld [vmem:[%s9560 + $0x39] sm:$0xf]
    %v10037 = vld [vmem:[%s9560 + $0x41] sm:$0xf]
    %v10038 = vld [vmem:[%s9560 + $0x49] sm:$0xf]
    %v10047 = vcombine.low %v10031, %v10032
    %v10048 = vcombine.low %v10033, %v10034
    %v10049 = vcombine.low %v10035, %v10036
    %v10050 = vcombine.low %v10037, %v10038
    %v10055 = vpack.c.bf16 %v10048, %v10047
    %v10056 = vpack.c.bf16 %v10050, %v10049
    %v10057 = vld [vmem:[#allocation15 + $0x80] sm:$0xf]
    %v10058 = vld [vmem:[#allocation15 + $0x84] sm:$0xf]
    %v10059 = vld [vmem:[#allocation15 + $0x88] sm:$0xf]
    %v10060 = vld [vmem:[#allocation15 + $0x8c] sm:$0xf]
    %v10061 = vld [vmem:[#allocation15 + $0x90] sm:$0xf]
    %v10062 = vld [vmem:[#allocation15 + $0x94] sm:$0xf]
    %v10063 = vld [vmem:[#allocation15 + $0x98] sm:$0xf]
    %v10064 = vld [vmem:[#allocation15 + $0x9c] sm:$0xf]
    %v10073 = vunpack.c.l.b16 %v10057
    %v10074 = vunpack.c.l.b16 %v10058
    %v10075 = vunpack.c.l.b16 %v10059
    %v10076 = vunpack.c.l.b16 %v10060
    %v10077 = vunpack.c.l.b16 %v10061
    %v10078 = vunpack.c.l.b16 %v10062
    %v10079 = vunpack.c.l.b16 %v10063
    %v10080 = vunpack.c.l.b16 %v10064
    %v10081 = vpack.c.b16 %v10074, %v10073
    %v10082 = vpack.c.b16 %v10076, %v10075
    %v10083 = vpack.c.b16 %v10078, %v10077
    %v10084 = vpack.c.b16 %v10080, %v10079
    %v10090 = vsel %vm9662, %v10055, 0
    %v10093 = vsel %vm9662, %v10056, 0
    %10095 = vmatprep.subr.bf16.mxu0 0
    %10096 = vmatpush1.bf16.msra.mxu0 %v10081
    %10097 = vmatprep.subr.bf16.mxu0 0
    %10098 = vmatpush1.bf16.msra.mxu0 %v10082
    %10099 = vmatprep.subr.bf16.mxu0 0
    %10100 = vmatpush1.bf16.msra.mxu0 %v10083
    %10101 = vmatprep.subr.bf16.mxu0 0
    %10102 = vmatpush1.bf16.msra.mxu0 %v10084
    %10103 = vmatprep.subr.bf16.mxu0 0
    %10104 = vmatpush1.bf16.msra.mxu0 0
    %10105 = vmatprep.subr.bf16.mxu0 0
    %10106 = vmatpush1.bf16.msra.mxu0 0
    %10107 = vmatprep.subr.bf16.mxu0 0
    %10108 = vmatpush1.bf16.msra.mxu0 0
    %10109 = vmatprep.subr.bf16.mxu0 0
    %10110 = vmatpush1.bf16.msra.mxu0 0
    %10111 = vmatprep.subr.bf16.mxu0 0
    %10112 = vmatpush1.bf16.msra.mxu0 0
    %10113 = vmatprep.subr.bf16.mxu0 0
    %10114 = vmatpush1.bf16.msra.mxu0 0
    %10115 = vmatprep.subr.bf16.mxu0 0
    %10116 = vmatpush1.bf16.msra.mxu0 0
    %10117 = vmatprep.subr.bf16.mxu0 0
    %10118 = vmatpush1.bf16.msra.mxu0 0
    %10119 = vmatprep.subr.bf16.mxu0 0
    %10120 = vmatpush1.bf16.msra.mxu0 0
    %10121 = vmatprep.subr.bf16.mxu0 0
    %10122 = vmatpush1.bf16.msra.mxu0 0
    %10123 = vmatprep.subr.bf16.mxu0 0
    %10124 = vmatpush1.bf16.msra.mxu0 0
    %10125 = vmatprep.subr.bf16.mxu0 0
    %10126 = vmatpush1.bf16.msra.mxu0 0
    %10127 = vmatprep.mubr.bf16.mxu0 0
    %10128 = vmatmul.mubr.bf16.gmra.mrb[0].mxu0 %v10090
    %v10129 = vpop.f32.mrb[0].mxu0
    %v10130 = vadd.f32 0.0, %v10129
    %v10131 = vpop.f32.mrb[0].mxu0
    %v10132 = vpop.f32.mrb[0].mxu0
    %v10133 = vadd.f32 0.0, %v10132
    %v10134 = vpop.f32.mrb[0].mxu0
    %10135 = vmatprep.mubr.bf16.mxu0 0
    %10136 = vmatmul.mubr.bf16.gmra.mrb[0].mxu0 %v10093
    %v10137 = vpop.f32.mrb[0].mxu0
    %v10138 = vadd.f32 0.0, %v10137
    %v10139 = vpop.f32.mrb[0].mxu0
    %v10140 = vpop.f32.mrb[0].mxu0
    %v10141 = vadd.f32 0.0, %v10140
    %v10142 = vpop.f32.mrb[0].mxu0
    %10143 = vdwg.mxu0
    %v10144 = vadd.f32 %v10027, %v10130
    %v10145 = vadd.f32 %v10028, %v10133
    %v10146 = vadd.f32 %v10029, %v10138
    %v10147 = vadd.f32 %v10030, %v10141
    %v10148 = vld [vmem:[%s9560 + $0x2] sm:$0xf]
    %v10149 = vld [vmem:[%s9560 + $0xa] sm:$0xf]
    %v10150 = vld [vmem:[%s9560 + $0x12] sm:$0xf]
    %v10151 = vld [vmem:[%s9560 + $0x1a] sm:$0xf]
    %v10152 = vld [vmem:[%s9560 + $0x32] sm:$0xf]
    %v10153 = vld [vmem:[%s9560 + $0x3a] sm:$0xf]
    %v10154 = vld [vmem:[%s9560 + $0x42] sm:$0xf]
    %v10155 = vld [vmem:[%s9560 + $0x4a] sm:$0xf]
    %v10164 = vcombine.low %v10148, %v10149
    %v10165 = vcombine.low %v10150, %v10151
    %v10166 = vcombine.low %v10152, %v10153
    %v10167 = vcombine.low %v10154, %v10155
    %v10172 = vpack.c.bf16 %v10165, %v10164
    %v10173 = vpack.c.bf16 %v10167, %v10166
    %v10174 = vld [vmem:[#allocation15 + $0xa0] sm:$0xf]
    %v10175 = vld [vmem:[#allocation15 + $0xa4] sm:$0xf]
    %v10176 = vld [vmem:[#allocation15 + $0xa8] sm:$0xf]
    %v10177 = vld [vmem:[#allocation15 + $0xac] sm:$0xf]
    %v10178 = vld [vmem:[#allocation15 + $0xb0] sm:$0xf]
    %v10179 = vld [vmem:[#allocation15 + $0xb4] sm:$0xf]
    %v10180 = vld [vmem:[#allocation15 + $0xb8] sm:$0xf]
    %v10181 = vld [vmem:[#allocation15 + $0xbc] sm:$0xf]
    %v10190 = vunpack.c.l.b16 %v10174
    %v10191 = vunpack.c.l.b16 %v10175
    %v10192 = vunpack.c.l.b16 %v10176
    %v10193 = vunpack.c.l.b16 %v10177
    %v10194 = vunpack.c.l.b16 %v10178
    %v10195 = vunpack.c.l.b16 %v10179
    %v10196 = vunpack.c.l.b16 %v10180
    %v10197 = vunpack.c.l.b16 %v10181
    %v10198 = vpack.c.b16 %v10191, %v10190
    %v10199 = vpack.c.b16 %v10193, %v10192
    %v10200 = vpack.c.b16 %v10195, %v10194
    %v10201 = vpack.c.b16 %v10197, %v10196
    %v10207 = vsel %vm9662, %v10172, 0
    %v10210 = vsel %vm9662, %v10173, 0
    %10212 = vmatprep.subr.bf16.mxu0 0
    %10213 = vmatpush1.bf16.msra.mxu0 %v10198
    %10214 = vmatprep.subr.bf16.mxu0 0
    %10215 = vmatpush1.bf16.msra.mxu0 %v10199
    %10216 = vmatprep.subr.bf16.mxu0 0
    %10217 = vmatpush1.bf16.msra.mxu0 %v10200
    %10218 = vmatprep.subr.bf16.mxu0 0
    %10219 = vmatpush1.bf16.msra.mxu0 %v10201
    %10220 = vmatprep.subr.bf16.mxu0 0
    %10221 = vmatpush1.bf16.msra.mxu0 0
    %10222 = vmatprep.subr.bf16.mxu0 0
    %10223 = vmatpush1.bf16.msra.mxu0 0
    %10224 = vmatprep.subr.bf16.mxu0 0
    %10225 = vmatpush1.bf16.msra.mxu0 0
    %10226 = vmatprep.subr.bf16.mxu0 0
    %10227 = vmatpush1.bf16.msra.mxu0 0
    %10228 = vmatprep.subr.bf16.mxu0 0
    %10229 = vmatpush1.bf16.msra.mxu0 0
    %10230 = vmatprep.subr.bf16.mxu0 0
    %10231 = vmatpush1.bf16.msra.mxu0 0
    %10232 = vmatprep.subr.bf16.mxu0 0
    %10233 = vmatpush1.bf16.msra.mxu0 0
    %10234 = vmatprep.subr.bf16.mxu0 0
    %10235 = vmatpush1.bf16.msra.mxu0 0
    %10236 = vmatprep.subr.bf16.mxu0 0
    %10237 = vmatpush1.bf16.msra.mxu0 0
    %10238 = vmatprep.subr.bf16.mxu0 0
    %10239 = vmatpush1.bf16.msra.mxu0 0
    %10240 = vmatprep.subr.bf16.mxu0 0
    %10241 = vmatpush1.bf16.msra.mxu0 0
    %10242 = vmatprep.subr.bf16.mxu0 0
    %10243 = vmatpush1.bf16.msra.mxu0 0
    %10244 = vmatprep.mubr.bf16.mxu0 0
    %10245 = vmatmul.mubr.bf16.gmra.mrb[0].mxu0 %v10207
    %v10246 = vpop.f32.mrb[0].mxu0
    %v10247 = vadd.f32 0.0, %v10246
    %v10248 = vpop.f32.mrb[0].mxu0
    %v10249 = vpop.f32.mrb[0].mxu0
    %v10250 = vadd.f32 0.0, %v10249
    %v10251 = vpop.f32.mrb[0].mxu0
    %10252 = vmatprep.mubr.bf16.mxu0 0
    %10253 = vmatmul.mubr.bf16.gmra.mrb[0].mxu0 %v10210
    %v10254 = vpop.f32.mrb[0].mxu0
    %v10255 = vadd.f32 0.0, %v10254
    %v10256 = vpop.f32.mrb[0].mxu0
    %v10257 = vpop.f32.mrb[0].mxu0
    %v10258 = vadd.f32 0.0, %v10257
    %v10259 = vpop.f32.mrb[0].mxu0
    %10260 = vdwg.mxu0
    %v10261 = vadd.f32 %v10144, %v10247
    %v10262 = vadd.f32 %v10145, %v10250
    %v10263 = vadd.f32 %v10146, %v10255
    %v10264 = vadd.f32 %v10147, %v10258
    %s10265 = scalar_lea.vmem [#allocation4], 16
    %v10266 = vld [vmem:[%s10265] sm:$0xf]
    %v10267 = vld [vmem:[%s10265 + $0x8] sm:$0xf]
    %v10268 = vld [vmem:[%s10265 + $0x10] sm:$0xf]
    %v10269 = vld [vmem:[%s10265 + $0x18] sm:$0xf]
    %v10270 = vld [vmem:[%s10265 + $0x30] sm:$0xf]
    %v10271 = vld [vmem:[%s10265 + $0x38] sm:$0xf]
    %v10272 = vld [vmem:[%s10265 + $0x40] sm:$0xf]
    %v10273 = vld [vmem:[%s10265 + $0x48] sm:$0xf]
    %v10282 = vcombine.low %v10266, %v10267
    %v10283 = vcombine.low %v10268, %v10269
    %v10284 = vcombine.low %v10270, %v10271
    %v10285 = vcombine.low %v10272, %v10273
    %v10290 = vpack.c.bf16 %v10283, %v10282
    %v10291 = vpack.c.bf16 %v10285, %v10284
    %v10292 = vld [vmem:[#allocation15 + $0xc0] sm:$0xf]
    %v10293 = vld [vmem:[#allocation15 + $0xc4] sm:$0xf]
    %v10294 = vld [vmem:[#allocation15 + $0xc8] sm:$0xf]
    %v10295 = vld [vmem:[#allocation15 + $0xcc] sm:$0xf]
    %v10296 = vld [vmem:[#allocation15 + $0xd0] sm:$0xf]
    %v10297 = vld [vmem:[#allocation15 + $0xd4] sm:$0xf]
    %v10298 = vld [vmem:[#allocation15 + $0xd8] sm:$0xf]
    %v10299 = vld [vmem:[#allocation15 + $0xdc] sm:$0xf]
    %v10308 = vunpack.c.l.b16 %v10292
    %v10309 = vunpack.c.l.b16 %v10293
    %v10310 = vunpack.c.l.b16 %v10294
    %v10311 = vunpack.c.l.b16 %v10295
    %v10312 = vunpack.c.l.b16 %v10296
    %v10313 = vunpack.c.l.b16 %v10297
    %v10314 = vunpack.c.l.b16 %v10298
    %v10315 = vunpack.c.l.b16 %v10299
    %v10316 = vpack.c.b16 %v10309, %v10308
    %v10317 = vpack.c.b16 %v10311, %v10310
    %v10318 = vpack.c.b16 %v10313, %v10312
    %v10319 = vpack.c.b16 %v10315, %v10314
    %v10325 = vsel %vm9662, %v10290, 0
    %v10328 = vsel %vm9662, %v10291, 0
    %10330 = vmatprep.subr.bf16.mxu0 0
    %10331 = vmatpush1.bf16.msra.mxu0 %v10316
    %10332 = vmatprep.subr.bf16.mxu0 0
    %10333 = vmatpush1.bf16.msra.mxu0 %v10317
    %10334 = vmatprep.subr.bf16.mxu0 0
    %10335 = vmatpush1.bf16.msra.mxu0 %v10318
    %10336 = vmatprep.subr.bf16.mxu0 0
    %10337 = vmatpush1.bf16.msra.mxu0 %v10319
    %10338 = vmatprep.subr.bf16.mxu0 0
    %10339 = vmatpush1.bf16.msra.mxu0 0
    %10340 = vmatprep.subr.bf16.mxu0 0
    %10341 = vmatpush1.bf16.msra.mxu0 0
    %10342 = vmatprep.subr.bf16.mxu0 0
    %10343 = vmatpush1.bf16.msra.mxu0 0
    %10344 = vmatprep.subr.bf16.mxu0 0
    %10345 = vmatpush1.bf16.msra.mxu0 0
    %10346 = vmatprep.subr.bf16.mxu0 0
    %10347 = vmatpush1.bf16.msra.mxu0 0
    %10348 = vmatprep.subr.bf16.mxu0 0
    %10349 = vmatpush1.bf16.msra.mxu0 0
    %10350 = vmatprep.subr.bf16.mxu0 0
    %10351 = vmatpush1.bf16.msra.mxu0 0
    %10352 = vmatprep.subr.bf16.mxu0 0
    %10353 = vmatpush1.bf16.msra.mxu0 0
    %10354 = vmatprep.subr.bf16.mxu0 0
    %10355 = vmatpush1.bf16.msra.mxu0 0
    %10356 = vmatprep.subr.bf16.mxu0 0
    %10357 = vmatpush1.bf16.msra.mxu0 0
    %10358 = vmatprep.subr.bf16.mxu0 0
    %10359 = vmatpush1.bf16.msra.mxu0 0
    %10360 = vmatprep.subr.bf16.mxu0 0
    %10361 = vmatpush1.bf16.msra.mxu0 0
    %10362 = vmatprep.mubr.bf16.mxu0 0
    %10363 = vmatmul.mubr.bf16.gmra.mrb[0].mxu0 %v10325
    %v10364 = vpop.f32.mrb[0].mxu0
    %v10365 = vadd.f32 0.0, %v10364
    %v10366 = vpop.f32.mrb[0].mxu0
    %v10367 = vpop.f32.mrb[0].mxu0
    %v10368 = vadd.f32 0.0, %v10367
    %v10369 = vpop.f32.mrb[0].mxu0
    %10370 = vmatprep.mubr.bf16.mxu0 0
    %10371 = vmatmul.mubr.bf16.gmra.mrb[0].mxu0 %v10328
    %v10372 = vpop.f32.mrb[0].mxu0
    %v10373 = vadd.f32 0.0, %v10372
    %v10374 = vpop.f32.mrb[0].mxu0
    %v10375 = vpop.f32.mrb[0].mxu0
    %v10376 = vadd.f32 0.0, %v10375
    %v10377 = vpop.f32.mrb[0].mxu0
    %10378 = vdwg.mxu0
    %v10379 = vadd.f32 %v10261, %v10365
    %v10380 = vadd.f32 %v10262, %v10368
    %v10381 = vadd.f32 %v10263, %v10373
    %v10382 = vadd.f32 %v10264, %v10376
    %v10383 = vld [vmem:[%s10265 + $0x1] sm:$0xf]
    %v10384 = vld [vmem:[%s10265 + $0x9] sm:$0xf]
    %v10385 = vld [vmem:[%s10265 + $0x11] sm:$0xf]
    %v10386 = vld [vmem:[%s10265 + $0x19] sm:$0xf]
    %v10387 = vld [vmem:[%s10265 + $0x31] sm:$0xf]
    %v10388 = vld [vmem:[%s10265 + $0x39] sm:$0xf]
    %v10389 = vld [vmem:[%s10265 + $0x41] sm:$0xf]
    %v10390 = vld [vmem:[%s10265 + $0x49] sm:$0xf]
    %v10399 = vcombine.low %v10383, %v10384
    %v10400 = vcombine.low %v10385, %v10386
    %v10401 = vcombine.low %v10387, %v10388
    %v10402 = vcombine.low %v10389, %v10390
    %v10407 = vpack.c.bf16 %v10400, %v10399
    %v10408 = vpack.c.bf16 %v10402, %v10401
    %v10409 = vld [vmem:[#allocation15 + $0xe0] sm:$0xf]
    %v10410 = vld [vmem:[#allocation15 + $0xe4] sm:$0xf]
    %v10411 = vld [vmem:[#allocation15 + $0xe8] sm:$0xf]
    %v10412 = vld [vmem:[#allocation15 + $0xec] sm:$0xf]
    %v10413 = vld [vmem:[#allocation15 + $0xf0] sm:$0xf]
    %v10414 = vld [vmem:[#allocation15 + $0xf4] sm:$0xf]
    %v10415 = vld [vmem:[#allocation15 + $0xf8] sm:$0xf]
    %v10416 = vld [vmem:[#allocation15 + $0xfc] sm:$0xf]
    %v10425 = vunpack.c.l.b16 %v10409
    %v10426 = vunpack.c.l.b16 %v10410
    %v10427 = vunpack.c.l.b16 %v10411
    %v10428 = vunpack.c.l.b16 %v10412
    %v10429 = vunpack.c.l.b16 %v10413
    %v10430 = vunpack.c.l.b16 %v10414
    %v10431 = vunpack.c.l.b16 %v10415
    %v10432 = vunpack.c.l.b16 %v10416
    %v10433 = vpack.c.b16 %v10426, %v10425
    %v10434 = vpack.c.b16 %v10428, %v10427
    %v10435 = vpack.c.b16 %v10430, %v10429
    %v10436 = vpack.c.b16 %v10432, %v10431
    %v10442 = vsel %vm9662, %v10407, 0
    %v10445 = vsel %vm9662, %v10408, 0
    %10447 = vmatprep.subr.bf16.mxu0 0
    %10448 = vmatpush1.bf16.msra.mxu0 %v10433
    %10449 = vmatprep.subr.bf16.mxu0 0
    %10450 = vmatpush1.bf16.msra.mxu0 %v10434
    %10451 = vmatprep.subr.bf16.mxu0 0
    %10452 = vmatpush1.bf16.msra.mxu0 %v10435
    %10453 = vmatprep.subr.bf16.mxu0 0
    %10454 = vmatpush1.bf16.msra.mxu0 %v10436
    %10455 = vmatprep.subr.bf16.mxu0 0
    %10456 = vmatpush1.bf16.msra.mxu0 0
    %10457 = vmatprep.subr.bf16.mxu0 0
    %10458 = vmatpush1.bf16.msra.mxu0 0
    %10459 = vmatprep.subr.bf16.mxu0 0
    %10460 = vmatpush1.bf16.msra.mxu0 0
    %10461 = vmatprep.subr.bf16.mxu0 0
    %10462 = vmatpush1.bf16.msra.mxu0 0
    %10463 = vmatprep.subr.bf16.mxu0 0
    %10464 = vmatpush1.bf16.msra.mxu0 0
    %10465 = vmatprep.subr.bf16.mxu0 0
    %10466 = vmatpush1.bf16.msra.mxu0 0
    %10467 = vmatprep.subr.bf16.mxu0 0
    %10468 = vmatpush1.bf16.msra.mxu0 0
    %10469 = vmatprep.subr.bf16.mxu0 0
    %10470 = vmatpush1.bf16.msra.mxu0 0
    %10471 = vmatprep.subr.bf16.mxu0 0
    %10472 = vmatpush1.bf16.msra.mxu0 0
    %10473 = vmatprep.subr.bf16.mxu0 0
    %10474 = vmatpush1.bf16.msra.mxu0 0
    %10475 = vmatprep.subr.bf16.mxu0 0
    %10476 = vmatpush1.bf16.msra.mxu0 0
    %10477 = vmatprep.subr.bf16.mxu0 0
    %10478 = vmatpush1.bf16.msra.mxu0 0
    %10479 = vmatprep.mubr.bf16.mxu0 0
    %10480 = vmatmul.mubr.bf16.gmra.mrb[0].mxu0 %v10442
    %v10481 = vpop.f32.mrb[0].mxu0
    %v10482 = vadd.f32 0.0, %v10481
    %v10483 = vpop.f32.mrb[0].mxu0
    %v10484 = vpop.f32.mrb[0].mxu0
    %v10485 = vadd.f32 0.0, %v10484
    %v10486 = vpop.f32.mrb[0].mxu0
    %10487 = vmatprep.mubr.bf16.mxu0 0
    %10488 = vmatmul.mubr.bf16.gmra.mrb[0].mxu0 %v10445
    %v10489 = vpop.f32.mrb[0].mxu0
    %v10490 = vadd.f32 0.0, %v10489
    %v10491 = vpop.f32.mrb[0].mxu0
    %v10492 = vpop.f32.mrb[0].mxu0
    %v10493 = vadd.f32 0.0, %v10492
    %v10494 = vpop.f32.mrb[0].mxu0
    %10495 = vdwg.mxu0
    %v10496 = vadd.f32 %v10379, %v10482
    %v10497 = vadd.f32 %v10380, %v10485
    %v10498 = vadd.f32 %v10381, %v10490
    %v10499 = vadd.f32 %v10382, %v10493
    %v10500 = vld [vmem:[%s10265 + $0x2] sm:$0xf]
    %v10501 = vld [vmem:[%s10265 + $0xa] sm:$0xf]
    %v10502 = vld [vmem:[%s10265 + $0x12] sm:$0xf]
    %v10503 = vld [vmem:[%s10265 + $0x1a] sm:$0xf]
    %v10504 = vld [vmem:[%s10265 + $0x32] sm:$0xf]
    %v10505 = vld [vmem:[%s10265 + $0x3a] sm:$0xf]
    %v10506 = vld [vmem:[%s10265 + $0x42] sm:$0xf]
    %v10507 = vld [vmem:[%s10265 + $0x4a] sm:$0xf]
    %v10516 = vcombine.low %v10500, %v10501
    %v10517 = vcombine.low %v10502, %v10503
    %v10518 = vcombine.low %v10504, %v10505
    %v10519 = vcombine.low %v10506, %v10507
    %v10524 = vpack.c.bf16 %v10517, %v10516
    %v10525 = vpack.c.bf16 %v10519, %v10518
    %v10526 = vld [vmem:[#allocation15 + $0x100] sm:$0xf]
    %v10527 = vld [vmem:[#allocation15 + $0x104] sm:$0xf]
    %v10528 = vld [vmem:[#allocation15 + $0x108] sm:$0xf]
    %v10529 = vld [vmem:[#allocation15 + $0x10c] sm:$0xf]
    %v10530 = vld [vmem:[#allocation15 + $0x110] sm:$0xf]
    %v10531 = vld [vmem:[#allocation15 + $0x114] sm:$0xf]
    %v10532 = vld [vmem:[#allocation15 + $0x118] sm:$0xf]
    %v10533 = vld [vmem:[#allocation15 + $0x11c] sm:$0xf]
    %v10542 = vunpack.c.l.b16 %v10526
    %v10543 = vunpack.c.l.b16 %v10527
    %v10544 = vunpack.c.l.b16 %v10528
    %v10545 = vunpack.c.l.b16 %v10529
    %v10546 = vunpack.c.l.b16 %v10530
    %v10547 = vunpack.c.l.b16 %v10531
    %v10548 = vunpack.c.l.b16 %v10532
    %v10549 = vunpack.c.l.b16 %v10533
    %v10550 = vpack.c.b16 %v10543, %v10542
    %v10551 = vpack.c.b16 %v10545, %v10544
    %v10552 = vpack.c.b16 %v10547, %v10546
    %v10553 = vpack.c.b16 %v10549, %v10548
    %v10559 = vsel %vm9662, %v10524, 0
    %v10562 = vsel %vm9662, %v10525, 0
    %10564 = vmatprep.subr.bf16.mxu0 0
    %10565 = vmatpush1.bf16.msra.mxu0 %v10550
    %10566 = vmatprep.subr.bf16.mxu0 0
    %10567 = vmatpush1.bf16.msra.mxu0 %v10551
    %10568 = vmatprep.subr.bf16.mxu0 0
    %10569 = vmatpush1.bf16.msra.mxu0 %v10552
    %10570 = vmatprep.subr.bf16.mxu0 0
    %10571 = vmatpush1.bf16.msra.mxu0 %v10553
    %10572 = vmatprep.subr.bf16.mxu0 0
    %10573 = vmatpush1.bf16.msra.mxu0 0
    %10574 = vmatprep.subr.bf16.mxu0 0
    %10575 = vmatpush1.bf16.msra.mxu0 0
    %10576 = vmatprep.subr.bf16.mxu0 0
    %10577 = vmatpush1.bf16.msra.mxu0 0
    %10578 = vmatprep.subr.bf16.mxu0 0
    %10579 = vmatpush1.bf16.msra.mxu0 0
    %10580 = vmatprep.subr.bf16.mxu0 0
    %10581 = vmatpush1.bf16.msra.mxu0 0
    %10582 = vmatprep.subr.bf16.mxu0 0
    %10583 = vmatpush1.bf16.msra.mxu0 0
    %10584 = vmatprep.subr.bf16.mxu0 0
    %10585 = vmatpush1.bf16.msra.mxu0 0
    %10586 = vmatprep.subr.bf16.mxu0 0
    %10587 = vmatpush1.bf16.msra.mxu0 0
    %10588 = vmatprep.subr.bf16.mxu0 0
    %10589 = vmatpush1.bf16.msra.mxu0 0
    %10590 = vmatprep.subr.bf16.mxu0 0
    %10591 = vmatpush1.bf16.msra.mxu0 0
    %10592 = vmatprep.subr.bf16.mxu0 0
    %10593 = vmatpush1.bf16.msra.mxu0 0
    %10594 = vmatprep.subr.bf16.mxu0 0
    %10595 = vmatpush1.bf16.msra.mxu0 0
    %10596 = vmatprep.mubr.bf16.mxu0 0
    %10597 = vmatmul.mubr.bf16.gmra.mrb[0].mxu0 %v10559
    %v10598 = vpop.f32.mrb[0].mxu0
    %v10599 = vadd.f32 0.0, %v10598
    %v10600 = vpop.f32.mrb[0].mxu0
    %v10601 = vpop.f32.mrb[0].mxu0
    %v10602 = vadd.f32 0.0, %v10601
    %v10603 = vpop.f32.mrb[0].mxu0
    %10604 = vmatprep.mubr.bf16.mxu0 0
    %10605 = vmatmul.mubr.bf16.gmra.mrb[0].mxu0 %v10562
    %v10606 = vpop.f32.mrb[0].mxu0
    %v10607 = vadd.f32 0.0, %v10606
    %v10608 = vpop.f32.mrb[0].mxu0
    %v10609 = vpop.f32.mrb[0].mxu0
    %v10610 = vadd.f32 0.0, %v10609
    %v10611 = vpop.f32.mrb[0].mxu0
    %10612 = vdwg.mxu0
    %v10613 = vadd.f32 %v10496, %v10599
    %v10614 = vadd.f32 %v10497, %v10602
    %v10615 = vadd.f32 %v10498, %v10607
    %v10616 = vadd.f32 %v10499, %v10610
    %v10617 = vld [vmem:[#allocation17] sm:$0x1]
    %v10619 = vlaneseq
    %v10620 = vshrl.u32 %v10619, 7
    %v10621 = vsub.s32 0, %v10620
    %v10622 = vrot.slane %v10617, %v10621
    %v10624 = vadd.f32 %v10613, %v10622
    %v10625 = vadd.f32 %v10614, %v10622
    %v10626 = vadd.f32 %v10615, %v10622
    %v10627 = vadd.f32 %v10616, %v10622
    %v10628 = vmax.f32 %v10624, 0.0
    %v10629 = vmax.f32 %v10625, 0.0
    %v10630 = vmax.f32 %v10626, 0.0
    %v10631 = vmax.f32 %v10627, 0.0
    %v10636 = vcombine.high %v10628, %v10628
    %v10637 = vcombine.high %v10629, %v10629
    %v10638 = vcombine.high %v10630, %v10630
    %v10639 = vcombine.high %v10631, %v10631
    %v10644 = vmax.f32 %v10628, %v10636
    %v10645 = vmax.f32 %v10629, %v10637
    %v10646 = vmax.f32 %v10630, %v10638
    %v10647 = vmax.f32 %v10631, %v10639
    %v10653 = vunpack.c.l.s4 1983009808
    %v10654 = vunpack.c.0.s8 %v10653
    %v10655 = vlaneseq
    %v10656 = vshrl.u32 %v10655, 7
    %v10657 = vsub.s32 %v10654, %v10656
    %v10658 = vrot.slane %v10644, %v10657
    %v10659 = vcombine.high %v10658, %v10658
    %v10661 = vunpack.c.l.s4 1983009808
    %v10662 = vunpack.c.0.s8 %v10661
    %v10663 = vlaneseq
    %v10664 = vshrl.u32 %v10663, 7
    %v10665 = vsub.s32 %v10662, %v10664
    %v10666 = vrot.slane %v10645, %v10665
    %v10667 = vcombine.high %v10666, %v10666
    %v10669 = vunpack.c.l.s4 1983009808
    %v10670 = vunpack.c.0.s8 %v10669
    %v10671 = vlaneseq
    %v10672 = vshrl.u32 %v10671, 7
    %v10673 = vsub.s32 %v10670, %v10672
    %v10674 = vrot.slane %v10646, %v10673
    %v10675 = vcombine.high %v10674, %v10674
    %v10677 = vunpack.c.l.s4 1983009808
    %v10678 = vunpack.c.0.s8 %v10677
    %v10679 = vlaneseq
    %v10680 = vshrl.u32 %v10679, 7
    %v10681 = vsub.s32 %v10678, %v10680
    %v10682 = vrot.slane %v10647, %v10681
    %v10683 = vcombine.high %v10682, %v10682
    %v10692 = vrot.slane %v10658, 7
    %v10693 = vrot.slane %v10692, 2
    %v10694 = vrot.slane %v10659, 7
    %v10695 = vrot.slane %v10694, 2
    %v10696 = vrot.slane %v10666, 7
    %v10697 = vrot.slane %v10696, 2
    %v10698 = vrot.slane %v10667, 7
    %v10699 = vrot.slane %v10698, 2
    %v10700 = vrot.slane %v10674, 7
    %v10701 = vrot.slane %v10700, 2
    %v10702 = vrot.slane %v10675, 7
    %v10703 = vrot.slane %v10702, 2
    %v10704 = vrot.slane %v10682, 7
    %v10705 = vrot.slane %v10704, 2
    %v10706 = vrot.slane %v10683, 7
    %v10707 = vrot.slane %v10706, 2
    %v10716 = vmax.f32 %v10658, %v10693
    %v10717 = vmax.f32 %v10659, %v10695
    %v10718 = vmax.f32 %v10666, %v10697
    %v10719 = vmax.f32 %v10667, %v10699
    %v10720 = vmax.f32 %v10674, %v10701
    %v10721 = vmax.f32 %v10675, %v10703
    %v10722 = vmax.f32 %v10682, %v10705
    %v10723 = vmax.f32 %v10683, %v10707
    %v10726 = vsel %vm2194, %v10716, %v10716
    %v10727 = vsel %vm2198, %v10716, %v10726
    %v10728 = vrot.slane %v10720, 7
    %v10729 = vsel %vm2188, %v10728, %v10727
    %v10730 = vsel %vm2192, %v10728, %v10729
    %v10731 = vsel %vm2196, %v10728, %v10730
    %v10732 = vsel %vm2200, %v10728, %v10731
    %10734 = vst [vmem:[#allocation5] sm:$0x3] %v10732
    %v10737 = vsel %vm2194, %v10717, %v10717
    %v10738 = vsel %vm2198, %v10717, %v10737
    %v10739 = vrot.slane %v10721, 7
    %v10740 = vsel %vm2188, %v10739, %v10738
    %v10741 = vsel %vm2192, %v10739, %v10740
    %v10742 = vsel %vm2196, %v10739, %v10741
    %v10743 = vsel %vm2200, %v10739, %v10742
    %10745 = vst [vmem:[#allocation5 + $0x2] sm:$0x3] %v10743
    %v10748 = vsel %vm2194, %v10718, %v10718
    %v10749 = vsel %vm2198, %v10718, %v10748
    %v10750 = vrot.slane %v10722, 7
    %v10751 = vsel %vm2188, %v10750, %v10749
    %v10752 = vsel %vm2192, %v10750, %v10751
    %v10753 = vsel %vm2196, %v10750, %v10752
    %v10754 = vsel %vm2200, %v10750, %v10753
    %10756 = vst [vmem:[#allocation5 + $0x4] sm:$0x3] %v10754
    %v10759 = vsel %vm2194, %v10719, %v10719
    %v10760 = vsel %vm2198, %v10719, %v10759
    %v10761 = vrot.slane %v10723, 7
    %v10762 = vsel %vm2188, %v10761, %v10760
    %v10763 = vsel %vm2192, %v10761, %v10762
    %v10764 = vsel %vm2196, %v10761, %v10763
    %v10765 = vsel %vm2200, %v10761, %v10764
    %10767 = vst [vmem:[#allocation5 + $0x6] sm:$0x3] %v10765
    %v10768 = vld [vmem:[#allocation5] sm:$0xff]
    %v10770 = vcombine.high %v10768, %v10768
    %v10772 = vunpack.c.l.s4 1983009808
    %v10773 = vunpack.c.0.s8 %v10772
    %v10774 = vlaneseq
    %v10775 = vshrl.u32 %v10774, 7
    %v10776 = vsub.s32 %v10773, %v10775
    %v10777 = vrot.slane %v10768, %v10776
    %v10779 = vunpack.c.l.s4 1983009808
    %v10780 = vunpack.c.0.s8 %v10779
    %v10781 = vlaneseq
    %v10782 = vshrl.u32 %v10781, 7
    %v10783 = vsub.s32 %v10780, %v10782
    %v10784 = vrot.slane %v10770, %v10783
    %v10785 = vcombine.high %v10777, %v10777
    %v10786 = vcombine.high %v10784, %v10784
    %v10791 = vpack.c.bf16 %v10777, %v10777
    %v10792 = vpack.c.bf16 %v10785, %v10785
    %v10793 = vpack.c.bf16 %v10784, %v10784
    %v10794 = vpack.c.bf16 %v10786, %v10786
    %v10795 = vld [vmem:[#allocation18] sm:$0xf]
    %v10796 = vld [vmem:[#allocation18 + $0x4] sm:$0xf]
    %v10797 = vld [vmem:[#allocation18 + $0x8] sm:$0xf]
    %v10798 = vld [vmem:[#allocation18 + $0xc] sm:$0xf]
    %v10799 = vld [vmem:[#allocation18 + $0x10] sm:$0xf]
    %v10800 = vld [vmem:[#allocation18 + $0x14] sm:$0xf]
    %v10801 = vld [vmem:[#allocation18 + $0x18] sm:$0xf]
    %v10802 = vld [vmem:[#allocation18 + $0x1c] sm:$0xf]
    %v10803 = vld [vmem:[#allocation18 + $0x20] sm:$0xf]
    %v10804 = vld [vmem:[#allocation18 + $0x24] sm:$0xf]
    %v10805 = vld [vmem:[#allocation18 + $0x28] sm:$0xf]
    %v10806 = vld [vmem:[#allocation18 + $0x2c] sm:$0xf]
    %v10807 = vld [vmem:[#allocation18 + $0x30] sm:$0xf]
    %v10808 = vld [vmem:[#allocation18 + $0x34] sm:$0xf]
    %v10809 = vld [vmem:[#allocation18 + $0x38] sm:$0xf]
    %v10810 = vld [vmem:[#allocation18 + $0x3c] sm:$0xf]
    %v10811 = vld [vmem:[#allocation18 + $0x40] sm:$0xf]
    %v10812 = vld [vmem:[#allocation18 + $0x44] sm:$0xf]
    %v10813 = vld [vmem:[#allocation18 + $0x48] sm:$0xf]
    %v10814 = vld [vmem:[#allocation18 + $0x4c] sm:$0xf]
    %v10815 = vld [vmem:[#allocation18 + $0x50] sm:$0xf]
    %v10816 = vld [vmem:[#allocation18 + $0x54] sm:$0xf]
    %v10817 = vld [vmem:[#allocation18 + $0x58] sm:$0xf]
    %v10818 = vld [vmem:[#allocation18 + $0x5c] sm:$0xf]
    %v10819 = vld [vmem:[#allocation18 + $0x60] sm:$0xf]
    %v10820 = vld [vmem:[#allocation18 + $0x64] sm:$0xf]
    %v10821 = vld [vmem:[#allocation18 + $0x68] sm:$0xf]
    %v10822 = vld [vmem:[#allocation18 + $0x6c] sm:$0xf]
    %v10823 = vld [vmem:[#allocation18 + $0x70] sm:$0xf]
    %v10824 = vld [vmem:[#allocation18 + $0x74] sm:$0xf]
    %v10825 = vld [vmem:[#allocation18 + $0x78] sm:$0xf]
    %v10826 = vld [vmem:[#allocation18 + $0x7c] sm:$0xf]
    %v10827 = vld [vmem:[#allocation18 + $0x80] sm:$0xf]
    %v10828 = vld [vmem:[#allocation18 + $0x84] sm:$0xf]
    %v10829 = vld [vmem:[#allocation18 + $0x88] sm:$0xf]
    %v10830 = vld [vmem:[#allocation18 + $0x8c] sm:$0xf]
    %v10831 = vld [vmem:[#allocation18 + $0x90] sm:$0xf]
    %v10832 = vld [vmem:[#allocation18 + $0x94] sm:$0xf]
    %v10833 = vld [vmem:[#allocation18 + $0x98] sm:$0xf]
    %v10834 = vld [vmem:[#allocation18 + $0x9c] sm:$0xf]
    %v10835 = vld [vmem:[#allocation18 + $0xa0] sm:$0xf]
    %v10836 = vld [vmem:[#allocation18 + $0xa4] sm:$0xf]
    %v10837 = vld [vmem:[#allocation18 + $0xa8] sm:$0xf]
    %v10838 = vld [vmem:[#allocation18 + $0xac] sm:$0xf]
    %v10839 = vld [vmem:[#allocation18 + $0xb0] sm:$0xf]
    %v10840 = vld [vmem:[#allocation18 + $0xb4] sm:$0xf]
    %v10841 = vld [vmem:[#allocation18 + $0xb8] sm:$0xf]
    %v10842 = vld [vmem:[#allocation18 + $0xbc] sm:$0xf]
    %v10843 = vld [vmem:[#allocation18 + $0xc0] sm:$0xf]
    %v10844 = vld [vmem:[#allocation18 + $0xc4] sm:$0xf]
    %v10845 = vld [vmem:[#allocation18 + $0xc8] sm:$0xf]
    %v10846 = vld [vmem:[#allocation18 + $0xcc] sm:$0xf]
    %v10847 = vld [vmem:[#allocation18 + $0xd0] sm:$0xf]
    %v10848 = vld [vmem:[#allocation18 + $0xd4] sm:$0xf]
    %v10849 = vld [vmem:[#allocation18 + $0xd8] sm:$0xf]
    %v10850 = vld [vmem:[#allocation18 + $0xdc] sm:$0xf]
    %v10851 = vld [vmem:[#allocation18 + $0xe0] sm:$0xf]
    %v10852 = vld [vmem:[#allocation18 + $0xe4] sm:$0xf]
    %v10853 = vld [vmem:[#allocation18 + $0xe8] sm:$0xf]
    %v10854 = vld [vmem:[#allocation18 + $0xec] sm:$0xf]
    %v10855 = vld [vmem:[#allocation18 + $0xf0] sm:$0xf]
    %v10856 = vld [vmem:[#allocation18 + $0xf4] sm:$0xf]
    %v10857 = vld [vmem:[#allocation18 + $0xf8] sm:$0xf]
    %v10858 = vld [vmem:[#allocation18 + $0xfc] sm:$0xf]
    %v10859 = vld [vmem:[#allocation20] sm:$0x1]
    %v10861 = vlaneseq
    %v10862 = vshrl.u32 %v10861, 7
    %v10863 = vsub.s32 0, %v10862
    %v10864 = vrot.slane %v10859, %v10863
    %v10930 = vunpack.c.l.b16 %v10795
    %v10931 = vunpack.c.l.b16 %v10796
    %v10932 = vunpack.c.l.b16 %v10797
    %v10933 = vunpack.c.l.b16 %v10798
    %v10934 = vunpack.c.l.b16 %v10799
    %v10935 = vunpack.c.l.b16 %v10800
    %v10936 = vunpack.c.l.b16 %v10801
    %v10937 = vunpack.c.l.b16 %v10802
    %v10938 = vunpack.c.l.b16 %v10803
    %v10939 = vunpack.c.l.b16 %v10804
    %v10940 = vunpack.c.l.b16 %v10805
    %v10941 = vunpack.c.l.b16 %v10806
    %v10942 = vunpack.c.l.b16 %v10807
    %v10943 = vunpack.c.l.b16 %v10808
    %v10944 = vunpack.c.l.b16 %v10809
    %v10945 = vunpack.c.l.b16 %v10810
    %v10946 = vunpack.c.l.b16 %v10811
    %v10947 = vunpack.c.l.b16 %v10812
    %v10948 = vunpack.c.l.b16 %v10813
    %v10949 = vunpack.c.l.b16 %v10814
    %v10950 = vunpack.c.l.b16 %v10815
    %v10951 = vunpack.c.l.b16 %v10816
    %v10952 = vunpack.c.l.b16 %v10817
    %v10953 = vunpack.c.l.b16 %v10818
    %v10954 = vunpack.c.l.b16 %v10819
    %v10955 = vunpack.c.l.b16 %v10820
    %v10956 = vunpack.c.l.b16 %v10821
    %v10957 = vunpack.c.l.b16 %v10822
    %v10958 = vunpack.c.l.b16 %v10823
    %v10959 = vunpack.c.l.b16 %v10824
    %v10960 = vunpack.c.l.b16 %v10825
    %v10961 = vunpack.c.l.b16 %v10826
    %v10962 = vunpack.c.l.b16 %v10827
    %v10963 = vunpack.c.l.b16 %v10828
    %v10964 = vunpack.c.l.b16 %v10829
    %v10965 = vunpack.c.l.b16 %v10830
    %v10966 = vunpack.c.l.b16 %v10831
    %v10967 = vunpack.c.l.b16 %v10832
    %v10968 = vunpack.c.l.b16 %v10833
    %v10969 = vunpack.c.l.b16 %v10834
    %v10970 = vunpack.c.l.b16 %v10835
    %v10971 = vunpack.c.l.b16 %v10836
    %v10972 = vunpack.c.l.b16 %v10837
    %v10973 = vunpack.c.l.b16 %v10838
    %v10974 = vunpack.c.l.b16 %v10839
    %v10975 = vunpack.c.l.b16 %v10840
    %v10976 = vunpack.c.l.b16 %v10841
    %v10977 = vunpack.c.l.b16 %v10842
    %v10978 = vunpack.c.l.b16 %v10843
    %v10979 = vunpack.c.l.b16 %v10844
    %v10980 = vunpack.c.l.b16 %v10845
    %v10981 = vunpack.c.l.b16 %v10846
    %v10982 = vunpack.c.l.b16 %v10847
    %v10983 = vunpack.c.l.b16 %v10848
    %v10984 = vunpack.c.l.b16 %v10849
    %v10985 = vunpack.c.l.b16 %v10850
    %v10986 = vunpack.c.l.b16 %v10851
    %v10987 = vunpack.c.l.b16 %v10852
    %v10988 = vunpack.c.l.b16 %v10853
    %v10989 = vunpack.c.l.b16 %v10854
    %v10990 = vunpack.c.l.b16 %v10855
    %v10991 = vunpack.c.l.b16 %v10856
    %v10992 = vunpack.c.l.b16 %v10857
    %v10993 = vunpack.c.l.b16 %v10858
    %v10994 = vpack.c.b16 %v10931, %v10930
    %v10995 = vpack.c.b16 %v10933, %v10932
    %v10996 = vpack.c.b16 %v10935, %v10934
    %v10997 = vpack.c.b16 %v10937, %v10936
    %v10998 = vpack.c.b16 %v10939, %v10938
    %v10999 = vpack.c.b16 %v10941, %v10940
    %v11000 = vpack.c.b16 %v10943, %v10942
    %v11001 = vpack.c.b16 %v10945, %v10944
    %v11002 = vpack.c.b16 %v10947, %v10946
    %v11003 = vpack.c.b16 %v10949, %v10948
    %v11004 = vpack.c.b16 %v10951, %v10950
    %v11005 = vpack.c.b16 %v10953, %v10952
    %v11006 = vpack.c.b16 %v10955, %v10954
    %v11007 = vpack.c.b16 %v10957, %v10956
    %v11008 = vpack.c.b16 %v10959, %v10958
    %v11009 = vpack.c.b16 %v10961, %v10960
    %v11010 = vpack.c.b16 %v10963, %v10962
    %v11011 = vpack.c.b16 %v10965, %v10964
    %v11012 = vpack.c.b16 %v10967, %v10966
    %v11013 = vpack.c.b16 %v10969, %v10968
    %v11014 = vpack.c.b16 %v10971, %v10970
    %v11015 = vpack.c.b16 %v10973, %v10972
    %v11016 = vpack.c.b16 %v10975, %v10974
    %v11017 = vpack.c.b16 %v10977, %v10976
    %v11018 = vpack.c.b16 %v10979, %v10978
    %v11019 = vpack.c.b16 %v10981, %v10980
    %v11020 = vpack.c.b16 %v10983, %v10982
    %v11021 = vpack.c.b16 %v10985, %v10984
    %v11022 = vpack.c.b16 %v10987, %v10986
    %v11023 = vpack.c.b16 %v10989, %v10988
    %v11024 = vpack.c.b16 %v10991, %v10990
    %v11025 = vpack.c.b16 %v10993, %v10992
    %11058 = vmatprep.subr.bf16.mxu0 0
    %11059 = vmatpush1.bf16.msra.mxu0 %v10994
    %11060 = vmatprep.subr.bf16.mxu0 0
    %11061 = vmatpush1.bf16.msra.mxu0 %v10995
    %11062 = vmatprep.subr.bf16.mxu0 0
    %11063 = vmatpush1.bf16.msra.mxu0 %v10996
    %11064 = vmatprep.subr.bf16.mxu0 0
    %11065 = vmatpush1.bf16.msra.mxu0 %v10997
    %11066 = vmatprep.subr.bf16.mxu0 0
    %11067 = vmatpush1.bf16.msra.mxu0 %v10998
    %11068 = vmatprep.subr.bf16.mxu0 0
    %11069 = vmatpush1.bf16.msra.mxu0 %v10999
    %11070 = vmatprep.subr.bf16.mxu0 0
    %11071 = vmatpush1.bf16.msra.mxu0 %v11000
    %11072 = vmatprep.subr.bf16.mxu0 0
    %11073 = vmatpush1.bf16.msra.mxu0 %v11001
    %11074 = vmatprep.subr.bf16.mxu0 0
    %11075 = vmatpush1.bf16.msra.mxu0 %v11002
    %11076 = vmatprep.subr.bf16.mxu0 0
    %11077 = vmatpush1.bf16.msra.mxu0 %v11003
    %11078 = vmatprep.subr.bf16.mxu0 0
    %11079 = vmatpush1.bf16.msra.mxu0 %v11004
    %11080 = vmatprep.subr.bf16.mxu0 0
    %11081 = vmatpush1.bf16.msra.mxu0 %v11005
    %11082 = vmatprep.subr.bf16.mxu0 0
    %11083 = vmatpush1.bf16.msra.mxu0 %v11006
    %11084 = vmatprep.subr.bf16.mxu0 0
    %11085 = vmatpush1.bf16.msra.mxu0 %v11007
    %11086 = vmatprep.subr.bf16.mxu0 0
    %11087 = vmatpush1.bf16.msra.mxu0 %v11008
    %11088 = vmatprep.subr.bf16.mxu0 0
    %11089 = vmatpush1.bf16.msra.mxu0 %v11009
    %11090 = vmatprep.mubr.bf16.mxu0 %v10792
    %11091 = vmatmul.mubr.bf16.gmra.mrb[0].mxu0 %v10791
    %v11092 = vpop.f32.mrb[0].mxu0
    %v11093 = vadd.f32 %v10864, %v11092
    %v11094 = vpop.f32.mrb[0].mxu0
    %v11095 = vpop.f32.mrb[0].mxu0
    %v11096 = vpop.f32.mrb[0].mxu0
    %11097 = vdwg.mxu0
    %11098 = vmatprep.subr.bf16.mxu0 0
    %11099 = vmatpush1.bf16.msra.mxu0 %v11010
    %11100 = vmatprep.subr.bf16.mxu0 0
    %11101 = vmatpush1.bf16.msra.mxu0 %v11011
    %11102 = vmatprep.subr.bf16.mxu0 0
    %11103 = vmatpush1.bf16.msra.mxu0 %v11012
    %11104 = vmatprep.subr.bf16.mxu0 0
    %11105 = vmatpush1.bf16.msra.mxu0 %v11013
    %11106 = vmatprep.subr.bf16.mxu0 0
    %11107 = vmatpush1.bf16.msra.mxu0 %v11014
    %11108 = vmatprep.subr.bf16.mxu0 0
    %11109 = vmatpush1.bf16.msra.mxu0 %v11015
    %11110 = vmatprep.subr.bf16.mxu0 0
    %11111 = vmatpush1.bf16.msra.mxu0 %v11016
    %11112 = vmatprep.subr.bf16.mxu0 0
    %11113 = vmatpush1.bf16.msra.mxu0 %v11017
    %11114 = vmatprep.subr.bf16.mxu0 0
    %11115 = vmatpush1.bf16.msra.mxu0 %v11018
    %11116 = vmatprep.subr.bf16.mxu0 0
    %11117 = vmatpush1.bf16.msra.mxu0 %v11019
    %11118 = vmatprep.subr.bf16.mxu0 0
    %11119 = vmatpush1.bf16.msra.mxu0 %v11020
    %11120 = vmatprep.subr.bf16.mxu0 0
    %11121 = vmatpush1.bf16.msra.mxu0 %v11021
    %11122 = vmatprep.subr.bf16.mxu0 0
    %11123 = vmatpush1.bf16.msra.mxu0 %v11022
    %11124 = vmatprep.subr.bf16.mxu0 0
    %11125 = vmatpush1.bf16.msra.mxu0 %v11023
    %11126 = vmatprep.subr.bf16.mxu0 0
    %11127 = vmatpush1.bf16.msra.mxu0 %v11024
    %11128 = vmatprep.subr.bf16.mxu0 0
    %11129 = vmatpush1.bf16.msra.mxu0 %v11025
    %11130 = vmatprep.mubr.bf16.mxu0 %v10794
    %11131 = vmatmul.mubr.bf16.gmra.mrb[0].mxu0 %v10793
    %v11132 = vpop.f32.mrb[0].mxu0
    %v11133 = vadd.f32 %v11093, %v11132
    %v11134 = vpop.f32.mrb[0].mxu0
    %v11135 = vpop.f32.mrb[0].mxu0
    %v11136 = vpop.f32.mrb[0].mxu0
    %11137 = vdwg.mxu0
    %v11138 = vmax.f32 %v11133, 0.0
    %v11139 = vpack.c.bf16 %v11138, %v11138
    %v11140 = vld [vmem:[#allocation21] sm:$0xf]
    %v11141 = vld [vmem:[#allocation21 + $0x4] sm:$0xf]
    %v11142 = vld [vmem:[#allocation21 + $0x8] sm:$0xf]
    %v11143 = vld [vmem:[#allocation21 + $0xc] sm:$0xf]
    %v11144 = vld [vmem:[#allocation21 + $0x10] sm:$0xf]
    %v11145 = vld [vmem:[#allocation21 + $0x14] sm:$0xf]
    %v11146 = vld [vmem:[#allocation21 + $0x18] sm:$0xf]
    %v11147 = vld [vmem:[#allocation21 + $0x1c] sm:$0xf]
    %v11148 = vld [vmem:[#allocation21 + $0x20] sm:$0xf]
    %v11149 = vld [vmem:[#allocation21 + $0x24] sm:$0xf]
    %v11150 = vld [vmem:[#allocation21 + $0x28] sm:$0xf]
    %v11151 = vld [vmem:[#allocation21 + $0x2c] sm:$0xf]
    %v11152 = vld [vmem:[#allocation21 + $0x30] sm:$0xf]
    %v11153 = vld [vmem:[#allocation21 + $0x34] sm:$0xf]
    %v11154 = vld [vmem:[#allocation21 + $0x38] sm:$0xf]
    %v11155 = vld [vmem:[#allocation21 + $0x3c] sm:$0xf]
    %v11156 = vld [vmem:[#allocation23] sm:$0x1]
    %v11158 = vlaneseq
    %v11159 = vshrl.u32 %v11158, 7
    %v11160 = vsub.s32 0, %v11159
    %v11161 = vrot.slane %v11156, %v11160
    %v11179 = vunpack.c.l.b16 %v11140
    %v11180 = vunpack.c.l.b16 %v11141
    %v11181 = vunpack.c.l.b16 %v11142
    %v11182 = vunpack.c.l.b16 %v11143
    %v11183 = vunpack.c.l.b16 %v11144
    %v11184 = vunpack.c.l.b16 %v11145
    %v11185 = vunpack.c.l.b16 %v11146
    %v11186 = vunpack.c.l.b16 %v11147
    %v11187 = vunpack.c.l.b16 %v11148
    %v11188 = vunpack.c.l.b16 %v11149
    %v11189 = vunpack.c.l.b16 %v11150
    %v11190 = vunpack.c.l.b16 %v11151
    %v11191 = vunpack.c.l.b16 %v11152
    %v11192 = vunpack.c.l.b16 %v11153
    %v11193 = vunpack.c.l.b16 %v11154
    %v11194 = vunpack.c.l.b16 %v11155
    %v11195 = vpack.c.b16 %v11180, %v11179
    %v11196 = vpack.c.b16 %v11182, %v11181
    %v11197 = vpack.c.b16 %v11184, %v11183
    %v11198 = vpack.c.b16 %v11186, %v11185
    %v11199 = vpack.c.b16 %v11188, %v11187
    %v11200 = vpack.c.b16 %v11190, %v11189
    %v11201 = vpack.c.b16 %v11192, %v11191
    %v11202 = vpack.c.b16 %v11194, %v11193
    %11211 = vmatprep.subr.bf16.mxu0 0
    %11212 = vmatpush1.bf16.msra.mxu0 %v11195
    %11213 = vmatprep.subr.bf16.mxu0 0
    %11214 = vmatpush1.bf16.msra.mxu0 %v11196
    %11215 = vmatprep.subr.bf16.mxu0 0
    %11216 = vmatpush1.bf16.msra.mxu0 %v11197
    %11217 = vmatprep.subr.bf16.mxu0 0
    %11218 = vmatpush1.bf16.msra.mxu0 %v11198
    %11219 = vmatprep.subr.bf16.mxu0 0
    %11220 = vmatpush1.bf16.msra.mxu0 %v11199
    %11221 = vmatprep.subr.bf16.mxu0 0
    %11222 = vmatpush1.bf16.msra.mxu0 %v11200
    %11223 = vmatprep.subr.bf16.mxu0 0
    %11224 = vmatpush1.bf16.msra.mxu0 %v11201
    %11225 = vmatprep.subr.bf16.mxu0 0
    %11226 = vmatpush1.bf16.msra.mxu0 %v11202
    %11227 = vmatprep.subr.bf16.mxu0 0
    %11228 = vmatpush1.bf16.msra.mxu0 0
    %11229 = vmatprep.subr.bf16.mxu0 0
    %11230 = vmatpush1.bf16.msra.mxu0 0
    %11231 = vmatprep.subr.bf16.mxu0 0
    %11232 = vmatpush1.bf16.msra.mxu0 0
    %11233 = vmatprep.subr.bf16.mxu0 0
    %11234 = vmatpush1.bf16.msra.mxu0 0
    %11235 = vmatprep.subr.bf16.mxu0 0
    %11236 = vmatpush1.bf16.msra.mxu0 0
    %11237 = vmatprep.subr.bf16.mxu0 0
    %11238 = vmatpush1.bf16.msra.mxu0 0
    %11239 = vmatprep.subr.bf16.mxu0 0
    %11240 = vmatpush1.bf16.msra.mxu0 0
    %11241 = vmatprep.subr.bf16.mxu0 0
    %11242 = vmatpush1.bf16.msra.mxu0 0
    %11243 = vmatprep.mubr.bf16.mxu0 0
    %11244 = vmatmul.mubr.bf16.gmra.mrb[0].mxu0 %v11139
    %v11245 = vpop.f32.mrb[0].mxu0
    %v11246 = vadd.f32 %v11161, %v11245
    %v11247 = vpop.f32.mrb[0].mxu0
    %v11248 = vpop.f32.mrb[0].mxu0
    %v11249 = vpop.f32.mrb[0].mxu0
    %11250 = vdwg.mxu0
    %vm11251 = vcmask 58368
    %11252 = vst.msk [vmem:[#allocation24] sm:$0x3] %vm11251, %v11246
    // Predicated region
    $region90: #{cnn_audio_classifier_forward.1} parent=1 // pred_check
      _
    $region91: #{cnn_audio_classifier_forward.1} parent=1 // pred_check_branch
      %11254 = sbr.rel (0) target = $region93
    $region92: #{cnn_audio_classifier_forward.1} parent=1 // pred_region
      %s11256 = ssub.s32 32, 32
      %11257 = vsyncadd [#allocation8], %s11256
      %s11259 = sshll.u32 [#allocation24], 4
      %s11260 = int_to_ptr.vmem [resolvable:$true] %s11259
      %11262 = dma.vmem_to_hbm [thread:$0]  %s11260, 32, %s11, [#allocation8]
    $region93: #{cnn_audio_classifier_forward.1} parent=1 // pred_fallthru
      _
    // Predicated region
    $region94: #{cnn_audio_classifier_forward.1} parent=1 // pred_check
      _
    $region95: #{cnn_audio_classifier_forward.1} parent=1 // pred_check_branch
      %11264 = sbr.rel (0) target = $region97
    $region96: #{cnn_audio_classifier_forward.1} parent=1 // pred_region
      %11265 = dma.done [#allocation8], 32
    $region97: #{cnn_audio_classifier_forward.1} parent=1 // pred_fallthru
      _
    %11266 = vsyncpa [#allocation7], 1
    %11267 = vsyncpa [#allocation10], 1
    %11268 = vsyncpa [#allocation13], 1
    %11269 = vsyncpa [#allocation16], 1
    %11270 = vsyncpa [#allocation19], 1
    %11271 = vsyncpa [#allocation22], 1
    %11272 = vsyncpa [#allocation8], 1

</llo_original>
